<compile_context>
chip_gen: v5e
topology: v5e:2x2
jax: 0.10.0
libtpu: 0.0.40
codegen_flags: <defaults>
</compile_context>

<pallas_src>
import math
import functools

import jax
import jax.numpy as jnp
from jax.experimental import pallas as pl
from jax.experimental.pallas import tpu as pltpu

_MXU_DTYPE = jnp.bfloat16   # MXU operand dtype; accumulation is always f32.


# --------------------------- in-kernel helpers ------------------------------ #

def _layer_norm(x, g, b, eps=1e-5):
    # x: [..., D] f32, g/b: [1, D] f32
    mu = jnp.mean(x, axis=-1, keepdims=True)
    var = jnp.mean((x - mu) ** 2, axis=-1, keepdims=True)
    return (x - mu) * jax.lax.rsqrt(var + eps) * g + b


def _proj(x, w, b):
    """x: [..., D] f32; w: [D, F] bf16 (pre-cast); b: [1, F] f32 -> [..., F] f32."""
    sh = x.shape
    x2 = x.reshape(-1, sh[-1]).astype(_MXU_DTYPE)   # stack rows -> one MXU push
    y = jnp.dot(x2, w, preferred_element_type=jnp.float32) + b
    return y.reshape(sh[:-1] + (w.shape[-1],))


def _mha_one(q, k, v, num_heads, mask=None):
    """q: [Lq, D], k/v: [Lk, D], mask: [1, 1, Lk] additive (or None) -> [Lq, D].

    All heads in a single batched contraction: no per-head lane slicing,
    no explicit k.T, no lane-dim concatenation.
    """
    Lq, D = q.shape
    Lk = k.shape[0]
    dh = D // num_heads
    scale = 1.0 / math.sqrt(dh)
    qh = q.reshape(Lq, num_heads, dh).astype(_MXU_DTYPE)
    kh = k.reshape(Lk, num_heads, dh).astype(_MXU_DTYPE)
    vh = v.reshape(Lk, num_heads, dh).astype(_MXU_DTYPE)
    s = jnp.einsum("qhd,khd->hqk", qh, kh,
                   preferred_element_type=jnp.float32) * scale     # [H, Lq, Lk]
    if mask is not None:
        s = s + mask
    m = jnp.max(s, axis=-1, keepdims=True)
    p = jnp.exp(s - m)
    p = p / jnp.sum(p, axis=-1, keepdims=True)   # exact softmax (parity)
    o = jnp.einsum("hqk,khd->qhd", p.astype(_MXU_DTYPE), vh,
                   preferred_element_type=jnp.float32)             # [Lq, H, dh]
    return o.reshape(Lq, D)


def _mha(q, k, v, num_heads, mask=None):
    """q: [BB, Lq, D], k/v: [BB, Lk, D]; BB is static and tiny."""
    outs = [_mha_one(q[i], k[i], v[i], num_heads, mask)
            for i in range(q.shape[0])]
    return jnp.stack(outs, axis=0)


# ------------------------------- fused kernel ------------------------------- #

def _artr_fused_kernel(
    # activations
    cls_ref, tok_ref, qe_ref,
    # encoder: fused qkv, out-proj, ln1, ffn, ln2
    e_wqkv_ref, e_bqkv_ref, e_wo_ref, e_bo_ref, e_ln1g_ref, e_ln1b_ref,
    e_w1_ref, e_b1_ref, e_w2_ref, e_b2_ref, e_ln2g_ref, e_ln2b_ref,
    # decoder self-attn + ln1
    d_wqkv_ref, d_bqkv_ref, d_wo_ref, d_bo_ref, d_ln1g_ref, d_ln1b_ref,
    # decoder cross-attn (+ fused kv) + ln2
    c_wq_ref, c_bq_ref, c_wkv_ref, c_bkv_ref, c_wo_ref, c_bo_ref,
    d_ln2g_ref, d_ln2b_ref,
    # decoder ffn + ln3
    d_w1_ref, d_b1_ref, d_w2_ref, d_b2_ref, d_ln3g_ref, d_ln3b_ref,
    # output
    o_ref,
    *, num_heads, pad_len):
    BB, S, D = tok_ref.shape
    L = S + 1
    Lp = pad_len
    Q = qe_ref.shape[0]
    f32 = jnp.float32

    # Assemble the padded encoder input in-register: [BB, Lp, D], Lp % 8 == 0.
    parts = [cls_ref[...], tok_ref[...]]
    if Lp > L:
        parts.append(jnp.zeros((BB, Lp - L, D), f32))
    x = jnp.concatenate(parts, axis=1)

    # Additive key-padding mask over the padded key axis (0 for valid keys).
    kpos = jax.lax.broadcasted_iota(jnp.int32, (1, 1, Lp), 2)
    kmask = jnp.where(kpos < L, 0.0, -1e30).astype(f32)              # [1, 1, Lp]

    # ----------------------- encoder layer (post-norm) ---------------------- #
    qkv = _proj(x, e_wqkv_ref[...], e_bqkv_ref[...])                 # [BB, Lp, 3D]
    attn = _mha(qkv[..., :D], qkv[..., D:2 * D], qkv[..., 2 * D:],
                num_heads, kmask)
    attn = _proj(attn, e_wo_ref[...], e_bo_ref[...])
    x = _layer_norm(x + attn, e_ln1g_ref[...], e_ln1b_ref[...])
    h = jnp.maximum(_proj(x, e_w1_ref[...], e_b1_ref[...]), 0.0)
    ff = _proj(h, e_w2_ref[...], e_b2_ref[...])
    mem = _layer_norm(x + ff, e_ln2g_ref[...], e_ln2b_ref[...])      # [BB, Lp, D]

    # -------- decoder layer: self-attn -> cross-attn -> FFN (post-norm) ----- #
    tgt = jnp.broadcast_to(qe_ref[...][None], (BB, Q, D))
    qkv = _proj(tgt, d_wqkv_ref[...], d_bqkv_ref[...])
    sa = _mha(qkv[..., :D], qkv[..., D:2 * D], qkv[..., 2 * D:], num_heads)
    sa = _proj(sa, d_wo_ref[...], d_bo_ref[...])
    t = _layer_norm(tgt + sa, d_ln1g_ref[...], d_ln1b_ref[...])

    q = _proj(t, c_wq_ref[...], c_bq_ref[...])
    kv = _proj(mem, c_wkv_ref[...], c_bkv_ref[...])                  # [BB, Lp, 2D]
    ca = _mha(q, kv[..., :D], kv[..., D:], num_heads, kmask)
    ca = _proj(ca, c_wo_ref[...], c_bo_ref[...])
    t = _layer_norm(t + ca, d_ln2g_ref[...], d_ln2b_ref[...])

    h = jnp.maximum(_proj(t, d_w1_ref[...], d_b1_ref[...]), 0.0)
    ff = _proj(h, d_w2_ref[...], d_b2_ref[...])
    t = _layer_norm(t + ff, d_ln3g_ref[...], d_ln3b_ref[...])        # [BB, Q, D]

    # Lane-dense store: one unmasked [BB, Q*D] (>=128 lanes) write.
    o_ref[0] = t.reshape(BB, Q * D)


# ------------------------------- host wrapper ------------------------------- #

def _const_spec(arr):
    # Whole-array block, constant block index -> DMA'd once, VMEM-resident.
    n = arr.ndim
    return pl.BlockSpec(arr.shape, lambda b, _n=n: (0,) * _n)


def pack_params(params):
    """Fuse qkv/kv weights, reshape bias rows, and pre-cast MXU weights to bf16.

    Called ONCE at setup time (outside the per-call forward path)."""
    enc, dec = params["encoder"], params["decoder"]
    row = lambda v: v.reshape(1, -1).astype(jnp.float32)
    wb = lambda w: w.astype(_MXU_DTYPE)

    ea, da, ca = enc["self_attn"], dec["self_attn"], dec["cross_attn"]
    return dict(
        query_embed=dec["query_embed"].astype(jnp.float32),
        # encoder
        e_wqkv=wb(jnp.concatenate([ea["wq"], ea["wk"], ea["wv"]], axis=1)),
        e_bqkv=row(jnp.concatenate([ea["bq"], ea["bk"], ea["bv"]])),
        e_wo=wb(ea["wo"]), e_bo=row(ea["bo"]),
        e_ln1g=row(enc["ln1_g"]), e_ln1b=row(enc["ln1_b"]),
        e_w1=wb(enc["ffn_w1"]), e_b1=row(enc["ffn_b1"]),
        e_w2=wb(enc["ffn_w2"]), e_b2=row(enc["ffn_b2"]),
        e_ln2g=row(enc["ln2_g"]), e_ln2b=row(enc["ln2_b"]),
        # decoder self-attn
        d_wqkv=wb(jnp.concatenate([da["wq"], da["wk"], da["wv"]], axis=1)),
        d_bqkv=row(jnp.concatenate([da["bq"], da["bk"], da["bv"]])),
        d_wo=wb(da["wo"]), d_bo=row(da["bo"]),
        d_ln1g=row(dec["ln1_g"]), d_ln1b=row(dec["ln1_b"]),
        # decoder cross-attn
        c_wq=wb(ca["wq"]), c_bq=row(ca["bq"]),
        c_wkv=wb(jnp.concatenate([ca["wk"], ca["wv"]], axis=1)),
        c_bkv=row(jnp.concatenate([ca["bk"], ca["bv"]])),
        c_wo=wb(ca["wo"]), c_bo=row(ca["bo"]),
        d_ln2g=row(dec["ln2_g"]), d_ln2b=row(dec["ln2_b"]),
        # decoder ffn
        d_w1=wb(dec["ffn_w1"]), d_b1=row(dec["ffn_b1"]),
        d_w2=wb(dec["ffn_w2"]), d_b2=row(dec["ffn_b2"]),
        d_ln3g=row(dec["ln3_g"]), d_ln3b=row(dec["ln3_b"]),
    )


def artr_forward(text_cls, text_tok, p, num_heads):
    B, S, D = text_tok.shape
    L = S + 1
    Lp = pl.cdiv(L, 8) * 8            # padded encoder length, multiple of 8
    Q = p["query_embed"].shape[0]
    F = p["e_w1"].shape[1]

    cls3 = text_cls[:, None, :].astype(jnp.float32)                  # [B, 1, D]
    tok = text_tok.astype(jnp.float32)                               # [B, S, D]

    # 2-way "parallel" grid keeps both TensorCores busy on megacore chips;
    # the rest of the batch is stacked inside each grid step (no per-row steps).
    G = 2 if (B % 2 == 0) else 1
    BB = B // G

    weights = (
        p["e_wqkv"], p["e_bqkv"], p["e_wo"], p["e_bo"], p["e_ln1g"], p["e_ln1b"],
        p["e_w1"], p["e_b1"], p["e_w2"], p["e_b2"], p["e_ln2g"], p["e_ln2b"],
        p["d_wqkv"], p["d_bqkv"], p["d_wo"], p["d_bo"], p["d_ln1g"], p["d_ln1b"],
        p["c_wq"], p["c_bq"], p["c_wkv"], p["c_bkv"], p["c_wo"], p["c_bo"],
        p["d_ln2g"], p["d_ln2b"],
        p["d_w1"], p["d_b1"], p["d_w2"], p["d_b2"], p["d_ln3g"], p["d_ln3b"],
    )
    operands = (cls3, tok, p["query_embed"]) + weights

    in_specs = [
        pl.BlockSpec((BB, 1, D), lambda b: (b, 0, 0)),
        pl.BlockSpec((BB, S, D), lambda b: (b, 0, 0)),
    ] + [_const_spec(w) for w in (p["query_embed"],) + weights]

    # Advisory cost estimate so XLA can schedule around the fused kernel.
    H, dh = num_heads, D // num_heads
    flops = B * (
        # encoder: qkv proj, attention, out proj, ffn
        2 * Lp * D * 3 * D + 4 * H * Lp * Lp * dh + 2 * Lp * D * D + 4 * Lp * D * F
        # decoder self-attn
        + 2 * Q * D * 3 * D + 4 * H * Q * Q * dh + 2 * Q * D * D
        # decoder cross-attn
        + 2 * Q * D * D + 2 * Lp * D * 2 * D + 4 * H * Q * Lp * dh + 2 * Q * D * D
        # decoder ffn
        + 4 * Q * D * F)
    transcendentals = B * H * (Lp * Lp + Q * Q + Q * Lp)
    bytes_accessed = int(sum(int(op.size) * op.dtype.itemsize for op in operands)
                         + B * Q * D * 4)

    # TODO(synk): at real DETR sizes (D=256, F=2048, long text), also
    # single-buffer the constant weight specs and tile the encoder sequence.
    out = pl.pallas_call(
        functools.partial(_artr_fused_kernel, num_heads=num_heads, pad_len=Lp),
        out_shape=jax.ShapeDtypeStruct((G, BB, Q * D), jnp.float32),
        grid=(G,),
        in_specs=in_specs,
        out_specs=pl.BlockSpec((1, BB, Q * D), lambda b: (b, 0, 0)),
        compiler_params=pltpu.CompilerParams(
            dimension_semantics=("parallel",),
            vmem_limit_bytes=32 * 1024 * 1024),
        cost_estimate=pl.CostEstimate(
            flops=int(flops),
            transcendentals=int(transcendentals),
            bytes_accessed=bytes_accessed),
    )(*operands)
    return out.reshape(B, Q, D)


# ------------------------------ parameter init ------------------------------ #

def _attn_params(key, D):
    ks = jax.random.split(key, 4)
    std = 0.02
    return {
        "wq": std * jax.random.normal(ks[0], (D, D), jnp.float32),
        "bq": jnp.zeros((D,), jnp.float32),
        "wk": std * jax.random.normal(ks[1], (D, D), jnp.float32),
        "bk": jnp.zeros((D,), jnp.float32),
        "wv": std * jax.random.normal(ks[2], (D, D), jnp.float32),
        "bv": jnp.zeros((D,), jnp.float32),
        "wo": std * jax.random.normal(ks[3], (D, D), jnp.float32),
        "bo": jnp.zeros((D,), jnp.float32),
    }


def init_params(key, num_obj_query, D, F):
    k_enc, k_dec = jax.random.split(key)
    ke = jax.random.split(k_enc, 3)
    kd = jax.random.split(k_dec, 4)
    std = 0.02
    encoder = {
        "self_attn": _attn_params(ke[0], D),
        "ffn_w1": std * jax.random.normal(ke[1], (D, F), jnp.float32),
        "ffn_b1": jnp.zeros((F,), jnp.float32),
        "ffn_w2": std * jax.random.normal(ke[2], (F, D), jnp.float32),
        "ffn_b2": jnp.zeros((D,), jnp.float32),
        "ln1_g": jnp.ones((D,), jnp.float32), "ln1_b": jnp.zeros((D,), jnp.float32),
        "ln2_g": jnp.ones((D,), jnp.float32), "ln2_b": jnp.zeros((D,), jnp.float32),
    }
    decoder = {
        "query_embed": std * jax.random.normal(kd[0], (num_obj_query, D), jnp.float32),
        "self_attn": _attn_params(kd[1], D),
        "cross_attn": _attn_params(kd[2], D),
        "ffn_w1": std * jax.random.normal(kd[3], (D, F), jnp.float32),
        "ffn_b1": jnp.zeros((F,), jnp.float32),
        "ffn_w2": std * jax.random.normal(jax.random.fold_in(kd[3], 1), (F, D), jnp.float32),
        "ffn_b2": jnp.zeros((D,), jnp.float32),
        "ln1_g": jnp.ones((D,), jnp.float32), "ln1_b": jnp.zeros((D,), jnp.float32),
        "ln2_g": jnp.ones((D,), jnp.float32), "ln2_b": jnp.zeros((D,), jnp.float32),
        "ln3_g": jnp.ones((D,), jnp.float32), "ln3_b": jnp.zeros((D,), jnp.float32),
    }
    return {"encoder": encoder, "decoder": decoder}


# ----------------------------------- main ----------------------------------- #

if __name__ == "__main__":
    B, S, D, F = 2, 8, 32, 64          # batch, text tokens, hidd_dim, ffn dim
    NUM_OBJ_QUERY = 8
    NUM_HEADS = 4

    key = jax.random.PRNGKey(0)
    k_cls, k_tok, k_par = jax.random.split(key, 3)
    text_cls = jax.random.normal(k_cls, (B, D), jnp.float32)       # [B, D]
    text_tok = jax.random.normal(k_tok, (B, S, D), jnp.float32)    # [B, S, D]

    params = init_params(k_par, NUM_OBJ_QUERY, D, F)
    packed = pack_params(params)       # fused/bf16 weights, computed once

    fwd = jax.jit(functools.partial(artr_forward, num_heads=NUM_HEADS))
    out = jax.block_until_ready(fwd(text_cls, text_tok, packed))

    assert out.shape == (B, NUM_OBJ_QUERY, D), out.shape
    assert bool(jnp.all(jnp.isfinite(out)))
    print("KERNEL_OK")
</pallas_src>

<mosaic_0001>
module attributes {stable_mosaic.version = 11 : i64} {
  func.func @_artr_fused_kernel(%arg0: i32, %arg1: memref<1x1x32xf32, #tpu.memory_space<vmem>>, %arg2: memref<1x8x32xf32, #tpu.memory_space<vmem>>, %arg3: memref<8x32xf32, #tpu.memory_space<vmem>>, %arg4: memref<32x96xbf16, #tpu.memory_space<vmem>>, %arg5: memref<1x96xf32, #tpu.memory_space<vmem>>, %arg6: memref<32x32xbf16, #tpu.memory_space<vmem>>, %arg7: memref<1x32xf32, #tpu.memory_space<vmem>>, %arg8: memref<1x32xf32, #tpu.memory_space<vmem>>, %arg9: memref<1x32xf32, #tpu.memory_space<vmem>>, %arg10: memref<32x64xbf16, #tpu.memory_space<vmem>>, %arg11: memref<1x64xf32, #tpu.memory_space<vmem>>, %arg12: memref<64x32xbf16, #tpu.memory_space<vmem>>, %arg13: memref<1x32xf32, #tpu.memory_space<vmem>>, %arg14: memref<1x32xf32, #tpu.memory_space<vmem>>, %arg15: memref<1x32xf32, #tpu.memory_space<vmem>>, %arg16: memref<32x96xbf16, #tpu.memory_space<vmem>>, %arg17: memref<1x96xf32, #tpu.memory_space<vmem>>, %arg18: memref<32x32xbf16, #tpu.memory_space<vmem>>, %arg19: memref<1x32xf32, #tpu.memory_space<vmem>>, %arg20: memref<1x32xf32, #tpu.memory_space<vmem>>, %arg21: memref<1x32xf32, #tpu.memory_space<vmem>>, %arg22: memref<32x32xbf16, #tpu.memory_space<vmem>>, %arg23: memref<1x32xf32, #tpu.memory_space<vmem>>, %arg24: memref<32x64xbf16, #tpu.memory_space<vmem>>, %arg25: memref<1x64xf32, #tpu.memory_space<vmem>>, %arg26: memref<32x32xbf16, #tpu.memory_space<vmem>>, %arg27: memref<1x32xf32, #tpu.memory_space<vmem>>, %arg28: memref<1x32xf32, #tpu.memory_space<vmem>>, %arg29: memref<1x32xf32, #tpu.memory_space<vmem>>, %arg30: memref<32x64xbf16, #tpu.memory_space<vmem>>, %arg31: memref<1x64xf32, #tpu.memory_space<vmem>>, %arg32: memref<64x32xbf16, #tpu.memory_space<vmem>>, %arg33: memref<1x32xf32, #tpu.memory_space<vmem>>, %arg34: memref<1x32xf32, #tpu.memory_space<vmem>>, %arg35: memref<1x32xf32, #tpu.memory_space<vmem>>, %arg36: memref<1x1x256xf32, #tpu.memory_space<vmem>>) attributes {dimension_semantics = [#tpu.dimension_semantics<parallel>], iteration_bounds = array<i64: 2>, scalar_prefetch = 0 : i64, scratch_operands = 0 : i64, tpu.core_type = #tpu.core_type<tc>, window_params = [{transform_indices = @transform_0, window_bounds = array<i64: 1, 1, 32>}, {transform_indices = @transform_1, window_bounds = array<i64: 1, 8, 32>}, {pipeline_mode = #tpu.pipeline_mode<synchronous>, transform_indices = @transform_2, window_bounds = array<i64: 8, 32>}, {pipeline_mode = #tpu.pipeline_mode<synchronous>, transform_indices = @transform_3, window_bounds = array<i64: 32, 96>}, {pipeline_mode = #tpu.pipeline_mode<synchronous>, transform_indices = @transform_4, window_bounds = array<i64: 1, 96>}, {pipeline_mode = #tpu.pipeline_mode<synchronous>, transform_indices = @transform_5, window_bounds = array<i64: 32, 32>}, {pipeline_mode = #tpu.pipeline_mode<synchronous>, transform_indices = @transform_6, window_bounds = array<i64: 1, 32>}, {pipeline_mode = #tpu.pipeline_mode<synchronous>, transform_indices = @transform_7, window_bounds = array<i64: 1, 32>}, {pipeline_mode = #tpu.pipeline_mode<synchronous>, transform_indices = @transform_8, window_bounds = array<i64: 1, 32>}, {pipeline_mode = #tpu.pipeline_mode<synchronous>, transform_indices = @transform_9, window_bounds = array<i64: 32, 64>}, {pipeline_mode = #tpu.pipeline_mode<synchronous>, transform_indices = @transform_10, window_bounds = array<i64: 1, 64>}, {pipeline_mode = #tpu.pipeline_mode<synchronous>, transform_indices = @transform_11, window_bounds = array<i64: 64, 32>}, {pipeline_mode = #tpu.pipeline_mode<synchronous>, transform_indices = @transform_12, window_bounds = array<i64: 1, 32>}, {pipeline_mode = #tpu.pipeline_mode<synchronous>, transform_indices = @transform_13, window_bounds = array<i64: 1, 32>}, {pipeline_mode = #tpu.pipeline_mode<synchronous>, transform_indices = @transform_14, window_bounds = array<i64: 1, 32>}, {pipeline_mode = #tpu.pipeline_mode<synchronous>, transform_indices = @transform_15, window_bounds = array<i64: 32, 96>}, {pipeline_mode = #tpu.pipeline_mode<synchronous>, transform_indices = @transform_16, window_bounds = array<i64: 1, 96>}, {pipeline_mode = #tpu.pipeline_mode<synchronous>, transform_indices = @transform_17, window_bounds = array<i64: 32, 32>}, {pipeline_mode = #tpu.pipeline_mode<synchronous>, transform_indices = @transform_18, window_bounds = array<i64: 1, 32>}, {pipeline_mode = #tpu.pipeline_mode<synchronous>, transform_indices = @transform_19, window_bounds = array<i64: 1, 32>}, {pipeline_mode = #tpu.pipeline_mode<synchronous>, transform_indices = @transform_20, window_bounds = array<i64: 1, 32>}, {pipeline_mode = #tpu.pipeline_mode<synchronous>, transform_indices = @transform_21, window_bounds = array<i64: 32, 32>}, {pipeline_mode = #tpu.pipeline_mode<synchronous>, transform_indices = @transform_22, window_bounds = array<i64: 1, 32>}, {pipeline_mode = #tpu.pipeline_mode<synchronous>, transform_indices = @transform_23, window_bounds = array<i64: 32, 64>}, {pipeline_mode = #tpu.pipeline_mode<synchronous>, transform_indices = @transform_24, window_bounds = array<i64: 1, 64>}, {pipeline_mode = #tpu.pipeline_mode<synchronous>, transform_indices = @transform_25, window_bounds = array<i64: 32, 32>}, {pipeline_mode = #tpu.pipeline_mode<synchronous>, transform_indices = @transform_26, window_bounds = array<i64: 1, 32>}, {pipeline_mode = #tpu.pipeline_mode<synchronous>, transform_indices = @transform_27, window_bounds = array<i64: 1, 32>}, {pipeline_mode = #tpu.pipeline_mode<synchronous>, transform_indices = @transform_28, window_bounds = array<i64: 1, 32>}, {pipeline_mode = #tpu.pipeline_mode<synchronous>, transform_indices = @transform_29, window_bounds = array<i64: 32, 64>}, {pipeline_mode = #tpu.pipeline_mode<synchronous>, transform_indices = @transform_30, window_bounds = array<i64: 1, 64>}, {pipeline_mode = #tpu.pipeline_mode<synchronous>, transform_indices = @transform_31, window_bounds = array<i64: 64, 32>}, {pipeline_mode = #tpu.pipeline_mode<synchronous>, transform_indices = @transform_32, window_bounds = array<i64: 1, 32>}, {pipeline_mode = #tpu.pipeline_mode<synchronous>, transform_indices = @transform_33, window_bounds = array<i64: 1, 32>}, {pipeline_mode = #tpu.pipeline_mode<synchronous>, transform_indices = @transform_34, window_bounds = array<i64: 1, 32>}, {transform_indices = @transform_35, window_bounds = array<i64: 1, 1, 256>}]} {
    %c0 = arith.constant 0 : index
    %c0_0 = arith.constant 0 : index
    %c0_1 = arith.constant 0 : index
    %0 = vector.load %arg1[%c0, %c0_0, %c0_1] : memref<1x1x32xf32, #tpu.memory_space<vmem>>, vector<1x1x32xf32>
    %c0_2 = arith.constant 0 : index
    %c0_3 = arith.constant 0 : index
    %c0_4 = arith.constant 0 : index
    %1 = vector.load %arg2[%c0_2, %c0_3, %c0_4] : memref<1x8x32xf32, #tpu.memory_space<vmem>>, vector<1x8x32xf32>
    %cst = arith.constant 0.000000e+00 : f32
    %2 = vector.broadcast %cst : f32 to vector<1x7x32xf32>
    %3 = tpu.concatenate %0, %1, %2 in 1 : vector<1x1x32xf32>, vector<1x8x32xf32>, vector<1x7x32xf32> -> vector<1x16x32xf32>
    %4 = tpu.iota {dimensions = array<i32: 2>} : vector<1x1x16xi32>
    %c9_i32 = arith.constant 9 : i32
    %5 = vector.broadcast %c9_i32 : i32 to vector<1x1x16xi32>
    %6 = arith.cmpi slt, %4, %5 : vector<1x1x16xi32>
    %cst_5 = arith.constant 0.000000e+00 : f32
    %cst_6 = arith.constant -1.000000e+30 : f32
    %7 = vector.broadcast %cst_5 : f32 to vector<1x1x16xf32>
    %8 = vector.broadcast %cst_6 : f32 to vector<1x1x16xf32>
    %9 = arith.select %6, %7, %8 : vector<1x1x16xi1>, vector<1x1x16xf32>
    %c0_7 = arith.constant 0 : index
    %c0_8 = arith.constant 0 : index
    %10 = vector.load %arg4[%c0_7, %c0_8] : memref<32x96xbf16, #tpu.memory_space<vmem>>, vector<32x96xbf16>
    %c0_9 = arith.constant 0 : index
    %c0_10 = arith.constant 0 : index
    %11 = vector.load %arg5[%c0_9, %c0_10] : memref<1x96xf32, #tpu.memory_space<vmem>>, vector<1x96xf32>
    %12 = vector.shape_cast %3 : vector<1x16x32xf32> to vector<16x32xf32>
    %13 = arith.truncf %12 : vector<16x32xf32> to vector<16x32xbf16>
    %cst_11 = arith.constant dense<0.000000e+00> : vector<16x96xf32>
    %14 = tpu.matmul %13, %10, %cst_11 {dimension_numbers = #tpu.dot_dimension_numbers<[1], [0], [0], [1], [0, 0, 1, 1], [], []>} : vector<16x32xbf16>, vector<32x96xbf16>, vector<16x96xf32> -> vector<16x96xf32>
    %15 = vector.broadcast %11 : vector<1x96xf32> to vector<16x96xf32>
    %16 = arith.addf %14, %15 : vector<16x96xf32>
    %17 = vector.shape_cast %16 : vector<16x96xf32> to vector<1x16x96xf32>
    %18 = vector.extract_strided_slice %17 {offsets = [0, 0, 0], sizes = [1, 16, 32], strides = [1, 1, 1]} : vector<1x16x96xf32> to vector<1x16x32xf32>
    %19 = vector.extract_strided_slice %17 {offsets = [0, 0, 32], sizes = [1, 16, 32], strides = [1, 1, 1]} : vector<1x16x96xf32> to vector<1x16x32xf32>
    %20 = vector.extract_strided_slice %17 {offsets = [0, 0, 64], sizes = [1, 16, 32], strides = [1, 1, 1]} : vector<1x16x96xf32> to vector<1x16x32xf32>
    %21 = vector.shape_cast %18 : vector<1x16x32xf32> to vector<16x32xf32>
    %22 = vector.shape_cast %19 : vector<1x16x32xf32> to vector<16x32xf32>
    %23 = vector.shape_cast %20 : vector<1x16x32xf32> to vector<16x32xf32>
    %24 = vector.shape_cast %21 : vector<16x32xf32> to vector<16x4x8xf32>
    %25 = arith.truncf %24 : vector<16x4x8xf32> to vector<16x4x8xbf16>
    %26 = vector.shape_cast %22 : vector<16x32xf32> to vector<16x4x8xf32>
    %27 = arith.truncf %26 : vector<16x4x8xf32> to vector<16x4x8xbf16>
    %28 = vector.shape_cast %23 : vector<16x32xf32> to vector<16x4x8xf32>
    %29 = arith.truncf %28 : vector<16x4x8xf32> to vector<16x4x8xbf16>
    "tpu.trace_start"() <{level = 10 : i32, message = "qhd,khd->hqk"}> : () -> ()
    %cst_12 = arith.constant dense<0.000000e+00> : vector<4x16x16xf32>
    %30 = tpu.matmul %25, %27, %cst_12 {dimension_numbers = #tpu.dot_dimension_numbers<[2], [2], [0], [0], [0, 1, 0, 0, 1, 0], [1], [1]>} : vector<16x4x8xbf16>, vector<16x4x8xbf16>, vector<4x16x16xf32> -> vector<4x16x16xf32>
    "tpu.trace_stop"() : () -> ()
    %cst_13 = arith.constant 0.353553385 : f32
    %31 = vector.broadcast %cst_13 : f32 to vector<4x16x16xf32>
    %32 = arith.mulf %30, %31 : vector<4x16x16xf32>
    %33 = vector.broadcast %9 : vector<1x1x16xf32> to vector<4x16x16xf32>
    %34 = arith.addf %32, %33 : vector<4x16x16xf32>
    %cst_14 = arith.constant dense<0xFF800000> : vector<4x16xf32>
    %35 = vector.multi_reduction <maximumf>, %34, %cst_14 [2] : vector<4x16x16xf32> to vector<4x16xf32>
    %36 = vector.shape_cast %35 : vector<4x16xf32> to vector<4x16x1xf32>
    %37 = vector.broadcast %36 : vector<4x16x1xf32> to vector<4x16x16xf32>
    %38 = arith.subf %34, %37 : vector<4x16x16xf32>
    %39 = math.exp %38 : vector<4x16x16xf32>
    %cst_15 = arith.constant dense<0.000000e+00> : vector<4x16xf32>
    %40 = vector.multi_reduction <add>, %39, %cst_15 [2] : vector<4x16x16xf32> to vector<4x16xf32>
    %41 = vector.shape_cast %40 : vector<4x16xf32> to vector<4x16x1xf32>
    %42 = vector.broadcast %41 : vector<4x16x1xf32> to vector<4x16x16xf32>
    %43 = arith.divf %39, %42 : vector<4x16x16xf32>
    %44 = arith.truncf %43 : vector<4x16x16xf32> to vector<4x16x16xbf16>
    "tpu.trace_start"() <{level = 10 : i32, message = "hqk,khd->qhd"}> : () -> ()
    %cst_16 = arith.constant dense<0.000000e+00> : vector<4x8x16xf32>
    %45 = tpu.matmul %29, %44, %cst_16 {dimension_numbers = #tpu.dot_dimension_numbers<[0], [2], [2], [1], [0, 1, 0, 2, 1, 1], [1], [0]>} : vector<16x4x8xbf16>, vector<4x16x16xbf16>, vector<4x8x16xf32> -> vector<4x8x16xf32>
    %46 = tpu.transpose %45, [2, 0, 1] : vector<4x8x16xf32> -> vector<16x4x8xf32>
    "tpu.trace_stop"() : () -> ()
    %47 = vector.shape_cast %46 : vector<16x4x8xf32> to vector<16x32xf32>
    %48 = vector.shape_cast %47 : vector<16x32xf32> to vector<1x16x32xf32>
    %c0_17 = arith.constant 0 : index
    %c0_18 = arith.constant 0 : index
    %49 = vector.load %arg6[%c0_17, %c0_18] : memref<32x32xbf16, #tpu.memory_space<vmem>>, vector<32x32xbf16>
    %c0_19 = arith.constant 0 : index
    %c0_20 = arith.constant 0 : index
    %50 = vector.load %arg7[%c0_19, %c0_20] : memref<1x32xf32, #tpu.memory_space<vmem>>, vector<1x32xf32>
    %51 = vector.shape_cast %48 : vector<1x16x32xf32> to vector<16x32xf32>
    %52 = arith.truncf %51 : vector<16x32xf32> to vector<16x32xbf16>
    %cst_21 = arith.constant dense<0.000000e+00> : vector<16x32xf32>
    %53 = tpu.matmul %52, %49, %cst_21 {dimension_numbers = #tpu.dot_dimension_numbers<[1], [0], [0], [1], [0, 0, 1, 1], [], []>} : vector<16x32xbf16>, vector<32x32xbf16>, vector<16x32xf32> -> vector<16x32xf32>
    %54 = vector.broadcast %50 : vector<1x32xf32> to vector<16x32xf32>
    %55 = arith.addf %53, %54 : vector<16x32xf32>
    %56 = vector.shape_cast %55 : vector<16x32xf32> to vector<1x16x32xf32>
    %57 = arith.addf %3, %56 : vector<1x16x32xf32>
    %c0_22 = arith.constant 0 : index
    %c0_23 = arith.constant 0 : index
    %58 = vector.load %arg8[%c0_22, %c0_23] : memref<1x32xf32, #tpu.memory_space<vmem>>, vector<1x32xf32>
    %c0_24 = arith.constant 0 : index
    %c0_25 = arith.constant 0 : index
    %59 = vector.load %arg9[%c0_24, %c0_25] : memref<1x32xf32, #tpu.memory_space<vmem>>, vector<1x32xf32>
    %cst_26 = arith.constant dense<0.000000e+00> : vector<1x16xf32>
    %60 = vector.multi_reduction <add>, %57, %cst_26 [2] : vector<1x16x32xf32> to vector<1x16xf32>
    %61 = vector.shape_cast %60 : vector<1x16xf32> to vector<1x16x1xf32>
    %cst_27 = arith.constant 3.200000e+01 : f32
    %62 = vector.broadcast %cst_27 : f32 to vector<1x16x1xf32>
    %63 = arith.divf %61, %62 : vector<1x16x1xf32>
    %64 = vector.broadcast %63 : vector<1x16x1xf32> to vector<1x16x32xf32>
    %65 = arith.subf %57, %64 : vector<1x16x32xf32>
    %66 = arith.mulf %65, %65 : vector<1x16x32xf32>
    %cst_28 = arith.constant dense<0.000000e+00> : vector<1x16xf32>
    %67 = vector.multi_reduction <add>, %66, %cst_28 [2] : vector<1x16x32xf32> to vector<1x16xf32>
    %68 = vector.shape_cast %67 : vector<1x16xf32> to vector<1x16x1xf32>
    %cst_29 = arith.constant 3.200000e+01 : f32
    %69 = vector.broadcast %cst_29 : f32 to vector<1x16x1xf32>
    %70 = arith.divf %68, %69 : vector<1x16x1xf32>
    %71 = vector.broadcast %63 : vector<1x16x1xf32> to vector<1x16x32xf32>
    %72 = arith.subf %57, %71 : vector<1x16x32xf32>
    %cst_30 = arith.constant 9.99999974E-6 : f32
    %73 = vector.broadcast %cst_30 : f32 to vector<1x16x1xf32>
    %74 = arith.addf %70, %73 : vector<1x16x1xf32>
    %75 = math.rsqrt %74 : vector<1x16x1xf32>
    %76 = vector.broadcast %75 : vector<1x16x1xf32> to vector<1x16x32xf32>
    %77 = arith.mulf %72, %76 : vector<1x16x32xf32>
    %78 = vector.shape_cast %58 : vector<1x32xf32> to vector<1x1x32xf32>
    %79 = vector.broadcast %78 : vector<1x1x32xf32> to vector<1x16x32xf32>
    %80 = arith.mulf %77, %79 : vector<1x16x32xf32>
    %81 = vector.shape_cast %59 : vector<1x32xf32> to vector<1x1x32xf32>
    %82 = vector.broadcast %81 : vector<1x1x32xf32> to vector<1x16x32xf32>
    %83 = arith.addf %80, %82 : vector<1x16x32xf32>
    %c0_31 = arith.constant 0 : index
    %c0_32 = arith.constant 0 : index
    %84 = vector.load %arg10[%c0_31, %c0_32] : memref<32x64xbf16, #tpu.memory_space<vmem>>, vector<32x64xbf16>
    %c0_33 = arith.constant 0 : index
    %c0_34 = arith.constant 0 : index
    %85 = vector.load %arg11[%c0_33, %c0_34] : memref<1x64xf32, #tpu.memory_space<vmem>>, vector<1x64xf32>
    %86 = vector.shape_cast %83 : vector<1x16x32xf32> to vector<16x32xf32>
    %87 = arith.truncf %86 : vector<16x32xf32> to vector<16x32xbf16>
    %cst_35 = arith.constant dense<0.000000e+00> : vector<16x64xf32>
    %88 = tpu.matmul %87, %84, %cst_35 {dimension_numbers = #tpu.dot_dimension_numbers<[1], [0], [0], [1], [0, 0, 1, 1], [], []>} : vector<16x32xbf16>, vector<32x64xbf16>, vector<16x64xf32> -> vector<16x64xf32>
    %89 = vector.broadcast %85 : vector<1x64xf32> to vector<16x64xf32>
    %90 = arith.addf %88, %89 : vector<16x64xf32>
    %91 = vector.shape_cast %90 : vector<16x64xf32> to vector<1x16x64xf32>
    %cst_36 = arith.constant 0.000000e+00 : f32
    %92 = vector.broadcast %cst_36 : f32 to vector<1x16x64xf32>
    %93 = arith.maximumf %91, %92 : vector<1x16x64xf32>
    %c0_37 = arith.constant 0 : index
    %c0_38 = arith.constant 0 : index
    %94 = vector.load %arg12[%c0_37, %c0_38] : memref<64x32xbf16, #tpu.memory_space<vmem>>, vector<64x32xbf16>
    %c0_39 = arith.constant 0 : index
    %c0_40 = arith.constant 0 : index
    %95 = vector.load %arg13[%c0_39, %c0_40] : memref<1x32xf32, #tpu.memory_space<vmem>>, vector<1x32xf32>
    %96 = vector.shape_cast %93 : vector<1x16x64xf32> to vector<16x64xf32>
    %97 = arith.truncf %96 : vector<16x64xf32> to vector<16x64xbf16>
    %cst_41 = arith.constant dense<0.000000e+00> : vector<16x32xf32>
    %98 = tpu.matmul %97, %94, %cst_41 {dimension_numbers = #tpu.dot_dimension_numbers<[1], [0], [0], [1], [0, 0, 1, 1], [], []>} : vector<16x64xbf16>, vector<64x32xbf16>, vector<16x32xf32> -> vector<16x32xf32>
    %99 = vector.broadcast %95 : vector<1x32xf32> to vector<16x32xf32>
    %100 = arith.addf %98, %99 : vector<16x32xf32>
    %101 = vector.shape_cast %100 : vector<16x32xf32> to vector<1x16x32xf32>
    %102 = arith.addf %83, %101 : vector<1x16x32xf32>
    %c0_42 = arith.constant 0 : index
    %c0_43 = arith.constant 0 : index
    %103 = vector.load %arg14[%c0_42, %c0_43] : memref<1x32xf32, #tpu.memory_space<vmem>>, vector<1x32xf32>
    %c0_44 = arith.constant 0 : index
    %c0_45 = arith.constant 0 : index
    %104 = vector.load %arg15[%c0_44, %c0_45] : memref<1x32xf32, #tpu.memory_space<vmem>>, vector<1x32xf32>
    %cst_46 = arith.constant dense<0.000000e+00> : vector<1x16xf32>
    %105 = vector.multi_reduction <add>, %102, %cst_46 [2] : vector<1x16x32xf32> to vector<1x16xf32>
    %106 = vector.shape_cast %105 : vector<1x16xf32> to vector<1x16x1xf32>
    %cst_47 = arith.constant 3.200000e+01 : f32
    %107 = vector.broadcast %cst_47 : f32 to vector<1x16x1xf32>
    %108 = arith.divf %106, %107 : vector<1x16x1xf32>
    %109 = vector.broadcast %108 : vector<1x16x1xf32> to vector<1x16x32xf32>
    %110 = arith.subf %102, %109 : vector<1x16x32xf32>
    %111 = arith.mulf %110, %110 : vector<1x16x32xf32>
    %cst_48 = arith.constant dense<0.000000e+00> : vector<1x16xf32>
    %112 = vector.multi_reduction <add>, %111, %cst_48 [2] : vector<1x16x32xf32> to vector<1x16xf32>
    %113 = vector.shape_cast %112 : vector<1x16xf32> to vector<1x16x1xf32>
    %cst_49 = arith.constant 3.200000e+01 : f32
    %114 = vector.broadcast %cst_49 : f32 to vector<1x16x1xf32>
    %115 = arith.divf %113, %114 : vector<1x16x1xf32>
    %116 = vector.broadcast %108 : vector<1x16x1xf32> to vector<1x16x32xf32>
    %117 = arith.subf %102, %116 : vector<1x16x32xf32>
    %cst_50 = arith.constant 9.99999974E-6 : f32
    %118 = vector.broadcast %cst_50 : f32 to vector<1x16x1xf32>
    %119 = arith.addf %115, %118 : vector<1x16x1xf32>
    %120 = math.rsqrt %119 : vector<1x16x1xf32>
    %121 = vector.broadcast %120 : vector<1x16x1xf32> to vector<1x16x32xf32>
    %122 = arith.mulf %117, %121 : vector<1x16x32xf32>
    %123 = vector.shape_cast %103 : vector<1x32xf32> to vector<1x1x32xf32>
    %124 = vector.broadcast %123 : vector<1x1x32xf32> to vector<1x16x32xf32>
    %125 = arith.mulf %122, %124 : vector<1x16x32xf32>
    %126 = vector.shape_cast %104 : vector<1x32xf32> to vector<1x1x32xf32>
    %127 = vector.broadcast %126 : vector<1x1x32xf32> to vector<1x16x32xf32>
    %128 = arith.addf %125, %127 : vector<1x16x32xf32>
    %c0_51 = arith.constant 0 : index
    %c0_52 = arith.constant 0 : index
    %129 = vector.load %arg3[%c0_51, %c0_52] : memref<8x32xf32, #tpu.memory_space<vmem>>, vector<8x32xf32>
    %130 = vector.shape_cast %129 : vector<8x32xf32> to vector<1x8x32xf32>
    %c0_53 = arith.constant 0 : index
    %c0_54 = arith.constant 0 : index
    %131 = vector.load %arg16[%c0_53, %c0_54] : memref<32x96xbf16, #tpu.memory_space<vmem>>, vector<32x96xbf16>
    %c0_55 = arith.constant 0 : index
    %c0_56 = arith.constant 0 : index
    %132 = vector.load %arg17[%c0_55, %c0_56] : memref<1x96xf32, #tpu.memory_space<vmem>>, vector<1x96xf32>
    %133 = vector.shape_cast %130 : vector<1x8x32xf32> to vector<8x32xf32>
    %134 = arith.truncf %133 : vector<8x32xf32> to vector<8x32xbf16>
    %cst_57 = arith.constant dense<0.000000e+00> : vector<8x96xf32>
    %135 = tpu.matmul %134, %131, %cst_57 {dimension_numbers = #tpu.dot_dimension_numbers<[1], [0], [0], [1], [0, 0, 1, 1], [], []>} : vector<8x32xbf16>, vector<32x96xbf16>, vector<8x96xf32> -> vector<8x96xf32>
    %136 = vector.broadcast %132 : vector<1x96xf32> to vector<8x96xf32>
    %137 = arith.addf %135, %136 : vector<8x96xf32>
    %138 = vector.shape_cast %137 : vector<8x96xf32> to vector<1x8x96xf32>
    %139 = vector.extract_strided_slice %138 {offsets = [0, 0, 0], sizes = [1, 8, 32], strides = [1, 1, 1]} : vector<1x8x96xf32> to vector<1x8x32xf32>
    %140 = vector.extract_strided_slice %138 {offsets = [0, 0, 32], sizes = [1, 8, 32], strides = [1, 1, 1]} : vector<1x8x96xf32> to vector<1x8x32xf32>
    %141 = vector.extract_strided_slice %138 {offsets = [0, 0, 64], sizes = [1, 8, 32], strides = [1, 1, 1]} : vector<1x8x96xf32> to vector<1x8x32xf32>
    %142 = vector.shape_cast %139 : vector<1x8x32xf32> to vector<8x32xf32>
    %143 = vector.shape_cast %140 : vector<1x8x32xf32> to vector<8x32xf32>
    %144 = vector.shape_cast %141 : vector<1x8x32xf32> to vector<8x32xf32>
    %145 = vector.shape_cast %142 : vector<8x32xf32> to vector<8x4x8xf32>
    %146 = arith.truncf %145 : vector<8x4x8xf32> to vector<8x4x8xbf16>
    %147 = vector.shape_cast %143 : vector<8x32xf32> to vector<8x4x8xf32>
    %148 = arith.truncf %147 : vector<8x4x8xf32> to vector<8x4x8xbf16>
    %149 = vector.shape_cast %144 : vector<8x32xf32> to vector<8x4x8xf32>
    %150 = arith.truncf %149 : vector<8x4x8xf32> to vector<8x4x8xbf16>
    "tpu.trace_start"() <{level = 10 : i32, message = "qhd,khd->hqk"}> : () -> ()
    %cst_58 = arith.constant dense<0.000000e+00> : vector<4x8x8xf32>
    %151 = tpu.matmul %146, %148, %cst_58 {dimension_numbers = #tpu.dot_dimension_numbers<[2], [2], [0], [0], [0, 1, 0, 0, 1, 0], [1], [1]>} : vector<8x4x8xbf16>, vector<8x4x8xbf16>, vector<4x8x8xf32> -> vector<4x8x8xf32>
    "tpu.trace_stop"() : () -> ()
    %cst_59 = arith.constant 0.353553385 : f32
    %152 = vector.broadcast %cst_59 : f32 to vector<4x8x8xf32>
    %153 = arith.mulf %151, %152 : vector<4x8x8xf32>
    %cst_60 = arith.constant dense<0xFF800000> : vector<4x8xf32>
    %154 = vector.multi_reduction <maximumf>, %153, %cst_60 [2] : vector<4x8x8xf32> to vector<4x8xf32>
    %155 = vector.shape_cast %154 : vector<4x8xf32> to vector<4x8x1xf32>
    %156 = vector.broadcast %155 : vector<4x8x1xf32> to vector<4x8x8xf32>
    %157 = arith.subf %153, %156 : vector<4x8x8xf32>
    %158 = math.exp %157 : vector<4x8x8xf32>
    %cst_61 = arith.constant dense<0.000000e+00> : vector<4x8xf32>
    %159 = vector.multi_reduction <add>, %158, %cst_61 [2] : vector<4x8x8xf32> to vector<4x8xf32>
    %160 = vector.shape_cast %159 : vector<4x8xf32> to vector<4x8x1xf32>
    %161 = vector.broadcast %160 : vector<4x8x1xf32> to vector<4x8x8xf32>
    %162 = arith.divf %158, %161 : vector<4x8x8xf32>
    %163 = arith.truncf %162 : vector<4x8x8xf32> to vector<4x8x8xbf16>
    "tpu.trace_start"() <{level = 10 : i32, message = "hqk,khd->qhd"}> : () -> ()
    %cst_62 = arith.constant dense<0.000000e+00> : vector<4x8x8xf32>
    %164 = tpu.matmul %150, %163, %cst_62 {dimension_numbers = #tpu.dot_dimension_numbers<[0], [2], [2], [1], [0, 1, 0, 2, 1, 1], [1], [0]>} : vector<8x4x8xbf16>, vector<4x8x8xbf16>, vector<4x8x8xf32> -> vector<4x8x8xf32>
    %165 = tpu.transpose %164, [2, 0, 1] : vector<4x8x8xf32> -> vector<8x4x8xf32>
    "tpu.trace_stop"() : () -> ()
    %166 = vector.shape_cast %165 : vector<8x4x8xf32> to vector<8x32xf32>
    %167 = vector.shape_cast %166 : vector<8x32xf32> to vector<1x8x32xf32>
    %c0_63 = arith.constant 0 : index
    %c0_64 = arith.constant 0 : index
    %168 = vector.load %arg18[%c0_63, %c0_64] : memref<32x32xbf16, #tpu.memory_space<vmem>>, vector<32x32xbf16>
    %c0_65 = arith.constant 0 : index
    %c0_66 = arith.constant 0 : index
    %169 = vector.load %arg19[%c0_65, %c0_66] : memref<1x32xf32, #tpu.memory_space<vmem>>, vector<1x32xf32>
    %170 = vector.shape_cast %167 : vector<1x8x32xf32> to vector<8x32xf32>
    %171 = arith.truncf %170 : vector<8x32xf32> to vector<8x32xbf16>
    %cst_67 = arith.constant dense<0.000000e+00> : vector<8x32xf32>
    %172 = tpu.matmul %171, %168, %cst_67 {dimension_numbers = #tpu.dot_dimension_numbers<[1], [0], [0], [1], [0, 0, 1, 1], [], []>} : vector<8x32xbf16>, vector<32x32xbf16>, vector<8x32xf32> -> vector<8x32xf32>
    %173 = vector.broadcast %169 : vector<1x32xf32> to vector<8x32xf32>
    %174 = arith.addf %172, %173 : vector<8x32xf32>
    %175 = vector.shape_cast %174 : vector<8x32xf32> to vector<1x8x32xf32>
    %176 = arith.addf %130, %175 : vector<1x8x32xf32>
    %c0_68 = arith.constant 0 : index
    %c0_69 = arith.constant 0 : index
    %177 = vector.load %arg20[%c0_68, %c0_69] : memref<1x32xf32, #tpu.memory_space<vmem>>, vector<1x32xf32>
    %c0_70 = arith.constant 0 : index
    %c0_71 = arith.constant 0 : index
    %178 = vector.load %arg21[%c0_70, %c0_71] : memref<1x32xf32, #tpu.memory_space<vmem>>, vector<1x32xf32>
    %cst_72 = arith.constant dense<0.000000e+00> : vector<1x8xf32>
    %179 = vector.multi_reduction <add>, %176, %cst_72 [2] : vector<1x8x32xf32> to vector<1x8xf32>
    %180 = vector.shape_cast %179 : vector<1x8xf32> to vector<1x8x1xf32>
    %cst_73 = arith.constant 3.200000e+01 : f32
    %181 = vector.broadcast %cst_73 : f32 to vector<1x8x1xf32>
    %182 = arith.divf %180, %181 : vector<1x8x1xf32>
    %183 = vector.broadcast %182 : vector<1x8x1xf32> to vector<1x8x32xf32>
    %184 = arith.subf %176, %183 : vector<1x8x32xf32>
    %185 = arith.mulf %184, %184 : vector<1x8x32xf32>
    %cst_74 = arith.constant dense<0.000000e+00> : vector<1x8xf32>
    %186 = vector.multi_reduction <add>, %185, %cst_74 [2] : vector<1x8x32xf32> to vector<1x8xf32>
    %187 = vector.shape_cast %186 : vector<1x8xf32> to vector<1x8x1xf32>
    %cst_75 = arith.constant 3.200000e+01 : f32
    %188 = vector.broadcast %cst_75 : f32 to vector<1x8x1xf32>
    %189 = arith.divf %187, %188 : vector<1x8x1xf32>
    %190 = vector.broadcast %182 : vector<1x8x1xf32> to vector<1x8x32xf32>
    %191 = arith.subf %176, %190 : vector<1x8x32xf32>
    %cst_76 = arith.constant 9.99999974E-6 : f32
    %192 = vector.broadcast %cst_76 : f32 to vector<1x8x1xf32>
    %193 = arith.addf %189, %192 : vector<1x8x1xf32>
    %194 = math.rsqrt %193 : vector<1x8x1xf32>
    %195 = vector.broadcast %194 : vector<1x8x1xf32> to vector<1x8x32xf32>
    %196 = arith.mulf %191, %195 : vector<1x8x32xf32>
    %197 = vector.shape_cast %177 : vector<1x32xf32> to vector<1x1x32xf32>
    %198 = vector.broadcast %197 : vector<1x1x32xf32> to vector<1x8x32xf32>
    %199 = arith.mulf %196, %198 : vector<1x8x32xf32>
    %200 = vector.shape_cast %178 : vector<1x32xf32> to vector<1x1x32xf32>
    %201 = vector.broadcast %200 : vector<1x1x32xf32> to vector<1x8x32xf32>
    %202 = arith.addf %199, %201 : vector<1x8x32xf32>
    %c0_77 = arith.constant 0 : index
    %c0_78 = arith.constant 0 : index
    %203 = vector.load %arg22[%c0_77, %c0_78] : memref<32x32xbf16, #tpu.memory_space<vmem>>, vector<32x32xbf16>
    %c0_79 = arith.constant 0 : index
    %c0_80 = arith.constant 0 : index
    %204 = vector.load %arg23[%c0_79, %c0_80] : memref<1x32xf32, #tpu.memory_space<vmem>>, vector<1x32xf32>
    %205 = vector.shape_cast %202 : vector<1x8x32xf32> to vector<8x32xf32>
    %206 = arith.truncf %205 : vector<8x32xf32> to vector<8x32xbf16>
    %cst_81 = arith.constant dense<0.000000e+00> : vector<8x32xf32>
    %207 = tpu.matmul %206, %203, %cst_81 {dimension_numbers = #tpu.dot_dimension_numbers<[1], [0], [0], [1], [0, 0, 1, 1], [], []>} : vector<8x32xbf16>, vector<32x32xbf16>, vector<8x32xf32> -> vector<8x32xf32>
    %208 = vector.broadcast %204 : vector<1x32xf32> to vector<8x32xf32>
    %209 = arith.addf %207, %208 : vector<8x32xf32>
    %210 = vector.shape_cast %209 : vector<8x32xf32> to vector<1x8x32xf32>
    %c0_82 = arith.constant 0 : index
    %c0_83 = arith.constant 0 : index
    %211 = vector.load %arg24[%c0_82, %c0_83] : memref<32x64xbf16, #tpu.memory_space<vmem>>, vector<32x64xbf16>
    %c0_84 = arith.constant 0 : index
    %c0_85 = arith.constant 0 : index
    %212 = vector.load %arg25[%c0_84, %c0_85] : memref<1x64xf32, #tpu.memory_space<vmem>>, vector<1x64xf32>
    %213 = vector.shape_cast %128 : vector<1x16x32xf32> to vector<16x32xf32>
    %214 = arith.truncf %213 : vector<16x32xf32> to vector<16x32xbf16>
    %cst_86 = arith.constant dense<0.000000e+00> : vector<16x64xf32>
    %215 = tpu.matmul %214, %211, %cst_86 {dimension_numbers = #tpu.dot_dimension_numbers<[1], [0], [0], [1], [0, 0, 1, 1], [], []>} : vector<16x32xbf16>, vector<32x64xbf16>, vector<16x64xf32> -> vector<16x64xf32>
    %216 = vector.broadcast %212 : vector<1x64xf32> to vector<16x64xf32>
    %217 = arith.addf %215, %216 : vector<16x64xf32>
    %218 = vector.shape_cast %217 : vector<16x64xf32> to vector<1x16x64xf32>
    %219 = vector.extract_strided_slice %218 {offsets = [0, 0, 0], sizes = [1, 16, 32], strides = [1, 1, 1]} : vector<1x16x64xf32> to vector<1x16x32xf32>
    %220 = vector.extract_strided_slice %218 {offsets = [0, 0, 32], sizes = [1, 16, 32], strides = [1, 1, 1]} : vector<1x16x64xf32> to vector<1x16x32xf32>
    %221 = vector.shape_cast %210 : vector<1x8x32xf32> to vector<8x32xf32>
    %222 = vector.shape_cast %219 : vector<1x16x32xf32> to vector<16x32xf32>
    %223 = vector.shape_cast %220 : vector<1x16x32xf32> to vector<16x32xf32>
    %224 = vector.shape_cast %221 : vector<8x32xf32> to vector<8x4x8xf32>
    %225 = arith.truncf %224 : vector<8x4x8xf32> to vector<8x4x8xbf16>
    %226 = vector.shape_cast %222 : vector<16x32xf32> to vector<16x4x8xf32>
    %227 = arith.truncf %226 : vector<16x4x8xf32> to vector<16x4x8xbf16>
    %228 = vector.shape_cast %223 : vector<16x32xf32> to vector<16x4x8xf32>
    %229 = arith.truncf %228 : vector<16x4x8xf32> to vector<16x4x8xbf16>
    "tpu.trace_start"() <{level = 10 : i32, message = "qhd,khd->hqk"}> : () -> ()
    %cst_87 = arith.constant dense<0.000000e+00> : vector<4x8x16xf32>
    %230 = tpu.matmul %225, %227, %cst_87 {dimension_numbers = #tpu.dot_dimension_numbers<[2], [2], [0], [0], [0, 1, 0, 0, 1, 0], [1], [1]>} : vector<8x4x8xbf16>, vector<16x4x8xbf16>, vector<4x8x16xf32> -> vector<4x8x16xf32>
    "tpu.trace_stop"() : () -> ()
    %cst_88 = arith.constant 0.353553385 : f32
    %231 = vector.broadcast %cst_88 : f32 to vector<4x8x16xf32>
    %232 = arith.mulf %230, %231 : vector<4x8x16xf32>
    %233 = vector.broadcast %9 : vector<1x1x16xf32> to vector<4x8x16xf32>
    %234 = arith.addf %232, %233 : vector<4x8x16xf32>
    %cst_89 = arith.constant dense<0xFF800000> : vector<4x8xf32>
    %235 = vector.multi_reduction <maximumf>, %234, %cst_89 [2] : vector<4x8x16xf32> to vector<4x8xf32>
    %236 = vector.shape_cast %235 : vector<4x8xf32> to vector<4x8x1xf32>
    %237 = vector.broadcast %236 : vector<4x8x1xf32> to vector<4x8x16xf32>
    %238 = arith.subf %234, %237 : vector<4x8x16xf32>
    %239 = math.exp %238 : vector<4x8x16xf32>
    %cst_90 = arith.constant dense<0.000000e+00> : vector<4x8xf32>
    %240 = vector.multi_reduction <add>, %239, %cst_90 [2] : vector<4x8x16xf32> to vector<4x8xf32>
    %241 = vector.shape_cast %240 : vector<4x8xf32> to vector<4x8x1xf32>
    %242 = vector.broadcast %241 : vector<4x8x1xf32> to vector<4x8x16xf32>
    %243 = arith.divf %239, %242 : vector<4x8x16xf32>
    %244 = arith.truncf %243 : vector<4x8x16xf32> to vector<4x8x16xbf16>
    "tpu.trace_start"() <{level = 10 : i32, message = "hqk,khd->qhd"}> : () -> ()
    %cst_91 = arith.constant dense<0.000000e+00> : vector<4x8x8xf32>
    %245 = tpu.matmul %229, %244, %cst_91 {dimension_numbers = #tpu.dot_dimension_numbers<[0], [2], [2], [1], [0, 1, 0, 2, 1, 1], [1], [0]>} : vector<16x4x8xbf16>, vector<4x8x16xbf16>, vector<4x8x8xf32> -> vector<4x8x8xf32>
    %246 = tpu.transpose %245, [2, 0, 1] : vector<4x8x8xf32> -> vector<8x4x8xf32>
    "tpu.trace_stop"() : () -> ()
    %247 = vector.shape_cast %246 : vector<8x4x8xf32> to vector<8x32xf32>
    %248 = vector.shape_cast %247 : vector<8x32xf32> to vector<1x8x32xf32>
    %c0_92 = arith.constant 0 : index
    %c0_93 = arith.constant 0 : index
    %249 = vector.load %arg26[%c0_92, %c0_93] : memref<32x32xbf16, #tpu.memory_space<vmem>>, vector<32x32xbf16>
    %c0_94 = arith.constant 0 : index
    %c0_95 = arith.constant 0 : index
    %250 = vector.load %arg27[%c0_94, %c0_95] : memref<1x32xf32, #tpu.memory_space<vmem>>, vector<1x32xf32>
    %251 = vector.shape_cast %248 : vector<1x8x32xf32> to vector<8x32xf32>
    %252 = arith.truncf %251 : vector<8x32xf32> to vector<8x32xbf16>
    %cst_96 = arith.constant dense<0.000000e+00> : vector<8x32xf32>
    %253 = tpu.matmul %252, %249, %cst_96 {dimension_numbers = #tpu.dot_dimension_numbers<[1], [0], [0], [1], [0, 0, 1, 1], [], []>} : vector<8x32xbf16>, vector<32x32xbf16>, vector<8x32xf32> -> vector<8x32xf32>
    %254 = vector.broadcast %250 : vector<1x32xf32> to vector<8x32xf32>
    %255 = arith.addf %253, %254 : vector<8x32xf32>
    %256 = vector.shape_cast %255 : vector<8x32xf32> to vector<1x8x32xf32>
    %257 = arith.addf %202, %256 : vector<1x8x32xf32>
    %c0_97 = arith.constant 0 : index
    %c0_98 = arith.constant 0 : index
    %258 = vector.load %arg28[%c0_97, %c0_98] : memref<1x32xf32, #tpu.memory_space<vmem>>, vector<1x32xf32>
    %c0_99 = arith.constant 0 : index
    %c0_100 = arith.constant 0 : index
    %259 = vector.load %arg29[%c0_99, %c0_100] : memref<1x32xf32, #tpu.memory_space<vmem>>, vector<1x32xf32>
    %cst_101 = arith.constant dense<0.000000e+00> : vector<1x8xf32>
    %260 = vector.multi_reduction <add>, %257, %cst_101 [2] : vector<1x8x32xf32> to vector<1x8xf32>
    %261 = vector.shape_cast %260 : vector<1x8xf32> to vector<1x8x1xf32>
    %cst_102 = arith.constant 3.200000e+01 : f32
    %262 = vector.broadcast %cst_102 : f32 to vector<1x8x1xf32>
    %263 = arith.divf %261, %262 : vector<1x8x1xf32>
    %264 = vector.broadcast %263 : vector<1x8x1xf32> to vector<1x8x32xf32>
    %265 = arith.subf %257, %264 : vector<1x8x32xf32>
    %266 = arith.mulf %265, %265 : vector<1x8x32xf32>
    %cst_103 = arith.constant dense<0.000000e+00> : vector<1x8xf32>
    %267 = vector.multi_reduction <add>, %266, %cst_103 [2] : vector<1x8x32xf32> to vector<1x8xf32>
    %268 = vector.shape_cast %267 : vector<1x8xf32> to vector<1x8x1xf32>
    %cst_104 = arith.constant 3.200000e+01 : f32
    %269 = vector.broadcast %cst_104 : f32 to vector<1x8x1xf32>
    %270 = arith.divf %268, %269 : vector<1x8x1xf32>
    %271 = vector.broadcast %263 : vector<1x8x1xf32> to vector<1x8x32xf32>
    %272 = arith.subf %257, %271 : vector<1x8x32xf32>
    %cst_105 = arith.constant 9.99999974E-6 : f32
    %273 = vector.broadcast %cst_105 : f32 to vector<1x8x1xf32>
    %274 = arith.addf %270, %273 : vector<1x8x1xf32>
    %275 = math.rsqrt %274 : vector<1x8x1xf32>
    %276 = vector.broadcast %275 : vector<1x8x1xf32> to vector<1x8x32xf32>
    %277 = arith.mulf %272, %276 : vector<1x8x32xf32>
    %278 = vector.shape_cast %258 : vector<1x32xf32> to vector<1x1x32xf32>
    %279 = vector.broadcast %278 : vector<1x1x32xf32> to vector<1x8x32xf32>
    %280 = arith.mulf %277, %279 : vector<1x8x32xf32>
    %281 = vector.shape_cast %259 : vector<1x32xf32> to vector<1x1x32xf32>
    %282 = vector.broadcast %281 : vector<1x1x32xf32> to vector<1x8x32xf32>
    %283 = arith.addf %280, %282 : vector<1x8x32xf32>
    %c0_106 = arith.constant 0 : index
    %c0_107 = arith.constant 0 : index
    %284 = vector.load %arg30[%c0_106, %c0_107] : memref<32x64xbf16, #tpu.memory_space<vmem>>, vector<32x64xbf16>
    %c0_108 = arith.constant 0 : index
    %c0_109 = arith.constant 0 : index
    %285 = vector.load %arg31[%c0_108, %c0_109] : memref<1x64xf32, #tpu.memory_space<vmem>>, vector<1x64xf32>
    %286 = vector.shape_cast %283 : vector<1x8x32xf32> to vector<8x32xf32>
    %287 = arith.truncf %286 : vector<8x32xf32> to vector<8x32xbf16>
    %cst_110 = arith.constant dense<0.000000e+00> : vector<8x64xf32>
    %288 = tpu.matmul %287, %284, %cst_110 {dimension_numbers = #tpu.dot_dimension_numbers<[1], [0], [0], [1], [0, 0, 1, 1], [], []>} : vector<8x32xbf16>, vector<32x64xbf16>, vector<8x64xf32> -> vector<8x64xf32>
    %289 = vector.broadcast %285 : vector<1x64xf32> to vector<8x64xf32>
    %290 = arith.addf %288, %289 : vector<8x64xf32>
    %291 = vector.shape_cast %290 : vector<8x64xf32> to vector<1x8x64xf32>
    %cst_111 = arith.constant 0.000000e+00 : f32
    %292 = vector.broadcast %cst_111 : f32 to vector<1x8x64xf32>
    %293 = arith.maximumf %291, %292 : vector<1x8x64xf32>
    %c0_112 = arith.constant 0 : index
    %c0_113 = arith.constant 0 : index
    %294 = vector.load %arg32[%c0_112, %c0_113] : memref<64x32xbf16, #tpu.memory_space<vmem>>, vector<64x32xbf16>
    %c0_114 = arith.constant 0 : index
    %c0_115 = arith.constant 0 : index
    %295 = vector.load %arg33[%c0_114, %c0_115] : memref<1x32xf32, #tpu.memory_space<vmem>>, vector<1x32xf32>
    %296 = vector.shape_cast %293 : vector<1x8x64xf32> to vector<8x64xf32>
    %297 = arith.truncf %296 : vector<8x64xf32> to vector<8x64xbf16>
    %cst_116 = arith.constant dense<0.000000e+00> : vector<8x32xf32>
    %298 = tpu.matmul %297, %294, %cst_116 {dimension_numbers = #tpu.dot_dimension_numbers<[1], [0], [0], [1], [0, 0, 1, 1], [], []>} : vector<8x64xbf16>, vector<64x32xbf16>, vector<8x32xf32> -> vector<8x32xf32>
    %299 = vector.broadcast %295 : vector<1x32xf32> to vector<8x32xf32>
    %300 = arith.addf %298, %299 : vector<8x32xf32>
    %301 = vector.shape_cast %300 : vector<8x32xf32> to vector<1x8x32xf32>
    %302 = arith.addf %283, %301 : vector<1x8x32xf32>
    %c0_117 = arith.constant 0 : index
    %c0_118 = arith.constant 0 : index
    %303 = vector.load %arg34[%c0_117, %c0_118] : memref<1x32xf32, #tpu.memory_space<vmem>>, vector<1x32xf32>
    %c0_119 = arith.constant 0 : index
    %c0_120 = arith.constant 0 : index
    %304 = vector.load %arg35[%c0_119, %c0_120] : memref<1x32xf32, #tpu.memory_space<vmem>>, vector<1x32xf32>
    %cst_121 = arith.constant dense<0.000000e+00> : vector<1x8xf32>
    %305 = vector.multi_reduction <add>, %302, %cst_121 [2] : vector<1x8x32xf32> to vector<1x8xf32>
    %306 = vector.shape_cast %305 : vector<1x8xf32> to vector<1x8x1xf32>
    %cst_122 = arith.constant 3.200000e+01 : f32
    %307 = vector.broadcast %cst_122 : f32 to vector<1x8x1xf32>
    %308 = arith.divf %306, %307 : vector<1x8x1xf32>
    %309 = vector.broadcast %308 : vector<1x8x1xf32> to vector<1x8x32xf32>
    %310 = arith.subf %302, %309 : vector<1x8x32xf32>
    %311 = arith.mulf %310, %310 : vector<1x8x32xf32>
    %cst_123 = arith.constant dense<0.000000e+00> : vector<1x8xf32>
    %312 = vector.multi_reduction <add>, %311, %cst_123 [2] : vector<1x8x32xf32> to vector<1x8xf32>
    %313 = vector.shape_cast %312 : vector<1x8xf32> to vector<1x8x1xf32>
    %cst_124 = arith.constant 3.200000e+01 : f32
    %314 = vector.broadcast %cst_124 : f32 to vector<1x8x1xf32>
    %315 = arith.divf %313, %314 : vector<1x8x1xf32>
    %316 = vector.broadcast %308 : vector<1x8x1xf32> to vector<1x8x32xf32>
    %317 = arith.subf %302, %316 : vector<1x8x32xf32>
    %cst_125 = arith.constant 9.99999974E-6 : f32
    %318 = vector.broadcast %cst_125 : f32 to vector<1x8x1xf32>
    %319 = arith.addf %315, %318 : vector<1x8x1xf32>
    %320 = math.rsqrt %319 : vector<1x8x1xf32>
    %321 = vector.broadcast %320 : vector<1x8x1xf32> to vector<1x8x32xf32>
    %322 = arith.mulf %317, %321 : vector<1x8x32xf32>
    %323 = vector.shape_cast %303 : vector<1x32xf32> to vector<1x1x32xf32>
    %324 = vector.broadcast %323 : vector<1x1x32xf32> to vector<1x8x32xf32>
    %325 = arith.mulf %322, %324 : vector<1x8x32xf32>
    %326 = vector.shape_cast %304 : vector<1x32xf32> to vector<1x1x32xf32>
    %327 = vector.broadcast %326 : vector<1x1x32xf32> to vector<1x8x32xf32>
    %328 = arith.addf %325, %327 : vector<1x8x32xf32>
    %329 = vector.shape_cast %328 : vector<1x8x32xf32> to vector<1x256xf32>
    %c0_126 = arith.constant 0 : index
    %c0_127 = arith.constant 0 : index
    %c0_128 = arith.constant 0 : index
    %330 = vector.load %arg36[%c0_126, %c0_127, %c0_128] : memref<1x1x256xf32, #tpu.memory_space<vmem>>, vector<1x1x256xf32>
    %331 = vector.shape_cast %330 : vector<1x1x256xf32> to vector<1x256xf32>
    %332 = vector.shape_cast %329 : vector<1x256xf32> to vector<1x1x256xf32>
    tpu.vector_store %arg36[%c0_126, %c0_127, %c0_128], %332 {strides = array<i32>} : memref<1x1x256xf32, #tpu.memory_space<vmem>>, vector<1x1x256xf32>,
    return
  }
  func.func @transform_0(%arg0: i32) -> (i32, i32, i32) {
    %c0_i32 = arith.constant 0 : i32
    %c0_i32_0 = arith.constant 0 : i32
    %c0_i32_1 = arith.constant 0 : i32
    return %arg0, %c0_i32, %c0_i32_0 : i32, i32, i32
  }
  func.func @transform_1(%arg0: i32) -> (i32, i32, i32) {
    %c0_i32 = arith.constant 0 : i32
    %c0_i32_0 = arith.constant 0 : i32
    %c0_i32_1 = arith.constant 0 : i32
    return %arg0, %c0_i32, %c0_i32_0 : i32, i32, i32
  }
  func.func @transform_2(%arg0: i32) -> (i32, i32) {
    %c0_i32 = arith.constant 0 : i32
    %c0_i32_0 = arith.constant 0 : i32
    %c0_i32_1 = arith.constant 0 : i32
    return %c0_i32, %c0_i32_0 : i32, i32
  }
  func.func @transform_3(%arg0: i32) -> (i32, i32) {
    %c0_i32 = arith.constant 0 : i32
    %c0_i32_0 = arith.constant 0 : i32
    %c0_i32_1 = arith.constant 0 : i32
    return %c0_i32, %c0_i32_0 : i32, i32
  }
  func.func @transform_4(%arg0: i32) -> (i32, i32) {
    %c0_i32 = arith.constant 0 : i32
    %c0_i32_0 = arith.constant 0 : i32
    %c0_i32_1 = arith.constant 0 : i32
    return %c0_i32, %c0_i32_0 : i32, i32
  }
  func.func @transform_5(%arg0: i32) -> (i32, i32) {
    %c0_i32 = arith.constant 0 : i32
    %c0_i32_0 = arith.constant 0 : i32
    %c0_i32_1 = arith.constant 0 : i32
    return %c0_i32, %c0_i32_0 : i32, i32
  }
  func.func @transform_6(%arg0: i32) -> (i32, i32) {
    %c0_i32 = arith.constant 0 : i32
    %c0_i32_0 = arith.constant 0 : i32
    %c0_i32_1 = arith.constant 0 : i32
    return %c0_i32, %c0_i32_0 : i32, i32
  }
  func.func @transform_7(%arg0: i32) -> (i32, i32) {
    %c0_i32 = arith.constant 0 : i32
    %c0_i32_0 = arith.constant 0 : i32
    %c0_i32_1 = arith.constant 0 : i32
    return %c0_i32, %c0_i32_0 : i32, i32
  }
  func.func @transform_8(%arg0: i32) -> (i32, i32) {
    %c0_i32 = arith.constant 0 : i32
    %c0_i32_0 = arith.constant 0 : i32
    %c0_i32_1 = arith.constant 0 : i32
    return %c0_i32, %c0_i32_0 : i32, i32
  }
  func.func @transform_9(%arg0: i32) -> (i32, i32) {
    %c0_i32 = arith.constant 0 : i32
    %c0_i32_0 = arith.constant 0 : i32
    %c0_i32_1 = arith.constant 0 : i32
    return %c0_i32, %c0_i32_0 : i32, i32
  }
  func.func @transform_10(%arg0: i32) -> (i32, i32) {
    %c0_i32 = arith.constant 0 : i32
    %c0_i32_0 = arith.constant 0 : i32
    %c0_i32_1 = arith.constant 0 : i32
    return %c0_i32, %c0_i32_0 : i32, i32
  }
  func.func @transform_11(%arg0: i32) -> (i32, i32) {
    %c0_i32 = arith.constant 0 : i32
    %c0_i32_0 = arith.constant 0 : i32
    %c0_i32_1 = arith.constant 0 : i32
    return %c0_i32, %c0_i32_0 : i32, i32
  }
  func.func @transform_12(%arg0: i32) -> (i32, i32) {
    %c0_i32 = arith.constant 0 : i32
    %c0_i32_0 = arith.constant 0 : i32
    %c0_i32_1 = arith.constant 0 : i32
    return %c0_i32, %c0_i32_0 : i32, i32
  }
  func.func @transform_13(%arg0: i32) -> (i32, i32) {
    %c0_i32 = arith.constant 0 : i32
    %c0_i32_0 = arith.constant 0 : i32
    %c0_i32_1 = arith.constant 0 : i32
    return %c0_i32, %c0_i32_0 : i32, i32
  }
  func.func @transform_14(%arg0: i32) -> (i32, i32) {
    %c0_i32 = arith.constant 0 : i32
    %c0_i32_0 = arith.constant 0 : i32
    %c0_i32_1 = arith.constant 0 : i32
    return %c0_i32, %c0_i32_0 : i32, i32
  }
  func.func @transform_15(%arg0: i32) -> (i32, i32) {
    %c0_i32 = arith.constant 0 : i32
    %c0_i32_0 = arith.constant 0 : i32
    %c0_i32_1 = arith.constant 0 : i32
    return %c0_i32, %c0_i32_0 : i32, i32
  }
  func.func @transform_16(%arg0: i32) -> (i32, i32) {
    %c0_i32 = arith.constant 0 : i32
    %c0_i32_0 = arith.constant 0 : i32
    %c0_i32_1 = arith.constant 0 : i32
    return %c0_i32, %c0_i32_0 : i32, i32
  }
  func.func @transform_17(%arg0: i32) -> (i32, i32) {
    %c0_i32 = arith.constant 0 : i32
    %c0_i32_0 = arith.constant 0 : i32
    %c0_i32_1 = arith.constant 0 : i32
    return %c0_i32, %c0_i32_0 : i32, i32
  }
  func.func @transform_18(%arg0: i32) -> (i32, i32) {
    %c0_i32 = arith.constant 0 : i32
    %c0_i32_0 = arith.constant 0 : i32
    %c0_i32_1 = arith.constant 0 : i32
    return %c0_i32, %c0_i32_0 : i32, i32
  }
  func.func @transform_19(%arg0: i32) -> (i32, i32) {
    %c0_i32 = arith.constant 0 : i32
    %c0_i32_0 = arith.constant 0 : i32
    %c0_i32_1 = arith.constant 0 : i32
    return %c0_i32, %c0_i32_0 : i32, i32
  }
  func.func @transform_20(%arg0: i32) -> (i32, i32) {
    %c0_i32 = arith.constant 0 : i32
    %c0_i32_0 = arith.constant 0 : i32
    %c0_i32_1 = arith.constant 0 : i32
    return %c0_i32, %c0_i32_0 : i32, i32
  }
  func.func @transform_21(%arg0: i32) -> (i32, i32) {
    %c0_i32 = arith.constant 0 : i32
    %c0_i32_0 = arith.constant 0 : i32
    %c0_i32_1 = arith.constant 0 : i32
    return %c0_i32, %c0_i32_0 : i32, i32
  }
  func.func @transform_22(%arg0: i32) -> (i32, i32) {
    %c0_i32 = arith.constant 0 : i32
    %c0_i32_0 = arith.constant 0 : i32
    %c0_i32_1 = arith.constant 0 : i32
    return %c0_i32, %c0_i32_0 : i32, i32
  }
  func.func @transform_23(%arg0: i32) -> (i32, i32) {
    %c0_i32 = arith.constant 0 : i32
    %c0_i32_0 = arith.constant 0 : i32
    %c0_i32_1 = arith.constant 0 : i32
    return %c0_i32, %c0_i32_0 : i32, i32
  }
  func.func @transform_24(%arg0: i32) -> (i32, i32) {
    %c0_i32 = arith.constant 0 : i32
    %c0_i32_0 = arith.constant 0 : i32
    %c0_i32_1 = arith.constant 0 : i32
    return %c0_i32, %c0_i32_0 : i32, i32
  }
  func.func @transform_25(%arg0: i32) -> (i32, i32) {
    %c0_i32 = arith.constant 0 : i32
    %c0_i32_0 = arith.constant 0 : i32
    %c0_i32_1 = arith.constant 0 : i32
    return %c0_i32, %c0_i32_0 : i32, i32
  }
  func.func @transform_26(%arg0: i32) -> (i32, i32) {
    %c0_i32 = arith.constant 0 : i32
    %c0_i32_0 = arith.constant 0 : i32
    %c0_i32_1 = arith.constant 0 : i32
    return %c0_i32, %c0_i32_0 : i32, i32
  }
  func.func @transform_27(%arg0: i32) -> (i32, i32) {
    %c0_i32 = arith.constant 0 : i32
    %c0_i32_0 = arith.constant 0 : i32
    %c0_i32_1 = arith.constant 0 : i32
    return %c0_i32, %c0_i32_0 : i32, i32
  }
  func.func @transform_28(%arg0: i32) -> (i32, i32) {
    %c0_i32 = arith.constant 0 : i32
    %c0_i32_0 = arith.constant 0 : i32
    %c0_i32_1 = arith.constant 0 : i32
    return %c0_i32, %c0_i32_0 : i32, i32
  }
  func.func @transform_29(%arg0: i32) -> (i32, i32) {
    %c0_i32 = arith.constant 0 : i32
    %c0_i32_0 = arith.constant 0 : i32
    %c0_i32_1 = arith.constant 0 : i32
    return %c0_i32, %c0_i32_0 : i32, i32
  }
  func.func @transform_30(%arg0: i32) -> (i32, i32) {
    %c0_i32 = arith.constant 0 : i32
    %c0_i32_0 = arith.constant 0 : i32
    %c0_i32_1 = arith.constant 0 : i32
    return %c0_i32, %c0_i32_0 : i32, i32
  }
  func.func @transform_31(%arg0: i32) -> (i32, i32) {
    %c0_i32 = arith.constant 0 : i32
    %c0_i32_0 = arith.constant 0 : i32
    %c0_i32_1 = arith.constant 0 : i32
    return %c0_i32, %c0_i32_0 : i32, i32
  }
  func.func @transform_32(%arg0: i32) -> (i32, i32) {
    %c0_i32 = arith.constant 0 : i32
    %c0_i32_0 = arith.constant 0 : i32
    %c0_i32_1 = arith.constant 0 : i32
    return %c0_i32, %c0_i32_0 : i32, i32
  }
  func.func @transform_33(%arg0: i32) -> (i32, i32) {
    %c0_i32 = arith.constant 0 : i32
    %c0_i32_0 = arith.constant 0 : i32
    %c0_i32_1 = arith.constant 0 : i32
    return %c0_i32, %c0_i32_0 : i32, i32
  }
  func.func @transform_34(%arg0: i32) -> (i32, i32) {
    %c0_i32 = arith.constant 0 : i32
    %c0_i32_0 = arith.constant 0 : i32
    %c0_i32_1 = arith.constant 0 : i32
    return %c0_i32, %c0_i32_0 : i32, i32
  }
  func.func @transform_35(%arg0: i32) -> (i32, i32, i32) {
    %c0_i32 = arith.constant 0 : i32
    %c0_i32_0 = arith.constant 0 : i32
    %c0_i32_1 = arith.constant 0 : i32
    return %arg0, %c0_i32, %c0_i32_0 : i32, i32, i32
  }
}

</mosaic_0001>

<llo_original>
// kernel: artr_forward.1
$region0: #{artr_forward.1}
  #allocation0 [shape = 'u32[]', space=smem, size = 0x4, offset = 0x4, fixed_abs, tag = 'smem constant byte address 0x4 - core index']
  #allocation1 [shape = 'u32[72,128]{1,0:T(1,128)}', space=vmem, size = 0x9000, scoped, tag = 'internal scratch']
  %s0 = inlined_call_operand.smem [shape: u32[36], index: -1, kind: input, shape index: {}]
  %s1 = sld [smem:[%s0]]
  %s2 = scalar_lea.smem %s0, 1
  %s3 = sld [smem:[%s2]]
  %s4 = scalar_lea.smem %s0, 2
  %s5 = sld [smem:[%s4]]
  %s6 = scalar_lea.smem %s0, 3
  %s7 = sld [smem:[%s6]]
  %s8 = scalar_lea.smem %s0, 4
  %s9 = sld [smem:[%s8]]
  %s10 = scalar_lea.smem %s0, 5
  %s11 = sld [smem:[%s10]]
  %s12 = scalar_lea.smem %s0, 6
  %s13 = sld [smem:[%s12]]
  %s14 = scalar_lea.smem %s0, 7
  %s15 = sld [smem:[%s14]]
  %s16 = scalar_lea.smem %s0, 8
  %s17 = sld [smem:[%s16]]
  %s18 = scalar_lea.smem %s0, 9
  %s19 = sld [smem:[%s18]]
  %s20 = scalar_lea.smem %s0, 10
  %s21 = sld [smem:[%s20]]
  %s22 = scalar_lea.smem %s0, 11
  %s23 = sld [smem:[%s22]]
  %s24 = scalar_lea.smem %s0, 12
  %s25 = sld [smem:[%s24]]
  %s26 = scalar_lea.smem %s0, 13
  %s27 = sld [smem:[%s26]]
  %s28 = scalar_lea.smem %s0, 14
  %s29 = sld [smem:[%s28]]
  %s30 = scalar_lea.smem %s0, 15
  %s31 = sld [smem:[%s30]]
  %s32 = scalar_lea.smem %s0, 16
  %s33 = sld [smem:[%s32]]
  %s34 = scalar_lea.smem %s0, 17
  %s35 = sld [smem:[%s34]]
  %s36 = scalar_lea.smem %s0, 18
  %s37 = sld [smem:[%s36]]
  %s38 = scalar_lea.smem %s0, 19
  %s39 = sld [smem:[%s38]]
  %s40 = scalar_lea.smem %s0, 20
  %s41 = sld [smem:[%s40]]
  %s42 = scalar_lea.smem %s0, 21
  %s43 = sld [smem:[%s42]]
  %s44 = scalar_lea.smem %s0, 22
  %s45 = sld [smem:[%s44]]
  %s46 = scalar_lea.smem %s0, 23
  %s47 = sld [smem:[%s46]]
  %s48 = scalar_lea.smem %s0, 24
  %s49 = sld [smem:[%s48]]
  %s50 = scalar_lea.smem %s0, 25
  %s51 = sld [smem:[%s50]]
  %s52 = scalar_lea.smem %s0, 26
  %s53 = sld [smem:[%s52]]
  %s54 = scalar_lea.smem %s0, 27
  %s55 = sld [smem:[%s54]]
  %s56 = scalar_lea.smem %s0, 28
  %s57 = sld [smem:[%s56]]
  %s58 = scalar_lea.smem %s0, 29
  %s59 = sld [smem:[%s58]]
  %s60 = scalar_lea.smem %s0, 30
  %s61 = sld [smem:[%s60]]
  %s62 = scalar_lea.smem %s0, 31
  %s63 = sld [smem:[%s62]]
  %s64 = scalar_lea.smem %s0, 32
  %s65 = sld [smem:[%s64]]
  %s66 = scalar_lea.smem %s0, 33
  %s67 = sld [smem:[%s66]]
  %s68 = scalar_lea.smem %s0, 34
  %s69 = sld [smem:[%s68]]
  %s70 = scalar_lea.smem %s0, 35
  %s71 = sld [smem:[%s70]]
  %s72 = sld [smem:[#allocation0]]
  $region265: #{artr_forward.1} parent=0
    _
  %s74 = ssub.s32 1, %s72
  %s75 = scalar_select 0, %s74, %s72
  $region1: #{artr_forward.1} parent=0
    #allocation2 [shape = 'u8[1024]{0}', space=vmem, size = 0x400, scoped, tag = 'input window, operand 0']
    #allocation3 [shape = 's32[2]{0}', space=sflag, size = 0x8, scoped, tag = 'scoped memory for artr_forward.1']
    #allocation4 [shape = 'u8[512]{0}', space=vmem, size = 0x400, scoped, tag = 'input window, operand 4, single buffered']
    #allocation5 [shape = 's32[1]{0}', space=sflag, size = 0x4, scoped, tag = 'scoped memory for artr_forward.1']
    #allocation6 [shape = 'u8[512]{0}', space=vmem, size = 0x400, scoped, tag = 'input window, operand 6, single buffered']
    #allocation7 [shape = 'u8[512]{0}', space=vmem, size = 0x400, scoped, tag = 'input window, operand 8, single buffered']
    #allocation8 [shape = 's32[1]{0}', space=sflag, size = 0x4, scoped, tag = 'scoped memory for artr_forward.1']
    #allocation9 [shape = 'u8[512]{0}', space=vmem, size = 0x400, scoped, tag = 'input window, operand 10, single buffered']
    #allocation10 [shape = 'u8[512]{0}', space=vmem, size = 0x400, scoped, tag = 'input window, operand 12, single buffered']
    #allocation11 [shape = 's32[1]{0}', space=sflag, size = 0x4, scoped, tag = 'scoped memory for artr_forward.1']
    #allocation12 [shape = 'u8[512]{0}', space=vmem, size = 0x400, scoped, tag = 'input window, operand 14, single buffered']
    #allocation13 [shape = 'u8[512]{0}', space=vmem, size = 0x400, scoped, tag = 'input window, operand 16, single buffered']
    #allocation14 [shape = 's32[1]{0}', space=sflag, size = 0x4, scoped, tag = 'scoped memory for artr_forward.1']
    #allocation15 [shape = 'u8[512]{0}', space=vmem, size = 0x400, scoped, tag = 'input window, operand 18, single buffered']
    #allocation16 [shape = 'u8[512]{0}', space=vmem, size = 0x400, scoped, tag = 'input window, operand 19, single buffered']
    #allocation17 [shape = 's32[1]{0}', space=sflag, size = 0x4, scoped, tag = 'scoped memory for artr_forward.1']
    #allocation18 [shape = 'u8[512]{0}', space=vmem, size = 0x400, scoped, tag = 'input window, operand 20, single buffered']
    #allocation19 [shape = 'u8[8192]{0}', space=vmem, size = 0x2000, scoped, tag = 'input window, operand 21, single buffered']
    #allocation20 [shape = 's32[1]{0}', space=sflag, size = 0x4, scoped, tag = 'scoped memory for artr_forward.1']
    #allocation21 [shape = 'u8[512]{0}', space=vmem, size = 0x400, scoped, tag = 'input window, operand 22, single buffered']
    #allocation22 [shape = 'u8[8192]{0}', space=vmem, size = 0x2000, scoped, tag = 'input window, operand 23, single buffered']
    #allocation23 [shape = 's32[1]{0}', space=sflag, size = 0x4, scoped, tag = 'scoped memory for artr_forward.1']
    #allocation24 [shape = 'u8[512]{0}', space=vmem, size = 0x400, scoped, tag = 'input window, operand 24, single buffered']
    #allocation25 [shape = 'u8[8192]{0}', space=vmem, size = 0x2000, scoped, tag = 'input window, operand 25, single buffered']
    #allocation26 [shape = 's32[1]{0}', space=sflag, size = 0x4, scoped, tag = 'scoped memory for artr_forward.1']
    #allocation27 [shape = 'u8[512]{0}', space=vmem, size = 0x400, scoped, tag = 'input window, operand 26, single buffered']
    #allocation28 [shape = 'u8[512]{0}', space=vmem, size = 0x400, scoped, tag = 'input window, operand 27, single buffered']
    #allocation29 [shape = 's32[1]{0}', space=sflag, size = 0x4, scoped, tag = 'scoped memory for artr_forward.1']
    #allocation30 [shape = 'u8[512]{0}', space=vmem, size = 0x400, scoped, tag = 'input window, operand 28, single buffered']
    #allocation31 [shape = 'u8[512]{0}', space=vmem, size = 0x400, scoped, tag = 'input window, operand 30, single buffered']
    #allocation32 [shape = 's32[1]{0}', space=sflag, size = 0x4, scoped, tag = 'scoped memory for artr_forward.1']
    #allocation33 [shape = 'u8[512]{0}', space=vmem, size = 0x400, scoped, tag = 'input window, operand 32, single buffered']
    #allocation34 [shape = 'u8[512]{0}', space=vmem, size = 0x400, scoped, tag = 'input window, operand 33, single buffered']
    #allocation35 [shape = 's32[1]{0}', space=sflag, size = 0x4, scoped, tag = 'scoped memory for artr_forward.1']
    #allocation36 [shape = 'u8[512]{0}', space=vmem, size = 0x400, scoped, tag = 'input window, operand 34, single buffered']
    %76 = vsyncpa [#allocation3], 0
    %s77 = scalar_lea.sflag [#allocation3], 1
    %78 = vsyncpa %s77, 0
    %79 = vsyncpa [#allocation5], 0
    %80 = vsyncpa [#allocation8], 0
    %81 = vsyncpa [#allocation11], 0
    %82 = vsyncpa [#allocation14], 0
    %83 = vsyncpa [#allocation17], 0
    %84 = vsyncpa [#allocation20], 0
    %85 = vsyncpa [#allocation23], 0
    %86 = vsyncpa [#allocation26], 0
    %87 = vsyncpa [#allocation29], 0
    %88 = vsyncpa [#allocation32], 0
    %89 = vsyncpa [#allocation35], 0
    loop: start=0, step=1, limit=4
    $region2: #{artr_forward.1} parent=1 // loop_pre_header
      _
    $region3: #{artr_forward.1} parent=1 // loop_header
      %s91 = sphi 0, %s95
      %p92 = scmp.ge.s32.totalorder %s91, 4
      %s101 = sphi 0, %s103
      %s104 = sphi 0, %s101
      %s105 = sphi 0, %s104
      %s121 = sphi 0, %s105
      %s127 = sphi 0, %s129
      %s130 = sphi 0, %s127
      %s131 = sphi 0, %s130
      %s147 = sphi 0, %s131
      %s151 = sphi 0, %s151
      %s153 = sphi 0, %s151
      %s154 = sphi 0, %s153
      %s168 = sphi 0, %s154
      %s172 = sphi 0, %s172
      %s174 = sphi 0, %s172
      %s175 = sphi 0, %s174
      %s189 = sphi 0, %s175
      %s193 = sphi 0, %s193
      %s195 = sphi 0, %s193
      %s196 = sphi 0, %s195
      %s210 = sphi 0, %s196
      %s214 = sphi 0, %s214
      %s216 = sphi 0, %s214
      %s217 = sphi 0, %s216
      %s231 = sphi 0, %s217
      %s235 = sphi 0, %s235
      %s237 = sphi 0, %s235
      %s238 = sphi 0, %s237
      %s252 = sphi 0, %s238
      %s256 = sphi 0, %s256
      %s258 = sphi 0, %s256
      %s259 = sphi 0, %s258
      %s273 = sphi 0, %s259
      %s277 = sphi 0, %s277
      %s279 = sphi 0, %s277
      %s280 = sphi 0, %s279
      %s294 = sphi 0, %s280
      %s298 = sphi 0, %s298
      %s300 = sphi 0, %s298
      %s301 = sphi 0, %s300
      %s315 = sphi 0, %s301
      %s319 = sphi 0, %s319
      %s321 = sphi 0, %s319
      %s322 = sphi 0, %s321
      %s336 = sphi 0, %s322
      %s340 = sphi 0, %s340
      %s342 = sphi 0, %s340
      %s343 = sphi 0, %s342
      %s357 = sphi 0, %s343
      %s361 = sphi 0, %s361
      %s363 = sphi 0, %s361
      %s364 = sphi 0, %s363
      %s378 = sphi 0, %s364
      %s382 = sphi 0, %s382
      %s384 = sphi 0, %s382
      %s385 = sphi 0, %s384
      %s399 = sphi 0, %s385
      %s403 = sphi 0, %s403
      %s405 = sphi 0, %s403
      %s406 = sphi 0, %s405
      %s420 = sphi 0, %s406
      %s424 = sphi 0, %s424
      %s426 = sphi 0, %s424
      %s427 = sphi 0, %s426
      %s441 = sphi 0, %s427
      %s445 = sphi 0, %s445
      %s447 = sphi 0, %s445
      %s448 = sphi 0, %s447
      %s462 = sphi 0, %s448
      %s466 = sphi 0, %s466
      %s468 = sphi 0, %s466
      %s469 = sphi 0, %s468
      %s483 = sphi 0, %s469
      %s487 = sphi 0, %s487
      %s489 = sphi 0, %s487
      %s490 = sphi 0, %s489
      %s504 = sphi 0, %s490
      %s508 = sphi 0, %s508
      %s510 = sphi 0, %s508
      %s511 = sphi 0, %s510
      %s525 = sphi 0, %s511
      %s529 = sphi 0, %s529
      %s531 = sphi 0, %s529
      %s532 = sphi 0, %s531
      %s546 = sphi 0, %s532
      %s550 = sphi 0, %s550
      %s552 = sphi 0, %s550
      %s553 = sphi 0, %s552
      %s567 = sphi 0, %s553
      %s571 = sphi 0, %s571
      %s573 = sphi 0, %s571
      %s574 = sphi 0, %s573
      %s588 = sphi 0, %s574
      %s592 = sphi 0, %s592
      %s594 = sphi 0, %s592
      %s595 = sphi 0, %s594
      %s609 = sphi 0, %s595
      %s613 = sphi 0, %s613
      %s615 = sphi 0, %s613
      %s616 = sphi 0, %s615
      %s630 = sphi 0, %s616
      %s634 = sphi 0, %s634
      %s636 = sphi 0, %s634
      %s637 = sphi 0, %s636
      %s651 = sphi 0, %s637
      %s655 = sphi 0, %s655
      %s657 = sphi 0, %s655
      %s658 = sphi 0, %s657
      %s672 = sphi 0, %s658
      %s676 = sphi 0, %s676
      %s678 = sphi 0, %s676
      %s679 = sphi 0, %s678
      %s693 = sphi 0, %s679
      %s697 = sphi 0, %s697
      %s699 = sphi 0, %s697
      %s700 = sphi 0, %s699
      %s714 = sphi 0, %s700
      %s718 = sphi 0, %s718
      %s720 = sphi 0, %s718
      %s721 = sphi 0, %s720
      %s735 = sphi 0, %s721
      %s739 = sphi 0, %s739
      %s741 = sphi 0, %s739
      %s742 = sphi 0, %s741
      %s756 = sphi 0, %s742
      %s760 = sphi 0, %s760
      %s762 = sphi 0, %s760
      %s763 = sphi 0, %s762
      %s777 = sphi 0, %s763
      %s781 = sphi 0, %s781
      %s783 = sphi 0, %s781
      %s784 = sphi 0, %s783
      %s798 = sphi 0, %s784
      %s802 = sphi 0, %s802
      %s804 = sphi 0, %s802
      %s805 = sphi 0, %s804
      %s819 = sphi 0, %s805
      %s823 = sphi 0, %s823
      %s825 = sphi 0, %s823
      %s826 = sphi 0, %s825
      %s840 = sphi 0, %s826
      %s846 = sphi 0, %s848
      %s849 = sphi 0, %s846
      %s850 = sphi 0, %s849
      %s866 = sphi 0, %s850
    $region4: #{artr_forward.1} parent=1 // loop_header_branch
      %94 = sbr.rel (%p92) target = $region8
    $region5: #{artr_forward.1} parent=1 // loop_body
      %s96 = ssub.s32 %s91, 1
      %s97 = ssub.s32 %s91, 2
      %s98 = sadd.s32 %s91, 1
      %s99 = ssub.s32 %s91, %s98
      %p100 = scmp.eq.s32.totalorder %s99, 0
      %s102 = sadd.s32 %s101, 1
      %s103 = scalar_select %p100, %s101, %s102
      %p106 = pneg %p100
      %p107 = scmp.eq.s32.totalorder %s91, 1
      %p108 = por %p106, %p107
      %p109 = scmp.ne.s32.totalorder %s101, %s104
      %p110 = scmp.eq.s32.totalorder %s91, 0
      %p111 = por %p109, %p110
      %p112 = scmp.ne.s32.totalorder %s101, %s104
      %p113 = scmp.eq.s32.totalorder %s96, 1
      %p114 = por %p112, %p113
      %p115 = scmp.ne.s32.totalorder %s104, %s105
      %p116 = scmp.eq.s32.totalorder %s96, 0
      %p117 = por %p115, %p116
      %p118 = scmp.ne.s32.totalorder %s104, %s105
      %p119 = scmp.eq.s32.totalorder %s97, 1
      %p120 = por %p118, %p119
      %p122 = scmp.ne.s32.totalorder %s105, %s121
      %p123 = scmp.eq.s32.totalorder %s97, 0
      %p124 = por %p122, %p123
      %s125 = ssub.s32 %s91, %s98
      %p126 = scmp.eq.s32.totalorder %s125, 0
      %s128 = sadd.s32 %s127, 1
      %s129 = scalar_select %p126, %s127, %s128
      %p132 = pneg %p126
      %p133 = scmp.eq.s32.totalorder %s91, 1
      %p134 = por %p132, %p133
      %p135 = scmp.ne.s32.totalorder %s127, %s130
      %p136 = scmp.eq.s32.totalorder %s91, 0
      %p137 = por %p135, %p136
      %p138 = scmp.ne.s32.totalorder %s127, %s130
      %p139 = scmp.eq.s32.totalorder %s96, 1
      %p140 = por %p138, %p139
      %p141 = scmp.ne.s32.totalorder %s130, %s131
      %p142 = scmp.eq.s32.totalorder %s96, 0
      %p143 = por %p141, %p142
      %p144 = scmp.ne.s32.totalorder %s130, %s131
      %p145 = scmp.eq.s32.totalorder %s97, 1
      %p146 = por %p144, %p145
      %p148 = scmp.ne.s32.totalorder %s131, %s147
      %p149 = scmp.eq.s32.totalorder %s97, 0
      %p150 = por %p148, %p149
      %s152 = sadd.s32 %s151, 1
      %p155 = scmp.eq.s32.totalorder %s91, 1
      %p156 = scmp.ne.s32.totalorder %s151, %s153
      %p157 = scmp.eq.s32.totalorder %s91, 0
      %p158 = por %p156, %p157
      %p159 = scmp.ne.s32.totalorder %s151, %s153
      %p160 = scmp.eq.s32.totalorder %s96, 1
      %p161 = por %p159, %p160
      %p162 = scmp.ne.s32.totalorder %s153, %s154
      %p163 = scmp.eq.s32.totalorder %s96, 0
      %p164 = por %p162, %p163
      %p165 = scmp.ne.s32.totalorder %s153, %s154
      %p166 = scmp.eq.s32.totalorder %s97, 1
      %p167 = por %p165, %p166
      %p169 = scmp.ne.s32.totalorder %s154, %s168
      %p170 = scmp.eq.s32.totalorder %s97, 0
      %p171 = por %p169, %p170
      %s173 = sadd.s32 %s172, 1
      %p176 = scmp.eq.s32.totalorder %s91, 1
      %p177 = scmp.ne.s32.totalorder %s172, %s174
      %p178 = scmp.eq.s32.totalorder %s91, 0
      %p179 = por %p177, %p178
      %p180 = scmp.ne.s32.totalorder %s172, %s174
      %p181 = scmp.eq.s32.totalorder %s96, 1
      %p182 = por %p180, %p181
      %p183 = scmp.ne.s32.totalorder %s174, %s175
      %p184 = scmp.eq.s32.totalorder %s96, 0
      %p185 = por %p183, %p184
      %p186 = scmp.ne.s32.totalorder %s174, %s175
      %p187 = scmp.eq.s32.totalorder %s97, 1
      %p188 = por %p186, %p187
      %p190 = scmp.ne.s32.totalorder %s175, %s189
      %p191 = scmp.eq.s32.totalorder %s97, 0
      %p192 = por %p190, %p191
      %s194 = sadd.s32 %s193, 1
      %p197 = scmp.eq.s32.totalorder %s91, 1
      %p198 = scmp.ne.s32.totalorder %s193, %s195
      %p199 = scmp.eq.s32.totalorder %s91, 0
      %p200 = por %p198, %p199
      %p201 = scmp.ne.s32.totalorder %s193, %s195
      %p202 = scmp.eq.s32.totalorder %s96, 1
      %p203 = por %p201, %p202
      %p204 = scmp.ne.s32.totalorder %s195, %s196
      %p205 = scmp.eq.s32.totalorder %s96, 0
      %p206 = por %p204, %p205
      %p207 = scmp.ne.s32.totalorder %s195, %s196
      %p208 = scmp.eq.s32.totalorder %s97, 1
      %p209 = por %p207, %p208
      %p211 = scmp.ne.s32.totalorder %s196, %s210
      %p212 = scmp.eq.s32.totalorder %s97, 0
      %p213 = por %p211, %p212
      %s215 = sadd.s32 %s214, 1
      %p218 = scmp.eq.s32.totalorder %s91, 1
      %p219 = scmp.ne.s32.totalorder %s214, %s216
      %p220 = scmp.eq.s32.totalorder %s91, 0
      %p221 = por %p219, %p220
      %p222 = scmp.ne.s32.totalorder %s214, %s216
      %p223 = scmp.eq.s32.totalorder %s96, 1
      %p224 = por %p222, %p223
      %p225 = scmp.ne.s32.totalorder %s216, %s217
      %p226 = scmp.eq.s32.totalorder %s96, 0
      %p227 = por %p225, %p226
      %p228 = scmp.ne.s32.totalorder %s216, %s217
      %p229 = scmp.eq.s32.totalorder %s97, 1
      %p230 = por %p228, %p229
      %p232 = scmp.ne.s32.totalorder %s217, %s231
      %p233 = scmp.eq.s32.totalorder %s97, 0
      %p234 = por %p232, %p233
      %s236 = sadd.s32 %s235, 1
      %p239 = scmp.eq.s32.totalorder %s91, 1
      %p240 = scmp.ne.s32.totalorder %s235, %s237
      %p241 = scmp.eq.s32.totalorder %s91, 0
      %p242 = por %p240, %p241
      %p243 = scmp.ne.s32.totalorder %s235, %s237
      %p244 = scmp.eq.s32.totalorder %s96, 1
      %p245 = por %p243, %p244
      %p246 = scmp.ne.s32.totalorder %s237, %s238
      %p247 = scmp.eq.s32.totalorder %s96, 0
      %p248 = por %p246, %p247
      %p249 = scmp.ne.s32.totalorder %s237, %s238
      %p250 = scmp.eq.s32.totalorder %s97, 1
      %p251 = por %p249, %p250
      %p253 = scmp.ne.s32.totalorder %s238, %s252
      %p254 = scmp.eq.s32.totalorder %s97, 0
      %p255 = por %p253, %p254
      %s257 = sadd.s32 %s256, 1
      %p260 = scmp.eq.s32.totalorder %s91, 1
      %p261 = scmp.ne.s32.totalorder %s256, %s258
      %p262 = scmp.eq.s32.totalorder %s91, 0
      %p263 = por %p261, %p262
      %p264 = scmp.ne.s32.totalorder %s256, %s258
      %p265 = scmp.eq.s32.totalorder %s96, 1
      %p266 = por %p264, %p265
      %p267 = scmp.ne.s32.totalorder %s258, %s259
      %p268 = scmp.eq.s32.totalorder %s96, 0
      %p269 = por %p267, %p268
      %p270 = scmp.ne.s32.totalorder %s258, %s259
      %p271 = scmp.eq.s32.totalorder %s97, 1
      %p272 = por %p270, %p271
      %p274 = scmp.ne.s32.totalorder %s259, %s273
      %p275 = scmp.eq.s32.totalorder %s97, 0
      %p276 = por %p274, %p275
      %s278 = sadd.s32 %s277, 1
      %p281 = scmp.eq.s32.totalorder %s91, 1
      %p282 = scmp.ne.s32.totalorder %s277, %s279
      %p283 = scmp.eq.s32.totalorder %s91, 0
      %p284 = por %p282, %p283
      %p285 = scmp.ne.s32.totalorder %s277, %s279
      %p286 = scmp.eq.s32.totalorder %s96, 1
      %p287 = por %p285, %p286
      %p288 = scmp.ne.s32.totalorder %s279, %s280
      %p289 = scmp.eq.s32.totalorder %s96, 0
      %p290 = por %p288, %p289
      %p291 = scmp.ne.s32.totalorder %s279, %s280
      %p292 = scmp.eq.s32.totalorder %s97, 1
      %p293 = por %p291, %p292
      %p295 = scmp.ne.s32.totalorder %s280, %s294
      %p296 = scmp.eq.s32.totalorder %s97, 0
      %p297 = por %p295, %p296
      %s299 = sadd.s32 %s298, 1
      %p302 = scmp.eq.s32.totalorder %s91, 1
      %p303 = scmp.ne.s32.totalorder %s298, %s300
      %p304 = scmp.eq.s32.totalorder %s91, 0
      %p305 = por %p303, %p304
      %p306 = scmp.ne.s32.totalorder %s298, %s300
      %p307 = scmp.eq.s32.totalorder %s96, 1
      %p308 = por %p306, %p307
      %p309 = scmp.ne.s32.totalorder %s300, %s301
      %p310 = scmp.eq.s32.totalorder %s96, 0
      %p311 = por %p309, %p310
      %p312 = scmp.ne.s32.totalorder %s300, %s301
      %p313 = scmp.eq.s32.totalorder %s97, 1
      %p314 = por %p312, %p313
      %p316 = scmp.ne.s32.totalorder %s301, %s315
      %p317 = scmp.eq.s32.totalorder %s97, 0
      %p318 = por %p316, %p317
      %s320 = sadd.s32 %s319, 1
      %p323 = scmp.eq.s32.totalorder %s91, 1
      %p324 = scmp.ne.s32.totalorder %s319, %s321
      %p325 = scmp.eq.s32.totalorder %s91, 0
      %p326 = por %p324, %p325
      %p327 = scmp.ne.s32.totalorder %s319, %s321
      %p328 = scmp.eq.s32.totalorder %s96, 1
      %p329 = por %p327, %p328
      %p330 = scmp.ne.s32.totalorder %s321, %s322
      %p331 = scmp.eq.s32.totalorder %s96, 0
      %p332 = por %p330, %p331
      %p333 = scmp.ne.s32.totalorder %s321, %s322
      %p334 = scmp.eq.s32.totalorder %s97, 1
      %p335 = por %p333, %p334
      %p337 = scmp.ne.s32.totalorder %s322, %s336
      %p338 = scmp.eq.s32.totalorder %s97, 0
      %p339 = por %p337, %p338
      %s341 = sadd.s32 %s340, 1
      %p344 = scmp.eq.s32.totalorder %s91, 1
      %p345 = scmp.ne.s32.totalorder %s340, %s342
      %p346 = scmp.eq.s32.totalorder %s91, 0
      %p347 = por %p345, %p346
      %p348 = scmp.ne.s32.totalorder %s340, %s342
      %p349 = scmp.eq.s32.totalorder %s96, 1
      %p350 = por %p348, %p349
      %p351 = scmp.ne.s32.totalorder %s342, %s343
      %p352 = scmp.eq.s32.totalorder %s96, 0
      %p353 = por %p351, %p352
      %p354 = scmp.ne.s32.totalorder %s342, %s343
      %p355 = scmp.eq.s32.totalorder %s97, 1
      %p356 = por %p354, %p355
      %p358 = scmp.ne.s32.totalorder %s343, %s357
      %p359 = scmp.eq.s32.totalorder %s97, 0
      %p360 = por %p358, %p359
      %s362 = sadd.s32 %s361, 1
      %p365 = scmp.eq.s32.totalorder %s91, 1
      %p366 = scmp.ne.s32.totalorder %s361, %s363
      %p367 = scmp.eq.s32.totalorder %s91, 0
      %p368 = por %p366, %p367
      %p369 = scmp.ne.s32.totalorder %s361, %s363
      %p370 = scmp.eq.s32.totalorder %s96, 1
      %p371 = por %p369, %p370
      %p372 = scmp.ne.s32.totalorder %s363, %s364
      %p373 = scmp.eq.s32.totalorder %s96, 0
      %p374 = por %p372, %p373
      %p375 = scmp.ne.s32.totalorder %s363, %s364
      %p376 = scmp.eq.s32.totalorder %s97, 1
      %p377 = por %p375, %p376
      %p379 = scmp.ne.s32.totalorder %s364, %s378
      %p380 = scmp.eq.s32.totalorder %s97, 0
      %p381 = por %p379, %p380
      %s383 = sadd.s32 %s382, 1
      %p386 = scmp.eq.s32.totalorder %s91, 1
      %p387 = scmp.ne.s32.totalorder %s382, %s384
      %p388 = scmp.eq.s32.totalorder %s91, 0
      %p389 = por %p387, %p388
      %p390 = scmp.ne.s32.totalorder %s382, %s384
      %p391 = scmp.eq.s32.totalorder %s96, 1
      %p392 = por %p390, %p391
      %p393 = scmp.ne.s32.totalorder %s384, %s385
      %p394 = scmp.eq.s32.totalorder %s96, 0
      %p395 = por %p393, %p394
      %p396 = scmp.ne.s32.totalorder %s384, %s385
      %p397 = scmp.eq.s32.totalorder %s97, 1
      %p398 = por %p396, %p397
      %p400 = scmp.ne.s32.totalorder %s385, %s399
      %p401 = scmp.eq.s32.totalorder %s97, 0
      %p402 = por %p400, %p401
      %s404 = sadd.s32 %s403, 1
      %p407 = scmp.eq.s32.totalorder %s91, 1
      %p408 = scmp.ne.s32.totalorder %s403, %s405
      %p409 = scmp.eq.s32.totalorder %s91, 0
      %p410 = por %p408, %p409
      %p411 = scmp.ne.s32.totalorder %s403, %s405
      %p412 = scmp.eq.s32.totalorder %s96, 1
      %p413 = por %p411, %p412
      %p414 = scmp.ne.s32.totalorder %s405, %s406
      %p415 = scmp.eq.s32.totalorder %s96, 0
      %p416 = por %p414, %p415
      %p417 = scmp.ne.s32.totalorder %s405, %s406
      %p418 = scmp.eq.s32.totalorder %s97, 1
      %p419 = por %p417, %p418
      %p421 = scmp.ne.s32.totalorder %s406, %s420
      %p422 = scmp.eq.s32.totalorder %s97, 0
      %p423 = por %p421, %p422
      %s425 = sadd.s32 %s424, 1
      %p428 = scmp.eq.s32.totalorder %s91, 1
      %p429 = scmp.ne.s32.totalorder %s424, %s426
      %p430 = scmp.eq.s32.totalorder %s91, 0
      %p431 = por %p429, %p430
      %p432 = scmp.ne.s32.totalorder %s424, %s426
      %p433 = scmp.eq.s32.totalorder %s96, 1
      %p434 = por %p432, %p433
      %p435 = scmp.ne.s32.totalorder %s426, %s427
      %p436 = scmp.eq.s32.totalorder %s96, 0
      %p437 = por %p435, %p436
      %p438 = scmp.ne.s32.totalorder %s426, %s427
      %p439 = scmp.eq.s32.totalorder %s97, 1
      %p440 = por %p438, %p439
      %p442 = scmp.ne.s32.totalorder %s427, %s441
      %p443 = scmp.eq.s32.totalorder %s97, 0
      %p444 = por %p442, %p443
      %s446 = sadd.s32 %s445, 1
      %p449 = scmp.eq.s32.totalorder %s91, 1
      %p450 = scmp.ne.s32.totalorder %s445, %s447
      %p451 = scmp.eq.s32.totalorder %s91, 0
      %p452 = por %p450, %p451
      %p453 = scmp.ne.s32.totalorder %s445, %s447
      %p454 = scmp.eq.s32.totalorder %s96, 1
      %p455 = por %p453, %p454
      %p456 = scmp.ne.s32.totalorder %s447, %s448
      %p457 = scmp.eq.s32.totalorder %s96, 0
      %p458 = por %p456, %p457
      %p459 = scmp.ne.s32.totalorder %s447, %s448
      %p460 = scmp.eq.s32.totalorder %s97, 1
      %p461 = por %p459, %p460
      %p463 = scmp.ne.s32.totalorder %s448, %s462
      %p464 = scmp.eq.s32.totalorder %s97, 0
      %p465 = por %p463, %p464
      %s467 = sadd.s32 %s466, 1
      %p470 = scmp.eq.s32.totalorder %s91, 1
      %p471 = scmp.ne.s32.totalorder %s466, %s468
      %p472 = scmp.eq.s32.totalorder %s91, 0
      %p473 = por %p471, %p472
      %p474 = scmp.ne.s32.totalorder %s466, %s468
      %p475 = scmp.eq.s32.totalorder %s96, 1
      %p476 = por %p474, %p475
      %p477 = scmp.ne.s32.totalorder %s468, %s469
      %p478 = scmp.eq.s32.totalorder %s96, 0
      %p479 = por %p477, %p478
      %p480 = scmp.ne.s32.totalorder %s468, %s469
      %p481 = scmp.eq.s32.totalorder %s97, 1
      %p482 = por %p480, %p481
      %p484 = scmp.ne.s32.totalorder %s469, %s483
      %p485 = scmp.eq.s32.totalorder %s97, 0
      %p486 = por %p484, %p485
      %s488 = sadd.s32 %s487, 1
      %p491 = scmp.eq.s32.totalorder %s91, 1
      %p492 = scmp.ne.s32.totalorder %s487, %s489
      %p493 = scmp.eq.s32.totalorder %s91, 0
      %p494 = por %p492, %p493
      %p495 = scmp.ne.s32.totalorder %s487, %s489
      %p496 = scmp.eq.s32.totalorder %s96, 1
      %p497 = por %p495, %p496
      %p498 = scmp.ne.s32.totalorder %s489, %s490
      %p499 = scmp.eq.s32.totalorder %s96, 0
      %p500 = por %p498, %p499
      %p501 = scmp.ne.s32.totalorder %s489, %s490
      %p502 = scmp.eq.s32.totalorder %s97, 1
      %p503 = por %p501, %p502
      %p505 = scmp.ne.s32.totalorder %s490, %s504
      %p506 = scmp.eq.s32.totalorder %s97, 0
      %p507 = por %p505, %p506
      %s509 = sadd.s32 %s508, 1
      %p512 = scmp.eq.s32.totalorder %s91, 1
      %p513 = scmp.ne.s32.totalorder %s508, %s510
      %p514 = scmp.eq.s32.totalorder %s91, 0
      %p515 = por %p513, %p514
      %p516 = scmp.ne.s32.totalorder %s508, %s510
      %p517 = scmp.eq.s32.totalorder %s96, 1
      %p518 = por %p516, %p517
      %p519 = scmp.ne.s32.totalorder %s510, %s511
      %p520 = scmp.eq.s32.totalorder %s96, 0
      %p521 = por %p519, %p520
      %p522 = scmp.ne.s32.totalorder %s510, %s511
      %p523 = scmp.eq.s32.totalorder %s97, 1
      %p524 = por %p522, %p523
      %p526 = scmp.ne.s32.totalorder %s511, %s525
      %p527 = scmp.eq.s32.totalorder %s97, 0
      %p528 = por %p526, %p527
      %s530 = sadd.s32 %s529, 1
      %p533 = scmp.eq.s32.totalorder %s91, 1
      %p534 = scmp.ne.s32.totalorder %s529, %s531
      %p535 = scmp.eq.s32.totalorder %s91, 0
      %p536 = por %p534, %p535
      %p537 = scmp.ne.s32.totalorder %s529, %s531
      %p538 = scmp.eq.s32.totalorder %s96, 1
      %p539 = por %p537, %p538
      %p540 = scmp.ne.s32.totalorder %s531, %s532
      %p541 = scmp.eq.s32.totalorder %s96, 0
      %p542 = por %p540, %p541
      %p543 = scmp.ne.s32.totalorder %s531, %s532
      %p544 = scmp.eq.s32.totalorder %s97, 1
      %p545 = por %p543, %p544
      %p547 = scmp.ne.s32.totalorder %s532, %s546
      %p548 = scmp.eq.s32.totalorder %s97, 0
      %p549 = por %p547, %p548
      %s551 = sadd.s32 %s550, 1
      %p554 = scmp.eq.s32.totalorder %s91, 1
      %p555 = scmp.ne.s32.totalorder %s550, %s552
      %p556 = scmp.eq.s32.totalorder %s91, 0
      %p557 = por %p555, %p556
      %p558 = scmp.ne.s32.totalorder %s550, %s552
      %p559 = scmp.eq.s32.totalorder %s96, 1
      %p560 = por %p558, %p559
      %p561 = scmp.ne.s32.totalorder %s552, %s553
      %p562 = scmp.eq.s32.totalorder %s96, 0
      %p563 = por %p561, %p562
      %p564 = scmp.ne.s32.totalorder %s552, %s553
      %p565 = scmp.eq.s32.totalorder %s97, 1
      %p566 = por %p564, %p565
      %p568 = scmp.ne.s32.totalorder %s553, %s567
      %p569 = scmp.eq.s32.totalorder %s97, 0
      %p570 = por %p568, %p569
      %s572 = sadd.s32 %s571, 1
      %p575 = scmp.eq.s32.totalorder %s91, 1
      %p576 = scmp.ne.s32.totalorder %s571, %s573
      %p577 = scmp.eq.s32.totalorder %s91, 0
      %p578 = por %p576, %p577
      %p579 = scmp.ne.s32.totalorder %s571, %s573
      %p580 = scmp.eq.s32.totalorder %s96, 1
      %p581 = por %p579, %p580
      %p582 = scmp.ne.s32.totalorder %s573, %s574
      %p583 = scmp.eq.s32.totalorder %s96, 0
      %p584 = por %p582, %p583
      %p585 = scmp.ne.s32.totalorder %s573, %s574
      %p586 = scmp.eq.s32.totalorder %s97, 1
      %p587 = por %p585, %p586
      %p589 = scmp.ne.s32.totalorder %s574, %s588
      %p590 = scmp.eq.s32.totalorder %s97, 0
      %p591 = por %p589, %p590
      %s593 = sadd.s32 %s592, 1
      %p596 = scmp.eq.s32.totalorder %s91, 1
      %p597 = scmp.ne.s32.totalorder %s592, %s594
      %p598 = scmp.eq.s32.totalorder %s91, 0
      %p599 = por %p597, %p598
      %p600 = scmp.ne.s32.totalorder %s592, %s594
      %p601 = scmp.eq.s32.totalorder %s96, 1
      %p602 = por %p600, %p601
      %p603 = scmp.ne.s32.totalorder %s594, %s595
      %p604 = scmp.eq.s32.totalorder %s96, 0
      %p605 = por %p603, %p604
      %p606 = scmp.ne.s32.totalorder %s594, %s595
      %p607 = scmp.eq.s32.totalorder %s97, 1
      %p608 = por %p606, %p607
      %p610 = scmp.ne.s32.totalorder %s595, %s609
      %p611 = scmp.eq.s32.totalorder %s97, 0
      %p612 = por %p610, %p611
      %s614 = sadd.s32 %s613, 1
      %p617 = scmp.eq.s32.totalorder %s91, 1
      %p618 = scmp.ne.s32.totalorder %s613, %s615
      %p619 = scmp.eq.s32.totalorder %s91, 0
      %p620 = por %p618, %p619
      %p621 = scmp.ne.s32.totalorder %s613, %s615
      %p622 = scmp.eq.s32.totalorder %s96, 1
      %p623 = por %p621, %p622
      %p624 = scmp.ne.s32.totalorder %s615, %s616
      %p625 = scmp.eq.s32.totalorder %s96, 0
      %p626 = por %p624, %p625
      %p627 = scmp.ne.s32.totalorder %s615, %s616
      %p628 = scmp.eq.s32.totalorder %s97, 1
      %p629 = por %p627, %p628
      %p631 = scmp.ne.s32.totalorder %s616, %s630
      %p632 = scmp.eq.s32.totalorder %s97, 0
      %p633 = por %p631, %p632
      %s635 = sadd.s32 %s634, 1
      %p638 = scmp.eq.s32.totalorder %s91, 1
      %p639 = scmp.ne.s32.totalorder %s634, %s636
      %p640 = scmp.eq.s32.totalorder %s91, 0
      %p641 = por %p639, %p640
      %p642 = scmp.ne.s32.totalorder %s634, %s636
      %p643 = scmp.eq.s32.totalorder %s96, 1
      %p644 = por %p642, %p643
      %p645 = scmp.ne.s32.totalorder %s636, %s637
      %p646 = scmp.eq.s32.totalorder %s96, 0
      %p647 = por %p645, %p646
      %p648 = scmp.ne.s32.totalorder %s636, %s637
      %p649 = scmp.eq.s32.totalorder %s97, 1
      %p650 = por %p648, %p649
      %p652 = scmp.ne.s32.totalorder %s637, %s651
      %p653 = scmp.eq.s32.totalorder %s97, 0
      %p654 = por %p652, %p653
      %s656 = sadd.s32 %s655, 1
      %p659 = scmp.eq.s32.totalorder %s91, 1
      %p660 = scmp.ne.s32.totalorder %s655, %s657
      %p661 = scmp.eq.s32.totalorder %s91, 0
      %p662 = por %p660, %p661
      %p663 = scmp.ne.s32.totalorder %s655, %s657
      %p664 = scmp.eq.s32.totalorder %s96, 1
      %p665 = por %p663, %p664
      %p666 = scmp.ne.s32.totalorder %s657, %s658
      %p667 = scmp.eq.s32.totalorder %s96, 0
      %p668 = por %p666, %p667
      %p669 = scmp.ne.s32.totalorder %s657, %s658
      %p670 = scmp.eq.s32.totalorder %s97, 1
      %p671 = por %p669, %p670
      %p673 = scmp.ne.s32.totalorder %s658, %s672
      %p674 = scmp.eq.s32.totalorder %s97, 0
      %p675 = por %p673, %p674
      %s677 = sadd.s32 %s676, 1
      %p680 = scmp.eq.s32.totalorder %s91, 1
      %p681 = scmp.ne.s32.totalorder %s676, %s678
      %p682 = scmp.eq.s32.totalorder %s91, 0
      %p683 = por %p681, %p682
      %p684 = scmp.ne.s32.totalorder %s676, %s678
      %p685 = scmp.eq.s32.totalorder %s96, 1
      %p686 = por %p684, %p685
      %p687 = scmp.ne.s32.totalorder %s678, %s679
      %p688 = scmp.eq.s32.totalorder %s96, 0
      %p689 = por %p687, %p688
      %p690 = scmp.ne.s32.totalorder %s678, %s679
      %p691 = scmp.eq.s32.totalorder %s97, 1
      %p692 = por %p690, %p691
      %p694 = scmp.ne.s32.totalorder %s679, %s693
      %p695 = scmp.eq.s32.totalorder %s97, 0
      %p696 = por %p694, %p695
      %s698 = sadd.s32 %s697, 1
      %p701 = scmp.eq.s32.totalorder %s91, 1
      %p702 = scmp.ne.s32.totalorder %s697, %s699
      %p703 = scmp.eq.s32.totalorder %s91, 0
      %p704 = por %p702, %p703
      %p705 = scmp.ne.s32.totalorder %s697, %s699
      %p706 = scmp.eq.s32.totalorder %s96, 1
      %p707 = por %p705, %p706
      %p708 = scmp.ne.s32.totalorder %s699, %s700
      %p709 = scmp.eq.s32.totalorder %s96, 0
      %p710 = por %p708, %p709
      %p711 = scmp.ne.s32.totalorder %s699, %s700
      %p712 = scmp.eq.s32.totalorder %s97, 1
      %p713 = por %p711, %p712
      %p715 = scmp.ne.s32.totalorder %s700, %s714
      %p716 = scmp.eq.s32.totalorder %s97, 0
      %p717 = por %p715, %p716
      %s719 = sadd.s32 %s718, 1
      %p722 = scmp.eq.s32.totalorder %s91, 1
      %p723 = scmp.ne.s32.totalorder %s718, %s720
      %p724 = scmp.eq.s32.totalorder %s91, 0
      %p725 = por %p723, %p724
      %p726 = scmp.ne.s32.totalorder %s718, %s720
      %p727 = scmp.eq.s32.totalorder %s96, 1
      %p728 = por %p726, %p727
      %p729 = scmp.ne.s32.totalorder %s720, %s721
      %p730 = scmp.eq.s32.totalorder %s96, 0
      %p731 = por %p729, %p730
      %p732 = scmp.ne.s32.totalorder %s720, %s721
      %p733 = scmp.eq.s32.totalorder %s97, 1
      %p734 = por %p732, %p733
      %p736 = scmp.ne.s32.totalorder %s721, %s735
      %p737 = scmp.eq.s32.totalorder %s97, 0
      %p738 = por %p736, %p737
      %s740 = sadd.s32 %s739, 1
      %p743 = scmp.eq.s32.totalorder %s91, 1
      %p744 = scmp.ne.s32.totalorder %s739, %s741
      %p745 = scmp.eq.s32.totalorder %s91, 0
      %p746 = por %p744, %p745
      %p747 = scmp.ne.s32.totalorder %s739, %s741
      %p748 = scmp.eq.s32.totalorder %s96, 1
      %p749 = por %p747, %p748
      %p750 = scmp.ne.s32.totalorder %s741, %s742
      %p751 = scmp.eq.s32.totalorder %s96, 0
      %p752 = por %p750, %p751
      %p753 = scmp.ne.s32.totalorder %s741, %s742
      %p754 = scmp.eq.s32.totalorder %s97, 1
      %p755 = por %p753, %p754
      %p757 = scmp.ne.s32.totalorder %s742, %s756
      %p758 = scmp.eq.s32.totalorder %s97, 0
      %p759 = por %p757, %p758
      %s761 = sadd.s32 %s760, 1
      %p764 = scmp.eq.s32.totalorder %s91, 1
      %p765 = scmp.ne.s32.totalorder %s760, %s762
      %p766 = scmp.eq.s32.totalorder %s91, 0
      %p767 = por %p765, %p766
      %p768 = scmp.ne.s32.totalorder %s760, %s762
      %p769 = scmp.eq.s32.totalorder %s96, 1
      %p770 = por %p768, %p769
      %p771 = scmp.ne.s32.totalorder %s762, %s763
      %p772 = scmp.eq.s32.totalorder %s96, 0
      %p773 = por %p771, %p772
      %p774 = scmp.ne.s32.totalorder %s762, %s763
      %p775 = scmp.eq.s32.totalorder %s97, 1
      %p776 = por %p774, %p775
      %p778 = scmp.ne.s32.totalorder %s763, %s777
      %p779 = scmp.eq.s32.totalorder %s97, 0
      %p780 = por %p778, %p779
      %s782 = sadd.s32 %s781, 1
      %p785 = scmp.eq.s32.totalorder %s91, 1
      %p786 = scmp.ne.s32.totalorder %s781, %s783
      %p787 = scmp.eq.s32.totalorder %s91, 0
      %p788 = por %p786, %p787
      %p789 = scmp.ne.s32.totalorder %s781, %s783
      %p790 = scmp.eq.s32.totalorder %s96, 1
      %p791 = por %p789, %p790
      %p792 = scmp.ne.s32.totalorder %s783, %s784
      %p793 = scmp.eq.s32.totalorder %s96, 0
      %p794 = por %p792, %p793
      %p795 = scmp.ne.s32.totalorder %s783, %s784
      %p796 = scmp.eq.s32.totalorder %s97, 1
      %p797 = por %p795, %p796
      %p799 = scmp.ne.s32.totalorder %s784, %s798
      %p800 = scmp.eq.s32.totalorder %s97, 0
      %p801 = por %p799, %p800
      %s803 = sadd.s32 %s802, 1
      %p806 = scmp.eq.s32.totalorder %s91, 1
      %p807 = scmp.ne.s32.totalorder %s802, %s804
      %p808 = scmp.eq.s32.totalorder %s91, 0
      %p809 = por %p807, %p808
      %p810 = scmp.ne.s32.totalorder %s802, %s804
      %p811 = scmp.eq.s32.totalorder %s96, 1
      %p812 = por %p810, %p811
      %p813 = scmp.ne.s32.totalorder %s804, %s805
      %p814 = scmp.eq.s32.totalorder %s96, 0
      %p815 = por %p813, %p814
      %p816 = scmp.ne.s32.totalorder %s804, %s805
      %p817 = scmp.eq.s32.totalorder %s97, 1
      %p818 = por %p816, %p817
      %p820 = scmp.ne.s32.totalorder %s805, %s819
      %p821 = scmp.eq.s32.totalorder %s97, 0
      %p822 = por %p820, %p821
      %s824 = sadd.s32 %s823, 1
      %p827 = scmp.eq.s32.totalorder %s91, 1
      %p828 = scmp.ne.s32.totalorder %s823, %s825
      %p829 = scmp.eq.s32.totalorder %s91, 0
      %p830 = por %p828, %p829
      %p831 = scmp.ne.s32.totalorder %s823, %s825
      %p832 = scmp.eq.s32.totalorder %s96, 1
      %p833 = por %p831, %p832
      %p834 = scmp.ne.s32.totalorder %s825, %s826
      %p835 = scmp.eq.s32.totalorder %s96, 0
      %p836 = por %p834, %p835
      %p837 = scmp.ne.s32.totalorder %s825, %s826
      %p838 = scmp.eq.s32.totalorder %s97, 1
      %p839 = por %p837, %p838
      %p841 = scmp.ne.s32.totalorder %s826, %s840
      %p842 = scmp.eq.s32.totalorder %s97, 0
      %p843 = por %p841, %p842
      %s844 = ssub.s32 %s91, %s98
      %p845 = scmp.eq.s32.totalorder %s844, 0
      %s847 = sadd.s32 %s846, 1
      %s848 = scalar_select %p845, %s846, %s847
      %p851 = pneg %p845
      %p852 = scmp.eq.s32.totalorder %s91, 1
      %p853 = por %p851, %p852
      %p854 = scmp.ne.s32.totalorder %s846, %s849
      %p855 = scmp.eq.s32.totalorder %s91, 0
      %p856 = por %p854, %p855
      %p857 = scmp.ne.s32.totalorder %s846, %s849
      %p858 = scmp.eq.s32.totalorder %s96, 1
      %p859 = por %p857, %p858
      %p860 = scmp.ne.s32.totalorder %s849, %s850
      %p861 = scmp.eq.s32.totalorder %s96, 0
      %p862 = por %p860, %p861
      %p863 = scmp.ne.s32.totalorder %s849, %s850
      %p864 = scmp.eq.s32.totalorder %s97, 1
      %p865 = por %p863, %p864
      %p867 = scmp.ne.s32.totalorder %s850, %s866
      %p868 = scmp.eq.s32.totalorder %s97, 0
      %p869 = por %p867, %p868
      %p870 = scmp.le.s32.totalorder 1, %s91
      %p871 = scmp.lt.s32.totalorder %s91, 3
      %p872 = pnand %p870, %p871
      %p873 = pneg %p872
      // Predicated region
      $region9: #{artr_forward.1} parent=5 // pred_check
        _
      $region10: #{artr_forward.1} parent=5 // pred_check_branch
        %875 = sbr.rel (%p872) target = $region12
      $region11: #{artr_forward.1} parent=5 // pred_region
        %s876 = ssub.s32 %s91, 1
        // Predicated region
        $region13: #{artr_forward.1} parent=11 // pred_check
          %p877 = pneg %p164
        $region14: #{artr_forward.1} parent=11 // pred_check_branch
          %879 = sbr.rel (%p877) target = $region16
        $region15: #{artr_forward.1} parent=11 // pred_region
          _
        $region16: #{artr_forward.1} parent=11 // pred_fallthru
          _
        // Predicated region
        $region17: #{artr_forward.1} parent=11 // pred_check
          %p880 = pneg %p185
        $region18: #{artr_forward.1} parent=11 // pred_check_branch
          %882 = sbr.rel (%p880) target = $region20
        $region19: #{artr_forward.1} parent=11 // pred_region
          _
        $region20: #{artr_forward.1} parent=11 // pred_fallthru
          _
        // Predicated region
        $region21: #{artr_forward.1} parent=11 // pred_check
          %p883 = pneg %p206
        $region22: #{artr_forward.1} parent=11 // pred_check_branch
          %885 = sbr.rel (%p883) target = $region24
        $region23: #{artr_forward.1} parent=11 // pred_region
          %887 = vsyncadd [#allocation5], 0
          %s889 = sshll.u32 %s9, 4
          %s890 = int_to_ptr.hbm [resolvable:$true] %s889
          %s891 = sshll.u32 [#allocation4], 4
          %s892 = int_to_ptr.vmem [resolvable:$true] %s891
          %894 = dma.hbm_to_vmem [thread:$0]  %s890, 16, %s892, [#allocation5]
        $region24: #{artr_forward.1} parent=11 // pred_fallthru
          _
        // Predicated region
        $region25: #{artr_forward.1} parent=11 // pred_check
          %p895 = pneg %p227
        $region26: #{artr_forward.1} parent=11 // pred_check_branch
          %897 = sbr.rel (%p895) target = $region28
        $region27: #{artr_forward.1} parent=11 // pred_region
          _
        $region28: #{artr_forward.1} parent=11 // pred_fallthru
          _
        // Predicated region
        $region29: #{artr_forward.1} parent=11 // pred_check
          %p898 = pneg %p248
        $region30: #{artr_forward.1} parent=11 // pred_check_branch
          %900 = sbr.rel (%p898) target = $region32
        $region31: #{artr_forward.1} parent=11 // pred_region
          %902 = vsyncadd [#allocation5], 0
          %s904 = sshll.u32 %s13, 4
          %s905 = int_to_ptr.hbm [resolvable:$true] %s904
          %s906 = sshll.u32 [#allocation6], 4
          %s907 = int_to_ptr.vmem [resolvable:$true] %s906
          %909 = dma.hbm_to_vmem [thread:$0]  %s905, 16, %s907, [#allocation5]
        $region32: #{artr_forward.1} parent=11 // pred_fallthru
          _
        // Predicated region
        $region33: #{artr_forward.1} parent=11 // pred_check
          %p910 = pneg %p269
        $region34: #{artr_forward.1} parent=11 // pred_check_branch
          %912 = sbr.rel (%p910) target = $region36
        $region35: #{artr_forward.1} parent=11 // pred_region
          _
        $region36: #{artr_forward.1} parent=11 // pred_fallthru
          _
        // Predicated region
        $region37: #{artr_forward.1} parent=11 // pred_check
          %p913 = pneg %p290
        $region38: #{artr_forward.1} parent=11 // pred_check_branch
          %915 = sbr.rel (%p913) target = $region40
        $region39: #{artr_forward.1} parent=11 // pred_region
          %917 = vsyncadd [#allocation8], 0
          %s919 = sshll.u32 %s17, 4
          %s920 = int_to_ptr.hbm [resolvable:$true] %s919
          %s921 = sshll.u32 [#allocation7], 4
          %s922 = int_to_ptr.vmem [resolvable:$true] %s921
          %924 = dma.hbm_to_vmem [thread:$0]  %s920, 16, %s922, [#allocation8]
        $region40: #{artr_forward.1} parent=11 // pred_fallthru
          _
        // Predicated region
        $region41: #{artr_forward.1} parent=11 // pred_check
          %p925 = pneg %p311
        $region42: #{artr_forward.1} parent=11 // pred_check_branch
          %927 = sbr.rel (%p925) target = $region44
        $region43: #{artr_forward.1} parent=11 // pred_region
          _
        $region44: #{artr_forward.1} parent=11 // pred_fallthru
          _
        // Predicated region
        $region45: #{artr_forward.1} parent=11 // pred_check
          %p928 = pneg %p332
        $region46: #{artr_forward.1} parent=11 // pred_check_branch
          %930 = sbr.rel (%p928) target = $region48
        $region47: #{artr_forward.1} parent=11 // pred_region
          %932 = vsyncadd [#allocation8], 0
          %s934 = sshll.u32 %s21, 4
          %s935 = int_to_ptr.hbm [resolvable:$true] %s934
          %s936 = sshll.u32 [#allocation9], 4
          %s937 = int_to_ptr.vmem [resolvable:$true] %s936
          %939 = dma.hbm_to_vmem [thread:$0]  %s935, 16, %s937, [#allocation8]
        $region48: #{artr_forward.1} parent=11 // pred_fallthru
          _
        // Predicated region
        $region49: #{artr_forward.1} parent=11 // pred_check
          %p940 = pneg %p353
        $region50: #{artr_forward.1} parent=11 // pred_check_branch
          %942 = sbr.rel (%p940) target = $region52
        $region51: #{artr_forward.1} parent=11 // pred_region
          _
        $region52: #{artr_forward.1} parent=11 // pred_fallthru
          _
        // Predicated region
        $region53: #{artr_forward.1} parent=11 // pred_check
          %p943 = pneg %p374
        $region54: #{artr_forward.1} parent=11 // pred_check_branch
          %945 = sbr.rel (%p943) target = $region56
        $region55: #{artr_forward.1} parent=11 // pred_region
          %947 = vsyncadd [#allocation11], 0
          %s949 = sshll.u32 %s25, 4
          %s950 = int_to_ptr.hbm [resolvable:$true] %s949
          %s951 = sshll.u32 [#allocation10], 4
          %s952 = int_to_ptr.vmem [resolvable:$true] %s951
          %954 = dma.hbm_to_vmem [thread:$0]  %s950, 16, %s952, [#allocation11]
        $region56: #{artr_forward.1} parent=11 // pred_fallthru
          _
        // Predicated region
        $region57: #{artr_forward.1} parent=11 // pred_check
          %p955 = pneg %p395
        $region58: #{artr_forward.1} parent=11 // pred_check_branch
          %957 = sbr.rel (%p955) target = $region60
        $region59: #{artr_forward.1} parent=11 // pred_region
          _
        $region60: #{artr_forward.1} parent=11 // pred_fallthru
          _
        // Predicated region
        $region61: #{artr_forward.1} parent=11 // pred_check
          %p958 = pneg %p416
        $region62: #{artr_forward.1} parent=11 // pred_check_branch
          %960 = sbr.rel (%p958) target = $region64
        $region63: #{artr_forward.1} parent=11 // pred_region
          %962 = vsyncadd [#allocation11], 0
          %s964 = sshll.u32 %s29, 4
          %s965 = int_to_ptr.hbm [resolvable:$true] %s964
          %s966 = sshll.u32 [#allocation12], 4
          %s967 = int_to_ptr.vmem [resolvable:$true] %s966
          %969 = dma.hbm_to_vmem [thread:$0]  %s965, 16, %s967, [#allocation11]
        $region64: #{artr_forward.1} parent=11 // pred_fallthru
          _
        // Predicated region
        $region65: #{artr_forward.1} parent=11 // pred_check
          %p970 = pneg %p437
        $region66: #{artr_forward.1} parent=11 // pred_check_branch
          %972 = sbr.rel (%p970) target = $region68
        $region67: #{artr_forward.1} parent=11 // pred_region
          _
        $region68: #{artr_forward.1} parent=11 // pred_fallthru
          _
        // Predicated region
        $region69: #{artr_forward.1} parent=11 // pred_check
          %p973 = pneg %p458
        $region70: #{artr_forward.1} parent=11 // pred_check_branch
          %975 = sbr.rel (%p973) target = $region72
        $region71: #{artr_forward.1} parent=11 // pred_region
          %977 = vsyncadd [#allocation14], 0
          %s979 = sshll.u32 %s33, 4
          %s980 = int_to_ptr.hbm [resolvable:$true] %s979
          %s981 = sshll.u32 [#allocation13], 4
          %s982 = int_to_ptr.vmem [resolvable:$true] %s981
          %984 = dma.hbm_to_vmem [thread:$0]  %s980, 16, %s982, [#allocation14]
        $region72: #{artr_forward.1} parent=11 // pred_fallthru
          _
        // Predicated region
        $region73: #{artr_forward.1} parent=11 // pred_check
          %p985 = pneg %p479
        $region74: #{artr_forward.1} parent=11 // pred_check_branch
          %987 = sbr.rel (%p985) target = $region76
        $region75: #{artr_forward.1} parent=11 // pred_region
          _
        $region76: #{artr_forward.1} parent=11 // pred_fallthru
          _
        // Predicated region
        $region77: #{artr_forward.1} parent=11 // pred_check
          %p988 = pneg %p500
        $region78: #{artr_forward.1} parent=11 // pred_check_branch
          %990 = sbr.rel (%p988) target = $region80
        $region79: #{artr_forward.1} parent=11 // pred_region
          %992 = vsyncadd [#allocation14], 0
          %s994 = sshll.u32 %s37, 4
          %s995 = int_to_ptr.hbm [resolvable:$true] %s994
          %s996 = sshll.u32 [#allocation15], 4
          %s997 = int_to_ptr.vmem [resolvable:$true] %s996
          %999 = dma.hbm_to_vmem [thread:$0]  %s995, 16, %s997, [#allocation14]
        $region80: #{artr_forward.1} parent=11 // pred_fallthru
          _
        // Predicated region
        $region81: #{artr_forward.1} parent=11 // pred_check
          %p1000 = pneg %p521
        $region82: #{artr_forward.1} parent=11 // pred_check_branch
          %1002 = sbr.rel (%p1000) target = $region84
        $region83: #{artr_forward.1} parent=11 // pred_region
          %1004 = vsyncadd [#allocation17], 0
          %s1006 = sshll.u32 %s39, 4
          %s1007 = int_to_ptr.hbm [resolvable:$true] %s1006
          %s1008 = sshll.u32 [#allocation16], 4
          %s1009 = int_to_ptr.vmem [resolvable:$true] %s1008
          %1011 = dma.hbm_to_vmem [thread:$0]  %s1007, 16, %s1009, [#allocation17]
        $region84: #{artr_forward.1} parent=11 // pred_fallthru
          _
        // Predicated region
        $region85: #{artr_forward.1} parent=11 // pred_check
          %p1012 = pneg %p542
        $region86: #{artr_forward.1} parent=11 // pred_check_branch
          %1014 = sbr.rel (%p1012) target = $region88
        $region87: #{artr_forward.1} parent=11 // pred_region
          %1016 = vsyncadd [#allocation17], 0
          %s1018 = sshll.u32 %s41, 4
          %s1019 = int_to_ptr.hbm [resolvable:$true] %s1018
          %s1020 = sshll.u32 [#allocation18], 4
          %s1021 = int_to_ptr.vmem [resolvable:$true] %s1020
          %1023 = dma.hbm_to_vmem [thread:$0]  %s1019, 16, %s1021, [#allocation17]
        $region88: #{artr_forward.1} parent=11 // pred_fallthru
          _
        // Predicated region
        $region89: #{artr_forward.1} parent=11 // pred_check
          %p1024 = pneg %p563
        $region90: #{artr_forward.1} parent=11 // pred_check_branch
          %1026 = sbr.rel (%p1024) target = $region92
        $region91: #{artr_forward.1} parent=11 // pred_region
          %1028 = vsyncadd [#allocation20], 0
          %s1029 = sshll.u32 %s43, 4
          %s1030 = int_to_ptr.hbm [resolvable:$true] %s1029
          %s1031 = sshll.u32 [#allocation19], 4
          %s1032 = int_to_ptr.vmem [resolvable:$true] %s1031
          %1037 = dma.hbm_to_vmem [thread:$0]  %s1030, 256, %s1032, [#allocation20], 64, 64, 4
        $region92: #{artr_forward.1} parent=11 // pred_fallthru
          _
        // Predicated region
        $region93: #{artr_forward.1} parent=11 // pred_check
          %p1038 = pneg %p584
        $region94: #{artr_forward.1} parent=11 // pred_check_branch
          %1040 = sbr.rel (%p1038) target = $region96
        $region95: #{artr_forward.1} parent=11 // pred_region
          %1042 = vsyncadd [#allocation20], 0
          %s1044 = sshll.u32 %s45, 4
          %s1045 = int_to_ptr.hbm [resolvable:$true] %s1044
          %s1046 = sshll.u32 [#allocation21], 4
          %s1047 = int_to_ptr.vmem [resolvable:$true] %s1046
          %1049 = dma.hbm_to_vmem [thread:$0]  %s1045, 16, %s1047, [#allocation20]
        $region96: #{artr_forward.1} parent=11 // pred_fallthru
          _
        // Predicated region
        $region97: #{artr_forward.1} parent=11 // pred_check
          %p1050 = pneg %p605
        $region98: #{artr_forward.1} parent=11 // pred_check_branch
          %1052 = sbr.rel (%p1050) target = $region100
        $region99: #{artr_forward.1} parent=11 // pred_region
          %1054 = vsyncadd [#allocation23], 0
          %s1055 = sshll.u32 %s47, 4
          %s1056 = int_to_ptr.hbm [resolvable:$true] %s1055
          %s1057 = sshll.u32 [#allocation22], 4
          %s1058 = int_to_ptr.vmem [resolvable:$true] %s1057
          %1063 = dma.hbm_to_vmem [thread:$0]  %s1056, 256, %s1058, [#allocation23], 64, 64, 4
        $region100: #{artr_forward.1} parent=11 // pred_fallthru
          _
        // Predicated region
        $region101: #{artr_forward.1} parent=11 // pred_check
          %p1064 = pneg %p626
        $region102: #{artr_forward.1} parent=11 // pred_check_branch
          %1066 = sbr.rel (%p1064) target = $region104
        $region103: #{artr_forward.1} parent=11 // pred_region
          %1068 = vsyncadd [#allocation23], 0
          %s1070 = sshll.u32 %s49, 4
          %s1071 = int_to_ptr.hbm [resolvable:$true] %s1070
          %s1072 = sshll.u32 [#allocation24], 4
          %s1073 = int_to_ptr.vmem [resolvable:$true] %s1072
          %1075 = dma.hbm_to_vmem [thread:$0]  %s1071, 16, %s1073, [#allocation23]
        $region104: #{artr_forward.1} parent=11 // pred_fallthru
          _
        // Predicated region
        $region105: #{artr_forward.1} parent=11 // pred_check
          %p1076 = pneg %p647
        $region106: #{artr_forward.1} parent=11 // pred_check_branch
          %1078 = sbr.rel (%p1076) target = $region108
        $region107: #{artr_forward.1} parent=11 // pred_region
          %1080 = vsyncadd [#allocation26], 0
          %s1081 = sshll.u32 %s51, 4
          %s1082 = int_to_ptr.hbm [resolvable:$true] %s1081
          %s1083 = sshll.u32 [#allocation25], 4
          %s1084 = int_to_ptr.vmem [resolvable:$true] %s1083
          %1089 = dma.hbm_to_vmem [thread:$0]  %s1082, 256, %s1084, [#allocation26], 64, 64, 4
        $region108: #{artr_forward.1} parent=11 // pred_fallthru
          _
        // Predicated region
        $region109: #{artr_forward.1} parent=11 // pred_check
          %p1090 = pneg %p668
        $region110: #{artr_forward.1} parent=11 // pred_check_branch
          %1092 = sbr.rel (%p1090) target = $region112
        $region111: #{artr_forward.1} parent=11 // pred_region
          %1094 = vsyncadd [#allocation26], 0
          %s1096 = sshll.u32 %s53, 4
          %s1097 = int_to_ptr.hbm [resolvable:$true] %s1096
          %s1098 = sshll.u32 [#allocation27], 4
          %s1099 = int_to_ptr.vmem [resolvable:$true] %s1098
          %1101 = dma.hbm_to_vmem [thread:$0]  %s1097, 16, %s1099, [#allocation26]
        $region112: #{artr_forward.1} parent=11 // pred_fallthru
          _
        // Predicated region
        $region113: #{artr_forward.1} parent=11 // pred_check
          %p1102 = pneg %p689
        $region114: #{artr_forward.1} parent=11 // pred_check_branch
          %1104 = sbr.rel (%p1102) target = $region116
        $region115: #{artr_forward.1} parent=11 // pred_region
          %1106 = vsyncadd [#allocation29], 0
          %s1108 = sshll.u32 %s55, 4
          %s1109 = int_to_ptr.hbm [resolvable:$true] %s1108
          %s1110 = sshll.u32 [#allocation28], 4
          %s1111 = int_to_ptr.vmem [resolvable:$true] %s1110
          %1113 = dma.hbm_to_vmem [thread:$0]  %s1109, 16, %s1111, [#allocation29]
        $region116: #{artr_forward.1} parent=11 // pred_fallthru
          _
        // Predicated region
        $region117: #{artr_forward.1} parent=11 // pred_check
          %p1114 = pneg %p710
        $region118: #{artr_forward.1} parent=11 // pred_check_branch
          %1116 = sbr.rel (%p1114) target = $region120
        $region119: #{artr_forward.1} parent=11 // pred_region
          %1118 = vsyncadd [#allocation29], 0
          %s1120 = sshll.u32 %s57, 4
          %s1121 = int_to_ptr.hbm [resolvable:$true] %s1120
          %s1122 = sshll.u32 [#allocation30], 4
          %s1123 = int_to_ptr.vmem [resolvable:$true] %s1122
          %1125 = dma.hbm_to_vmem [thread:$0]  %s1121, 16, %s1123, [#allocation29]
        $region120: #{artr_forward.1} parent=11 // pred_fallthru
          _
        // Predicated region
        $region121: #{artr_forward.1} parent=11 // pred_check
          %p1126 = pneg %p731
        $region122: #{artr_forward.1} parent=11 // pred_check_branch
          %1128 = sbr.rel (%p1126) target = $region124
        $region123: #{artr_forward.1} parent=11 // pred_region
          _
        $region124: #{artr_forward.1} parent=11 // pred_fallthru
          _
        // Predicated region
        $region125: #{artr_forward.1} parent=11 // pred_check
          %p1129 = pneg %p752
        $region126: #{artr_forward.1} parent=11 // pred_check_branch
          %1131 = sbr.rel (%p1129) target = $region128
        $region127: #{artr_forward.1} parent=11 // pred_region
          %1133 = vsyncadd [#allocation32], 0
          %s1135 = sshll.u32 %s61, 4
          %s1136 = int_to_ptr.hbm [resolvable:$true] %s1135
          %s1137 = sshll.u32 [#allocation31], 4
          %s1138 = int_to_ptr.vmem [resolvable:$true] %s1137
          %1140 = dma.hbm_to_vmem [thread:$0]  %s1136, 16, %s1138, [#allocation32]
        $region128: #{artr_forward.1} parent=11 // pred_fallthru
          _
        // Predicated region
        $region129: #{artr_forward.1} parent=11 // pred_check
          %p1141 = pneg %p773
        $region130: #{artr_forward.1} parent=11 // pred_check_branch
          %1143 = sbr.rel (%p1141) target = $region132
        $region131: #{artr_forward.1} parent=11 // pred_region
          _
        $region132: #{artr_forward.1} parent=11 // pred_fallthru
          _
        // Predicated region
        $region133: #{artr_forward.1} parent=11 // pred_check
          %p1144 = pneg %p794
        $region134: #{artr_forward.1} parent=11 // pred_check_branch
          %1146 = sbr.rel (%p1144) target = $region136
        $region135: #{artr_forward.1} parent=11 // pred_region
          %1148 = vsyncadd [#allocation32], 0
          %s1150 = sshll.u32 %s65, 4
          %s1151 = int_to_ptr.hbm [resolvable:$true] %s1150
          %s1152 = sshll.u32 [#allocation33], 4
          %s1153 = int_to_ptr.vmem [resolvable:$true] %s1152
          %1155 = dma.hbm_to_vmem [thread:$0]  %s1151, 16, %s1153, [#allocation32]
        $region136: #{artr_forward.1} parent=11 // pred_fallthru
          _
        // Predicated region
        $region137: #{artr_forward.1} parent=11 // pred_check
          %p1156 = pneg %p815
        $region138: #{artr_forward.1} parent=11 // pred_check_branch
          %1158 = sbr.rel (%p1156) target = $region140
        $region139: #{artr_forward.1} parent=11 // pred_region
          %1160 = vsyncadd [#allocation35], 0
          %s1162 = sshll.u32 %s67, 4
          %s1163 = int_to_ptr.hbm [resolvable:$true] %s1162
          %s1164 = sshll.u32 [#allocation34], 4
          %s1165 = int_to_ptr.vmem [resolvable:$true] %s1164
          %1167 = dma.hbm_to_vmem [thread:$0]  %s1163, 16, %s1165, [#allocation35]
        $region140: #{artr_forward.1} parent=11 // pred_fallthru
          _
        // Predicated region
        $region141: #{artr_forward.1} parent=11 // pred_check
          %p1168 = pneg %p836
        $region142: #{artr_forward.1} parent=11 // pred_check_branch
          %1170 = sbr.rel (%p1168) target = $region144
        $region143: #{artr_forward.1} parent=11 // pred_region
          %1172 = vsyncadd [#allocation35], 0
          %s1174 = sshll.u32 %s69, 4
          %s1175 = int_to_ptr.hbm [resolvable:$true] %s1174
          %s1176 = sshll.u32 [#allocation36], 4
          %s1177 = int_to_ptr.vmem [resolvable:$true] %s1176
          %1179 = dma.hbm_to_vmem [thread:$0]  %s1175, 16, %s1177, [#allocation35]
        $region144: #{artr_forward.1} parent=11 // pred_fallthru
          _
      $region12: #{artr_forward.1} parent=5 // pred_fallthru
        _
      %p1180 = scmp.lt.s32.totalorder %s91, 2
      // Predicated region
      $region145: #{artr_forward.1} parent=5 // pred_check
        %p1181 = pneg %p1180
      $region146: #{artr_forward.1} parent=5 // pred_check_branch
        %1183 = sbr.rel (%p1181) target = $region148
      $region147: #{artr_forward.1} parent=5 // pred_region
        // Predicated region
        $region149: #{artr_forward.1} parent=147 // pred_check
          %p1184 = pneg %p111
        $region150: #{artr_forward.1} parent=147 // pred_check_branch
          %1186 = sbr.rel (%p1184) target = $region152
        $region151: #{artr_forward.1} parent=147 // pred_region
          %s1187 = sand.u32 %s101, 1
          %s1188 = scalar_lea.sflag [#allocation3], %s1187
          %s1189 = sand.u32 %s101, 1
          %s1190 = scalar_lea.vmem [#allocation2], %s1189
          %1192 = vsyncadd %s1188, 0
          %s1193 = scalar_lea.hbm %s1, %s91
          %s1195 = sshll.u32 %s1193, 4
          %s1196 = int_to_ptr.hbm [resolvable:$true] %s1195
          %s1197 = sshll.u32 %s1190, 4
          %s1198 = int_to_ptr.vmem [resolvable:$true] %s1197
          %1200 = dma.hbm_to_vmem [thread:$0]  %s1196, 16, %s1198, %s1188
        $region152: #{artr_forward.1} parent=147 // pred_fallthru
          _
        // Predicated region
        $region153: #{artr_forward.1} parent=147 // pred_check
          %p1201 = pneg %p137
        $region154: #{artr_forward.1} parent=147 // pred_check_branch
          %1203 = sbr.rel (%p1201) target = $region156
        $region155: #{artr_forward.1} parent=147 // pred_region
          %p1204 = scmp.lt.s32.totalorder %s91, 1
          %s1205 = scalar_select %p1204, %s91, 1
          %s1206 = smul.addr %s1205, 8
          %s1207 = scalar_lea.vmem %s3, %s1206
        $region156: #{artr_forward.1} parent=147 // pred_fallthru
          _
      $region148: #{artr_forward.1} parent=5 // pred_fallthru
        _
      %p1208 = scmp.le.s32.totalorder 1, %s91
      %p1209 = scmp.lt.s32.totalorder %s91, 3
      %p1210 = pnand %p1208, %p1209
      %p1211 = pneg %p1210
      // Predicated region
      $region157: #{artr_forward.1} parent=5 // pred_check
        _
      $region158: #{artr_forward.1} parent=5 // pred_check_branch
        %1213 = sbr.rel (%p1210) target = $region160
      $region159: #{artr_forward.1} parent=5 // pred_region
        %s1214 = ssub.s32 %s91, 1
        %s1215 = sand.u32 %s104, 1
        %s1216 = scalar_lea.sflag [#allocation3], %s1215
        %s1217 = sand.u32 %s104, 1
        %s1218 = scalar_lea.vmem [#allocation2], %s1217
        // Predicated region
        $region161: #{artr_forward.1} parent=159 // pred_check
          %p1219 = pneg %p117
        $region162: #{artr_forward.1} parent=159 // pred_check_branch
          %1221 = sbr.rel (%p1219) target = $region164
        $region163: #{artr_forward.1} parent=159 // pred_region
          %1223 = dma.done %s1216, 16
        $region164: #{artr_forward.1} parent=159 // pred_fallthru
          _
        // Predicated region
        $region165: #{artr_forward.1} parent=159 // pred_check
          %p1224 = pneg %p206
        $region166: #{artr_forward.1} parent=159 // pred_check_branch
          %1226 = sbr.rel (%p1224) target = $region168
        $region167: #{artr_forward.1} parent=159 // pred_region
          %1228 = dma.done [#allocation5], 16
        $region168: #{artr_forward.1} parent=159 // pred_fallthru
          _
        // Predicated region
        $region169: #{artr_forward.1} parent=159 // pred_check
          %p1229 = pneg %p248
        $region170: #{artr_forward.1} parent=159 // pred_check_branch
          %1231 = sbr.rel (%p1229) target = $region172
        $region171: #{artr_forward.1} parent=159 // pred_region
          %1233 = dma.done [#allocation5], 16
        $region172: #{artr_forward.1} parent=159 // pred_fallthru
          _
        // Predicated region
        $region173: #{artr_forward.1} parent=159 // pred_check
          %p1234 = pneg %p290
        $region174: #{artr_forward.1} parent=159 // pred_check_branch
          %1236 = sbr.rel (%p1234) target = $region176
        $region175: #{artr_forward.1} parent=159 // pred_region
          %1238 = dma.done [#allocation8], 16
        $region176: #{artr_forward.1} parent=159 // pred_fallthru
          _
        // Predicated region
        $region177: #{artr_forward.1} parent=159 // pred_check
          %p1239 = pneg %p332
        $region178: #{artr_forward.1} parent=159 // pred_check_branch
          %1241 = sbr.rel (%p1239) target = $region180
        $region179: #{artr_forward.1} parent=159 // pred_region
          %1243 = dma.done [#allocation8], 16
        $region180: #{artr_forward.1} parent=159 // pred_fallthru
          _
        // Predicated region
        $region181: #{artr_forward.1} parent=159 // pred_check
          %p1244 = pneg %p374
        $region182: #{artr_forward.1} parent=159 // pred_check_branch
          %1246 = sbr.rel (%p1244) target = $region184
        $region183: #{artr_forward.1} parent=159 // pred_region
          %1248 = dma.done [#allocation11], 16
        $region184: #{artr_forward.1} parent=159 // pred_fallthru
          _
        // Predicated region
        $region185: #{artr_forward.1} parent=159 // pred_check
          %p1249 = pneg %p416
        $region186: #{artr_forward.1} parent=159 // pred_check_branch
          %1251 = sbr.rel (%p1249) target = $region188
        $region187: #{artr_forward.1} parent=159 // pred_region
          %1253 = dma.done [#allocation11], 16
        $region188: #{artr_forward.1} parent=159 // pred_fallthru
          _
        // Predicated region
        $region189: #{artr_forward.1} parent=159 // pred_check
          %p1254 = pneg %p458
        $region190: #{artr_forward.1} parent=159 // pred_check_branch
          %1256 = sbr.rel (%p1254) target = $region192
        $region191: #{artr_forward.1} parent=159 // pred_region
          %1258 = dma.done [#allocation14], 16
        $region192: #{artr_forward.1} parent=159 // pred_fallthru
          _
        // Predicated region
        $region193: #{artr_forward.1} parent=159 // pred_check
          %p1259 = pneg %p500
        $region194: #{artr_forward.1} parent=159 // pred_check_branch
          %1261 = sbr.rel (%p1259) target = $region196
        $region195: #{artr_forward.1} parent=159 // pred_region
          %1263 = dma.done [#allocation14], 16
        $region196: #{artr_forward.1} parent=159 // pred_fallthru
          _
        // Predicated region
        $region197: #{artr_forward.1} parent=159 // pred_check
          %p1264 = pneg %p521
        $region198: #{artr_forward.1} parent=159 // pred_check_branch
          %1266 = sbr.rel (%p1264) target = $region200
        $region199: #{artr_forward.1} parent=159 // pred_region
          %1268 = dma.done [#allocation17], 16
        $region200: #{artr_forward.1} parent=159 // pred_fallthru
          _
        // Predicated region
        $region201: #{artr_forward.1} parent=159 // pred_check
          %p1269 = pneg %p542
        $region202: #{artr_forward.1} parent=159 // pred_check_branch
          %1271 = sbr.rel (%p1269) target = $region204
        $region203: #{artr_forward.1} parent=159 // pred_region
          %1273 = dma.done [#allocation17], 16
        $region204: #{artr_forward.1} parent=159 // pred_fallthru
          _
        // Predicated region
        $region205: #{artr_forward.1} parent=159 // pred_check
          %p1274 = pneg %p563
        $region206: #{artr_forward.1} parent=159 // pred_check_branch
          %1276 = sbr.rel (%p1274) target = $region208
        $region207: #{artr_forward.1} parent=159 // pred_region
          %1278 = dma.done [#allocation20], 256
        $region208: #{artr_forward.1} parent=159 // pred_fallthru
          _
        // Predicated region
        $region209: #{artr_forward.1} parent=159 // pred_check
          %p1279 = pneg %p584
        $region210: #{artr_forward.1} parent=159 // pred_check_branch
          %1281 = sbr.rel (%p1279) target = $region212
        $region211: #{artr_forward.1} parent=159 // pred_region
          %1283 = dma.done [#allocation20], 16
        $region212: #{artr_forward.1} parent=159 // pred_fallthru
          _
        // Predicated region
        $region213: #{artr_forward.1} parent=159 // pred_check
          %p1284 = pneg %p605
        $region214: #{artr_forward.1} parent=159 // pred_check_branch
          %1286 = sbr.rel (%p1284) target = $region216
        $region215: #{artr_forward.1} parent=159 // pred_region
          %1288 = dma.done [#allocation23], 256
        $region216: #{artr_forward.1} parent=159 // pred_fallthru
          _
        // Predicated region
        $region217: #{artr_forward.1} parent=159 // pred_check
          %p1289 = pneg %p626
        $region218: #{artr_forward.1} parent=159 // pred_check_branch
          %1291 = sbr.rel (%p1289) target = $region220
        $region219: #{artr_forward.1} parent=159 // pred_region
          %1293 = dma.done [#allocation23], 16
        $region220: #{artr_forward.1} parent=159 // pred_fallthru
          _
        // Predicated region
        $region221: #{artr_forward.1} parent=159 // pred_check
          %p1294 = pneg %p647
        $region222: #{artr_forward.1} parent=159 // pred_check_branch
          %1296 = sbr.rel (%p1294) target = $region224
        $region223: #{artr_forward.1} parent=159 // pred_region
          %1298 = dma.done [#allocation26], 256
        $region224: #{artr_forward.1} parent=159 // pred_fallthru
          _
        // Predicated region
        $region225: #{artr_forward.1} parent=159 // pred_check
          %p1299 = pneg %p668
        $region226: #{artr_forward.1} parent=159 // pred_check_branch
          %1301 = sbr.rel (%p1299) target = $region228
        $region227: #{artr_forward.1} parent=159 // pred_region
          %1303 = dma.done [#allocation26], 16
        $region228: #{artr_forward.1} parent=159 // pred_fallthru
          _
        // Predicated region
        $region229: #{artr_forward.1} parent=159 // pred_check
          %p1304 = pneg %p689
        $region230: #{artr_forward.1} parent=159 // pred_check_branch
          %1306 = sbr.rel (%p1304) target = $region232
        $region231: #{artr_forward.1} parent=159 // pred_region
          %1308 = dma.done [#allocation29], 16
        $region232: #{artr_forward.1} parent=159 // pred_fallthru
          _
        // Predicated region
        $region233: #{artr_forward.1} parent=159 // pred_check
          %p1309 = pneg %p710
        $region234: #{artr_forward.1} parent=159 // pred_check_branch
          %1311 = sbr.rel (%p1309) target = $region236
        $region235: #{artr_forward.1} parent=159 // pred_region
          %1313 = dma.done [#allocation29], 16
        $region236: #{artr_forward.1} parent=159 // pred_fallthru
          _
        // Predicated region
        $region237: #{artr_forward.1} parent=159 // pred_check
          %p1314 = pneg %p752
        $region238: #{artr_forward.1} parent=159 // pred_check_branch
          %1316 = sbr.rel (%p1314) target = $region240
        $region239: #{artr_forward.1} parent=159 // pred_region
          %1318 = dma.done [#allocation32], 16
        $region240: #{artr_forward.1} parent=159 // pred_fallthru
          _
        // Predicated region
        $region241: #{artr_forward.1} parent=159 // pred_check
          %p1319 = pneg %p794
        $region242: #{artr_forward.1} parent=159 // pred_check_branch
          %1321 = sbr.rel (%p1319) target = $region244
        $region243: #{artr_forward.1} parent=159 // pred_region
          %1323 = dma.done [#allocation32], 16
        $region244: #{artr_forward.1} parent=159 // pred_fallthru
          _
        // Predicated region
        $region245: #{artr_forward.1} parent=159 // pred_check
          %p1324 = pneg %p815
        $region246: #{artr_forward.1} parent=159 // pred_check_branch
          %1326 = sbr.rel (%p1324) target = $region248
        $region247: #{artr_forward.1} parent=159 // pred_region
          %1328 = dma.done [#allocation35], 16
        $region248: #{artr_forward.1} parent=159 // pred_fallthru
          _
        // Predicated region
        $region249: #{artr_forward.1} parent=159 // pred_check
          %p1329 = pneg %p836
        $region250: #{artr_forward.1} parent=159 // pred_check_branch
          %1331 = sbr.rel (%p1329) target = $region252
        $region251: #{artr_forward.1} parent=159 // pred_region
          %1333 = dma.done [#allocation35], 16
        $region252: #{artr_forward.1} parent=159 // pred_fallthru
          _
        %s1334 = sand.u32 %s104, 1
        %s1335 = scalar_lea.sflag [#allocation3], %s1334
        %s1336 = sand.u32 %s104, 1
        %s1337 = scalar_lea.vmem [#allocation2], %s1336
        %p1338 = pneg %p117
        %p1339 = pneg %p114
        %p1340 = scmp.lt.s32.totalorder %s96, 1
        %s1341 = scalar_select %p1340, %s96, 1
        %s1342 = smul.addr %s1341, 8
        %s1343 = scalar_lea.vmem %s3, %s1342
        %p1344 = pneg %p143
        %p1345 = pneg %p140
        %p1346 = pneg %p164
        %p1347 = pneg %p161
        %p1348 = pneg %p185
        %p1349 = pneg %p182
        %p1350 = pneg %p206
        %p1351 = pneg %p203
        %p1352 = pneg %p227
        %p1353 = pneg %p224
        %p1354 = pneg %p248
        %p1355 = pneg %p245
        %p1356 = pneg %p269
        %p1357 = pneg %p266
        %p1358 = pneg %p290
        %p1359 = pneg %p287
        %p1360 = pneg %p311
        %p1361 = pneg %p308
        %p1362 = pneg %p332
        %p1363 = pneg %p329
        %p1364 = pneg %p353
        %p1365 = pneg %p350
        %p1366 = pneg %p374
        %p1367 = pneg %p371
        %p1368 = pneg %p395
        %p1369 = pneg %p392
        %p1370 = pneg %p416
        %p1371 = pneg %p413
        %p1372 = pneg %p437
        %p1373 = pneg %p434
        %p1374 = pneg %p458
        %p1375 = pneg %p455
        %p1376 = pneg %p479
        %p1377 = pneg %p476
        %p1378 = pneg %p500
        %p1379 = pneg %p497
        %p1380 = pneg %p521
        %p1381 = pneg %p518
        %p1382 = pneg %p542
        %p1383 = pneg %p539
        %p1384 = pneg %p563
        %p1385 = pneg %p560
        %p1386 = pneg %p584
        %p1387 = pneg %p581
        %p1388 = pneg %p605
        %p1389 = pneg %p602
        %p1390 = pneg %p626
        %p1391 = pneg %p623
        %p1392 = pneg %p647
        %p1393 = pneg %p644
        %p1394 = pneg %p668
        %p1395 = pneg %p665
        %p1396 = pneg %p689
        %p1397 = pneg %p686
        %p1398 = pneg %p710
        %p1399 = pneg %p707
        %p1400 = pneg %p731
        %p1401 = pneg %p728
        %p1402 = pneg %p752
        %p1403 = pneg %p749
        %p1404 = pneg %p773
        %p1405 = pneg %p770
        %p1406 = pneg %p794
        %p1407 = pneg %p791
        %p1408 = pneg %p815
        %p1409 = pneg %p812
        %p1410 = pneg %p836
        %p1411 = pneg %p833
        %p1412 = pneg %p862
        %p1413 = pneg %p859
        %p1414 = scmp.lt.s32.totalorder %s96, 1
        %s1415 = scalar_select %p1414, %s96, 1
        %s1416 = smul.addr %s1415, 2
        %s1417 = scalar_lea.vmem %s71, %s1416
        %p1418 = scmp.lt.s32.totalorder %s96, 1
        %s1419 = scalar_select %p1418, %s96, 1
        %s1420 = smul.addr %s1419, 8
        %s1421 = scalar_lea.vmem %s3, %s1420
        %p1422 = scmp.lt.s32.totalorder %s96, 1
        %s1423 = scalar_select %p1422, %s96, 1
        %s1424 = smul.addr %s1423, 2
        %s1425 = scalar_lea.vmem %s71, %s1424
        %v1427 = vld [vmem:[%s1218] sm:$0x1]
        %v1428 = vld [vmem:[%s1421] sm:$0xff]
        %v1430 = vrot.slane %v1428, 7
        %vm1432 = vcmask 1040384
        %v1433 = vsel %vm1432, %v1427, %v1430
        %v1434 = vsel %vm1432, %v1430, 0.0
        %v1435 = vlaneseq
        %v1436 = vand.u32 %v1435, 127
        %vm1437 = vcmp.lt.s32.totalorder %v1436, 9
        %v1438 = vsel %vm1437, 0.0, -1e+30
        %v1439 = vld [vmem:[%s7] sm:$0xf]
        %v1440 = vld [vmem:[%s7 + $0x4] sm:$0xf]
        %v1441 = vld [vmem:[%s7 + $0x8] sm:$0xf]
        %v1442 = vld [vmem:[%s7 + $0xc] sm:$0xf]
        %v1443 = vld [vmem:[#allocation4] sm:$0x1]
        %v1444 = vpack.c.bf16 %v1434, %v1433
        %v1446 = vperm.slane %v1443, 0
        %v1452 = vunpack.c.l.b16 %v1439
        %v1453 = vunpack.c.l.b16 %v1440
        %v1454 = vunpack.c.l.b16 %v1441
        %v1455 = vunpack.c.l.b16 %v1442
        %v1456 = vpack.c.b16 %v1453, %v1452
        %v1457 = vpack.c.b16 %v1455, %v1454
        %vm1460 = vcmask 261120
        %v1462 = vsel %vm1460, %v1444, 0
        %1464 = vmatpush.bf16.msra.mxu0 0
        %1465 = vmatpush.bf16.msra.mxu0 0
        %1466 = vmatpush.bf16.msra.mxu0 0
        %1467 = vmatpush.bf16.msra.mxu0 0
        %1468 = vmatpush.bf16.msra.mxu0 0
        %1469 = vmatpush.bf16.msra.mxu0 0
        %1470 = vmatpush.bf16.msra.mxu0 %v1457
        %1471 = vmatpush.bf16.msra.mxu0 %v1456
        %1472 = vmatmul.bf16.gmra.mxu0 %v1462
        %v1473 = vpop.f32.mrf.mxu0
        %v1474 = vadd.f32 %v1446, %v1473
        %v1475 = vpop.f32.mrf.mxu0
        %v1476 = vadd.f32 %v1446, %v1475
        %1477 = vdwg.mxu0
        %1480 = vrot.lane.b32.xlu0 %v1474, 120
        %v1481 = vpop.permute.xlu0 %1480
        %1482 = vrot.lane.b32.xlu0 %v1476, 120
        %v1483 = vpop.permute.xlu0 %1482
        %1486 = vrot.lane.b32.xlu0 %v1474, 112
        %v1487 = vpop.permute.xlu0 %1486
        %1488 = vrot.lane.b32.xlu0 %v1476, 112
        %v1489 = vpop.permute.xlu0 %1488
        %1492 = vrot.lane.b32.xlu0 %v1474, 104
        %v1493 = vpop.permute.xlu0 %1492
        %1494 = vrot.lane.b32.xlu0 %v1476, 104
        %v1495 = vpop.permute.xlu0 %1494
        %v1498 = vrot.slane %v1487, 4
        %vm1499 = vcmask 1047556
        %v1500 = vsel %vm1499, %v1498, %v1474
        %v1501 = vrot.slane %v1474, 4
        %v1502 = vsel %vm1499, %v1487, %v1501
        %v1504 = vunpack.c.l.s4 1983009808
        %v1505 = vunpack.c.0.s8 %v1504
        %v1506 = vperm.slane %v1500, %v1505
        %v1508 = vunpack.c.l.s4 1983009808
        %v1509 = vunpack.c.0.s8 %v1508
        %v1510 = vperm.slane %v1502, %v1509
        %v1511 = vrot.slane %v1493, 4
        %v1512 = vsel %vm1499, %v1511, %v1481
        %v1513 = vrot.slane %v1481, 4
        %v1514 = vsel %vm1499, %v1493, %v1513
        %v1516 = vunpack.c.l.s4 1983009808
        %v1517 = vunpack.c.0.s8 %v1516
        %v1518 = vperm.slane %v1512, %v1517
        %v1520 = vunpack.c.l.s4 1983009808
        %v1521 = vunpack.c.0.s8 %v1520
        %v1522 = vperm.slane %v1514, %v1521
        %v1523 = vrot.slane %v1518, 4
        %v1524 = vsel %vm1499, %v1523, %v1506
        %v1525 = vrot.slane %v1506, 4
        %v1526 = vsel %vm1499, %v1518, %v1525
        %v1528 = vunpack.c.l.s4 1934713408
        %v1529 = vunpack.c.0.s8 %v1528
        %v1530 = vperm.slane %v1524, %v1529
        %v1532 = vunpack.c.l.s4 1934713408
        %v1533 = vunpack.c.0.s8 %v1532
        %v1534 = vperm.slane %v1526, %v1533
        %v1535 = vrot.slane %v1522, 4
        %v1536 = vsel %vm1499, %v1535, %v1510
        %v1537 = vrot.slane %v1510, 4
        %v1538 = vsel %vm1499, %v1522, %v1537
        %v1540 = vunpack.c.l.s4 1934713408
        %v1541 = vunpack.c.0.s8 %v1540
        %v1542 = vperm.slane %v1536, %v1541
        %v1544 = vunpack.c.l.s4 1934713408
        %v1545 = vunpack.c.0.s8 %v1544
        %v1546 = vperm.slane %v1538, %v1545
        %v1547 = vrot.slane %v1530, 4
        %v1548 = vsel %vm1499, 0.0, %v1547
        %v1549 = vrot.slane %v1534, 4
        %v1550 = vsel %vm1499, 0.0, %v1549
        %v1551 = vrot.slane %v1542, 4
        %v1552 = vsel %vm1499, 0.0, %v1551
        %v1553 = vrot.slane %v1546, 4
        %v1554 = vsel %vm1499, 0.0, %v1553
        %v1555 = vrot.slane %v1489, 4
        %v1556 = vsel %vm1499, %v1555, %v1476
        %v1557 = vrot.slane %v1476, 4
        %v1558 = vsel %vm1499, %v1489, %v1557
        %v1560 = vunpack.c.l.s4 1983009808
        %v1561 = vunpack.c.0.s8 %v1560
        %v1562 = vperm.slane %v1556, %v1561
        %v1564 = vunpack.c.l.s4 1983009808
        %v1565 = vunpack.c.0.s8 %v1564
        %v1566 = vperm.slane %v1558, %v1565
        %v1567 = vrot.slane %v1495, 4
        %v1568 = vsel %vm1499, %v1567, %v1483
        %v1569 = vrot.slane %v1483, 4
        %v1570 = vsel %vm1499, %v1495, %v1569
        %v1572 = vunpack.c.l.s4 1983009808
        %v1573 = vunpack.c.0.s8 %v1572
        %v1574 = vperm.slane %v1568, %v1573
        %v1576 = vunpack.c.l.s4 1983009808
        %v1577 = vunpack.c.0.s8 %v1576
        %v1578 = vperm.slane %v1570, %v1577
        %v1579 = vrot.slane %v1574, 4
        %v1580 = vsel %vm1499, %v1579, %v1562
        %v1581 = vrot.slane %v1562, 4
        %v1582 = vsel %vm1499, %v1574, %v1581
        %v1584 = vunpack.c.l.s4 1934713408
        %v1585 = vunpack.c.0.s8 %v1584
        %v1586 = vperm.slane %v1580, %v1585
        %v1588 = vunpack.c.l.s4 1934713408
        %v1589 = vunpack.c.0.s8 %v1588
        %v1590 = vperm.slane %v1582, %v1589
        %v1591 = vrot.slane %v1578, 4
        %v1592 = vsel %vm1499, %v1591, %v1566
        %v1593 = vrot.slane %v1566, 4
        %v1594 = vsel %vm1499, %v1578, %v1593
        %v1596 = vunpack.c.l.s4 1934713408
        %v1597 = vunpack.c.0.s8 %v1596
        %v1598 = vperm.slane %v1592, %v1597
        %v1600 = vunpack.c.l.s4 1934713408
        %v1601 = vunpack.c.0.s8 %v1600
        %v1602 = vperm.slane %v1594, %v1601
        %v1603 = vrot.slane %v1586, 4
        %v1604 = vsel %vm1499, 0.0, %v1603
        %v1605 = vrot.slane %v1590, 4
        %v1606 = vsel %vm1499, 0.0, %v1605
        %v1607 = vrot.slane %v1598, 4
        %v1608 = vsel %vm1499, 0.0, %v1607
        %v1609 = vrot.slane %v1602, 4
        %v1610 = vsel %vm1499, 0.0, %v1609
        %v1611 = vpack.c.bf16 %v1530, %v1530
        %v1612 = vpack.c.bf16 %v1548, %v1548
        %v1613 = vpack.c.bf16 %v1534, %v1534
        %v1614 = vpack.c.bf16 %v1550, %v1550
        %v1615 = vpack.c.bf16 %v1542, %v1542
        %v1616 = vpack.c.bf16 %v1552, %v1552
        %v1617 = vpack.c.bf16 %v1546, %v1546
        %v1618 = vpack.c.bf16 %v1554, %v1554
        %v1619 = vpack.c.bf16 %v1586, %v1586
        %v1620 = vpack.c.bf16 %v1604, %v1604
        %v1621 = vpack.c.bf16 %v1590, %v1590
        %v1622 = vpack.c.bf16 %v1606, %v1606
        %v1623 = vpack.c.bf16 %v1598, %v1598
        %v1624 = vpack.c.bf16 %v1608, %v1608
        %v1625 = vpack.c.bf16 %v1602, %v1602
        %v1626 = vpack.c.bf16 %v1610, %v1610
        %1627 = vrot.lane.b32.xlu0 %v1474, 96
        %v1628 = vpop.permute.xlu0 %1627
        %1629 = vrot.lane.b32.xlu0 %v1476, 96
        %v1630 = vpop.permute.xlu0 %1629
        %1631 = vrot.lane.b32.xlu0 %v1481, 96
        %v1632 = vpop.permute.xlu0 %1631
        %1633 = vrot.lane.b32.xlu0 %v1483, 96
        %v1634 = vpop.permute.xlu0 %1633
        %1635 = vrot.lane.b32.xlu0 %v1487, 96
        %v1636 = vpop.permute.xlu0 %1635
        %1637 = vrot.lane.b32.xlu0 %v1489, 96
        %v1638 = vpop.permute.xlu0 %1637
        %1639 = vrot.lane.b32.xlu0 %v1493, 96
        %v1640 = vpop.permute.xlu0 %1639
        %1641 = vrot.lane.b32.xlu0 %v1495, 96
        %v1642 = vpop.permute.xlu0 %1641
        %v1651 = vrot.slane %v1636, 4
        %v1652 = vsel %vm1499, %v1651, %v1628
        %v1653 = vrot.slane %v1628, 4
        %v1654 = vsel %vm1499, %v1636, %v1653
        %v1656 = vunpack.c.l.s4 1983009808
        %v1657 = vunpack.c.0.s8 %v1656
        %v1658 = vperm.slane %v1652, %v1657
        %v1660 = vunpack.c.l.s4 1983009808
        %v1661 = vunpack.c.0.s8 %v1660
        %v1662 = vperm.slane %v1654, %v1661
        %v1663 = vrot.slane %v1640, 4
        %v1664 = vsel %vm1499, %v1663, %v1632
        %v1665 = vrot.slane %v1632, 4
        %v1666 = vsel %vm1499, %v1640, %v1665
        %v1668 = vunpack.c.l.s4 1983009808
        %v1669 = vunpack.c.0.s8 %v1668
        %v1670 = vperm.slane %v1664, %v1669
        %v1672 = vunpack.c.l.s4 1983009808
        %v1673 = vunpack.c.0.s8 %v1672
        %v1674 = vperm.slane %v1666, %v1673
        %v1675 = vrot.slane %v1670, 4
        %v1676 = vsel %vm1499, %v1675, %v1658
        %v1677 = vrot.slane %v1658, 4
        %v1678 = vsel %vm1499, %v1670, %v1677
        %v1680 = vunpack.c.l.s4 1934713408
        %v1681 = vunpack.c.0.s8 %v1680
        %v1682 = vperm.slane %v1676, %v1681
        %v1684 = vunpack.c.l.s4 1934713408
        %v1685 = vunpack.c.0.s8 %v1684
        %v1686 = vperm.slane %v1678, %v1685
        %v1687 = vrot.slane %v1674, 4
        %v1688 = vsel %vm1499, %v1687, %v1662
        %v1689 = vrot.slane %v1662, 4
        %v1690 = vsel %vm1499, %v1674, %v1689
        %v1692 = vunpack.c.l.s4 1934713408
        %v1693 = vunpack.c.0.s8 %v1692
        %v1694 = vperm.slane %v1688, %v1693
        %v1696 = vunpack.c.l.s4 1934713408
        %v1697 = vunpack.c.0.s8 %v1696
        %v1698 = vperm.slane %v1690, %v1697
        %v1699 = vrot.slane %v1682, 4
        %v1700 = vsel %vm1499, 0.0, %v1699
        %v1701 = vrot.slane %v1686, 4
        %v1702 = vsel %vm1499, 0.0, %v1701
        %v1703 = vrot.slane %v1694, 4
        %v1704 = vsel %vm1499, 0.0, %v1703
        %v1705 = vrot.slane %v1698, 4
        %v1706 = vsel %vm1499, 0.0, %v1705
        %v1707 = vrot.slane %v1638, 4
        %v1708 = vsel %vm1499, %v1707, %v1630
        %v1709 = vrot.slane %v1630, 4
        %v1710 = vsel %vm1499, %v1638, %v1709
        %v1712 = vunpack.c.l.s4 1983009808
        %v1713 = vunpack.c.0.s8 %v1712
        %v1714 = vperm.slane %v1708, %v1713
        %v1716 = vunpack.c.l.s4 1983009808
        %v1717 = vunpack.c.0.s8 %v1716
        %v1718 = vperm.slane %v1710, %v1717
        %v1719 = vrot.slane %v1642, 4
        %v1720 = vsel %vm1499, %v1719, %v1634
        %v1721 = vrot.slane %v1634, 4
        %v1722 = vsel %vm1499, %v1642, %v1721
        %v1724 = vunpack.c.l.s4 1983009808
        %v1725 = vunpack.c.0.s8 %v1724
        %v1726 = vperm.slane %v1720, %v1725
        %v1728 = vunpack.c.l.s4 1983009808
        %v1729 = vunpack.c.0.s8 %v1728
        %v1730 = vperm.slane %v1722, %v1729
        %v1731 = vrot.slane %v1726, 4
        %v1732 = vsel %vm1499, %v1731, %v1714
        %v1733 = vrot.slane %v1714, 4
        %v1734 = vsel %vm1499, %v1726, %v1733
        %v1736 = vunpack.c.l.s4 1934713408
        %v1737 = vunpack.c.0.s8 %v1736
        %v1738 = vperm.slane %v1732, %v1737
        %v1740 = vunpack.c.l.s4 1934713408
        %v1741 = vunpack.c.0.s8 %v1740
        %v1742 = vperm.slane %v1734, %v1741
        %v1743 = vrot.slane %v1730, 4
        %v1744 = vsel %vm1499, %v1743, %v1718
        %v1745 = vrot.slane %v1718, 4
        %v1746 = vsel %vm1499, %v1730, %v1745
        %v1748 = vunpack.c.l.s4 1934713408
        %v1749 = vunpack.c.0.s8 %v1748
        %v1750 = vperm.slane %v1744, %v1749
        %v1752 = vunpack.c.l.s4 1934713408
        %v1753 = vunpack.c.0.s8 %v1752
        %v1754 = vperm.slane %v1746, %v1753
        %v1755 = vrot.slane %v1738, 4
        %v1756 = vsel %vm1499, 0.0, %v1755
        %v1757 = vrot.slane %v1742, 4
        %v1758 = vsel %vm1499, 0.0, %v1757
        %v1759 = vrot.slane %v1750, 4
        %v1760 = vsel %vm1499, 0.0, %v1759
        %v1761 = vrot.slane %v1754, 4
        %v1762 = vsel %vm1499, 0.0, %v1761
        %v1763 = vpack.c.bf16 %v1682, %v1682
        %v1764 = vpack.c.bf16 %v1700, %v1700
        %v1765 = vpack.c.bf16 %v1686, %v1686
        %v1766 = vpack.c.bf16 %v1702, %v1702
        %v1767 = vpack.c.bf16 %v1694, %v1694
        %v1768 = vpack.c.bf16 %v1704, %v1704
        %v1769 = vpack.c.bf16 %v1698, %v1698
        %v1770 = vpack.c.bf16 %v1706, %v1706
        %v1771 = vpack.c.bf16 %v1738, %v1738
        %v1772 = vpack.c.bf16 %v1756, %v1756
        %v1773 = vpack.c.bf16 %v1742, %v1742
        %v1774 = vpack.c.bf16 %v1758, %v1758
        %v1775 = vpack.c.bf16 %v1750, %v1750
        %v1776 = vpack.c.bf16 %v1760, %v1760
        %v1777 = vpack.c.bf16 %v1754, %v1754
        %v1778 = vpack.c.bf16 %v1762, %v1762
        %1779 = vrot.lane.b32.xlu0 %v1474, 64
        %v1780 = vpop.permute.xlu0 %1779
        %1781 = vrot.lane.b32.xlu0 %v1476, 64
        %v1782 = vpop.permute.xlu0 %1781
        %1783 = vrot.lane.b32.xlu0 %v1481, 64
        %v1784 = vpop.permute.xlu0 %1783
        %1785 = vrot.lane.b32.xlu0 %v1483, 64
        %v1786 = vpop.permute.xlu0 %1785
        %1787 = vrot.lane.b32.xlu0 %v1487, 64
        %v1788 = vpop.permute.xlu0 %1787
        %1789 = vrot.lane.b32.xlu0 %v1489, 64
        %v1790 = vpop.permute.xlu0 %1789
        %1791 = vrot.lane.b32.xlu0 %v1493, 64
        %v1792 = vpop.permute.xlu0 %1791
        %1793 = vrot.lane.b32.xlu0 %v1495, 64
        %v1794 = vpop.permute.xlu0 %1793
        %v1803 = vrot.slane %v1788, 4
        %v1804 = vsel %vm1499, %v1803, %v1780
        %v1805 = vrot.slane %v1780, 4
        %v1806 = vsel %vm1499, %v1788, %v1805
        %v1808 = vunpack.c.l.s4 1983009808
        %v1809 = vunpack.c.0.s8 %v1808
        %v1810 = vperm.slane %v1804, %v1809
        %v1812 = vunpack.c.l.s4 1983009808
        %v1813 = vunpack.c.0.s8 %v1812
        %v1814 = vperm.slane %v1806, %v1813
        %v1815 = vrot.slane %v1792, 4
        %v1816 = vsel %vm1499, %v1815, %v1784
        %v1817 = vrot.slane %v1784, 4
        %v1818 = vsel %vm1499, %v1792, %v1817
        %v1820 = vunpack.c.l.s4 1983009808
        %v1821 = vunpack.c.0.s8 %v1820
        %v1822 = vperm.slane %v1816, %v1821
        %v1824 = vunpack.c.l.s4 1983009808
        %v1825 = vunpack.c.0.s8 %v1824
        %v1826 = vperm.slane %v1818, %v1825
        %v1827 = vrot.slane %v1822, 4
        %v1828 = vsel %vm1499, %v1827, %v1810
        %v1829 = vrot.slane %v1810, 4
        %v1830 = vsel %vm1499, %v1822, %v1829
        %v1832 = vunpack.c.l.s4 1934713408
        %v1833 = vunpack.c.0.s8 %v1832
        %v1834 = vperm.slane %v1828, %v1833
        %v1836 = vunpack.c.l.s4 1934713408
        %v1837 = vunpack.c.0.s8 %v1836
        %v1838 = vperm.slane %v1830, %v1837
        %v1839 = vrot.slane %v1826, 4
        %v1840 = vsel %vm1499, %v1839, %v1814
        %v1841 = vrot.slane %v1814, 4
        %v1842 = vsel %vm1499, %v1826, %v1841
        %v1844 = vunpack.c.l.s4 1934713408
        %v1845 = vunpack.c.0.s8 %v1844
        %v1846 = vperm.slane %v1840, %v1845
        %v1848 = vunpack.c.l.s4 1934713408
        %v1849 = vunpack.c.0.s8 %v1848
        %v1850 = vperm.slane %v1842, %v1849
        %v1851 = vrot.slane %v1834, 4
        %v1852 = vsel %vm1499, 0.0, %v1851
        %v1853 = vrot.slane %v1838, 4
        %v1854 = vsel %vm1499, 0.0, %v1853
        %v1855 = vrot.slane %v1846, 4
        %v1856 = vsel %vm1499, 0.0, %v1855
        %v1857 = vrot.slane %v1850, 4
        %v1858 = vsel %vm1499, 0.0, %v1857
        %v1859 = vrot.slane %v1790, 4
        %v1860 = vsel %vm1499, %v1859, %v1782
        %v1861 = vrot.slane %v1782, 4
        %v1862 = vsel %vm1499, %v1790, %v1861
        %v1864 = vunpack.c.l.s4 1983009808
        %v1865 = vunpack.c.0.s8 %v1864
        %v1866 = vperm.slane %v1860, %v1865
        %v1868 = vunpack.c.l.s4 1983009808
        %v1869 = vunpack.c.0.s8 %v1868
        %v1870 = vperm.slane %v1862, %v1869
        %v1871 = vrot.slane %v1794, 4
        %v1872 = vsel %vm1499, %v1871, %v1786
        %v1873 = vrot.slane %v1786, 4
        %v1874 = vsel %vm1499, %v1794, %v1873
        %v1876 = vunpack.c.l.s4 1983009808
        %v1877 = vunpack.c.0.s8 %v1876
        %v1878 = vperm.slane %v1872, %v1877
        %v1880 = vunpack.c.l.s4 1983009808
        %v1881 = vunpack.c.0.s8 %v1880
        %v1882 = vperm.slane %v1874, %v1881
        %v1883 = vrot.slane %v1878, 4
        %v1884 = vsel %vm1499, %v1883, %v1866
        %v1885 = vrot.slane %v1866, 4
        %v1886 = vsel %vm1499, %v1878, %v1885
        %v1888 = vunpack.c.l.s4 1934713408
        %v1889 = vunpack.c.0.s8 %v1888
        %v1890 = vperm.slane %v1884, %v1889
        %v1892 = vunpack.c.l.s4 1934713408
        %v1893 = vunpack.c.0.s8 %v1892
        %v1894 = vperm.slane %v1886, %v1893
        %v1895 = vrot.slane %v1882, 4
        %v1896 = vsel %vm1499, %v1895, %v1870
        %v1897 = vrot.slane %v1870, 4
        %v1898 = vsel %vm1499, %v1882, %v1897
        %v1900 = vunpack.c.l.s4 1934713408
        %v1901 = vunpack.c.0.s8 %v1900
        %v1902 = vperm.slane %v1896, %v1901
        %v1904 = vunpack.c.l.s4 1934713408
        %v1905 = vunpack.c.0.s8 %v1904
        %v1906 = vperm.slane %v1898, %v1905
        %v1907 = vrot.slane %v1890, 4
        %v1908 = vsel %vm1499, 0.0, %v1907
        %v1909 = vrot.slane %v1894, 4
        %v1910 = vsel %vm1499, 0.0, %v1909
        %v1911 = vrot.slane %v1902, 4
        %v1912 = vsel %vm1499, 0.0, %v1911
        %v1913 = vrot.slane %v1906, 4
        %v1914 = vsel %vm1499, 0.0, %v1913
        %v1915 = vpack.c.bf16 %v1834, %v1834
        %v1916 = vpack.c.bf16 %v1852, %v1852
        %v1917 = vpack.c.bf16 %v1838, %v1838
        %v1918 = vpack.c.bf16 %v1854, %v1854
        %v1919 = vpack.c.bf16 %v1846, %v1846
        %v1920 = vpack.c.bf16 %v1856, %v1856
        %v1921 = vpack.c.bf16 %v1850, %v1850
        %v1922 = vpack.c.bf16 %v1858, %v1858
        %v1923 = vpack.c.bf16 %v1890, %v1890
        %v1924 = vpack.c.bf16 %v1908, %v1908
        %v1925 = vpack.c.bf16 %v1894, %v1894
        %v1926 = vpack.c.bf16 %v1910, %v1910
        %v1927 = vpack.c.bf16 %v1902, %v1902
        %v1928 = vpack.c.bf16 %v1912, %v1912
        %v1929 = vpack.c.bf16 %v1906, %v1906
        %v1930 = vpack.c.bf16 %v1914, %v1914
        %v1931 = vrot.slane %v1615, 4
        %vm1932 = vcmask 1047556
        %v1933 = vsel %vm1932, %v1931, %v1611
        %v1935 = vunpack.c.l.s4 1983009808
        %v1936 = vunpack.c.0.s8 %v1935
        %v1937 = vperm.slane %v1933, %v1936
        %v1938 = vrot.slane %v1617, 4
        %v1939 = vsel %vm1932, %v1938, %v1613
        %v1941 = vunpack.c.l.s4 1983009808
        %v1942 = vunpack.c.0.s8 %v1941
        %v1943 = vperm.slane %v1939, %v1942
        %v1944 = vrot.slane %v1943, 4
        %v1945 = vsel %vm1932, %v1944, %v1937
        %v1947 = vunpack.c.l.s4 1934713408
        %v1948 = vunpack.c.0.s8 %v1947
        %v1949 = vperm.slane %v1945, %v1948
        %v1950 = vrot.slane %v1949, 4
        %v1951 = vsel %vm1932, 0, %v1950
        %v1952 = vrot.slane %v1616, 4
        %v1953 = vsel %vm1932, %v1952, %v1612
        %v1955 = vunpack.c.l.s4 1983009808
        %v1956 = vunpack.c.0.s8 %v1955
        %v1957 = vperm.slane %v1953, %v1956
        %v1958 = vrot.slane %v1618, 4
        %v1959 = vsel %vm1932, %v1958, %v1614
        %v1961 = vunpack.c.l.s4 1983009808
        %v1962 = vunpack.c.0.s8 %v1961
        %v1963 = vperm.slane %v1959, %v1962
        %v1964 = vrot.slane %v1963, 4
        %v1965 = vsel %vm1932, %v1964, %v1957
        %v1967 = vunpack.c.l.s4 1934713408
        %v1968 = vunpack.c.0.s8 %v1967
        %v1969 = vperm.slane %v1965, %v1968
        %v1970 = vrot.slane %v1969, 4
        %v1971 = vsel %vm1932, 0, %v1970
        %v1972 = vrot.slane %v1623, 4
        %v1973 = vsel %vm1932, %v1972, %v1619
        %v1975 = vunpack.c.l.s4 1983009808
        %v1976 = vunpack.c.0.s8 %v1975
        %v1977 = vperm.slane %v1973, %v1976
        %v1978 = vrot.slane %v1625, 4
        %v1979 = vsel %vm1932, %v1978, %v1621
        %v1981 = vunpack.c.l.s4 1983009808
        %v1982 = vunpack.c.0.s8 %v1981
        %v1983 = vperm.slane %v1979, %v1982
        %v1984 = vrot.slane %v1983, 4
        %v1985 = vsel %vm1932, %v1984, %v1977
        %v1987 = vunpack.c.l.s4 1934713408
        %v1988 = vunpack.c.0.s8 %v1987
        %v1989 = vperm.slane %v1985, %v1988
        %v1990 = vrot.slane %v1989, 4
        %v1991 = vsel %vm1932, 0, %v1990
        %v1992 = vrot.slane %v1624, 4
        %v1993 = vsel %vm1932, %v1992, %v1620
        %v1995 = vunpack.c.l.s4 1983009808
        %v1996 = vunpack.c.0.s8 %v1995
        %v1997 = vperm.slane %v1993, %v1996
        %v1998 = vrot.slane %v1626, 4
        %v1999 = vsel %vm1932, %v1998, %v1622
        %v2001 = vunpack.c.l.s4 1983009808
        %v2002 = vunpack.c.0.s8 %v2001
        %v2003 = vperm.slane %v1999, %v2002
        %v2004 = vrot.slane %v2003, 4
        %v2005 = vsel %vm1932, %v2004, %v1997
        %v2007 = vunpack.c.l.s4 1934713408
        %v2008 = vunpack.c.0.s8 %v2007
        %v2009 = vperm.slane %v2005, %v2008
        %v2010 = vrot.slane %v2009, 4
        %v2011 = vsel %vm1932, 0, %v2010
        %v2014 = vpack.i.b16 %v1969, %v1949
        %v2015 = vshrl.u32 %v1949, 16
        %v2016 = vshrl.u32 %v1969, 16
        %v2017 = vpack.i.b16 %v2016, %v2015
        %v2020 = vpack.i.b16 %v1971, %v1951
        %v2021 = vshrl.u32 %v1951, 16
        %v2022 = vshrl.u32 %v1971, 16
        %v2023 = vpack.i.b16 %v2022, %v2021
        %v2026 = vpack.i.b16 %v2009, %v1989
        %v2027 = vshrl.u32 %v1989, 16
        %v2028 = vshrl.u32 %v2009, 16
        %v2029 = vpack.i.b16 %v2028, %v2027
        %v2032 = vpack.i.b16 %v2011, %v1991
        %v2033 = vshrl.u32 %v1991, 16
        %v2034 = vshrl.u32 %v2011, 16
        %v2035 = vpack.i.b16 %v2034, %v2033
        %2036 = vxpose.xlu0.c.b16.start [1/8] %v1763, 128
        %2037 = vxpose.xlu0.c.b16.cont [2/8] 0, 128
        %2038 = vxpose.xlu0.c.b16.cont [3/8] 0, 128
        %2039 = vxpose.xlu0.c.b16.cont [4/8] 0, 128
        %2040 = vxpose.xlu0.c.b16.cont [5/8] 0, 128
        %2041 = vxpose.xlu0.c.b16.cont [6/8] 0, 128
        %2042 = vxpose.xlu0.c.b16.cont [7/8] 0, 128
        %2043 = vxpose.xlu0.c.b16.end [8/8] 0, 128
        %v2044 = vpop.trf.xlu0
        %v2045 = vpop.trf.xlu0
        %v2046 = vpop.trf.xlu0
        %v2047 = vpop.trf.xlu0
        %v2048 = vpop.trf.xlu0
        %v2049 = vpop.trf.xlu0
        %v2050 = vpop.trf.xlu0
        %v2051 = vpop.trf.xlu0
        %2052 = vxpose.xlu0.c.b16.start [1/8] %v1764, 128
        %2053 = vxpose.xlu0.c.b16.cont [2/8] 0, 128
        %2054 = vxpose.xlu0.c.b16.cont [3/8] 0, 128
        %2055 = vxpose.xlu0.c.b16.cont [4/8] 0, 128
        %2056 = vxpose.xlu0.c.b16.cont [5/8] 0, 128
        %2057 = vxpose.xlu0.c.b16.cont [6/8] 0, 128
        %2058 = vxpose.xlu0.c.b16.cont [7/8] 0, 128
        %2059 = vxpose.xlu0.c.b16.end [8/8] 0, 128
        %v2060 = vpop.trf.xlu0
        %v2061 = vpop.trf.xlu0
        %v2062 = vpop.trf.xlu0
        %v2063 = vpop.trf.xlu0
        %v2064 = vpop.trf.xlu0
        %v2065 = vpop.trf.xlu0
        %v2066 = vpop.trf.xlu0
        %v2067 = vpop.trf.xlu0
        %2068 = vxpose.xlu0.c.b16.start [1/8] %v1765, 128
        %2069 = vxpose.xlu0.c.b16.cont [2/8] 0, 128
        %2070 = vxpose.xlu0.c.b16.cont [3/8] 0, 128
        %2071 = vxpose.xlu0.c.b16.cont [4/8] 0, 128
        %2072 = vxpose.xlu0.c.b16.cont [5/8] 0, 128
        %2073 = vxpose.xlu0.c.b16.cont [6/8] 0, 128
        %2074 = vxpose.xlu0.c.b16.cont [7/8] 0, 128
        %2075 = vxpose.xlu0.c.b16.end [8/8] 0, 128
        %v2076 = vpop.trf.xlu0
        %v2077 = vpop.trf.xlu0
        %v2078 = vpop.trf.xlu0
        %v2079 = vpop.trf.xlu0
        %v2080 = vpop.trf.xlu0
        %v2081 = vpop.trf.xlu0
        %v2082 = vpop.trf.xlu0
        %v2083 = vpop.trf.xlu0
        %2084 = vxpose.xlu0.c.b16.start [1/8] %v1766, 128
        %2085 = vxpose.xlu0.c.b16.cont [2/8] 0, 128
        %2086 = vxpose.xlu0.c.b16.cont [3/8] 0, 128
        %2087 = vxpose.xlu0.c.b16.cont [4/8] 0, 128
        %2088 = vxpose.xlu0.c.b16.cont [5/8] 0, 128
        %2089 = vxpose.xlu0.c.b16.cont [6/8] 0, 128
        %2090 = vxpose.xlu0.c.b16.cont [7/8] 0, 128
        %2091 = vxpose.xlu0.c.b16.end [8/8] 0, 128
        %v2092 = vpop.trf.xlu0
        %v2093 = vpop.trf.xlu0
        %v2094 = vpop.trf.xlu0
        %v2095 = vpop.trf.xlu0
        %v2096 = vpop.trf.xlu0
        %v2097 = vpop.trf.xlu0
        %v2098 = vpop.trf.xlu0
        %v2099 = vpop.trf.xlu0
        %2100 = vxpose.xlu0.c.b16.start [1/8] %v1767, 128
        %2101 = vxpose.xlu0.c.b16.cont [2/8] 0, 128
        %2102 = vxpose.xlu0.c.b16.cont [3/8] 0, 128
        %2103 = vxpose.xlu0.c.b16.cont [4/8] 0, 128
        %2104 = vxpose.xlu0.c.b16.cont [5/8] 0, 128
        %2105 = vxpose.xlu0.c.b16.cont [6/8] 0, 128
        %2106 = vxpose.xlu0.c.b16.cont [7/8] 0, 128
        %2107 = vxpose.xlu0.c.b16.end [8/8] 0, 128
        %v2108 = vpop.trf.xlu0
        %v2109 = vpop.trf.xlu0
        %v2110 = vpop.trf.xlu0
        %v2111 = vpop.trf.xlu0
        %v2112 = vpop.trf.xlu0
        %v2113 = vpop.trf.xlu0
        %v2114 = vpop.trf.xlu0
        %v2115 = vpop.trf.xlu0
        %2116 = vxpose.xlu0.c.b16.start [1/8] %v1768, 128
        %2117 = vxpose.xlu0.c.b16.cont [2/8] 0, 128
        %2118 = vxpose.xlu0.c.b16.cont [3/8] 0, 128
        %2119 = vxpose.xlu0.c.b16.cont [4/8] 0, 128
        %2120 = vxpose.xlu0.c.b16.cont [5/8] 0, 128
        %2121 = vxpose.xlu0.c.b16.cont [6/8] 0, 128
        %2122 = vxpose.xlu0.c.b16.cont [7/8] 0, 128
        %2123 = vxpose.xlu0.c.b16.end [8/8] 0, 128
        %v2124 = vpop.trf.xlu0
        %v2125 = vpop.trf.xlu0
        %v2126 = vpop.trf.xlu0
        %v2127 = vpop.trf.xlu0
        %v2128 = vpop.trf.xlu0
        %v2129 = vpop.trf.xlu0
        %v2130 = vpop.trf.xlu0
        %v2131 = vpop.trf.xlu0
        %2132 = vxpose.xlu0.c.b16.start [1/8] %v1769, 128
        %2133 = vxpose.xlu0.c.b16.cont [2/8] 0, 128
        %2134 = vxpose.xlu0.c.b16.cont [3/8] 0, 128
        %2135 = vxpose.xlu0.c.b16.cont [4/8] 0, 128
        %2136 = vxpose.xlu0.c.b16.cont [5/8] 0, 128
        %2137 = vxpose.xlu0.c.b16.cont [6/8] 0, 128
        %2138 = vxpose.xlu0.c.b16.cont [7/8] 0, 128
        %2139 = vxpose.xlu0.c.b16.end [8/8] 0, 128
        %v2140 = vpop.trf.xlu0
        %v2141 = vpop.trf.xlu0
        %v2142 = vpop.trf.xlu0
        %v2143 = vpop.trf.xlu0
        %v2144 = vpop.trf.xlu0
        %v2145 = vpop.trf.xlu0
        %v2146 = vpop.trf.xlu0
        %v2147 = vpop.trf.xlu0
        %2148 = vxpose.xlu0.c.b16.start [1/8] %v1770, 128
        %2149 = vxpose.xlu0.c.b16.cont [2/8] 0, 128
        %2150 = vxpose.xlu0.c.b16.cont [3/8] 0, 128
        %2151 = vxpose.xlu0.c.b16.cont [4/8] 0, 128
        %2152 = vxpose.xlu0.c.b16.cont [5/8] 0, 128
        %2153 = vxpose.xlu0.c.b16.cont [6/8] 0, 128
        %2154 = vxpose.xlu0.c.b16.cont [7/8] 0, 128
        %2155 = vxpose.xlu0.c.b16.end [8/8] 0, 128
        %v2156 = vpop.trf.xlu0
        %v2157 = vpop.trf.xlu0
        %v2158 = vpop.trf.xlu0
        %v2159 = vpop.trf.xlu0
        %v2160 = vpop.trf.xlu0
        %v2161 = vpop.trf.xlu0
        %v2162 = vpop.trf.xlu0
        %v2163 = vpop.trf.xlu0
        %2164 = vxpose.xlu0.c.b16.start [1/8] %v1771, 128
        %2165 = vxpose.xlu0.c.b16.cont [2/8] 0, 128
        %2166 = vxpose.xlu0.c.b16.cont [3/8] 0, 128
        %2167 = vxpose.xlu0.c.b16.cont [4/8] 0, 128
        %2168 = vxpose.xlu0.c.b16.cont [5/8] 0, 128
        %2169 = vxpose.xlu0.c.b16.cont [6/8] 0, 128
        %2170 = vxpose.xlu0.c.b16.cont [7/8] 0, 128
        %2171 = vxpose.xlu0.c.b16.end [8/8] 0, 128
        %v2172 = vpop.trf.xlu0
        %v2173 = vpop.trf.xlu0
        %v2174 = vpop.trf.xlu0
        %v2175 = vpop.trf.xlu0
        %v2176 = vpop.trf.xlu0
        %v2177 = vpop.trf.xlu0
        %v2178 = vpop.trf.xlu0
        %v2179 = vpop.trf.xlu0
        %2180 = vxpose.xlu0.c.b16.start [1/8] %v1772, 128
        %2181 = vxpose.xlu0.c.b16.cont [2/8] 0, 128
        %2182 = vxpose.xlu0.c.b16.cont [3/8] 0, 128
        %2183 = vxpose.xlu0.c.b16.cont [4/8] 0, 128
        %2184 = vxpose.xlu0.c.b16.cont [5/8] 0, 128
        %2185 = vxpose.xlu0.c.b16.cont [6/8] 0, 128
        %2186 = vxpose.xlu0.c.b16.cont [7/8] 0, 128
        %2187 = vxpose.xlu0.c.b16.end [8/8] 0, 128
        %v2188 = vpop.trf.xlu0
        %v2189 = vpop.trf.xlu0
        %v2190 = vpop.trf.xlu0
        %v2191 = vpop.trf.xlu0
        %v2192 = vpop.trf.xlu0
        %v2193 = vpop.trf.xlu0
        %v2194 = vpop.trf.xlu0
        %v2195 = vpop.trf.xlu0
        %2196 = vxpose.xlu0.c.b16.start [1/8] %v1773, 128
        %2197 = vxpose.xlu0.c.b16.cont [2/8] 0, 128
        %2198 = vxpose.xlu0.c.b16.cont [3/8] 0, 128
        %2199 = vxpose.xlu0.c.b16.cont [4/8] 0, 128
        %2200 = vxpose.xlu0.c.b16.cont [5/8] 0, 128
        %2201 = vxpose.xlu0.c.b16.cont [6/8] 0, 128
        %2202 = vxpose.xlu0.c.b16.cont [7/8] 0, 128
        %2203 = vxpose.xlu0.c.b16.end [8/8] 0, 128
        %v2204 = vpop.trf.xlu0
        %v2205 = vpop.trf.xlu0
        %v2206 = vpop.trf.xlu0
        %v2207 = vpop.trf.xlu0
        %v2208 = vpop.trf.xlu0
        %v2209 = vpop.trf.xlu0
        %v2210 = vpop.trf.xlu0
        %v2211 = vpop.trf.xlu0
        %2212 = vxpose.xlu0.c.b16.start [1/8] %v1774, 128
        %2213 = vxpose.xlu0.c.b16.cont [2/8] 0, 128
        %2214 = vxpose.xlu0.c.b16.cont [3/8] 0, 128
        %2215 = vxpose.xlu0.c.b16.cont [4/8] 0, 128
        %2216 = vxpose.xlu0.c.b16.cont [5/8] 0, 128
        %2217 = vxpose.xlu0.c.b16.cont [6/8] 0, 128
        %2218 = vxpose.xlu0.c.b16.cont [7/8] 0, 128
        %2219 = vxpose.xlu0.c.b16.end [8/8] 0, 128
        %v2220 = vpop.trf.xlu0
        %v2221 = vpop.trf.xlu0
        %v2222 = vpop.trf.xlu0
        %v2223 = vpop.trf.xlu0
        %v2224 = vpop.trf.xlu0
        %v2225 = vpop.trf.xlu0
        %v2226 = vpop.trf.xlu0
        %v2227 = vpop.trf.xlu0
        %2228 = vxpose.xlu0.c.b16.start [1/8] %v1775, 128
        %2229 = vxpose.xlu0.c.b16.cont [2/8] 0, 128
        %2230 = vxpose.xlu0.c.b16.cont [3/8] 0, 128
        %2231 = vxpose.xlu0.c.b16.cont [4/8] 0, 128
        %2232 = vxpose.xlu0.c.b16.cont [5/8] 0, 128
        %2233 = vxpose.xlu0.c.b16.cont [6/8] 0, 128
        %2234 = vxpose.xlu0.c.b16.cont [7/8] 0, 128
        %2235 = vxpose.xlu0.c.b16.end [8/8] 0, 128
        %v2236 = vpop.trf.xlu0
        %v2237 = vpop.trf.xlu0
        %v2238 = vpop.trf.xlu0
        %v2239 = vpop.trf.xlu0
        %v2240 = vpop.trf.xlu0
        %v2241 = vpop.trf.xlu0
        %v2242 = vpop.trf.xlu0
        %v2243 = vpop.trf.xlu0
        %2244 = vxpose.xlu0.c.b16.start [1/8] %v1776, 128
        %2245 = vxpose.xlu0.c.b16.cont [2/8] 0, 128
        %2246 = vxpose.xlu0.c.b16.cont [3/8] 0, 128
        %2247 = vxpose.xlu0.c.b16.cont [4/8] 0, 128
        %2248 = vxpose.xlu0.c.b16.cont [5/8] 0, 128
        %2249 = vxpose.xlu0.c.b16.cont [6/8] 0, 128
        %2250 = vxpose.xlu0.c.b16.cont [7/8] 0, 128
        %2251 = vxpose.xlu0.c.b16.end [8/8] 0, 128
        %v2252 = vpop.trf.xlu0
        %v2253 = vpop.trf.xlu0
        %v2254 = vpop.trf.xlu0
        %v2255 = vpop.trf.xlu0
        %v2256 = vpop.trf.xlu0
        %v2257 = vpop.trf.xlu0
        %v2258 = vpop.trf.xlu0
        %v2259 = vpop.trf.xlu0
        %2260 = vxpose.xlu0.c.b16.start [1/8] %v1777, 128
        %2261 = vxpose.xlu0.c.b16.cont [2/8] 0, 128
        %2262 = vxpose.xlu0.c.b16.cont [3/8] 0, 128
        %2263 = vxpose.xlu0.c.b16.cont [4/8] 0, 128
        %2264 = vxpose.xlu0.c.b16.cont [5/8] 0, 128
        %2265 = vxpose.xlu0.c.b16.cont [6/8] 0, 128
        %2266 = vxpose.xlu0.c.b16.cont [7/8] 0, 128
        %2267 = vxpose.xlu0.c.b16.end [8/8] 0, 128
        %v2268 = vpop.trf.xlu0
        %v2269 = vpop.trf.xlu0
        %v2270 = vpop.trf.xlu0
        %v2271 = vpop.trf.xlu0
        %v2272 = vpop.trf.xlu0
        %v2273 = vpop.trf.xlu0
        %v2274 = vpop.trf.xlu0
        %v2275 = vpop.trf.xlu0
        %2276 = vxpose.xlu0.c.b16.start [1/8] %v1778, 128
        %2277 = vxpose.xlu0.c.b16.cont [2/8] 0, 128
        %2278 = vxpose.xlu0.c.b16.cont [3/8] 0, 128
        %2279 = vxpose.xlu0.c.b16.cont [4/8] 0, 128
        %2280 = vxpose.xlu0.c.b16.cont [5/8] 0, 128
        %2281 = vxpose.xlu0.c.b16.cont [6/8] 0, 128
        %2282 = vxpose.xlu0.c.b16.cont [7/8] 0, 128
        %2283 = vxpose.xlu0.c.b16.end [8/8] 0, 128
        %v2284 = vpop.trf.xlu0
        %v2285 = vpop.trf.xlu0
        %v2286 = vpop.trf.xlu0
        %v2287 = vpop.trf.xlu0
        %v2288 = vpop.trf.xlu0
        %v2289 = vpop.trf.xlu0
        %v2290 = vpop.trf.xlu0
        %v2291 = vpop.trf.xlu0
        %v2292 = vrot.slane %v2108, 4
        %v2293 = vsel %vm1932, %v2292, %v2044
        %v2295 = vunpack.c.l.s4 1983009808
        %v2296 = vunpack.c.0.s8 %v2295
        %v2297 = vperm.slane %v2293, %v2296
        %v2298 = vrot.slane %v2140, 4
        %v2299 = vsel %vm1932, %v2298, %v2076
        %v2301 = vunpack.c.l.s4 1983009808
        %v2302 = vunpack.c.0.s8 %v2301
        %v2303 = vperm.slane %v2299, %v2302
        %v2304 = vrot.slane %v2236, 4
        %v2305 = vsel %vm1932, %v2304, %v2172
        %v2307 = vunpack.c.l.s4 1983009808
        %v2308 = vunpack.c.0.s8 %v2307
        %v2309 = vperm.slane %v2305, %v2308
        %v2310 = vrot.slane %v2268, 4
        %v2311 = vsel %vm1932, %v2310, %v2204
        %v2313 = vunpack.c.l.s4 1983009808
        %v2314 = vunpack.c.0.s8 %v2313
        %v2315 = vperm.slane %v2311, %v2314
        %v2316 = vrot.slane %v2303, 4
        %v2317 = vsel %vm1932, %v2316, %v2297
        %v2318 = vrot.slane %v2297, 4
        %v2319 = vsel %vm1932, %v2303, %v2318
        %v2321 = vunpack.c.l.s4 1934713408
        %v2322 = vunpack.c.0.s8 %v2321
        %v2323 = vperm.slane %v2317, %v2322
        %v2325 = vunpack.c.l.s4 1934713408
        %v2326 = vunpack.c.0.s8 %v2325
        %v2327 = vperm.slane %v2319, %v2326
        %v2328 = vrot.slane %v2315, 4
        %v2329 = vsel %vm1932, %v2328, %v2309
        %v2330 = vrot.slane %v2309, 4
        %v2331 = vsel %vm1932, %v2315, %v2330
        %v2333 = vunpack.c.l.s4 1934713408
        %v2334 = vunpack.c.0.s8 %v2333
        %v2335 = vperm.slane %v2329, %v2334
        %v2337 = vunpack.c.l.s4 1934713408
        %v2338 = vunpack.c.0.s8 %v2337
        %v2339 = vperm.slane %v2331, %v2338
        %v2340 = vrot.slane %v2335, 4
        %v2341 = vsel %vm1932, %v2340, %v2323
        %v2342 = vrot.slane %v2323, 4
        %v2343 = vsel %vm1932, %v2335, %v2342
        %v2344 = vrot.slane %v2339, 4
        %v2345 = vsel %vm1932, %v2344, %v2327
        %v2346 = vrot.slane %v2327, 4
        %v2347 = vsel %vm1932, %v2339, %v2346
        %v2348 = vrot.slane %v2124, 4
        %v2349 = vsel %vm1932, %v2348, %v2060
        %v2351 = vunpack.c.l.s4 1983009808
        %v2352 = vunpack.c.0.s8 %v2351
        %v2353 = vperm.slane %v2349, %v2352
        %v2354 = vrot.slane %v2156, 4
        %v2355 = vsel %vm1932, %v2354, %v2092
        %v2357 = vunpack.c.l.s4 1983009808
        %v2358 = vunpack.c.0.s8 %v2357
        %v2359 = vperm.slane %v2355, %v2358
        %v2360 = vrot.slane %v2252, 4
        %v2361 = vsel %vm1932, %v2360, %v2188
        %v2363 = vunpack.c.l.s4 1983009808
        %v2364 = vunpack.c.0.s8 %v2363
        %v2365 = vperm.slane %v2361, %v2364
        %v2366 = vrot.slane %v2284, 4
        %v2367 = vsel %vm1932, %v2366, %v2220
        %v2369 = vunpack.c.l.s4 1983009808
        %v2370 = vunpack.c.0.s8 %v2369
        %v2371 = vperm.slane %v2367, %v2370
        %v2372 = vrot.slane %v2359, 4
        %v2373 = vsel %vm1932, %v2372, %v2353
        %v2374 = vrot.slane %v2353, 4
        %v2375 = vsel %vm1932, %v2359, %v2374
        %v2377 = vunpack.c.l.s4 1934713408
        %v2378 = vunpack.c.0.s8 %v2377
        %v2379 = vperm.slane %v2373, %v2378
        %v2381 = vunpack.c.l.s4 1934713408
        %v2382 = vunpack.c.0.s8 %v2381
        %v2383 = vperm.slane %v2375, %v2382
        %v2384 = vrot.slane %v2371, 4
        %v2385 = vsel %vm1932, %v2384, %v2365
        %v2386 = vrot.slane %v2365, 4
        %v2387 = vsel %vm1932, %v2371, %v2386
        %v2389 = vunpack.c.l.s4 1934713408
        %v2390 = vunpack.c.0.s8 %v2389
        %v2391 = vperm.slane %v2385, %v2390
        %v2393 = vunpack.c.l.s4 1934713408
        %v2394 = vunpack.c.0.s8 %v2393
        %v2395 = vperm.slane %v2387, %v2394
        %v2396 = vrot.slane %v2391, 4
        %v2397 = vsel %vm1932, %v2396, %v2379
        %v2398 = vrot.slane %v2379, 4
        %v2399 = vsel %vm1932, %v2391, %v2398
        %v2400 = vrot.slane %v2395, 4
        %v2401 = vsel %vm1932, %v2400, %v2383
        %v2402 = vrot.slane %v2383, 4
        %v2403 = vsel %vm1932, %v2395, %v2402
        %v2406 = vpack.i.b16 %v2397, %v2341
        %v2408 = vshrl.u32 %v2341, 16
        %v2409 = vshrl.u32 %v2397, 16
        %v2410 = vpack.i.b16 %v2409, %v2408
        %v2414 = vpack.i.b16 %v2399, %v2343
        %v2416 = vshrl.u32 %v2343, 16
        %v2417 = vshrl.u32 %v2399, 16
        %v2418 = vpack.i.b16 %v2417, %v2416
        %v2422 = vpack.i.b16 %v2401, %v2345
        %v2424 = vshrl.u32 %v2345, 16
        %v2425 = vshrl.u32 %v2401, 16
        %v2426 = vpack.i.b16 %v2425, %v2424
        %v2430 = vpack.i.b16 %v2403, %v2347
        %v2432 = vshrl.u32 %v2347, 16
        %v2433 = vshrl.u32 %v2403, 16
        %v2434 = vpack.i.b16 %v2433, %v2432
        %2436 = vxpose.xlu0.c.b16.start [1/8] %v2406, 128
        %2437 = vxpose.xlu0.c.b16.cont [2/8] 0, 128
        %2438 = vxpose.xlu0.c.b16.cont [3/8] 0, 128
        %2439 = vxpose.xlu0.c.b16.cont [4/8] 0, 128
        %2440 = vxpose.xlu0.c.b16.cont [5/8] 0, 128
        %2441 = vxpose.xlu0.c.b16.cont [6/8] 0, 128
        %2442 = vxpose.xlu0.c.b16.cont [7/8] 0, 128
        %2443 = vxpose.xlu0.c.b16.end [8/8] 0, 128
        %v2444 = vpop.trf.xlu0
        %v2445 = vpop.trf.xlu0
        %v2446 = vpop.trf.xlu0
        %v2447 = vpop.trf.xlu0
        %v2448 = vpop.trf.xlu0
        %v2449 = vpop.trf.xlu0
        %v2450 = vpop.trf.xlu0
        %v2451 = vpop.trf.xlu0
        %2452 = vxpose.xlu0.c.b16.start [1/8] %v2410, 128
        %2453 = vxpose.xlu0.c.b16.cont [2/8] 0, 128
        %2454 = vxpose.xlu0.c.b16.cont [3/8] 0, 128
        %2455 = vxpose.xlu0.c.b16.cont [4/8] 0, 128
        %2456 = vxpose.xlu0.c.b16.cont [5/8] 0, 128
        %2457 = vxpose.xlu0.c.b16.cont [6/8] 0, 128
        %2458 = vxpose.xlu0.c.b16.cont [7/8] 0, 128
        %2459 = vxpose.xlu0.c.b16.end [8/8] 0, 128
        %v2460 = vpop.trf.xlu0
        %v2461 = vpop.trf.xlu0
        %v2462 = vpop.trf.xlu0
        %v2463 = vpop.trf.xlu0
        %v2464 = vpop.trf.xlu0
        %v2465 = vpop.trf.xlu0
        %v2466 = vpop.trf.xlu0
        %v2467 = vpop.trf.xlu0
        %2468 = vxpose.xlu0.c.b16.start [1/8] %v2414, 128
        %2469 = vxpose.xlu0.c.b16.cont [2/8] 0, 128
        %2470 = vxpose.xlu0.c.b16.cont [3/8] 0, 128
        %2471 = vxpose.xlu0.c.b16.cont [4/8] 0, 128
        %2472 = vxpose.xlu0.c.b16.cont [5/8] 0, 128
        %2473 = vxpose.xlu0.c.b16.cont [6/8] 0, 128
        %2474 = vxpose.xlu0.c.b16.cont [7/8] 0, 128
        %2475 = vxpose.xlu0.c.b16.end [8/8] 0, 128
        %v2476 = vpop.trf.xlu0
        %v2477 = vpop.trf.xlu0
        %v2478 = vpop.trf.xlu0
        %v2479 = vpop.trf.xlu0
        %v2480 = vpop.trf.xlu0
        %v2481 = vpop.trf.xlu0
        %v2482 = vpop.trf.xlu0
        %v2483 = vpop.trf.xlu0
        %2484 = vxpose.xlu0.c.b16.start [1/8] %v2418, 128
        %2485 = vxpose.xlu0.c.b16.cont [2/8] 0, 128
        %2486 = vxpose.xlu0.c.b16.cont [3/8] 0, 128
        %2487 = vxpose.xlu0.c.b16.cont [4/8] 0, 128
        %2488 = vxpose.xlu0.c.b16.cont [5/8] 0, 128
        %2489 = vxpose.xlu0.c.b16.cont [6/8] 0, 128
        %2490 = vxpose.xlu0.c.b16.cont [7/8] 0, 128
        %2491 = vxpose.xlu0.c.b16.end [8/8] 0, 128
        %v2492 = vpop.trf.xlu0
        %v2493 = vpop.trf.xlu0
        %v2494 = vpop.trf.xlu0
        %v2495 = vpop.trf.xlu0
        %v2496 = vpop.trf.xlu0
        %v2497 = vpop.trf.xlu0
        %v2498 = vpop.trf.xlu0
        %v2499 = vpop.trf.xlu0
        %2500 = vxpose.xlu0.c.b16.start [1/8] %v2422, 128
        %2501 = vxpose.xlu0.c.b16.cont [2/8] 0, 128
        %2502 = vxpose.xlu0.c.b16.cont [3/8] 0, 128
        %2503 = vxpose.xlu0.c.b16.cont [4/8] 0, 128
        %2504 = vxpose.xlu0.c.b16.cont [5/8] 0, 128
        %2505 = vxpose.xlu0.c.b16.cont [6/8] 0, 128
        %2506 = vxpose.xlu0.c.b16.cont [7/8] 0, 128
        %2507 = vxpose.xlu0.c.b16.end [8/8] 0, 128
        %v2508 = vpop.trf.xlu0
        %v2509 = vpop.trf.xlu0
        %v2510 = vpop.trf.xlu0
        %v2511 = vpop.trf.xlu0
        %v2512 = vpop.trf.xlu0
        %v2513 = vpop.trf.xlu0
        %v2514 = vpop.trf.xlu0
        %v2515 = vpop.trf.xlu0
        %2516 = vxpose.xlu0.c.b16.start [1/8] %v2426, 128
        %2517 = vxpose.xlu0.c.b16.cont [2/8] 0, 128
        %2518 = vxpose.xlu0.c.b16.cont [3/8] 0, 128
        %2519 = vxpose.xlu0.c.b16.cont [4/8] 0, 128
        %2520 = vxpose.xlu0.c.b16.cont [5/8] 0, 128
        %2521 = vxpose.xlu0.c.b16.cont [6/8] 0, 128
        %2522 = vxpose.xlu0.c.b16.cont [7/8] 0, 128
        %2523 = vxpose.xlu0.c.b16.end [8/8] 0, 128
        %v2524 = vpop.trf.xlu0
        %v2525 = vpop.trf.xlu0
        %v2526 = vpop.trf.xlu0
        %v2527 = vpop.trf.xlu0
        %v2528 = vpop.trf.xlu0
        %v2529 = vpop.trf.xlu0
        %v2530 = vpop.trf.xlu0
        %v2531 = vpop.trf.xlu0
        %2532 = vxpose.xlu0.c.b16.start [1/8] %v2430, 128
        %2533 = vxpose.xlu0.c.b16.cont [2/8] 0, 128
        %2534 = vxpose.xlu0.c.b16.cont [3/8] 0, 128
        %2535 = vxpose.xlu0.c.b16.cont [4/8] 0, 128
        %2536 = vxpose.xlu0.c.b16.cont [5/8] 0, 128
        %2537 = vxpose.xlu0.c.b16.cont [6/8] 0, 128
        %2538 = vxpose.xlu0.c.b16.cont [7/8] 0, 128
        %2539 = vxpose.xlu0.c.b16.end [8/8] 0, 128
        %v2540 = vpop.trf.xlu0
        %v2541 = vpop.trf.xlu0
        %v2542 = vpop.trf.xlu0
        %v2543 = vpop.trf.xlu0
        %v2544 = vpop.trf.xlu0
        %v2545 = vpop.trf.xlu0
        %v2546 = vpop.trf.xlu0
        %v2547 = vpop.trf.xlu0
        %2548 = vxpose.xlu0.c.b16.start [1/8] %v2434, 128
        %2549 = vxpose.xlu0.c.b16.cont [2/8] 0, 128
        %2550 = vxpose.xlu0.c.b16.cont [3/8] 0, 128
        %2551 = vxpose.xlu0.c.b16.cont [4/8] 0, 128
        %2552 = vxpose.xlu0.c.b16.cont [5/8] 0, 128
        %2553 = vxpose.xlu0.c.b16.cont [6/8] 0, 128
        %2554 = vxpose.xlu0.c.b16.cont [7/8] 0, 128
        %2555 = vxpose.xlu0.c.b16.end [8/8] 0, 128
        %v2556 = vpop.trf.xlu0
        %v2557 = vpop.trf.xlu0
        %v2558 = vpop.trf.xlu0
        %v2559 = vpop.trf.xlu0
        %v2560 = vpop.trf.xlu0
        %v2561 = vpop.trf.xlu0
        %v2562 = vpop.trf.xlu0
        %v2563 = vpop.trf.xlu0
        %v2564 = vrot.slane %v2508, 4
        %v2565 = vsel %vm1932, %v2564, %v2444
        %v2567 = vunpack.c.l.s4 1983009808
        %v2568 = vunpack.c.0.s8 %v2567
        %v2569 = vperm.slane %v2565, %v2568
        %v2570 = vrot.slane %v2540, 4
        %v2571 = vsel %vm1932, %v2570, %v2476
        %v2573 = vunpack.c.l.s4 1983009808
        %v2574 = vunpack.c.0.s8 %v2573
        %v2575 = vperm.slane %v2571, %v2574
        %v2576 = vrot.slane %v2575, 4
        %v2577 = vsel %vm1932, %v2576, %v2569
        %v2579 = vunpack.c.l.s4 1934713408
        %v2580 = vunpack.c.0.s8 %v2579
        %v2581 = vperm.slane %v2577, %v2580
        %v2582 = vrot.slane %v2581, 4
        %v2583 = vsel %vm1932, 0, %v2582
        %v2584 = vrot.slane %v2524, 4
        %v2585 = vsel %vm1932, %v2584, %v2460
        %v2587 = vunpack.c.l.s4 1983009808
        %v2588 = vunpack.c.0.s8 %v2587
        %v2589 = vperm.slane %v2585, %v2588
        %v2590 = vrot.slane %v2556, 4
        %v2591 = vsel %vm1932, %v2590, %v2492
        %v2593 = vunpack.c.l.s4 1983009808
        %v2594 = vunpack.c.0.s8 %v2593
        %v2595 = vperm.slane %v2591, %v2594
        %v2596 = vrot.slane %v2595, 4
        %v2597 = vsel %vm1932, %v2596, %v2589
        %v2599 = vunpack.c.l.s4 1934713408
        %v2600 = vunpack.c.0.s8 %v2599
        %v2601 = vperm.slane %v2597, %v2600
        %v2602 = vrot.slane %v2601, 4
        %v2603 = vsel %vm1932, 0, %v2602
        %v2606 = vpack.i.b16 %v2601, %v2581
        %v2607 = vshrl.u32 %v2581, 16
        %v2608 = vshrl.u32 %v2601, 16
        %v2609 = vpack.i.b16 %v2608, %v2607
        %v2612 = vpack.i.b16 %v2603, %v2583
        %v2613 = vshrl.u32 %v2583, 16
        %v2614 = vshrl.u32 %v2603, 16
        %v2615 = vpack.i.b16 %v2614, %v2613
        %v2616 = vunpack.c.l.b16 %v2014
        %v2617 = vunpack.c.l.b16 %v2026
        %v2618 = vpack.c.b16 %v2617, %v2616
        %vm2619 = vcmask 64512
        %v2621 = vsel %vm2619, %v2618, 0
        %vm2623 = vcmask 1043456
        %v2625 = vsel %vm2623, %v2606, 0
        %2627 = vmatpush.bf16.msra.mxu0 0
        %2628 = vmatpush.bf16.msra.mxu0 0
        %2629 = vmatpush.bf16.msra.mxu0 0
        %2630 = vmatpush.bf16.msra.mxu0 0
        %2631 = vmatpush.bf16.msra.mxu0 0
        %2632 = vmatpush.bf16.msra.mxu0 0
        %2633 = vmatpush.bf16.msra.mxu0 0
        %2634 = vmatpush.bf16.msra.mxu0 %v2625
        %2635 = vmatmul.bf16.gmra.mxu0 %v2621
        %v2636 = vpop.f32.mrf.mxu0
        %v2637 = vadd.f32 0.0, %v2636
        %v2638 = vpop.f32.mrf.mxu0
        %v2639 = vadd.f32 0.0, %v2638
        %2640 = vdwg.mxu0
        %v2641 = vunpack.c.l.b16 %v2017
        %v2642 = vunpack.c.l.b16 %v2029
        %v2643 = vpack.c.b16 %v2642, %v2641
        %v2645 = vsel %vm2619, %v2643, 0
        %v2648 = vsel %vm2623, %v2609, 0
        %2650 = vmatpush.bf16.msra.mxu0 0
        %2651 = vmatpush.bf16.msra.mxu0 0
        %2652 = vmatpush.bf16.msra.mxu0 0
        %2653 = vmatpush.bf16.msra.mxu0 0
        %2654 = vmatpush.bf16.msra.mxu0 0
        %2655 = vmatpush.bf16.msra.mxu0 0
        %2656 = vmatpush.bf16.msra.mxu0 0
        %2657 = vmatpush.bf16.msra.mxu0 %v2648
        %2658 = vmatmul.bf16.gmra.mxu0 %v2645
        %v2659 = vpop.f32.mrf.mxu0
        %v2660 = vadd.f32 0.0, %v2659
        %v2661 = vpop.f32.mrf.mxu0
        %v2662 = vadd.f32 0.0, %v2661
        %2663 = vdwg.mxu0
        %v2664 = vunpack.c.l.b16 %v2020
        %v2665 = vunpack.c.l.b16 %v2032
        %v2666 = vpack.c.b16 %v2665, %v2664
        %v2668 = vsel %vm2619, %v2666, 0
        %v2671 = vsel %vm2623, %v2612, 0
        %2673 = vmatpush.bf16.msra.mxu0 0
        %2674 = vmatpush.bf16.msra.mxu0 0
        %2675 = vmatpush.bf16.msra.mxu0 0
        %2676 = vmatpush.bf16.msra.mxu0 0
        %2677 = vmatpush.bf16.msra.mxu0 0
        %2678 = vmatpush.bf16.msra.mxu0 0
        %2679 = vmatpush.bf16.msra.mxu0 0
        %2680 = vmatpush.bf16.msra.mxu0 %v2671
        %2681 = vmatmul.bf16.gmra.mxu0 %v2668
        %v2682 = vpop.f32.mrf.mxu0
        %v2683 = vadd.f32 0.0, %v2682
        %v2684 = vpop.f32.mrf.mxu0
        %v2685 = vadd.f32 0.0, %v2684
        %2686 = vdwg.mxu0
        %v2687 = vunpack.c.l.b16 %v2023
        %v2688 = vunpack.c.l.b16 %v2035
        %v2689 = vpack.c.b16 %v2688, %v2687
        %v2691 = vsel %vm2619, %v2689, 0
        %v2694 = vsel %vm2623, %v2615, 0
        %2696 = vmatpush.bf16.msra.mxu0 0
        %2697 = vmatpush.bf16.msra.mxu0 0
        %2698 = vmatpush.bf16.msra.mxu0 0
        %2699 = vmatpush.bf16.msra.mxu0 0
        %2700 = vmatpush.bf16.msra.mxu0 0
        %2701 = vmatpush.bf16.msra.mxu0 0
        %2702 = vmatpush.bf16.msra.mxu0 0
        %2703 = vmatpush.bf16.msra.mxu0 %v2694
        %2704 = vmatmul.bf16.gmra.mxu0 %v2691
        %v2705 = vpop.f32.mrf.mxu0
        %v2706 = vadd.f32 0.0, %v2705
        %v2707 = vpop.f32.mrf.mxu0
        %v2708 = vadd.f32 0.0, %v2707
        %2709 = vdwg.mxu0
        %v2710 = vmul.f32 %v2637, 0.35355338
        %v2711 = vmul.f32 %v2639, 0.35355338
        %v2712 = vmul.f32 %v2660, 0.35355338
        %v2713 = vmul.f32 %v2662, 0.35355338
        %v2714 = vmul.f32 %v2683, 0.35355338
        %v2715 = vmul.f32 %v2685, 0.35355338
        %v2716 = vmul.f32 %v2706, 0.35355338
        %v2717 = vmul.f32 %v2708, 0.35355338
        %v2718 = vadd.f32 %v2710, %v1438
        %v2719 = vadd.f32 %v2711, %v1438
        %v2720 = vadd.f32 %v2712, %v1438
        %v2721 = vadd.f32 %v2713, %v1438
        %v2722 = vadd.f32 %v2714, %v1438
        %v2723 = vadd.f32 %v2715, %v1438
        %v2724 = vadd.f32 %v2716, %v1438
        %v2725 = vadd.f32 %v2717, %v1438
        %vm2726 = vcmask 130048
        %v2727 = vsel %vm2726, %v2718, -inf
        %2728 = vmax.xlane.f32.xlu0 %v2727
        %v2729 = vpop.xlane.xlu0 %2728
        %v2730 = vsel %vm2726, %v2719, -inf
        %2731 = vmax.xlane.f32.xlu0 %v2730
        %v2732 = vpop.xlane.xlu0 %2731
        %v2733 = vsel %vm2726, %v2720, -inf
        %2734 = vmax.xlane.f32.xlu0 %v2733
        %v2735 = vpop.xlane.xlu0 %2734
        %v2736 = vsel %vm2726, %v2721, -inf
        %2737 = vmax.xlane.f32.xlu0 %v2736
        %v2738 = vpop.xlane.xlu0 %2737
        %v2739 = vsel %vm2726, %v2722, -inf
        %2740 = vmax.xlane.f32.xlu0 %v2739
        %v2741 = vpop.xlane.xlu0 %2740
        %v2742 = vsel %vm2726, %v2723, -inf
        %2743 = vmax.xlane.f32.xlu0 %v2742
        %v2744 = vpop.xlane.xlu0 %2743
        %v2745 = vsel %vm2726, %v2724, -inf
        %2746 = vmax.xlane.f32.xlu0 %v2745
        %v2747 = vpop.xlane.xlu0 %2746
        %v2748 = vsel %vm2726, %v2725, -inf
        %2749 = vmax.xlane.f32.xlu0 %v2748
        %v2750 = vpop.xlane.xlu0 %2749
        %v2751 = vsub.f32 %v2718, %v2729
        %v2752 = vsub.f32 %v2719, %v2732
        %v2753 = vsub.f32 %v2720, %v2735
        %v2754 = vsub.f32 %v2721, %v2738
        %v2755 = vsub.f32 %v2722, %v2741
        %v2756 = vsub.f32 %v2723, %v2744
        %v2757 = vsub.f32 %v2724, %v2747
        %v2758 = vsub.f32 %v2725, %v2750
        %v2759 = vmul.f32 %v2751, 1.442695
        %v2760 = vpow.pop %v2759
        %v2761 = vmul.f32 %v2752, 1.442695
        %v2762 = vpow.pop %v2761
        %v2763 = vmul.f32 %v2753, 1.442695
        %v2764 = vpow.pop %v2763
        %v2765 = vmul.f32 %v2754, 1.442695
        %v2766 = vpow.pop %v2765
        %v2767 = vmul.f32 %v2755, 1.442695
        %v2768 = vpow.pop %v2767
        %v2769 = vmul.f32 %v2756, 1.442695
        %v2770 = vpow.pop %v2769
        %v2771 = vmul.f32 %v2757, 1.442695
        %v2772 = vpow.pop %v2771
        %v2773 = vmul.f32 %v2758, 1.442695
        %v2774 = vpow.pop %v2773
        %v2775 = vsel %vm2726, %v2760, 0.0
        %2776 = vadd.xlane.f32.xlu0 %v2775
        %v2777 = vpop.xlane.xlu0 %2776
        %v2778 = vsel %vm2726, %v2762, 0.0
        %2779 = vadd.xlane.f32.xlu0 %v2778
        %v2780 = vpop.xlane.xlu0 %2779
        %v2781 = vsel %vm2726, %v2764, 0.0
        %2782 = vadd.xlane.f32.xlu0 %v2781
        %v2783 = vpop.xlane.xlu0 %2782
        %v2784 = vsel %vm2726, %v2766, 0.0
        %2785 = vadd.xlane.f32.xlu0 %v2784
        %v2786 = vpop.xlane.xlu0 %2785
        %v2787 = vsel %vm2726, %v2768, 0.0
        %2788 = vadd.xlane.f32.xlu0 %v2787
        %v2789 = vpop.xlane.xlu0 %2788
        %v2790 = vsel %vm2726, %v2770, 0.0
        %2791 = vadd.xlane.f32.xlu0 %v2790
        %v2792 = vpop.xlane.xlu0 %2791
        %v2793 = vsel %vm2726, %v2772, 0.0
        %2794 = vadd.xlane.f32.xlu0 %v2793
        %v2795 = vpop.xlane.xlu0 %2794
        %v2796 = vsel %vm2726, %v2774, 0.0
        %2797 = vadd.xlane.f32.xlu0 %v2796
        %v2798 = vpop.xlane.xlu0 %2797
        %v2799 = vrcp.pop %v2777
        %v2800 = vmul.f32 %v2777, %v2799
        %v2801 = vsub.f32 1.0, %v2800
        %v2802 = vmul.f32 %v2799, %v2801
        %v2803 = vadd.f32 %v2799, %v2802
        %vm2804 = vweird.f32 %v2777
        %vm2805 = vweird.f32 %v2799
        %vm2806 = vmor %vm2804, %vm2805
        %v2807 = vsel %vm2806, %v2799, %v2803
        %v2808 = vand.u32 2147483647, %v2777
        %vm2809 = vcmp.eq.f32.partialorder %v2808, 8.507059e+37
        %v2810 = vand.u32 %v2777, 2147483648
        %v2811 = vor.u32 1.1754944e-38, %v2810
        %v2812 = vsel %vm2809, %v2811, %v2807
        %v2813 = vmul.f32 %v2760, %v2812
        %v2814 = vrcp.pop %v2780
        %v2815 = vmul.f32 %v2780, %v2814
        %v2816 = vsub.f32 1.0, %v2815
        %v2817 = vmul.f32 %v2814, %v2816
        %v2818 = vadd.f32 %v2814, %v2817
        %vm2819 = vweird.f32 %v2780
        %vm2820 = vweird.f32 %v2814
        %vm2821 = vmor %vm2819, %vm2820
        %v2822 = vsel %vm2821, %v2814, %v2818
        %v2823 = vand.u32 2147483647, %v2780
        %vm2824 = vcmp.eq.f32.partialorder %v2823, 8.507059e+37
        %v2825 = vand.u32 %v2780, 2147483648
        %v2826 = vor.u32 1.1754944e-38, %v2825
        %v2827 = vsel %vm2824, %v2826, %v2822
        %v2828 = vmul.f32 %v2762, %v2827
        %v2829 = vrcp.pop %v2783
        %v2830 = vmul.f32 %v2783, %v2829
        %v2831 = vsub.f32 1.0, %v2830
        %v2832 = vmul.f32 %v2829, %v2831
        %v2833 = vadd.f32 %v2829, %v2832
        %vm2834 = vweird.f32 %v2783
        %vm2835 = vweird.f32 %v2829
        %vm2836 = vmor %vm2834, %vm2835
        %v2837 = vsel %vm2836, %v2829, %v2833
        %v2838 = vand.u32 2147483647, %v2783
        %vm2839 = vcmp.eq.f32.partialorder %v2838, 8.507059e+37
        %v2840 = vand.u32 %v2783, 2147483648
        %v2841 = vor.u32 1.1754944e-38, %v2840
        %v2842 = vsel %vm2839, %v2841, %v2837
        %v2843 = vmul.f32 %v2764, %v2842
        %v2844 = vrcp.pop %v2786
        %v2845 = vmul.f32 %v2786, %v2844
        %v2846 = vsub.f32 1.0, %v2845
        %v2847 = vmul.f32 %v2844, %v2846
        %v2848 = vadd.f32 %v2844, %v2847
        %vm2849 = vweird.f32 %v2786
        %vm2850 = vweird.f32 %v2844
        %vm2851 = vmor %vm2849, %vm2850
        %v2852 = vsel %vm2851, %v2844, %v2848
        %v2853 = vand.u32 2147483647, %v2786
        %vm2854 = vcmp.eq.f32.partialorder %v2853, 8.507059e+37
        %v2855 = vand.u32 %v2786, 2147483648
        %v2856 = vor.u32 1.1754944e-38, %v2855
        %v2857 = vsel %vm2854, %v2856, %v2852
        %v2858 = vmul.f32 %v2766, %v2857
        %v2859 = vrcp.pop %v2789
        %v2860 = vmul.f32 %v2789, %v2859
        %v2861 = vsub.f32 1.0, %v2860
        %v2862 = vmul.f32 %v2859, %v2861
        %v2863 = vadd.f32 %v2859, %v2862
        %vm2864 = vweird.f32 %v2789
        %vm2865 = vweird.f32 %v2859
        %vm2866 = vmor %vm2864, %vm2865
        %v2867 = vsel %vm2866, %v2859, %v2863
        %v2868 = vand.u32 2147483647, %v2789
        %vm2869 = vcmp.eq.f32.partialorder %v2868, 8.507059e+37
        %v2870 = vand.u32 %v2789, 2147483648
        %v2871 = vor.u32 1.1754944e-38, %v2870
        %v2872 = vsel %vm2869, %v2871, %v2867
        %v2873 = vmul.f32 %v2768, %v2872
        %v2874 = vrcp.pop %v2792
        %v2875 = vmul.f32 %v2792, %v2874
        %v2876 = vsub.f32 1.0, %v2875
        %v2877 = vmul.f32 %v2874, %v2876
        %v2878 = vadd.f32 %v2874, %v2877
        %vm2879 = vweird.f32 %v2792
        %vm2880 = vweird.f32 %v2874
        %vm2881 = vmor %vm2879, %vm2880
        %v2882 = vsel %vm2881, %v2874, %v2878
        %v2883 = vand.u32 2147483647, %v2792
        %vm2884 = vcmp.eq.f32.partialorder %v2883, 8.507059e+37
        %v2885 = vand.u32 %v2792, 2147483648
        %v2886 = vor.u32 1.1754944e-38, %v2885
        %v2887 = vsel %vm2884, %v2886, %v2882
        %v2888 = vmul.f32 %v2770, %v2887
        %v2889 = vrcp.pop %v2795
        %v2890 = vmul.f32 %v2795, %v2889
        %v2891 = vsub.f32 1.0, %v2890
        %v2892 = vmul.f32 %v2889, %v2891
        %v2893 = vadd.f32 %v2889, %v2892
        %vm2894 = vweird.f32 %v2795
        %vm2895 = vweird.f32 %v2889
        %vm2896 = vmor %vm2894, %vm2895
        %v2897 = vsel %vm2896, %v2889, %v2893
        %v2898 = vand.u32 2147483647, %v2795
        %vm2899 = vcmp.eq.f32.partialorder %v2898, 8.507059e+37
        %v2900 = vand.u32 %v2795, 2147483648
        %v2901 = vor.u32 1.1754944e-38, %v2900
        %v2902 = vsel %vm2899, %v2901, %v2897
        %v2903 = vmul.f32 %v2772, %v2902
        %v2904 = vrcp.pop %v2798
        %v2905 = vmul.f32 %v2798, %v2904
        %v2906 = vsub.f32 1.0, %v2905
        %v2907 = vmul.f32 %v2904, %v2906
        %v2908 = vadd.f32 %v2904, %v2907
        %vm2909 = vweird.f32 %v2798
        %vm2910 = vweird.f32 %v2904
        %vm2911 = vmor %vm2909, %vm2910
        %v2912 = vsel %vm2911, %v2904, %v2908
        %v2913 = vand.u32 2147483647, %v2798
        %vm2914 = vcmp.eq.f32.partialorder %v2913, 8.507059e+37
        %v2915 = vand.u32 %v2798, 2147483648
        %v2916 = vor.u32 1.1754944e-38, %v2915
        %v2917 = vsel %vm2914, %v2916, %v2912
        %v2918 = vmul.f32 %v2774, %v2917
        %v2919 = vpack.c.bf16 %v2813, %v2813
        %v2920 = vpack.c.bf16 %v2828, %v2828
        %v2921 = vpack.c.bf16 %v2843, %v2843
        %v2922 = vpack.c.bf16 %v2858, %v2858
        %v2923 = vpack.c.bf16 %v2873, %v2873
        %v2924 = vpack.c.bf16 %v2888, %v2888
        %v2925 = vpack.c.bf16 %v2903, %v2903
        %v2926 = vpack.c.bf16 %v2918, %v2918
        %2927 = vxpose.xlu0.c.b16.start [1/8] %v1915, 128
        %2928 = vxpose.xlu0.c.b16.cont [2/8] 0, 128
        %2929 = vxpose.xlu0.c.b16.cont [3/8] 0, 128
        %2930 = vxpose.xlu0.c.b16.cont [4/8] 0, 128
        %2931 = vxpose.xlu0.c.b16.cont [5/8] 0, 128
        %2932 = vxpose.xlu0.c.b16.cont [6/8] 0, 128
        %2933 = vxpose.xlu0.c.b16.cont [7/8] 0, 128
        %2934 = vxpose.xlu0.c.b16.end [8/8] 0, 128
        %v2935 = vpop.trf.xlu0
        %v2936 = vpop.trf.xlu0
        %v2937 = vpop.trf.xlu0
        %v2938 = vpop.trf.xlu0
        %v2939 = vpop.trf.xlu0
        %v2940 = vpop.trf.xlu0
        %v2941 = vpop.trf.xlu0
        %v2942 = vpop.trf.xlu0
        %2943 = vxpose.xlu0.c.b16.start [1/8] %v1916, 128
        %2944 = vxpose.xlu0.c.b16.cont [2/8] 0, 128
        %2945 = vxpose.xlu0.c.b16.cont [3/8] 0, 128
        %2946 = vxpose.xlu0.c.b16.cont [4/8] 0, 128
        %2947 = vxpose.xlu0.c.b16.cont [5/8] 0, 128
        %2948 = vxpose.xlu0.c.b16.cont [6/8] 0, 128
        %2949 = vxpose.xlu0.c.b16.cont [7/8] 0, 128
        %2950 = vxpose.xlu0.c.b16.end [8/8] 0, 128
        %v2951 = vpop.trf.xlu0
        %v2952 = vpop.trf.xlu0
        %v2953 = vpop.trf.xlu0
        %v2954 = vpop.trf.xlu0
        %v2955 = vpop.trf.xlu0
        %v2956 = vpop.trf.xlu0
        %v2957 = vpop.trf.xlu0
        %v2958 = vpop.trf.xlu0
        %2959 = vxpose.xlu0.c.b16.start [1/8] %v1917, 128
        %2960 = vxpose.xlu0.c.b16.cont [2/8] 0, 128
        %2961 = vxpose.xlu0.c.b16.cont [3/8] 0, 128
        %2962 = vxpose.xlu0.c.b16.cont [4/8] 0, 128
        %2963 = vxpose.xlu0.c.b16.cont [5/8] 0, 128
        %2964 = vxpose.xlu0.c.b16.cont [6/8] 0, 128
        %2965 = vxpose.xlu0.c.b16.cont [7/8] 0, 128
        %2966 = vxpose.xlu0.c.b16.end [8/8] 0, 128
        %v2967 = vpop.trf.xlu0
        %v2968 = vpop.trf.xlu0
        %v2969 = vpop.trf.xlu0
        %v2970 = vpop.trf.xlu0
        %v2971 = vpop.trf.xlu0
        %v2972 = vpop.trf.xlu0
        %v2973 = vpop.trf.xlu0
        %v2974 = vpop.trf.xlu0
        %2975 = vxpose.xlu0.c.b16.start [1/8] %v1918, 128
        %2976 = vxpose.xlu0.c.b16.cont [2/8] 0, 128
        %2977 = vxpose.xlu0.c.b16.cont [3/8] 0, 128
        %2978 = vxpose.xlu0.c.b16.cont [4/8] 0, 128
        %2979 = vxpose.xlu0.c.b16.cont [5/8] 0, 128
        %2980 = vxpose.xlu0.c.b16.cont [6/8] 0, 128
        %2981 = vxpose.xlu0.c.b16.cont [7/8] 0, 128
        %2982 = vxpose.xlu0.c.b16.end [8/8] 0, 128
        %v2983 = vpop.trf.xlu0
        %v2984 = vpop.trf.xlu0
        %v2985 = vpop.trf.xlu0
        %v2986 = vpop.trf.xlu0
        %v2987 = vpop.trf.xlu0
        %v2988 = vpop.trf.xlu0
        %v2989 = vpop.trf.xlu0
        %v2990 = vpop.trf.xlu0
        %2991 = vxpose.xlu0.c.b16.start [1/8] %v1919, 128
        %2992 = vxpose.xlu0.c.b16.cont [2/8] 0, 128
        %2993 = vxpose.xlu0.c.b16.cont [3/8] 0, 128
        %2994 = vxpose.xlu0.c.b16.cont [4/8] 0, 128
        %2995 = vxpose.xlu0.c.b16.cont [5/8] 0, 128
        %2996 = vxpose.xlu0.c.b16.cont [6/8] 0, 128
        %2997 = vxpose.xlu0.c.b16.cont [7/8] 0, 128
        %2998 = vxpose.xlu0.c.b16.end [8/8] 0, 128
        %v2999 = vpop.trf.xlu0
        %v3000 = vpop.trf.xlu0
        %v3001 = vpop.trf.xlu0
        %v3002 = vpop.trf.xlu0
        %v3003 = vpop.trf.xlu0
        %v3004 = vpop.trf.xlu0
        %v3005 = vpop.trf.xlu0
        %v3006 = vpop.trf.xlu0
        %3007 = vxpose.xlu0.c.b16.start [1/8] %v1920, 128
        %3008 = vxpose.xlu0.c.b16.cont [2/8] 0, 128
        %3009 = vxpose.xlu0.c.b16.cont [3/8] 0, 128
        %3010 = vxpose.xlu0.c.b16.cont [4/8] 0, 128
        %3011 = vxpose.xlu0.c.b16.cont [5/8] 0, 128
        %3012 = vxpose.xlu0.c.b16.cont [6/8] 0, 128
        %3013 = vxpose.xlu0.c.b16.cont [7/8] 0, 128
        %3014 = vxpose.xlu0.c.b16.end [8/8] 0, 128
        %v3015 = vpop.trf.xlu0
        %v3016 = vpop.trf.xlu0
        %v3017 = vpop.trf.xlu0
        %v3018 = vpop.trf.xlu0
        %v3019 = vpop.trf.xlu0
        %v3020 = vpop.trf.xlu0
        %v3021 = vpop.trf.xlu0
        %v3022 = vpop.trf.xlu0
        %3023 = vxpose.xlu0.c.b16.start [1/8] %v1921, 128
        %3024 = vxpose.xlu0.c.b16.cont [2/8] 0, 128
        %3025 = vxpose.xlu0.c.b16.cont [3/8] 0, 128
        %3026 = vxpose.xlu0.c.b16.cont [4/8] 0, 128
        %3027 = vxpose.xlu0.c.b16.cont [5/8] 0, 128
        %3028 = vxpose.xlu0.c.b16.cont [6/8] 0, 128
        %3029 = vxpose.xlu0.c.b16.cont [7/8] 0, 128
        %3030 = vxpose.xlu0.c.b16.end [8/8] 0, 128
        %v3031 = vpop.trf.xlu0
        %v3032 = vpop.trf.xlu0
        %v3033 = vpop.trf.xlu0
        %v3034 = vpop.trf.xlu0
        %v3035 = vpop.trf.xlu0
        %v3036 = vpop.trf.xlu0
        %v3037 = vpop.trf.xlu0
        %v3038 = vpop.trf.xlu0
        %3039 = vxpose.xlu0.c.b16.start [1/8] %v1922, 128
        %3040 = vxpose.xlu0.c.b16.cont [2/8] 0, 128
        %3041 = vxpose.xlu0.c.b16.cont [3/8] 0, 128
        %3042 = vxpose.xlu0.c.b16.cont [4/8] 0, 128
        %3043 = vxpose.xlu0.c.b16.cont [5/8] 0, 128
        %3044 = vxpose.xlu0.c.b16.cont [6/8] 0, 128
        %3045 = vxpose.xlu0.c.b16.cont [7/8] 0, 128
        %3046 = vxpose.xlu0.c.b16.end [8/8] 0, 128
        %v3047 = vpop.trf.xlu0
        %v3048 = vpop.trf.xlu0
        %v3049 = vpop.trf.xlu0
        %v3050 = vpop.trf.xlu0
        %v3051 = vpop.trf.xlu0
        %v3052 = vpop.trf.xlu0
        %v3053 = vpop.trf.xlu0
        %v3054 = vpop.trf.xlu0
        %3055 = vxpose.xlu0.c.b16.start [1/8] %v1923, 128
        %3056 = vxpose.xlu0.c.b16.cont [2/8] 0, 128
        %3057 = vxpose.xlu0.c.b16.cont [3/8] 0, 128
        %3058 = vxpose.xlu0.c.b16.cont [4/8] 0, 128
        %3059 = vxpose.xlu0.c.b16.cont [5/8] 0, 128
        %3060 = vxpose.xlu0.c.b16.cont [6/8] 0, 128
        %3061 = vxpose.xlu0.c.b16.cont [7/8] 0, 128
        %3062 = vxpose.xlu0.c.b16.end [8/8] 0, 128
        %v3063 = vpop.trf.xlu0
        %v3064 = vpop.trf.xlu0
        %v3065 = vpop.trf.xlu0
        %v3066 = vpop.trf.xlu0
        %v3067 = vpop.trf.xlu0
        %v3068 = vpop.trf.xlu0
        %v3069 = vpop.trf.xlu0
        %v3070 = vpop.trf.xlu0
        %3071 = vxpose.xlu0.c.b16.start [1/8] %v1924, 128
        %3072 = vxpose.xlu0.c.b16.cont [2/8] 0, 128
        %3073 = vxpose.xlu0.c.b16.cont [3/8] 0, 128
        %3074 = vxpose.xlu0.c.b16.cont [4/8] 0, 128
        %3075 = vxpose.xlu0.c.b16.cont [5/8] 0, 128
        %3076 = vxpose.xlu0.c.b16.cont [6/8] 0, 128
        %3077 = vxpose.xlu0.c.b16.cont [7/8] 0, 128
        %3078 = vxpose.xlu0.c.b16.end [8/8] 0, 128
        %v3079 = vpop.trf.xlu0
        %v3080 = vpop.trf.xlu0
        %v3081 = vpop.trf.xlu0
        %v3082 = vpop.trf.xlu0
        %v3083 = vpop.trf.xlu0
        %v3084 = vpop.trf.xlu0
        %v3085 = vpop.trf.xlu0
        %v3086 = vpop.trf.xlu0
        %3087 = vxpose.xlu0.c.b16.start [1/8] %v1925, 128
        %3088 = vxpose.xlu0.c.b16.cont [2/8] 0, 128
        %3089 = vxpose.xlu0.c.b16.cont [3/8] 0, 128
        %3090 = vxpose.xlu0.c.b16.cont [4/8] 0, 128
        %3091 = vxpose.xlu0.c.b16.cont [5/8] 0, 128
        %3092 = vxpose.xlu0.c.b16.cont [6/8] 0, 128
        %3093 = vxpose.xlu0.c.b16.cont [7/8] 0, 128
        %3094 = vxpose.xlu0.c.b16.end [8/8] 0, 128
        %v3095 = vpop.trf.xlu0
        %v3096 = vpop.trf.xlu0
        %v3097 = vpop.trf.xlu0
        %v3098 = vpop.trf.xlu0
        %v3099 = vpop.trf.xlu0
        %v3100 = vpop.trf.xlu0
        %v3101 = vpop.trf.xlu0
        %v3102 = vpop.trf.xlu0
        %3103 = vxpose.xlu0.c.b16.start [1/8] %v1926, 128
        %3104 = vxpose.xlu0.c.b16.cont [2/8] 0, 128
        %3105 = vxpose.xlu0.c.b16.cont [3/8] 0, 128
        %3106 = vxpose.xlu0.c.b16.cont [4/8] 0, 128
        %3107 = vxpose.xlu0.c.b16.cont [5/8] 0, 128
        %3108 = vxpose.xlu0.c.b16.cont [6/8] 0, 128
        %3109 = vxpose.xlu0.c.b16.cont [7/8] 0, 128
        %3110 = vxpose.xlu0.c.b16.end [8/8] 0, 128
        %v3111 = vpop.trf.xlu0
        %v3112 = vpop.trf.xlu0
        %v3113 = vpop.trf.xlu0
        %v3114 = vpop.trf.xlu0
        %v3115 = vpop.trf.xlu0
        %v3116 = vpop.trf.xlu0
        %v3117 = vpop.trf.xlu0
        %v3118 = vpop.trf.xlu0
        %3119 = vxpose.xlu0.c.b16.start [1/8] %v1927, 128
        %3120 = vxpose.xlu0.c.b16.cont [2/8] 0, 128
        %3121 = vxpose.xlu0.c.b16.cont [3/8] 0, 128
        %3122 = vxpose.xlu0.c.b16.cont [4/8] 0, 128
        %3123 = vxpose.xlu0.c.b16.cont [5/8] 0, 128
        %3124 = vxpose.xlu0.c.b16.cont [6/8] 0, 128
        %3125 = vxpose.xlu0.c.b16.cont [7/8] 0, 128
        %3126 = vxpose.xlu0.c.b16.end [8/8] 0, 128
        %v3127 = vpop.trf.xlu0
        %v3128 = vpop.trf.xlu0
        %v3129 = vpop.trf.xlu0
        %v3130 = vpop.trf.xlu0
        %v3131 = vpop.trf.xlu0
        %v3132 = vpop.trf.xlu0
        %v3133 = vpop.trf.xlu0
        %v3134 = vpop.trf.xlu0
        %3135 = vxpose.xlu0.c.b16.start [1/8] %v1928, 128
        %3136 = vxpose.xlu0.c.b16.cont [2/8] 0, 128
        %3137 = vxpose.xlu0.c.b16.cont [3/8] 0, 128
        %3138 = vxpose.xlu0.c.b16.cont [4/8] 0, 128
        %3139 = vxpose.xlu0.c.b16.cont [5/8] 0, 128
        %3140 = vxpose.xlu0.c.b16.cont [6/8] 0, 128
        %3141 = vxpose.xlu0.c.b16.cont [7/8] 0, 128
        %3142 = vxpose.xlu0.c.b16.end [8/8] 0, 128
        %v3143 = vpop.trf.xlu0
        %v3144 = vpop.trf.xlu0
        %v3145 = vpop.trf.xlu0
        %v3146 = vpop.trf.xlu0
        %v3147 = vpop.trf.xlu0
        %v3148 = vpop.trf.xlu0
        %v3149 = vpop.trf.xlu0
        %v3150 = vpop.trf.xlu0
        %3151 = vxpose.xlu0.c.b16.start [1/8] %v1929, 128
        %3152 = vxpose.xlu0.c.b16.cont [2/8] 0, 128
        %3153 = vxpose.xlu0.c.b16.cont [3/8] 0, 128
        %3154 = vxpose.xlu0.c.b16.cont [4/8] 0, 128
        %3155 = vxpose.xlu0.c.b16.cont [5/8] 0, 128
        %3156 = vxpose.xlu0.c.b16.cont [6/8] 0, 128
        %3157 = vxpose.xlu0.c.b16.cont [7/8] 0, 128
        %3158 = vxpose.xlu0.c.b16.end [8/8] 0, 128
        %v3159 = vpop.trf.xlu0
        %v3160 = vpop.trf.xlu0
        %v3161 = vpop.trf.xlu0
        %v3162 = vpop.trf.xlu0
        %v3163 = vpop.trf.xlu0
        %v3164 = vpop.trf.xlu0
        %v3165 = vpop.trf.xlu0
        %v3166 = vpop.trf.xlu0
        %3167 = vxpose.xlu0.c.b16.start [1/8] %v1930, 128
        %3168 = vxpose.xlu0.c.b16.cont [2/8] 0, 128
        %3169 = vxpose.xlu0.c.b16.cont [3/8] 0, 128
        %3170 = vxpose.xlu0.c.b16.cont [4/8] 0, 128
        %3171 = vxpose.xlu0.c.b16.cont [5/8] 0, 128
        %3172 = vxpose.xlu0.c.b16.cont [6/8] 0, 128
        %3173 = vxpose.xlu0.c.b16.cont [7/8] 0, 128
        %3174 = vxpose.xlu0.c.b16.end [8/8] 0, 128
        %v3175 = vpop.trf.xlu0
        %v3176 = vpop.trf.xlu0
        %v3177 = vpop.trf.xlu0
        %v3178 = vpop.trf.xlu0
        %v3179 = vpop.trf.xlu0
        %v3180 = vpop.trf.xlu0
        %v3181 = vpop.trf.xlu0
        %v3182 = vpop.trf.xlu0
        %v3183 = vrot.slane %v2999, 4
        %v3184 = vsel %vm1932, %v3183, %v2935
        %v3186 = vunpack.c.l.s4 1983009808
        %v3187 = vunpack.c.0.s8 %v3186
        %v3188 = vperm.slane %v3184, %v3187
        %v3189 = vrot.slane %v3031, 4
        %v3190 = vsel %vm1932, %v3189, %v2967
        %v3192 = vunpack.c.l.s4 1983009808
        %v3193 = vunpack.c.0.s8 %v3192
        %v3194 = vperm.slane %v3190, %v3193
        %v3195 = vrot.slane %v3127, 4
        %v3196 = vsel %vm1932, %v3195, %v3063
        %v3198 = vunpack.c.l.s4 1983009808
        %v3199 = vunpack.c.0.s8 %v3198
        %v3200 = vperm.slane %v3196, %v3199
        %v3201 = vrot.slane %v3159, 4
        %v3202 = vsel %vm1932, %v3201, %v3095
        %v3204 = vunpack.c.l.s4 1983009808
        %v3205 = vunpack.c.0.s8 %v3204
        %v3206 = vperm.slane %v3202, %v3205
        %v3207 = vrot.slane %v3194, 4
        %v3208 = vsel %vm1932, %v3207, %v3188
        %v3209 = vrot.slane %v3188, 4
        %v3210 = vsel %vm1932, %v3194, %v3209
        %v3212 = vunpack.c.l.s4 1934713408
        %v3213 = vunpack.c.0.s8 %v3212
        %v3214 = vperm.slane %v3208, %v3213
        %v3216 = vunpack.c.l.s4 1934713408
        %v3217 = vunpack.c.0.s8 %v3216
        %v3218 = vperm.slane %v3210, %v3217
        %v3219 = vrot.slane %v3206, 4
        %v3220 = vsel %vm1932, %v3219, %v3200
        %v3221 = vrot.slane %v3200, 4
        %v3222 = vsel %vm1932, %v3206, %v3221
        %v3224 = vunpack.c.l.s4 1934713408
        %v3225 = vunpack.c.0.s8 %v3224
        %v3226 = vperm.slane %v3220, %v3225
        %v3228 = vunpack.c.l.s4 1934713408
        %v3229 = vunpack.c.0.s8 %v3228
        %v3230 = vperm.slane %v3222, %v3229
        %v3231 = vrot.slane %v3226, 4
        %v3232 = vsel %vm1932, %v3231, %v3214
        %v3233 = vrot.slane %v3214, 4
        %v3234 = vsel %vm1932, %v3226, %v3233
        %v3235 = vrot.slane %v3230, 4
        %v3236 = vsel %vm1932, %v3235, %v3218
        %v3237 = vrot.slane %v3218, 4
        %v3238 = vsel %vm1932, %v3230, %v3237
        %v3239 = vrot.slane %v3015, 4
        %v3240 = vsel %vm1932, %v3239, %v2951
        %v3242 = vunpack.c.l.s4 1983009808
        %v3243 = vunpack.c.0.s8 %v3242
        %v3244 = vperm.slane %v3240, %v3243
        %v3245 = vrot.slane %v3047, 4
        %v3246 = vsel %vm1932, %v3245, %v2983
        %v3248 = vunpack.c.l.s4 1983009808
        %v3249 = vunpack.c.0.s8 %v3248
        %v3250 = vperm.slane %v3246, %v3249
        %v3251 = vrot.slane %v3143, 4
        %v3252 = vsel %vm1932, %v3251, %v3079
        %v3254 = vunpack.c.l.s4 1983009808
        %v3255 = vunpack.c.0.s8 %v3254
        %v3256 = vperm.slane %v3252, %v3255
        %v3257 = vrot.slane %v3175, 4
        %v3258 = vsel %vm1932, %v3257, %v3111
        %v3260 = vunpack.c.l.s4 1983009808
        %v3261 = vunpack.c.0.s8 %v3260
        %v3262 = vperm.slane %v3258, %v3261
        %v3263 = vrot.slane %v3250, 4
        %v3264 = vsel %vm1932, %v3263, %v3244
        %v3265 = vrot.slane %v3244, 4
        %v3266 = vsel %vm1932, %v3250, %v3265
        %v3268 = vunpack.c.l.s4 1934713408
        %v3269 = vunpack.c.0.s8 %v3268
        %v3270 = vperm.slane %v3264, %v3269
        %v3272 = vunpack.c.l.s4 1934713408
        %v3273 = vunpack.c.0.s8 %v3272
        %v3274 = vperm.slane %v3266, %v3273
        %v3275 = vrot.slane %v3262, 4
        %v3276 = vsel %vm1932, %v3275, %v3256
        %v3277 = vrot.slane %v3256, 4
        %v3278 = vsel %vm1932, %v3262, %v3277
        %v3280 = vunpack.c.l.s4 1934713408
        %v3281 = vunpack.c.0.s8 %v3280
        %v3282 = vperm.slane %v3276, %v3281
        %v3284 = vunpack.c.l.s4 1934713408
        %v3285 = vunpack.c.0.s8 %v3284
        %v3286 = vperm.slane %v3278, %v3285
        %v3287 = vrot.slane %v3282, 4
        %v3288 = vsel %vm1932, %v3287, %v3270
        %v3289 = vrot.slane %v3270, 4
        %v3290 = vsel %vm1932, %v3282, %v3289
        %v3291 = vrot.slane %v3286, 4
        %v3292 = vsel %vm1932, %v3291, %v3274
        %v3293 = vrot.slane %v3274, 4
        %v3294 = vsel %vm1932, %v3286, %v3293
        %v3297 = vpack.i.b16 %v3288, %v3232
        %v3299 = vshrl.u32 %v3232, 16
        %v3300 = vshrl.u32 %v3288, 16
        %v3301 = vpack.i.b16 %v3300, %v3299
        %v3305 = vpack.i.b16 %v3290, %v3234
        %v3307 = vshrl.u32 %v3234, 16
        %v3308 = vshrl.u32 %v3290, 16
        %v3309 = vpack.i.b16 %v3308, %v3307
        %v3313 = vpack.i.b16 %v3292, %v3236
        %v3315 = vshrl.u32 %v3236, 16
        %v3316 = vshrl.u32 %v3292, 16
        %v3317 = vpack.i.b16 %v3316, %v3315
        %v3321 = vpack.i.b16 %v3294, %v3238
        %v3323 = vshrl.u32 %v3238, 16
        %v3324 = vshrl.u32 %v3294, 16
        %v3325 = vpack.i.b16 %v3324, %v3323
        %3327 = vxpose.xlu0.c.b16.start [1/8] %v3297, 128
        %3328 = vxpose.xlu0.c.b16.cont [2/8] 0, 128
        %3329 = vxpose.xlu0.c.b16.cont [3/8] 0, 128
        %3330 = vxpose.xlu0.c.b16.cont [4/8] 0, 128
        %3331 = vxpose.xlu0.c.b16.cont [5/8] 0, 128
        %3332 = vxpose.xlu0.c.b16.cont [6/8] 0, 128
        %3333 = vxpose.xlu0.c.b16.cont [7/8] 0, 128
        %3334 = vxpose.xlu0.c.b16.end [8/8] 0, 128
        %v3335 = vpop.trf.xlu0
        %v3336 = vpop.trf.xlu0
        %v3337 = vpop.trf.xlu0
        %v3338 = vpop.trf.xlu0
        %v3339 = vpop.trf.xlu0
        %v3340 = vpop.trf.xlu0
        %v3341 = vpop.trf.xlu0
        %v3342 = vpop.trf.xlu0
        %3343 = vxpose.xlu0.c.b16.start [1/8] %v3301, 128
        %3344 = vxpose.xlu0.c.b16.cont [2/8] 0, 128
        %3345 = vxpose.xlu0.c.b16.cont [3/8] 0, 128
        %3346 = vxpose.xlu0.c.b16.cont [4/8] 0, 128
        %3347 = vxpose.xlu0.c.b16.cont [5/8] 0, 128
        %3348 = vxpose.xlu0.c.b16.cont [6/8] 0, 128
        %3349 = vxpose.xlu0.c.b16.cont [7/8] 0, 128
        %3350 = vxpose.xlu0.c.b16.end [8/8] 0, 128
        %v3351 = vpop.trf.xlu0
        %v3352 = vpop.trf.xlu0
        %v3353 = vpop.trf.xlu0
        %v3354 = vpop.trf.xlu0
        %v3355 = vpop.trf.xlu0
        %v3356 = vpop.trf.xlu0
        %v3357 = vpop.trf.xlu0
        %v3358 = vpop.trf.xlu0
        %3359 = vxpose.xlu0.c.b16.start [1/8] %v3305, 128
        %3360 = vxpose.xlu0.c.b16.cont [2/8] 0, 128
        %3361 = vxpose.xlu0.c.b16.cont [3/8] 0, 128
        %3362 = vxpose.xlu0.c.b16.cont [4/8] 0, 128
        %3363 = vxpose.xlu0.c.b16.cont [5/8] 0, 128
        %3364 = vxpose.xlu0.c.b16.cont [6/8] 0, 128
        %3365 = vxpose.xlu0.c.b16.cont [7/8] 0, 128
        %3366 = vxpose.xlu0.c.b16.end [8/8] 0, 128
        %v3367 = vpop.trf.xlu0
        %v3368 = vpop.trf.xlu0
        %v3369 = vpop.trf.xlu0
        %v3370 = vpop.trf.xlu0
        %v3371 = vpop.trf.xlu0
        %v3372 = vpop.trf.xlu0
        %v3373 = vpop.trf.xlu0
        %v3374 = vpop.trf.xlu0
        %3375 = vxpose.xlu0.c.b16.start [1/8] %v3309, 128
        %3376 = vxpose.xlu0.c.b16.cont [2/8] 0, 128
        %3377 = vxpose.xlu0.c.b16.cont [3/8] 0, 128
        %3378 = vxpose.xlu0.c.b16.cont [4/8] 0, 128
        %3379 = vxpose.xlu0.c.b16.cont [5/8] 0, 128
        %3380 = vxpose.xlu0.c.b16.cont [6/8] 0, 128
        %3381 = vxpose.xlu0.c.b16.cont [7/8] 0, 128
        %3382 = vxpose.xlu0.c.b16.end [8/8] 0, 128
        %v3383 = vpop.trf.xlu0
        %v3384 = vpop.trf.xlu0
        %v3385 = vpop.trf.xlu0
        %v3386 = vpop.trf.xlu0
        %v3387 = vpop.trf.xlu0
        %v3388 = vpop.trf.xlu0
        %v3389 = vpop.trf.xlu0
        %v3390 = vpop.trf.xlu0
        %3391 = vxpose.xlu0.c.b16.start [1/8] %v3313, 128
        %3392 = vxpose.xlu0.c.b16.cont [2/8] 0, 128
        %3393 = vxpose.xlu0.c.b16.cont [3/8] 0, 128
        %3394 = vxpose.xlu0.c.b16.cont [4/8] 0, 128
        %3395 = vxpose.xlu0.c.b16.cont [5/8] 0, 128
        %3396 = vxpose.xlu0.c.b16.cont [6/8] 0, 128
        %3397 = vxpose.xlu0.c.b16.cont [7/8] 0, 128
        %3398 = vxpose.xlu0.c.b16.end [8/8] 0, 128
        %v3399 = vpop.trf.xlu0
        %v3400 = vpop.trf.xlu0
        %v3401 = vpop.trf.xlu0
        %v3402 = vpop.trf.xlu0
        %v3403 = vpop.trf.xlu0
        %v3404 = vpop.trf.xlu0
        %v3405 = vpop.trf.xlu0
        %v3406 = vpop.trf.xlu0
        %3407 = vxpose.xlu0.c.b16.start [1/8] %v3317, 128
        %3408 = vxpose.xlu0.c.b16.cont [2/8] 0, 128
        %3409 = vxpose.xlu0.c.b16.cont [3/8] 0, 128
        %3410 = vxpose.xlu0.c.b16.cont [4/8] 0, 128
        %3411 = vxpose.xlu0.c.b16.cont [5/8] 0, 128
        %3412 = vxpose.xlu0.c.b16.cont [6/8] 0, 128
        %3413 = vxpose.xlu0.c.b16.cont [7/8] 0, 128
        %3414 = vxpose.xlu0.c.b16.end [8/8] 0, 128
        %v3415 = vpop.trf.xlu0
        %v3416 = vpop.trf.xlu0
        %v3417 = vpop.trf.xlu0
        %v3418 = vpop.trf.xlu0
        %v3419 = vpop.trf.xlu0
        %v3420 = vpop.trf.xlu0
        %v3421 = vpop.trf.xlu0
        %v3422 = vpop.trf.xlu0
        %3423 = vxpose.xlu0.c.b16.start [1/8] %v3321, 128
        %3424 = vxpose.xlu0.c.b16.cont [2/8] 0, 128
        %3425 = vxpose.xlu0.c.b16.cont [3/8] 0, 128
        %3426 = vxpose.xlu0.c.b16.cont [4/8] 0, 128
        %3427 = vxpose.xlu0.c.b16.cont [5/8] 0, 128
        %3428 = vxpose.xlu0.c.b16.cont [6/8] 0, 128
        %3429 = vxpose.xlu0.c.b16.cont [7/8] 0, 128
        %3430 = vxpose.xlu0.c.b16.end [8/8] 0, 128
        %v3431 = vpop.trf.xlu0
        %v3432 = vpop.trf.xlu0
        %v3433 = vpop.trf.xlu0
        %v3434 = vpop.trf.xlu0
        %v3435 = vpop.trf.xlu0
        %v3436 = vpop.trf.xlu0
        %v3437 = vpop.trf.xlu0
        %v3438 = vpop.trf.xlu0
        %3439 = vxpose.xlu0.c.b16.start [1/8] %v3325, 128
        %3440 = vxpose.xlu0.c.b16.cont [2/8] 0, 128
        %3441 = vxpose.xlu0.c.b16.cont [3/8] 0, 128
        %3442 = vxpose.xlu0.c.b16.cont [4/8] 0, 128
        %3443 = vxpose.xlu0.c.b16.cont [5/8] 0, 128
        %3444 = vxpose.xlu0.c.b16.cont [6/8] 0, 128
        %3445 = vxpose.xlu0.c.b16.cont [7/8] 0, 128
        %3446 = vxpose.xlu0.c.b16.end [8/8] 0, 128
        %v3447 = vpop.trf.xlu0
        %v3448 = vpop.trf.xlu0
        %v3449 = vpop.trf.xlu0
        %v3450 = vpop.trf.xlu0
        %v3451 = vpop.trf.xlu0
        %v3452 = vpop.trf.xlu0
        %v3453 = vpop.trf.xlu0
        %v3454 = vpop.trf.xlu0
        %v3455 = vrot.slane %v3399, 4
        %v3456 = vsel %vm1932, %v3455, %v3335
        %v3458 = vunpack.c.l.s4 1983009808
        %v3459 = vunpack.c.0.s8 %v3458
        %v3460 = vperm.slane %v3456, %v3459
        %v3461 = vrot.slane %v3431, 4
        %v3462 = vsel %vm1932, %v3461, %v3367
        %v3464 = vunpack.c.l.s4 1983009808
        %v3465 = vunpack.c.0.s8 %v3464
        %v3466 = vperm.slane %v3462, %v3465
        %v3467 = vrot.slane %v3466, 4
        %v3468 = vsel %vm1932, %v3467, %v3460
        %v3470 = vunpack.c.l.s4 1934713408
        %v3471 = vunpack.c.0.s8 %v3470
        %v3472 = vperm.slane %v3468, %v3471
        %v3473 = vrot.slane %v3472, 4
        %v3474 = vsel %vm1932, 0, %v3473
        %v3475 = vrot.slane %v3415, 4
        %v3476 = vsel %vm1932, %v3475, %v3351
        %v3478 = vunpack.c.l.s4 1983009808
        %v3479 = vunpack.c.0.s8 %v3478
        %v3480 = vperm.slane %v3476, %v3479
        %v3481 = vrot.slane %v3447, 4
        %v3482 = vsel %vm1932, %v3481, %v3383
        %v3484 = vunpack.c.l.s4 1983009808
        %v3485 = vunpack.c.0.s8 %v3484
        %v3486 = vperm.slane %v3482, %v3485
        %v3487 = vrot.slane %v3486, 4
        %v3488 = vsel %vm1932, %v3487, %v3480
        %v3490 = vunpack.c.l.s4 1934713408
        %v3491 = vunpack.c.0.s8 %v3490
        %v3492 = vperm.slane %v3488, %v3491
        %v3493 = vrot.slane %v3492, 4
        %v3494 = vsel %vm1932, 0, %v3493
        %v3497 = vpack.i.b16 %v3492, %v3472
        %v3498 = vshrl.u32 %v3472, 16
        %v3499 = vshrl.u32 %v3492, 16
        %v3500 = vpack.i.b16 %v3499, %v3498
        %v3503 = vpack.i.b16 %v3494, %v3474
        %v3504 = vshrl.u32 %v3474, 16
        %v3505 = vshrl.u32 %v3494, 16
        %v3506 = vpack.i.b16 %v3505, %v3504
        %v3509 = vunpack.c.l.b16 %v2919
        %v3510 = vunpack.c.l.b16 %v2920
        %v3511 = vpack.c.b16 %v3510, %v3509
        %v3513 = vsel %vm2726, %v3497, 0
        %v3516 = vsel %vm2726, %v3511, 0
        %3518 = vmatpush.bf16.xpose.msra.mxu0 0
        %3519 = vmatpush.bf16.xpose.msra.mxu0 0
        %3520 = vmatpush.bf16.xpose.msra.mxu0 0
        %3521 = vmatpush.bf16.xpose.msra.mxu0 0
        %3522 = vmatpush.bf16.xpose.msra.mxu0 0
        %3523 = vmatpush.bf16.xpose.msra.mxu0 0
        %3524 = vmatpush.bf16.xpose.msra.mxu0 0
        %3525 = vmatpush.bf16.xpose.msra.mxu0 %v3516
        %3526 = vmatmul.bf16.gmra.mxu0 %v3513
        %v3527 = vpop.f32.mrf.mxu0
        %v3528 = vadd.f32 0.0, %v3527
        %v3529 = vpop.f32.mrf.mxu0
        %3530 = vdwg.mxu0
        %v3533 = vunpack.c.l.b16 %v2921
        %v3534 = vunpack.c.l.b16 %v2922
        %v3535 = vpack.c.b16 %v3534, %v3533
        %v3537 = vsel %vm2726, %v3500, 0
        %v3540 = vsel %vm2726, %v3535, 0
        %3542 = vmatpush.bf16.xpose.msra.mxu0 0
        %3543 = vmatpush.bf16.xpose.msra.mxu0 0
        %3544 = vmatpush.bf16.xpose.msra.mxu0 0
        %3545 = vmatpush.bf16.xpose.msra.mxu0 0
        %3546 = vmatpush.bf16.xpose.msra.mxu0 0
        %3547 = vmatpush.bf16.xpose.msra.mxu0 0
        %3548 = vmatpush.bf16.xpose.msra.mxu0 0
        %3549 = vmatpush.bf16.xpose.msra.mxu0 %v3540
        %3550 = vmatmul.bf16.gmra.mxu0 %v3537
        %v3551 = vpop.f32.mrf.mxu0
        %v3552 = vadd.f32 0.0, %v3551
        %v3553 = vpop.f32.mrf.mxu0
        %3554 = vdwg.mxu0
        %v3557 = vunpack.c.l.b16 %v2923
        %v3558 = vunpack.c.l.b16 %v2924
        %v3559 = vpack.c.b16 %v3558, %v3557
        %v3561 = vsel %vm2726, %v3503, 0
        %v3564 = vsel %vm2726, %v3559, 0
        %3566 = vmatpush.bf16.xpose.msra.mxu0 0
        %3567 = vmatpush.bf16.xpose.msra.mxu0 0
        %3568 = vmatpush.bf16.xpose.msra.mxu0 0
        %3569 = vmatpush.bf16.xpose.msra.mxu0 0
        %3570 = vmatpush.bf16.xpose.msra.mxu0 0
        %3571 = vmatpush.bf16.xpose.msra.mxu0 0
        %3572 = vmatpush.bf16.xpose.msra.mxu0 0
        %3573 = vmatpush.bf16.xpose.msra.mxu0 %v3564
        %3574 = vmatmul.bf16.gmra.mxu0 %v3561
        %v3575 = vpop.f32.mrf.mxu0
        %v3576 = vadd.f32 0.0, %v3575
        %v3577 = vpop.f32.mrf.mxu0
        %3578 = vdwg.mxu0
        %v3581 = vunpack.c.l.b16 %v2925
        %v3582 = vunpack.c.l.b16 %v2926
        %v3583 = vpack.c.b16 %v3582, %v3581
        %v3585 = vsel %vm2726, %v3506, 0
        %v3588 = vsel %vm2726, %v3583, 0
        %3590 = vmatpush.bf16.xpose.msra.mxu0 0
        %3591 = vmatpush.bf16.xpose.msra.mxu0 0
        %3592 = vmatpush.bf16.xpose.msra.mxu0 0
        %3593 = vmatpush.bf16.xpose.msra.mxu0 0
        %3594 = vmatpush.bf16.xpose.msra.mxu0 0
        %3595 = vmatpush.bf16.xpose.msra.mxu0 0
        %3596 = vmatpush.bf16.xpose.msra.mxu0 0
        %3597 = vmatpush.bf16.xpose.msra.mxu0 %v3588
        %3598 = vmatmul.bf16.gmra.mxu0 %v3585
        %v3599 = vpop.f32.mrf.mxu0
        %v3600 = vadd.f32 0.0, %v3599
        %v3601 = vpop.f32.mrf.mxu0
        %3602 = vdwg.mxu0
        %3603 = vxpose.xlu0.b32.start [1/16] %v3528, 128
        %3604 = vxpose.xlu0.b32.cont [2/16] 0.0, 128
        %3605 = vxpose.xlu0.b32.cont [3/16] 0.0, 128
        %3606 = vxpose.xlu0.b32.cont [4/16] 0.0, 128
        %3607 = vxpose.xlu0.b32.cont [5/16] 0.0, 128
        %3608 = vxpose.xlu0.b32.cont [6/16] 0.0, 128
        %3609 = vxpose.xlu0.b32.cont [7/16] 0.0, 128
        %3610 = vxpose.xlu0.b32.cont [8/16] 0.0, 128
        %3611 = vxpose.xlu0.b32.cont [9/16] 0.0, 128
        %3612 = vxpose.xlu0.b32.cont [10/16] 0.0, 128
        %3613 = vxpose.xlu0.b32.cont [11/16] 0.0, 128
        %3614 = vxpose.xlu0.b32.cont [12/16] 0.0, 128
        %3615 = vxpose.xlu0.b32.cont [13/16] 0.0, 128
        %3616 = vxpose.xlu0.b32.cont [14/16] 0.0, 128
        %3617 = vxpose.xlu0.b32.cont [15/16] 0.0, 128
        %3618 = vxpose.xlu0.b32.end [16/16] 0.0, 128
        %v3619 = vpop.trf.xlu0
        %v3620 = vpop.trf.xlu0
        %v3621 = vpop.trf.xlu0
        %v3622 = vpop.trf.xlu0
        %v3623 = vpop.trf.xlu0
        %v3624 = vpop.trf.xlu0
        %v3625 = vpop.trf.xlu0
        %v3626 = vpop.trf.xlu0
        %v3627 = vpop.trf.xlu0
        %v3628 = vpop.trf.xlu0
        %v3629 = vpop.trf.xlu0
        %v3630 = vpop.trf.xlu0
        %v3631 = vpop.trf.xlu0
        %v3632 = vpop.trf.xlu0
        %v3633 = vpop.trf.xlu0
        %v3634 = vpop.trf.xlu0
        %3635 = vxpose.xlu0.b32.start [1/16] %v3552, 128
        %3636 = vxpose.xlu0.b32.cont [2/16] 0.0, 128
        %3637 = vxpose.xlu0.b32.cont [3/16] 0.0, 128
        %3638 = vxpose.xlu0.b32.cont [4/16] 0.0, 128
        %3639 = vxpose.xlu0.b32.cont [5/16] 0.0, 128
        %3640 = vxpose.xlu0.b32.cont [6/16] 0.0, 128
        %3641 = vxpose.xlu0.b32.cont [7/16] 0.0, 128
        %3642 = vxpose.xlu0.b32.cont [8/16] 0.0, 128
        %3643 = vxpose.xlu0.b32.cont [9/16] 0.0, 128
        %3644 = vxpose.xlu0.b32.cont [10/16] 0.0, 128
        %3645 = vxpose.xlu0.b32.cont [11/16] 0.0, 128
        %3646 = vxpose.xlu0.b32.cont [12/16] 0.0, 128
        %3647 = vxpose.xlu0.b32.cont [13/16] 0.0, 128
        %3648 = vxpose.xlu0.b32.cont [14/16] 0.0, 128
        %3649 = vxpose.xlu0.b32.cont [15/16] 0.0, 128
        %3650 = vxpose.xlu0.b32.end [16/16] 0.0, 128
        %v3651 = vpop.trf.xlu0
        %v3652 = vpop.trf.xlu0
        %v3653 = vpop.trf.xlu0
        %v3654 = vpop.trf.xlu0
        %v3655 = vpop.trf.xlu0
        %v3656 = vpop.trf.xlu0
        %v3657 = vpop.trf.xlu0
        %v3658 = vpop.trf.xlu0
        %v3659 = vpop.trf.xlu0
        %v3660 = vpop.trf.xlu0
        %v3661 = vpop.trf.xlu0
        %v3662 = vpop.trf.xlu0
        %v3663 = vpop.trf.xlu0
        %v3664 = vpop.trf.xlu0
        %v3665 = vpop.trf.xlu0
        %v3666 = vpop.trf.xlu0
        %3667 = vxpose.xlu0.b32.start [1/16] %v3576, 128
        %3668 = vxpose.xlu0.b32.cont [2/16] 0.0, 128
        %3669 = vxpose.xlu0.b32.cont [3/16] 0.0, 128
        %3670 = vxpose.xlu0.b32.cont [4/16] 0.0, 128
        %3671 = vxpose.xlu0.b32.cont [5/16] 0.0, 128
        %3672 = vxpose.xlu0.b32.cont [6/16] 0.0, 128
        %3673 = vxpose.xlu0.b32.cont [7/16] 0.0, 128
        %3674 = vxpose.xlu0.b32.cont [8/16] 0.0, 128
        %3675 = vxpose.xlu0.b32.cont [9/16] 0.0, 128
        %3676 = vxpose.xlu0.b32.cont [10/16] 0.0, 128
        %3677 = vxpose.xlu0.b32.cont [11/16] 0.0, 128
        %3678 = vxpose.xlu0.b32.cont [12/16] 0.0, 128
        %3679 = vxpose.xlu0.b32.cont [13/16] 0.0, 128
        %3680 = vxpose.xlu0.b32.cont [14/16] 0.0, 128
        %3681 = vxpose.xlu0.b32.cont [15/16] 0.0, 128
        %3682 = vxpose.xlu0.b32.end [16/16] 0.0, 128
        %v3683 = vpop.trf.xlu0
        %v3684 = vpop.trf.xlu0
        %v3685 = vpop.trf.xlu0
        %v3686 = vpop.trf.xlu0
        %v3687 = vpop.trf.xlu0
        %v3688 = vpop.trf.xlu0
        %v3689 = vpop.trf.xlu0
        %v3690 = vpop.trf.xlu0
        %v3691 = vpop.trf.xlu0
        %v3692 = vpop.trf.xlu0
        %v3693 = vpop.trf.xlu0
        %v3694 = vpop.trf.xlu0
        %v3695 = vpop.trf.xlu0
        %v3696 = vpop.trf.xlu0
        %v3697 = vpop.trf.xlu0
        %v3698 = vpop.trf.xlu0
        %3699 = vxpose.xlu0.b32.start [1/16] %v3600, 128
        %3700 = vxpose.xlu0.b32.cont [2/16] 0.0, 128
        %3701 = vxpose.xlu0.b32.cont [3/16] 0.0, 128
        %3702 = vxpose.xlu0.b32.cont [4/16] 0.0, 128
        %3703 = vxpose.xlu0.b32.cont [5/16] 0.0, 128
        %3704 = vxpose.xlu0.b32.cont [6/16] 0.0, 128
        %3705 = vxpose.xlu0.b32.cont [7/16] 0.0, 128
        %3706 = vxpose.xlu0.b32.cont [8/16] 0.0, 128
        %3707 = vxpose.xlu0.b32.cont [9/16] 0.0, 128
        %3708 = vxpose.xlu0.b32.cont [10/16] 0.0, 128
        %3709 = vxpose.xlu0.b32.cont [11/16] 0.0, 128
        %3710 = vxpose.xlu0.b32.cont [12/16] 0.0, 128
        %3711 = vxpose.xlu0.b32.cont [13/16] 0.0, 128
        %3712 = vxpose.xlu0.b32.cont [14/16] 0.0, 128
        %3713 = vxpose.xlu0.b32.cont [15/16] 0.0, 128
        %3714 = vxpose.xlu0.b32.end [16/16] 0.0, 128
        %v3715 = vpop.trf.xlu0
        %v3716 = vpop.trf.xlu0
        %v3717 = vpop.trf.xlu0
        %v3718 = vpop.trf.xlu0
        %v3719 = vpop.trf.xlu0
        %v3720 = vpop.trf.xlu0
        %v3721 = vpop.trf.xlu0
        %v3722 = vpop.trf.xlu0
        %v3723 = vpop.trf.xlu0
        %v3724 = vpop.trf.xlu0
        %v3725 = vpop.trf.xlu0
        %v3726 = vpop.trf.xlu0
        %v3727 = vpop.trf.xlu0
        %v3728 = vpop.trf.xlu0
        %v3729 = vpop.trf.xlu0
        %v3730 = vpop.trf.xlu0
        %v3731 = vrot.slane %v3683, 4
        %v3732 = vsel %vm1499, %v3731, %v3619
        %v3733 = vrot.slane %v3619, 4
        %v3734 = vsel %vm1499, %v3683, %v3733
        %v3736 = vunpack.c.l.s4 1983009808
        %v3737 = vunpack.c.0.s8 %v3736
        %v3738 = vperm.slane %v3732, %v3737
        %v3740 = vunpack.c.l.s4 1983009808
        %v3741 = vunpack.c.0.s8 %v3740
        %v3742 = vperm.slane %v3734, %v3741
        %v3743 = vrot.slane %v3715, 4
        %v3744 = vsel %vm1499, %v3743, %v3651
        %v3745 = vrot.slane %v3651, 4
        %v3746 = vsel %vm1499, %v3715, %v3745
        %v3748 = vunpack.c.l.s4 1983009808
        %v3749 = vunpack.c.0.s8 %v3748
        %v3750 = vperm.slane %v3744, %v3749
        %v3752 = vunpack.c.l.s4 1983009808
        %v3753 = vunpack.c.0.s8 %v3752
        %v3754 = vperm.slane %v3746, %v3753
        %v3755 = vrot.slane %v3750, 4
        %v3756 = vsel %vm1499, %v3755, %v3738
        %v3757 = vrot.slane %v3738, 4
        %v3758 = vsel %vm1499, %v3750, %v3757
        %v3760 = vunpack.c.l.s4 1934713408
        %v3761 = vunpack.c.0.s8 %v3760
        %v3762 = vperm.slane %v3756, %v3761
        %v3764 = vunpack.c.l.s4 1934713408
        %v3765 = vunpack.c.0.s8 %v3764
        %v3766 = vperm.slane %v3758, %v3765
        %v3767 = vrot.slane %v3754, 4
        %v3768 = vsel %vm1499, %v3767, %v3742
        %v3769 = vrot.slane %v3742, 4
        %v3770 = vsel %vm1499, %v3754, %v3769
        %v3772 = vunpack.c.l.s4 1934713408
        %v3773 = vunpack.c.0.s8 %v3772
        %v3774 = vperm.slane %v3768, %v3773
        %v3776 = vunpack.c.l.s4 1934713408
        %v3777 = vunpack.c.0.s8 %v3776
        %v3778 = vperm.slane %v3770, %v3777
        %v3779 = vrot.slane %v3762, 4
        %v3780 = vsel %vm1499, 0.0, %v3779
        %v3781 = vrot.slane %v3766, 4
        %v3782 = vsel %vm1499, 0.0, %v3781
        %v3783 = vrot.slane %v3774, 4
        %v3784 = vsel %vm1499, 0.0, %v3783
        %v3785 = vrot.slane %v3778, 4
        %v3786 = vsel %vm1499, 0.0, %v3785
        %v3787 = vrot.slane %v3684, 4
        %v3788 = vsel %vm1499, %v3787, %v3620
        %v3789 = vrot.slane %v3620, 4
        %v3790 = vsel %vm1499, %v3684, %v3789
        %v3792 = vunpack.c.l.s4 1983009808
        %v3793 = vunpack.c.0.s8 %v3792
        %v3794 = vperm.slane %v3788, %v3793
        %v3796 = vunpack.c.l.s4 1983009808
        %v3797 = vunpack.c.0.s8 %v3796
        %v3798 = vperm.slane %v3790, %v3797
        %v3799 = vrot.slane %v3716, 4
        %v3800 = vsel %vm1499, %v3799, %v3652
        %v3801 = vrot.slane %v3652, 4
        %v3802 = vsel %vm1499, %v3716, %v3801
        %v3804 = vunpack.c.l.s4 1983009808
        %v3805 = vunpack.c.0.s8 %v3804
        %v3806 = vperm.slane %v3800, %v3805
        %v3808 = vunpack.c.l.s4 1983009808
        %v3809 = vunpack.c.0.s8 %v3808
        %v3810 = vperm.slane %v3802, %v3809
        %v3811 = vrot.slane %v3806, 4
        %v3812 = vsel %vm1499, %v3811, %v3794
        %v3813 = vrot.slane %v3794, 4
        %v3814 = vsel %vm1499, %v3806, %v3813
        %v3816 = vunpack.c.l.s4 1934713408
        %v3817 = vunpack.c.0.s8 %v3816
        %v3818 = vperm.slane %v3812, %v3817
        %v3820 = vunpack.c.l.s4 1934713408
        %v3821 = vunpack.c.0.s8 %v3820
        %v3822 = vperm.slane %v3814, %v3821
        %v3823 = vrot.slane %v3810, 4
        %v3824 = vsel %vm1499, %v3823, %v3798
        %v3825 = vrot.slane %v3798, 4
        %v3826 = vsel %vm1499, %v3810, %v3825
        %v3828 = vunpack.c.l.s4 1934713408
        %v3829 = vunpack.c.0.s8 %v3828
        %v3830 = vperm.slane %v3824, %v3829
        %v3832 = vunpack.c.l.s4 1934713408
        %v3833 = vunpack.c.0.s8 %v3832
        %v3834 = vperm.slane %v3826, %v3833
        %v3835 = vrot.slane %v3818, 4
        %v3836 = vsel %vm1499, 0.0, %v3835
        %v3837 = vrot.slane %v3822, 4
        %v3838 = vsel %vm1499, 0.0, %v3837
        %v3839 = vrot.slane %v3830, 4
        %v3840 = vsel %vm1499, 0.0, %v3839
        %v3841 = vrot.slane %v3834, 4
        %v3842 = vsel %vm1499, 0.0, %v3841
        %v3843 = vsel %vm1499, %v3781, %v3762
        %v3845 = vunpack.c.l.s4 1983009808
        %v3846 = vunpack.c.0.s8 %v3845
        %v3847 = vperm.slane %v3843, %v3846
        %v3848 = vrot.slane %v3782, 4
        %v3849 = vsel %vm1499, %v3848, %v3780
        %v3851 = vunpack.c.l.s4 1983009808
        %v3852 = vunpack.c.0.s8 %v3851
        %v3853 = vperm.slane %v3849, %v3852
        %v3854 = vsel %vm1499, %v3785, %v3774
        %v3856 = vunpack.c.l.s4 1983009808
        %v3857 = vunpack.c.0.s8 %v3856
        %v3858 = vperm.slane %v3854, %v3857
        %v3859 = vrot.slane %v3786, 4
        %v3860 = vsel %vm1499, %v3859, %v3784
        %v3862 = vunpack.c.l.s4 1983009808
        %v3863 = vunpack.c.0.s8 %v3862
        %v3864 = vperm.slane %v3860, %v3863
        %v3865 = vrot.slane %v3853, 4
        %v3866 = vsel %vm1499, %v3865, %v3847
        %v3867 = vrot.slane %v3847, 4
        %v3868 = vsel %vm1499, %v3853, %v3867
        %v3870 = vunpack.c.l.s4 1934713408
        %v3871 = vunpack.c.0.s8 %v3870
        %v3872 = vperm.slane %v3866, %v3871
        %v3874 = vunpack.c.l.s4 1934713408
        %v3875 = vunpack.c.0.s8 %v3874
        %v3876 = vperm.slane %v3868, %v3875
        %v3877 = vrot.slane %v3864, 4
        %v3878 = vsel %vm1499, %v3877, %v3858
        %v3879 = vrot.slane %v3858, 4
        %v3880 = vsel %vm1499, %v3864, %v3879
        %v3882 = vunpack.c.l.s4 1934713408
        %v3883 = vunpack.c.0.s8 %v3882
        %v3884 = vperm.slane %v3878, %v3883
        %v3886 = vunpack.c.l.s4 1934713408
        %v3887 = vunpack.c.0.s8 %v3886
        %v3888 = vperm.slane %v3880, %v3887
        %v3889 = vrot.slane %v3884, 4
        %v3890 = vsel %vm1499, %v3889, %v3872
        %v3891 = vrot.slane %v3872, 4
        %v3892 = vsel %vm1499, %v3884, %v3891
        %v3893 = vrot.slane %v3888, 4
        %v3894 = vsel %vm1499, %v3893, %v3876
        %v3895 = vrot.slane %v3876, 4
        %v3896 = vsel %vm1499, %v3888, %v3895
        %v3897 = vsel %vm1499, %v3837, %v3818
        %v3899 = vunpack.c.l.s4 1983009808
        %v3900 = vunpack.c.0.s8 %v3899
        %v3901 = vperm.slane %v3897, %v3900
        %v3902 = vrot.slane %v3838, 4
        %v3903 = vsel %vm1499, %v3902, %v3836
        %v3905 = vunpack.c.l.s4 1983009808
        %v3906 = vunpack.c.0.s8 %v3905
        %v3907 = vperm.slane %v3903, %v3906
        %v3908 = vsel %vm1499, %v3841, %v3830
        %v3910 = vunpack.c.l.s4 1983009808
        %v3911 = vunpack.c.0.s8 %v3910
        %v3912 = vperm.slane %v3908, %v3911
        %v3913 = vrot.slane %v3842, 4
        %v3914 = vsel %vm1499, %v3913, %v3840
        %v3916 = vunpack.c.l.s4 1983009808
        %v3917 = vunpack.c.0.s8 %v3916
        %v3918 = vperm.slane %v3914, %v3917
        %v3919 = vrot.slane %v3907, 4
        %v3920 = vsel %vm1499, %v3919, %v3901
        %v3921 = vrot.slane %v3901, 4
        %v3922 = vsel %vm1499, %v3907, %v3921
        %v3924 = vunpack.c.l.s4 1934713408
        %v3925 = vunpack.c.0.s8 %v3924
        %v3926 = vperm.slane %v3920, %v3925
        %v3928 = vunpack.c.l.s4 1934713408
        %v3929 = vunpack.c.0.s8 %v3928
        %v3930 = vperm.slane %v3922, %v3929
        %v3931 = vrot.slane %v3918, 4
        %v3932 = vsel %vm1499, %v3931, %v3912
        %v3933 = vrot.slane %v3912, 4
        %v3934 = vsel %vm1499, %v3918, %v3933
        %v3936 = vunpack.c.l.s4 1934713408
        %v3937 = vunpack.c.0.s8 %v3936
        %v3938 = vperm.slane %v3932, %v3937
        %v3940 = vunpack.c.l.s4 1934713408
        %v3941 = vunpack.c.0.s8 %v3940
        %v3942 = vperm.slane %v3934, %v3941
        %v3943 = vrot.slane %v3938, 4
        %v3944 = vsel %vm1499, %v3943, %v3926
        %v3945 = vrot.slane %v3926, 4
        %v3946 = vsel %vm1499, %v3938, %v3945
        %v3947 = vrot.slane %v3942, 4
        %v3948 = vsel %vm1499, %v3947, %v3930
        %v3949 = vrot.slane %v3930, 4
        %v3950 = vsel %vm1499, %v3942, %v3949
        %3953 = vrot.lane.b32.xlu0 %v3892, 8
        %v3954 = vpop.permute.xlu0 %3953
        %3955 = vrot.lane.b32.xlu0 %v3946, 8
        %v3956 = vpop.permute.xlu0 %3955
        %3961 = vrot.lane.b32.xlu0 %v3894, 16
        %v3962 = vpop.permute.xlu0 %3961
        %3963 = vrot.lane.b32.xlu0 %v3948, 16
        %v3964 = vpop.permute.xlu0 %3963
        %3969 = vrot.lane.b32.xlu0 %v3896, 24
        %v3970 = vpop.permute.xlu0 %3969
        %3971 = vrot.lane.b32.xlu0 %v3950, 24
        %v3972 = vpop.permute.xlu0 %3971
        %v3975 = vsel %vm2619, %v3890, %v3954
        %v3976 = vsel %vm2619, %v3944, %v3956
        %v3977 = vsel %vm2726, %v3975, %v3962
        %v3978 = vsel %vm2726, %v3976, %v3964
        %vm3979 = vcmask 195584
        %v3980 = vsel %vm3979, %v3977, %v3970
        %v3981 = vsel %vm3979, %v3978, %v3972
        %v3982 = vld [vmem:[%s11] sm:$0xf]
        %v3983 = vld [vmem:[%s11 + $0x4] sm:$0xf]
        %v3984 = vld [vmem:[%s11 + $0x8] sm:$0xf]
        %v3985 = vld [vmem:[%s11 + $0xc] sm:$0xf]
        %v3986 = vld [vmem:[#allocation6] sm:$0x1]
        %v3987 = vpack.c.bf16 %v3981, %v3980
        %v3989 = vperm.slane %v3986, 0
        %v3995 = vunpack.c.l.b16 %v3982
        %v3996 = vunpack.c.l.b16 %v3983
        %v3997 = vunpack.c.l.b16 %v3984
        %v3998 = vunpack.c.l.b16 %v3985
        %v3999 = vpack.c.b16 %v3996, %v3995
        %v4000 = vpack.c.b16 %v3998, %v3997
        %v4004 = vsel %vm1460, %v3987, 0
        %4006 = vmatpush.bf16.msra.mxu0 0
        %4007 = vmatpush.bf16.msra.mxu0 0
        %4008 = vmatpush.bf16.msra.mxu0 0
        %4009 = vmatpush.bf16.msra.mxu0 0
        %4010 = vmatpush.bf16.msra.mxu0 0
        %4011 = vmatpush.bf16.msra.mxu0 0
        %4012 = vmatpush.bf16.msra.mxu0 %v4000
        %4013 = vmatpush.bf16.msra.mxu0 %v3999
        %4014 = vmatmul.bf16.gmra.mxu0 %v4004
        %v4015 = vpop.f32.mrf.mxu0
        %v4016 = vadd.f32 %v3989, %v4015
        %v4017 = vpop.f32.mrf.mxu0
        %v4018 = vadd.f32 %v3989, %v4017
        %4019 = vdwg.mxu0
        %v4020 = vadd.f32 %v1433, %v4016
        %v4021 = vadd.f32 %v1434, %v4018
        %v4022 = vld [vmem:[%s15] sm:$0x1]
        %v4023 = vld [vmem:[#allocation7] sm:$0x1]
        %v4024 = vsel %vm1460, %v4020, 0.0
        %4025 = vadd.xlane.f32.xlu0 %v4024
        %v4026 = vpop.xlane.xlu0 %4025
        %v4027 = vsel %vm1460, %v4021, 0.0
        %4028 = vadd.xlane.f32.xlu0 %v4027
        %v4029 = vpop.xlane.xlu0 %4028
        %v4030 = vrcp.pop 32.0
        %v4031 = vmul.f32 32.0, %v4030
        %v4032 = vsub.f32 1.0, %v4031
        %v4033 = vmul.f32 %v4030, %v4032
        %v4034 = vadd.f32 %v4030, %v4033
        %vm4035 = vweird.f32 %v4030
        %v4036 = vsel %vm4035, %v4030, %v4034
        %v4037 = vmul.f32 %v4026, %v4036
        %v4038 = vmul.f32 %v4029, %v4036
        %v4039 = vsub.f32 %v4020, %v4037
        %v4040 = vsub.f32 %v4021, %v4038
        %v4041 = vmul.f32 %v4039, %v4039
        %v4042 = vmul.f32 %v4040, %v4040
        %v4043 = vsel %vm1460, %v4041, 0.0
        %4044 = vadd.xlane.f32.xlu0 %v4043
        %v4045 = vpop.xlane.xlu0 %4044
        %v4046 = vsel %vm1460, %v4042, 0.0
        %4047 = vadd.xlane.f32.xlu0 %v4046
        %v4048 = vpop.xlane.xlu0 %4047
        %v4049 = vmul.f32 %v4045, %v4036
        %v4050 = vmul.f32 %v4048, %v4036
        %v4051 = vadd.f32 %v4049, 1e-05
        %v4052 = vadd.f32 %v4050, 1e-05
        %v4053 = vrsqrt.pop %v4051
        %v4054 = vmul.f32 %v4053, %v4051
        %v4055 = vmul.f32 %v4054, %v4053
        %v4056 = vmul.f32 0.5, %v4055
        %v4057 = vsub.f32 1.5, %v4056
        %v4058 = vmul.f32 %v4053, %v4057
        %vm4059 = vweird.f32 %v4051
        %vm4060 = vweird.f32 %v4053
        %vm4061 = vmor %vm4059, %vm4060
        %v4062 = vsel %vm4061, %v4053, %v4058
        %v4063 = vrsqrt.pop %v4052
        %v4064 = vmul.f32 %v4063, %v4052
        %v4065 = vmul.f32 %v4064, %v4063
        %v4066 = vmul.f32 0.5, %v4065
        %v4067 = vsub.f32 1.5, %v4066
        %v4068 = vmul.f32 %v4063, %v4067
        %vm4069 = vweird.f32 %v4052
        %vm4070 = vweird.f32 %v4063
        %vm4071 = vmor %vm4069, %vm4070
        %v4072 = vsel %vm4071, %v4063, %v4068
        %v4073 = vmul.f32 %v4039, %v4062
        %v4074 = vmul.f32 %v4040, %v4072
        %v4076 = vperm.slane %v4022, 0
        %v4078 = vmul.f32 %v4073, %v4076
        %v4079 = vmul.f32 %v4074, %v4076
        %v4081 = vperm.slane %v4023, 0
        %v4083 = vadd.f32 %v4078, %v4081
        %v4084 = vadd.f32 %v4079, %v4081
        %v4085 = vld [vmem:[%s19] sm:$0xf]
        %v4086 = vld [vmem:[%s19 + $0x4] sm:$0xf]
        %v4087 = vld [vmem:[%s19 + $0x8] sm:$0xf]
        %v4088 = vld [vmem:[%s19 + $0xc] sm:$0xf]
        %v4089 = vld [vmem:[#allocation9] sm:$0x1]
        %v4090 = vpack.c.bf16 %v4084, %v4083
        %v4092 = vperm.slane %v4089, 0
        %v4098 = vunpack.c.l.b16 %v4085
        %v4099 = vunpack.c.l.b16 %v4086
        %v4100 = vunpack.c.l.b16 %v4087
        %v4101 = vunpack.c.l.b16 %v4088
        %v4102 = vpack.c.b16 %v4099, %v4098
        %v4103 = vpack.c.b16 %v4101, %v4100
        %v4107 = vsel %vm1460, %v4090, 0
        %4109 = vmatpush.bf16.msra.mxu0 0
        %4110 = vmatpush.bf16.msra.mxu0 0
        %4111 = vmatpush.bf16.msra.mxu0 0
        %4112 = vmatpush.bf16.msra.mxu0 0
        %4113 = vmatpush.bf16.msra.mxu0 0
        %4114 = vmatpush.bf16.msra.mxu0 0
        %4115 = vmatpush.bf16.msra.mxu0 %v4103
        %4116 = vmatpush.bf16.msra.mxu0 %v4102
        %4117 = vmatmul.bf16.gmra.mxu0 %v4107
        %v4118 = vpop.f32.mrf.mxu0
        %v4119 = vadd.f32 %v4092, %v4118
        %v4120 = vpop.f32.mrf.mxu0
        %v4121 = vadd.f32 %v4092, %v4120
        %4122 = vdwg.mxu0
        %v4123 = vmax.f32 %v4119, 0.0
        %v4124 = vmax.f32 %v4121, 0.0
        %v4125 = vld [vmem:[%s23] sm:$0xf]
        %v4126 = vld [vmem:[%s23 + $0x4] sm:$0xf]
        %v4127 = vld [vmem:[%s23 + $0x8] sm:$0xf]
        %v4128 = vld [vmem:[%s23 + $0xc] sm:$0xf]
        %v4129 = vld [vmem:[%s23 + $0x10] sm:$0xf]
        %v4130 = vld [vmem:[%s23 + $0x14] sm:$0xf]
        %v4131 = vld [vmem:[%s23 + $0x18] sm:$0xf]
        %v4132 = vld [vmem:[%s23 + $0x1c] sm:$0xf]
        %v4133 = vld [vmem:[#allocation10] sm:$0x1]
        %v4134 = vpack.c.bf16 %v4124, %v4123
        %v4136 = vperm.slane %v4133, 0
        %v4146 = vunpack.c.l.b16 %v4125
        %v4147 = vunpack.c.l.b16 %v4126
        %v4148 = vunpack.c.l.b16 %v4127
        %v4149 = vunpack.c.l.b16 %v4128
        %v4150 = vunpack.c.l.b16 %v4129
        %v4151 = vunpack.c.l.b16 %v4130
        %v4152 = vunpack.c.l.b16 %v4131
        %v4153 = vunpack.c.l.b16 %v4132
        %v4154 = vpack.c.b16 %v4147, %v4146
        %v4155 = vpack.c.b16 %v4149, %v4148
        %v4156 = vpack.c.b16 %v4151, %v4150
        %v4157 = vpack.c.b16 %v4153, %v4152
        %vm4162 = vcmask 523264
        %v4164 = vsel %vm4162, %v4134, 0
        %4166 = vmatpush.bf16.msra.mxu0 0
        %4167 = vmatpush.bf16.msra.mxu0 0
        %4168 = vmatpush.bf16.msra.mxu0 0
        %4169 = vmatpush.bf16.msra.mxu0 0
        %4170 = vmatpush.bf16.msra.mxu0 %v4157
        %4171 = vmatpush.bf16.msra.mxu0 %v4156
        %4172 = vmatpush.bf16.msra.mxu0 %v4155
        %4173 = vmatpush.bf16.msra.mxu0 %v4154
        %4174 = vmatmul.bf16.gmra.mxu0 %v4164
        %v4175 = vpop.f32.mrf.mxu0
        %v4176 = vadd.f32 %v4136, %v4175
        %v4177 = vpop.f32.mrf.mxu0
        %v4178 = vadd.f32 %v4136, %v4177
        %4179 = vdwg.mxu0
        %v4180 = vadd.f32 %v4083, %v4176
        %v4181 = vadd.f32 %v4084, %v4178
        %v4182 = vld [vmem:[%s27] sm:$0x1]
        %v4183 = vld [vmem:[#allocation12] sm:$0x1]
        %v4184 = vsel %vm1460, %v4180, 0.0
        %4185 = vadd.xlane.f32.xlu0 %v4184
        %v4186 = vpop.xlane.xlu0 %4185
        %v4187 = vsel %vm1460, %v4181, 0.0
        %4188 = vadd.xlane.f32.xlu0 %v4187
        %v4189 = vpop.xlane.xlu0 %4188
        %v4190 = vmul.f32 %v4186, %v4036
        %v4191 = vmul.f32 %v4189, %v4036
        %v4192 = vsub.f32 %v4180, %v4190
        %v4193 = vsub.f32 %v4181, %v4191
        %v4194 = vmul.f32 %v4192, %v4192
        %v4195 = vmul.f32 %v4193, %v4193
        %v4196 = vsel %vm1460, %v4194, 0.0
        %4197 = vadd.xlane.f32.xlu0 %v4196
        %v4198 = vpop.xlane.xlu0 %4197
        %v4199 = vsel %vm1460, %v4195, 0.0
        %4200 = vadd.xlane.f32.xlu0 %v4199
        %v4201 = vpop.xlane.xlu0 %4200
        %v4202 = vmul.f32 %v4198, %v4036
        %v4203 = vmul.f32 %v4201, %v4036
        %v4204 = vadd.f32 %v4202, 1e-05
        %v4205 = vadd.f32 %v4203, 1e-05
        %v4206 = vrsqrt.pop %v4204
        %v4207 = vmul.f32 %v4206, %v4204
        %v4208 = vmul.f32 %v4207, %v4206
        %v4209 = vmul.f32 0.5, %v4208
        %v4210 = vsub.f32 1.5, %v4209
        %v4211 = vmul.f32 %v4206, %v4210
        %vm4212 = vweird.f32 %v4204
        %vm4213 = vweird.f32 %v4206
        %vm4214 = vmor %vm4212, %vm4213
        %v4215 = vsel %vm4214, %v4206, %v4211
        %v4216 = vrsqrt.pop %v4205
        %v4217 = vmul.f32 %v4216, %v4205
        %v4218 = vmul.f32 %v4217, %v4216
        %v4219 = vmul.f32 0.5, %v4218
        %v4220 = vsub.f32 1.5, %v4219
        %v4221 = vmul.f32 %v4216, %v4220
        %vm4222 = vweird.f32 %v4205
        %vm4223 = vweird.f32 %v4216
        %vm4224 = vmor %vm4222, %vm4223
        %v4225 = vsel %vm4224, %v4216, %v4221
        %v4226 = vmul.f32 %v4192, %v4215
        %v4227 = vmul.f32 %v4193, %v4225
        %v4229 = vperm.slane %v4182, 0
        %v4231 = vmul.f32 %v4226, %v4229
        %v4232 = vmul.f32 %v4227, %v4229
        %v4234 = vperm.slane %v4183, 0
        %v4236 = vadd.f32 %v4231, %v4234
        %v4237 = vadd.f32 %v4232, %v4234
        %v4238 = vld [vmem:[%s5] sm:$0xff]
        %v4239 = vld [vmem:[%s31] sm:$0xf]
        %v4240 = vld [vmem:[%s31 + $0x4] sm:$0xf]
        %v4241 = vld [vmem:[%s31 + $0x8] sm:$0xf]
        %v4242 = vld [vmem:[%s31 + $0xc] sm:$0xf]
        %v4243 = vld [vmem:[#allocation13] sm:$0x1]
        %v4244 = vpack.c.bf16 %v4238, %v4238
        %v4246 = vperm.slane %v4243, 0
        %v4252 = vunpack.c.l.b16 %v4239
        %v4253 = vunpack.c.l.b16 %v4240
        %v4254 = vunpack.c.l.b16 %v4241
        %v4255 = vunpack.c.l.b16 %v4242
        %v4256 = vpack.c.b16 %v4253, %v4252
        %v4257 = vpack.c.b16 %v4255, %v4254
        %v4261 = vsel %vm1460, %v4244, 0
        %4263 = vmatpush.bf16.msra.mxu0 0
        %4264 = vmatpush.bf16.msra.mxu0 0
        %4265 = vmatpush.bf16.msra.mxu0 0
        %4266 = vmatpush.bf16.msra.mxu0 0
        %4267 = vmatpush.bf16.msra.mxu0 0
        %4268 = vmatpush.bf16.msra.mxu0 0
        %4269 = vmatpush.bf16.msra.mxu0 %v4257
        %4270 = vmatpush.bf16.msra.mxu0 %v4256
        %4271 = vmatmul.bf16.gmra.mxu0 %v4261
        %v4272 = vpop.f32.mrf.mxu0
        %v4273 = vadd.f32 %v4246, %v4272
        %v4274 = vpop.f32.mrf.mxu0
        %4275 = vdwg.mxu0
        %4277 = vrot.lane.b32.xlu0 %v4273, 120
        %v4278 = vpop.permute.xlu0 %4277
        %4280 = vrot.lane.b32.xlu0 %v4273, 112
        %v4281 = vpop.permute.xlu0 %4280
        %4283 = vrot.lane.b32.xlu0 %v4273, 104
        %v4284 = vpop.permute.xlu0 %4283
        %v4286 = vrot.slane %v4281, 4
        %v4287 = vsel %vm1499, %v4286, %v4273
        %v4288 = vrot.slane %v4273, 4
        %v4289 = vsel %vm1499, %v4281, %v4288
        %v4291 = vunpack.c.l.s4 1983009808
        %v4292 = vunpack.c.0.s8 %v4291
        %v4293 = vperm.slane %v4287, %v4292
        %v4295 = vunpack.c.l.s4 1983009808
        %v4296 = vunpack.c.0.s8 %v4295
        %v4297 = vperm.slane %v4289, %v4296
        %v4298 = vrot.slane %v4284, 4
        %v4299 = vsel %vm1499, %v4298, %v4278
        %v4300 = vrot.slane %v4278, 4
        %v4301 = vsel %vm1499, %v4284, %v4300
        %v4303 = vunpack.c.l.s4 1983009808
        %v4304 = vunpack.c.0.s8 %v4303
        %v4305 = vperm.slane %v4299, %v4304
        %v4307 = vunpack.c.l.s4 1983009808
        %v4308 = vunpack.c.0.s8 %v4307
        %v4309 = vperm.slane %v4301, %v4308
        %v4310 = vrot.slane %v4305, 4
        %v4311 = vsel %vm1499, %v4310, %v4293
        %v4312 = vrot.slane %v4293, 4
        %v4313 = vsel %vm1499, %v4305, %v4312
        %v4315 = vunpack.c.l.s4 1934713408
        %v4316 = vunpack.c.0.s8 %v4315
        %v4317 = vperm.slane %v4311, %v4316
        %v4319 = vunpack.c.l.s4 1934713408
        %v4320 = vunpack.c.0.s8 %v4319
        %v4321 = vperm.slane %v4313, %v4320
        %v4322 = vrot.slane %v4309, 4
        %v4323 = vsel %vm1499, %v4322, %v4297
        %v4324 = vrot.slane %v4297, 4
        %v4325 = vsel %vm1499, %v4309, %v4324
        %v4327 = vunpack.c.l.s4 1934713408
        %v4328 = vunpack.c.0.s8 %v4327
        %v4329 = vperm.slane %v4323, %v4328
        %v4331 = vunpack.c.l.s4 1934713408
        %v4332 = vunpack.c.0.s8 %v4331
        %v4333 = vperm.slane %v4325, %v4332
        %v4334 = vrot.slane %v4317, 4
        %v4335 = vsel %vm1499, 0.0, %v4334
        %v4336 = vrot.slane %v4321, 4
        %v4337 = vsel %vm1499, 0.0, %v4336
        %v4338 = vrot.slane %v4329, 4
        %v4339 = vsel %vm1499, 0.0, %v4338
        %v4340 = vrot.slane %v4333, 4
        %v4341 = vsel %vm1499, 0.0, %v4340
        %v4342 = vpack.c.bf16 %v4317, %v4317
        %v4343 = vpack.c.bf16 %v4335, %v4335
        %v4344 = vpack.c.bf16 %v4321, %v4321
        %v4345 = vpack.c.bf16 %v4337, %v4337
        %v4346 = vpack.c.bf16 %v4329, %v4329
        %v4347 = vpack.c.bf16 %v4339, %v4339
        %v4348 = vpack.c.bf16 %v4333, %v4333
        %v4349 = vpack.c.bf16 %v4341, %v4341
        %4350 = vrot.lane.b32.xlu0 %v4273, 96
        %v4351 = vpop.permute.xlu0 %4350
        %4352 = vrot.lane.b32.xlu0 %v4278, 96
        %v4353 = vpop.permute.xlu0 %4352
        %4354 = vrot.lane.b32.xlu0 %v4281, 96
        %v4355 = vpop.permute.xlu0 %4354
        %4356 = vrot.lane.b32.xlu0 %v4284, 96
        %v4357 = vpop.permute.xlu0 %4356
        %v4362 = vrot.slane %v4355, 4
        %v4363 = vsel %vm1499, %v4362, %v4351
        %v4364 = vrot.slane %v4351, 4
        %v4365 = vsel %vm1499, %v4355, %v4364
        %v4367 = vunpack.c.l.s4 1983009808
        %v4368 = vunpack.c.0.s8 %v4367
        %v4369 = vperm.slane %v4363, %v4368
        %v4371 = vunpack.c.l.s4 1983009808
        %v4372 = vunpack.c.0.s8 %v4371
        %v4373 = vperm.slane %v4365, %v4372
        %v4374 = vrot.slane %v4357, 4
        %v4375 = vsel %vm1499, %v4374, %v4353
        %v4376 = vrot.slane %v4353, 4
        %v4377 = vsel %vm1499, %v4357, %v4376
        %v4379 = vunpack.c.l.s4 1983009808
        %v4380 = vunpack.c.0.s8 %v4379
        %v4381 = vperm.slane %v4375, %v4380
        %v4383 = vunpack.c.l.s4 1983009808
        %v4384 = vunpack.c.0.s8 %v4383
        %v4385 = vperm.slane %v4377, %v4384
        %v4386 = vrot.slane %v4381, 4
        %v4387 = vsel %vm1499, %v4386, %v4369
        %v4388 = vrot.slane %v4369, 4
        %v4389 = vsel %vm1499, %v4381, %v4388
        %v4391 = vunpack.c.l.s4 1934713408
        %v4392 = vunpack.c.0.s8 %v4391
        %v4393 = vperm.slane %v4387, %v4392
        %v4395 = vunpack.c.l.s4 1934713408
        %v4396 = vunpack.c.0.s8 %v4395
        %v4397 = vperm.slane %v4389, %v4396
        %v4398 = vrot.slane %v4385, 4
        %v4399 = vsel %vm1499, %v4398, %v4373
        %v4400 = vrot.slane %v4373, 4
        %v4401 = vsel %vm1499, %v4385, %v4400
        %v4403 = vunpack.c.l.s4 1934713408
        %v4404 = vunpack.c.0.s8 %v4403
        %v4405 = vperm.slane %v4399, %v4404
        %v4407 = vunpack.c.l.s4 1934713408
        %v4408 = vunpack.c.0.s8 %v4407
        %v4409 = vperm.slane %v4401, %v4408
        %v4410 = vrot.slane %v4393, 4
        %v4411 = vsel %vm1499, 0.0, %v4410
        %v4412 = vrot.slane %v4397, 4
        %v4413 = vsel %vm1499, 0.0, %v4412
        %v4414 = vrot.slane %v4405, 4
        %v4415 = vsel %vm1499, 0.0, %v4414
        %v4416 = vrot.slane %v4409, 4
        %v4417 = vsel %vm1499, 0.0, %v4416
        %v4418 = vpack.c.bf16 %v4393, %v4393
        %v4419 = vpack.c.bf16 %v4411, %v4411
        %v4420 = vpack.c.bf16 %v4397, %v4397
        %v4421 = vpack.c.bf16 %v4413, %v4413
        %v4422 = vpack.c.bf16 %v4405, %v4405
        %v4423 = vpack.c.bf16 %v4415, %v4415
        %v4424 = vpack.c.bf16 %v4409, %v4409
        %v4425 = vpack.c.bf16 %v4417, %v4417
        %4426 = vrot.lane.b32.xlu0 %v4273, 64
        %v4427 = vpop.permute.xlu0 %4426
        %4428 = vrot.lane.b32.xlu0 %v4278, 64
        %v4429 = vpop.permute.xlu0 %4428
        %4430 = vrot.lane.b32.xlu0 %v4281, 64
        %v4431 = vpop.permute.xlu0 %4430
        %4432 = vrot.lane.b32.xlu0 %v4284, 64
        %v4433 = vpop.permute.xlu0 %4432
        %v4438 = vrot.slane %v4431, 4
        %v4439 = vsel %vm1499, %v4438, %v4427
        %v4440 = vrot.slane %v4427, 4
        %v4441 = vsel %vm1499, %v4431, %v4440
        %v4443 = vunpack.c.l.s4 1983009808
        %v4444 = vunpack.c.0.s8 %v4443
        %v4445 = vperm.slane %v4439, %v4444
        %v4447 = vunpack.c.l.s4 1983009808
        %v4448 = vunpack.c.0.s8 %v4447
        %v4449 = vperm.slane %v4441, %v4448
        %v4450 = vrot.slane %v4433, 4
        %v4451 = vsel %vm1499, %v4450, %v4429
        %v4452 = vrot.slane %v4429, 4
        %v4453 = vsel %vm1499, %v4433, %v4452
        %v4455 = vunpack.c.l.s4 1983009808
        %v4456 = vunpack.c.0.s8 %v4455
        %v4457 = vperm.slane %v4451, %v4456
        %v4459 = vunpack.c.l.s4 1983009808
        %v4460 = vunpack.c.0.s8 %v4459
        %v4461 = vperm.slane %v4453, %v4460
        %v4462 = vrot.slane %v4457, 4
        %v4463 = vsel %vm1499, %v4462, %v4445
        %v4464 = vrot.slane %v4445, 4
        %v4465 = vsel %vm1499, %v4457, %v4464
        %v4467 = vunpack.c.l.s4 1934713408
        %v4468 = vunpack.c.0.s8 %v4467
        %v4469 = vperm.slane %v4463, %v4468
        %v4471 = vunpack.c.l.s4 1934713408
        %v4472 = vunpack.c.0.s8 %v4471
        %v4473 = vperm.slane %v4465, %v4472
        %v4474 = vrot.slane %v4461, 4
        %v4475 = vsel %vm1499, %v4474, %v4449
        %v4476 = vrot.slane %v4449, 4
        %v4477 = vsel %vm1499, %v4461, %v4476
        %v4479 = vunpack.c.l.s4 1934713408
        %v4480 = vunpack.c.0.s8 %v4479
        %v4481 = vperm.slane %v4475, %v4480
        %v4483 = vunpack.c.l.s4 1934713408
        %v4484 = vunpack.c.0.s8 %v4483
        %v4485 = vperm.slane %v4477, %v4484
        %v4486 = vrot.slane %v4469, 4
        %v4487 = vsel %vm1499, 0.0, %v4486
        %v4488 = vrot.slane %v4473, 4
        %v4489 = vsel %vm1499, 0.0, %v4488
        %v4490 = vrot.slane %v4481, 4
        %v4491 = vsel %vm1499, 0.0, %v4490
        %v4492 = vrot.slane %v4485, 4
        %v4493 = vsel %vm1499, 0.0, %v4492
        %v4494 = vpack.c.bf16 %v4469, %v4469
        %v4495 = vpack.c.bf16 %v4487, %v4487
        %v4496 = vpack.c.bf16 %v4473, %v4473
        %v4497 = vpack.c.bf16 %v4489, %v4489
        %v4498 = vpack.c.bf16 %v4481, %v4481
        %v4499 = vpack.c.bf16 %v4491, %v4491
        %v4500 = vpack.c.bf16 %v4485, %v4485
        %v4501 = vpack.c.bf16 %v4493, %v4493
        %v4502 = vrot.slane %v4346, 4
        %v4503 = vsel %vm1932, %v4502, %v4342
        %v4505 = vunpack.c.l.s4 1983009808
        %v4506 = vunpack.c.0.s8 %v4505
        %v4507 = vperm.slane %v4503, %v4506
        %v4508 = vrot.slane %v4348, 4
        %v4509 = vsel %vm1932, %v4508, %v4344
        %v4511 = vunpack.c.l.s4 1983009808
        %v4512 = vunpack.c.0.s8 %v4511
        %v4513 = vperm.slane %v4509, %v4512
        %v4514 = vrot.slane %v4513, 4
        %v4515 = vsel %vm1932, %v4514, %v4507
        %v4517 = vunpack.c.l.s4 1934713408
        %v4518 = vunpack.c.0.s8 %v4517
        %v4519 = vperm.slane %v4515, %v4518
        %v4520 = vrot.slane %v4519, 4
        %v4521 = vsel %vm1932, 0, %v4520
        %v4522 = vrot.slane %v4347, 4
        %v4523 = vsel %vm1932, %v4522, %v4343
        %v4525 = vunpack.c.l.s4 1983009808
        %v4526 = vunpack.c.0.s8 %v4525
        %v4527 = vperm.slane %v4523, %v4526
        %v4528 = vrot.slane %v4349, 4
        %v4529 = vsel %vm1932, %v4528, %v4345
        %v4531 = vunpack.c.l.s4 1983009808
        %v4532 = vunpack.c.0.s8 %v4531
        %v4533 = vperm.slane %v4529, %v4532
        %v4534 = vrot.slane %v4533, 4
        %v4535 = vsel %vm1932, %v4534, %v4527
        %v4537 = vunpack.c.l.s4 1934713408
        %v4538 = vunpack.c.0.s8 %v4537
        %v4539 = vperm.slane %v4535, %v4538
        %v4540 = vrot.slane %v4539, 4
        %v4541 = vsel %vm1932, 0, %v4540
        %v4544 = vpack.i.b16 %v4539, %v4519
        %v4545 = vshrl.u32 %v4519, 16
        %v4546 = vshrl.u32 %v4539, 16
        %v4547 = vpack.i.b16 %v4546, %v4545
        %v4550 = vpack.i.b16 %v4541, %v4521
        %v4551 = vshrl.u32 %v4521, 16
        %v4552 = vshrl.u32 %v4541, 16
        %v4553 = vpack.i.b16 %v4552, %v4551
        %4554 = vxpose.xlu0.c.b16.start [1/8] %v4418, 128
        %4555 = vxpose.xlu0.c.b16.cont [2/8] 0, 128
        %4556 = vxpose.xlu0.c.b16.cont [3/8] 0, 128
        %4557 = vxpose.xlu0.c.b16.cont [4/8] 0, 128
        %4558 = vxpose.xlu0.c.b16.cont [5/8] 0, 128
        %4559 = vxpose.xlu0.c.b16.cont [6/8] 0, 128
        %4560 = vxpose.xlu0.c.b16.cont [7/8] 0, 128
        %4561 = vxpose.xlu0.c.b16.end [8/8] 0, 128
        %v4562 = vpop.trf.xlu0
        %v4563 = vpop.trf.xlu0
        %v4564 = vpop.trf.xlu0
        %v4565 = vpop.trf.xlu0
        %v4566 = vpop.trf.xlu0
        %v4567 = vpop.trf.xlu0
        %v4568 = vpop.trf.xlu0
        %v4569 = vpop.trf.xlu0
        %4570 = vxpose.xlu0.c.b16.start [1/8] %v4419, 128
        %4571 = vxpose.xlu0.c.b16.cont [2/8] 0, 128
        %4572 = vxpose.xlu0.c.b16.cont [3/8] 0, 128
        %4573 = vxpose.xlu0.c.b16.cont [4/8] 0, 128
        %4574 = vxpose.xlu0.c.b16.cont [5/8] 0, 128
        %4575 = vxpose.xlu0.c.b16.cont [6/8] 0, 128
        %4576 = vxpose.xlu0.c.b16.cont [7/8] 0, 128
        %4577 = vxpose.xlu0.c.b16.end [8/8] 0, 128
        %v4578 = vpop.trf.xlu0
        %v4579 = vpop.trf.xlu0
        %v4580 = vpop.trf.xlu0
        %v4581 = vpop.trf.xlu0
        %v4582 = vpop.trf.xlu0
        %v4583 = vpop.trf.xlu0
        %v4584 = vpop.trf.xlu0
        %v4585 = vpop.trf.xlu0
        %4586 = vxpose.xlu0.c.b16.start [1/8] %v4420, 128
        %4587 = vxpose.xlu0.c.b16.cont [2/8] 0, 128
        %4588 = vxpose.xlu0.c.b16.cont [3/8] 0, 128
        %4589 = vxpose.xlu0.c.b16.cont [4/8] 0, 128
        %4590 = vxpose.xlu0.c.b16.cont [5/8] 0, 128
        %4591 = vxpose.xlu0.c.b16.cont [6/8] 0, 128
        %4592 = vxpose.xlu0.c.b16.cont [7/8] 0, 128
        %4593 = vxpose.xlu0.c.b16.end [8/8] 0, 128
        %v4594 = vpop.trf.xlu0
        %v4595 = vpop.trf.xlu0
        %v4596 = vpop.trf.xlu0
        %v4597 = vpop.trf.xlu0
        %v4598 = vpop.trf.xlu0
        %v4599 = vpop.trf.xlu0
        %v4600 = vpop.trf.xlu0
        %v4601 = vpop.trf.xlu0
        %4602 = vxpose.xlu0.c.b16.start [1/8] %v4421, 128
        %4603 = vxpose.xlu0.c.b16.cont [2/8] 0, 128
        %4604 = vxpose.xlu0.c.b16.cont [3/8] 0, 128
        %4605 = vxpose.xlu0.c.b16.cont [4/8] 0, 128
        %4606 = vxpose.xlu0.c.b16.cont [5/8] 0, 128
        %4607 = vxpose.xlu0.c.b16.cont [6/8] 0, 128
        %4608 = vxpose.xlu0.c.b16.cont [7/8] 0, 128
        %4609 = vxpose.xlu0.c.b16.end [8/8] 0, 128
        %v4610 = vpop.trf.xlu0
        %v4611 = vpop.trf.xlu0
        %v4612 = vpop.trf.xlu0
        %v4613 = vpop.trf.xlu0
        %v4614 = vpop.trf.xlu0
        %v4615 = vpop.trf.xlu0
        %v4616 = vpop.trf.xlu0
        %v4617 = vpop.trf.xlu0
        %4618 = vxpose.xlu0.c.b16.start [1/8] %v4422, 128
        %4619 = vxpose.xlu0.c.b16.cont [2/8] 0, 128
        %4620 = vxpose.xlu0.c.b16.cont [3/8] 0, 128
        %4621 = vxpose.xlu0.c.b16.cont [4/8] 0, 128
        %4622 = vxpose.xlu0.c.b16.cont [5/8] 0, 128
        %4623 = vxpose.xlu0.c.b16.cont [6/8] 0, 128
        %4624 = vxpose.xlu0.c.b16.cont [7/8] 0, 128
        %4625 = vxpose.xlu0.c.b16.end [8/8] 0, 128
        %v4626 = vpop.trf.xlu0
        %v4627 = vpop.trf.xlu0
        %v4628 = vpop.trf.xlu0
        %v4629 = vpop.trf.xlu0
        %v4630 = vpop.trf.xlu0
        %v4631 = vpop.trf.xlu0
        %v4632 = vpop.trf.xlu0
        %v4633 = vpop.trf.xlu0
        %4634 = vxpose.xlu0.c.b16.start [1/8] %v4423, 128
        %4635 = vxpose.xlu0.c.b16.cont [2/8] 0, 128
        %4636 = vxpose.xlu0.c.b16.cont [3/8] 0, 128
        %4637 = vxpose.xlu0.c.b16.cont [4/8] 0, 128
        %4638 = vxpose.xlu0.c.b16.cont [5/8] 0, 128
        %4639 = vxpose.xlu0.c.b16.cont [6/8] 0, 128
        %4640 = vxpose.xlu0.c.b16.cont [7/8] 0, 128
        %4641 = vxpose.xlu0.c.b16.end [8/8] 0, 128
        %v4642 = vpop.trf.xlu0
        %v4643 = vpop.trf.xlu0
        %v4644 = vpop.trf.xlu0
        %v4645 = vpop.trf.xlu0
        %v4646 = vpop.trf.xlu0
        %v4647 = vpop.trf.xlu0
        %v4648 = vpop.trf.xlu0
        %v4649 = vpop.trf.xlu0
        %4650 = vxpose.xlu0.c.b16.start [1/8] %v4424, 128
        %4651 = vxpose.xlu0.c.b16.cont [2/8] 0, 128
        %4652 = vxpose.xlu0.c.b16.cont [3/8] 0, 128
        %4653 = vxpose.xlu0.c.b16.cont [4/8] 0, 128
        %4654 = vxpose.xlu0.c.b16.cont [5/8] 0, 128
        %4655 = vxpose.xlu0.c.b16.cont [6/8] 0, 128
        %4656 = vxpose.xlu0.c.b16.cont [7/8] 0, 128
        %4657 = vxpose.xlu0.c.b16.end [8/8] 0, 128
        %v4658 = vpop.trf.xlu0
        %v4659 = vpop.trf.xlu0
        %v4660 = vpop.trf.xlu0
        %v4661 = vpop.trf.xlu0
        %v4662 = vpop.trf.xlu0
        %v4663 = vpop.trf.xlu0
        %v4664 = vpop.trf.xlu0
        %v4665 = vpop.trf.xlu0
        %4666 = vxpose.xlu0.c.b16.start [1/8] %v4425, 128
        %4667 = vxpose.xlu0.c.b16.cont [2/8] 0, 128
        %4668 = vxpose.xlu0.c.b16.cont [3/8] 0, 128
        %4669 = vxpose.xlu0.c.b16.cont [4/8] 0, 128
        %4670 = vxpose.xlu0.c.b16.cont [5/8] 0, 128
        %4671 = vxpose.xlu0.c.b16.cont [6/8] 0, 128
        %4672 = vxpose.xlu0.c.b16.cont [7/8] 0, 128
        %4673 = vxpose.xlu0.c.b16.end [8/8] 0, 128
        %v4674 = vpop.trf.xlu0
        %v4675 = vpop.trf.xlu0
        %v4676 = vpop.trf.xlu0
        %v4677 = vpop.trf.xlu0
        %v4678 = vpop.trf.xlu0
        %v4679 = vpop.trf.xlu0
        %v4680 = vpop.trf.xlu0
        %v4681 = vpop.trf.xlu0
        %v4682 = vrot.slane %v4626, 4
        %v4683 = vsel %vm1932, %v4682, %v4562
        %v4685 = vunpack.c.l.s4 1983009808
        %v4686 = vunpack.c.0.s8 %v4685
        %v4687 = vperm.slane %v4683, %v4686
        %v4688 = vrot.slane %v4658, 4
        %v4689 = vsel %vm1932, %v4688, %v4594
        %v4691 = vunpack.c.l.s4 1983009808
        %v4692 = vunpack.c.0.s8 %v4691
        %v4693 = vperm.slane %v4689, %v4692
        %v4694 = vrot.slane %v4693, 4
        %v4695 = vsel %vm1932, %v4694, %v4687
        %v4696 = vrot.slane %v4687, 4
        %v4697 = vsel %vm1932, %v4693, %v4696
        %v4699 = vunpack.c.l.s4 1934713408
        %v4700 = vunpack.c.0.s8 %v4699
        %v4701 = vperm.slane %v4695, %v4700
        %v4703 = vunpack.c.l.s4 1934713408
        %v4704 = vunpack.c.0.s8 %v4703
        %v4705 = vperm.slane %v4697, %v4704
        %v4706 = vrot.slane %v4701, 4
        %v4707 = vsel %vm1932, 0, %v4706
        %v4708 = vrot.slane %v4705, 4
        %v4709 = vsel %vm1932, 0, %v4708
        %v4710 = vrot.slane %v4642, 4
        %v4711 = vsel %vm1932, %v4710, %v4578
        %v4713 = vunpack.c.l.s4 1983009808
        %v4714 = vunpack.c.0.s8 %v4713
        %v4715 = vperm.slane %v4711, %v4714
        %v4716 = vrot.slane %v4674, 4
        %v4717 = vsel %vm1932, %v4716, %v4610
        %v4719 = vunpack.c.l.s4 1983009808
        %v4720 = vunpack.c.0.s8 %v4719
        %v4721 = vperm.slane %v4717, %v4720
        %v4722 = vrot.slane %v4721, 4
        %v4723 = vsel %vm1932, %v4722, %v4715
        %v4724 = vrot.slane %v4715, 4
        %v4725 = vsel %vm1932, %v4721, %v4724
        %v4727 = vunpack.c.l.s4 1934713408
        %v4728 = vunpack.c.0.s8 %v4727
        %v4729 = vperm.slane %v4723, %v4728
        %v4731 = vunpack.c.l.s4 1934713408
        %v4732 = vunpack.c.0.s8 %v4731
        %v4733 = vperm.slane %v4725, %v4732
        %v4734 = vrot.slane %v4729, 4
        %v4735 = vsel %vm1932, 0, %v4734
        %v4736 = vrot.slane %v4733, 4
        %v4737 = vsel %vm1932, 0, %v4736
        %v4740 = vpack.i.b16 %v4729, %v4701
        %v4742 = vshrl.u32 %v4701, 16
        %v4743 = vshrl.u32 %v4729, 16
        %v4744 = vpack.i.b16 %v4743, %v4742
        %v4748 = vpack.i.b16 %v4735, %v4707
        %v4750 = vshrl.u32 %v4707, 16
        %v4751 = vshrl.u32 %v4735, 16
        %v4752 = vpack.i.b16 %v4751, %v4750
        %v4756 = vpack.i.b16 %v4733, %v4705
        %v4758 = vshrl.u32 %v4705, 16
        %v4759 = vshrl.u32 %v4733, 16
        %v4760 = vpack.i.b16 %v4759, %v4758
        %v4764 = vpack.i.b16 %v4737, %v4709
        %v4766 = vshrl.u32 %v4709, 16
        %v4767 = vshrl.u32 %v4737, 16
        %v4768 = vpack.i.b16 %v4767, %v4766
        %4770 = vxpose.xlu0.c.b16.start [1/8] %v4740, 128
        %4771 = vxpose.xlu0.c.b16.cont [2/8] 0, 128
        %4772 = vxpose.xlu0.c.b16.cont [3/8] 0, 128
        %4773 = vxpose.xlu0.c.b16.cont [4/8] 0, 128
        %4774 = vxpose.xlu0.c.b16.cont [5/8] 0, 128
        %4775 = vxpose.xlu0.c.b16.cont [6/8] 0, 128
        %4776 = vxpose.xlu0.c.b16.cont [7/8] 0, 128
        %4777 = vxpose.xlu0.c.b16.end [8/8] 0, 128
        %v4778 = vpop.trf.xlu0
        %v4779 = vpop.trf.xlu0
        %v4780 = vpop.trf.xlu0
        %v4781 = vpop.trf.xlu0
        %v4782 = vpop.trf.xlu0
        %v4783 = vpop.trf.xlu0
        %v4784 = vpop.trf.xlu0
        %v4785 = vpop.trf.xlu0
        %4786 = vxpose.xlu0.c.b16.start [1/8] %v4744, 128
        %4787 = vxpose.xlu0.c.b16.cont [2/8] 0, 128
        %4788 = vxpose.xlu0.c.b16.cont [3/8] 0, 128
        %4789 = vxpose.xlu0.c.b16.cont [4/8] 0, 128
        %4790 = vxpose.xlu0.c.b16.cont [5/8] 0, 128
        %4791 = vxpose.xlu0.c.b16.cont [6/8] 0, 128
        %4792 = vxpose.xlu0.c.b16.cont [7/8] 0, 128
        %4793 = vxpose.xlu0.c.b16.end [8/8] 0, 128
        %v4794 = vpop.trf.xlu0
        %v4795 = vpop.trf.xlu0
        %v4796 = vpop.trf.xlu0
        %v4797 = vpop.trf.xlu0
        %v4798 = vpop.trf.xlu0
        %v4799 = vpop.trf.xlu0
        %v4800 = vpop.trf.xlu0
        %v4801 = vpop.trf.xlu0
        %4802 = vxpose.xlu0.c.b16.start [1/8] %v4748, 128
        %4803 = vxpose.xlu0.c.b16.cont [2/8] 0, 128
        %4804 = vxpose.xlu0.c.b16.cont [3/8] 0, 128
        %4805 = vxpose.xlu0.c.b16.cont [4/8] 0, 128
        %4806 = vxpose.xlu0.c.b16.cont [5/8] 0, 128
        %4807 = vxpose.xlu0.c.b16.cont [6/8] 0, 128
        %4808 = vxpose.xlu0.c.b16.cont [7/8] 0, 128
        %4809 = vxpose.xlu0.c.b16.end [8/8] 0, 128
        %v4810 = vpop.trf.xlu0
        %v4811 = vpop.trf.xlu0
        %v4812 = vpop.trf.xlu0
        %v4813 = vpop.trf.xlu0
        %v4814 = vpop.trf.xlu0
        %v4815 = vpop.trf.xlu0
        %v4816 = vpop.trf.xlu0
        %v4817 = vpop.trf.xlu0
        %4818 = vxpose.xlu0.c.b16.start [1/8] %v4752, 128
        %4819 = vxpose.xlu0.c.b16.cont [2/8] 0, 128
        %4820 = vxpose.xlu0.c.b16.cont [3/8] 0, 128
        %4821 = vxpose.xlu0.c.b16.cont [4/8] 0, 128
        %4822 = vxpose.xlu0.c.b16.cont [5/8] 0, 128
        %4823 = vxpose.xlu0.c.b16.cont [6/8] 0, 128
        %4824 = vxpose.xlu0.c.b16.cont [7/8] 0, 128
        %4825 = vxpose.xlu0.c.b16.end [8/8] 0, 128
        %v4826 = vpop.trf.xlu0
        %v4827 = vpop.trf.xlu0
        %v4828 = vpop.trf.xlu0
        %v4829 = vpop.trf.xlu0
        %v4830 = vpop.trf.xlu0
        %v4831 = vpop.trf.xlu0
        %v4832 = vpop.trf.xlu0
        %v4833 = vpop.trf.xlu0
        %4834 = vxpose.xlu0.c.b16.start [1/8] %v4756, 128
        %4835 = vxpose.xlu0.c.b16.cont [2/8] 0, 128
        %4836 = vxpose.xlu0.c.b16.cont [3/8] 0, 128
        %4837 = vxpose.xlu0.c.b16.cont [4/8] 0, 128
        %4838 = vxpose.xlu0.c.b16.cont [5/8] 0, 128
        %4839 = vxpose.xlu0.c.b16.cont [6/8] 0, 128
        %4840 = vxpose.xlu0.c.b16.cont [7/8] 0, 128
        %4841 = vxpose.xlu0.c.b16.end [8/8] 0, 128
        %v4842 = vpop.trf.xlu0
        %v4843 = vpop.trf.xlu0
        %v4844 = vpop.trf.xlu0
        %v4845 = vpop.trf.xlu0
        %v4846 = vpop.trf.xlu0
        %v4847 = vpop.trf.xlu0
        %v4848 = vpop.trf.xlu0
        %v4849 = vpop.trf.xlu0
        %4850 = vxpose.xlu0.c.b16.start [1/8] %v4760, 128
        %4851 = vxpose.xlu0.c.b16.cont [2/8] 0, 128
        %4852 = vxpose.xlu0.c.b16.cont [3/8] 0, 128
        %4853 = vxpose.xlu0.c.b16.cont [4/8] 0, 128
        %4854 = vxpose.xlu0.c.b16.cont [5/8] 0, 128
        %4855 = vxpose.xlu0.c.b16.cont [6/8] 0, 128
        %4856 = vxpose.xlu0.c.b16.cont [7/8] 0, 128
        %4857 = vxpose.xlu0.c.b16.end [8/8] 0, 128
        %v4858 = vpop.trf.xlu0
        %v4859 = vpop.trf.xlu0
        %v4860 = vpop.trf.xlu0
        %v4861 = vpop.trf.xlu0
        %v4862 = vpop.trf.xlu0
        %v4863 = vpop.trf.xlu0
        %v4864 = vpop.trf.xlu0
        %v4865 = vpop.trf.xlu0
        %4866 = vxpose.xlu0.c.b16.start [1/8] %v4764, 128
        %4867 = vxpose.xlu0.c.b16.cont [2/8] 0, 128
        %4868 = vxpose.xlu0.c.b16.cont [3/8] 0, 128
        %4869 = vxpose.xlu0.c.b16.cont [4/8] 0, 128
        %4870 = vxpose.xlu0.c.b16.cont [5/8] 0, 128
        %4871 = vxpose.xlu0.c.b16.cont [6/8] 0, 128
        %4872 = vxpose.xlu0.c.b16.cont [7/8] 0, 128
        %4873 = vxpose.xlu0.c.b16.end [8/8] 0, 128
        %v4874 = vpop.trf.xlu0
        %v4875 = vpop.trf.xlu0
        %v4876 = vpop.trf.xlu0
        %v4877 = vpop.trf.xlu0
        %v4878 = vpop.trf.xlu0
        %v4879 = vpop.trf.xlu0
        %v4880 = vpop.trf.xlu0
        %v4881 = vpop.trf.xlu0
        %4882 = vxpose.xlu0.c.b16.start [1/8] %v4768, 128
        %4883 = vxpose.xlu0.c.b16.cont [2/8] 0, 128
        %4884 = vxpose.xlu0.c.b16.cont [3/8] 0, 128
        %4885 = vxpose.xlu0.c.b16.cont [4/8] 0, 128
        %4886 = vxpose.xlu0.c.b16.cont [5/8] 0, 128
        %4887 = vxpose.xlu0.c.b16.cont [6/8] 0, 128
        %4888 = vxpose.xlu0.c.b16.cont [7/8] 0, 128
        %4889 = vxpose.xlu0.c.b16.end [8/8] 0, 128
        %v4890 = vpop.trf.xlu0
        %v4891 = vpop.trf.xlu0
        %v4892 = vpop.trf.xlu0
        %v4893 = vpop.trf.xlu0
        %v4894 = vpop.trf.xlu0
        %v4895 = vpop.trf.xlu0
        %v4896 = vpop.trf.xlu0
        %v4897 = vpop.trf.xlu0
        %v4898 = vrot.slane %v4842, 4
        %v4899 = vsel %vm1932, %v4898, %v4778
        %v4901 = vunpack.c.l.s4 1983009808
        %v4902 = vunpack.c.0.s8 %v4901
        %v4903 = vperm.slane %v4899, %v4902
        %v4904 = vrot.slane %v4874, 4
        %v4905 = vsel %vm1932, %v4904, %v4810
        %v4907 = vunpack.c.l.s4 1983009808
        %v4908 = vunpack.c.0.s8 %v4907
        %v4909 = vperm.slane %v4905, %v4908
        %v4910 = vrot.slane %v4909, 4
        %v4911 = vsel %vm1932, %v4910, %v4903
        %v4913 = vunpack.c.l.s4 1934713408
        %v4914 = vunpack.c.0.s8 %v4913
        %v4915 = vperm.slane %v4911, %v4914
        %v4916 = vrot.slane %v4915, 4
        %v4917 = vsel %vm1932, 0, %v4916
        %v4918 = vrot.slane %v4858, 4
        %v4919 = vsel %vm1932, %v4918, %v4794
        %v4921 = vunpack.c.l.s4 1983009808
        %v4922 = vunpack.c.0.s8 %v4921
        %v4923 = vperm.slane %v4919, %v4922
        %v4924 = vrot.slane %v4890, 4
        %v4925 = vsel %vm1932, %v4924, %v4826
        %v4927 = vunpack.c.l.s4 1983009808
        %v4928 = vunpack.c.0.s8 %v4927
        %v4929 = vperm.slane %v4925, %v4928
        %v4930 = vrot.slane %v4929, 4
        %v4931 = vsel %vm1932, %v4930, %v4923
        %v4933 = vunpack.c.l.s4 1934713408
        %v4934 = vunpack.c.0.s8 %v4933
        %v4935 = vperm.slane %v4931, %v4934
        %v4936 = vrot.slane %v4935, 4
        %v4937 = vsel %vm1932, 0, %v4936
        %v4940 = vpack.i.b16 %v4935, %v4915
        %v4941 = vshrl.u32 %v4915, 16
        %v4942 = vshrl.u32 %v4935, 16
        %v4943 = vpack.i.b16 %v4942, %v4941
        %v4946 = vpack.i.b16 %v4937, %v4917
        %v4947 = vshrl.u32 %v4917, 16
        %v4948 = vshrl.u32 %v4937, 16
        %v4949 = vpack.i.b16 %v4948, %v4947
        %v4951 = vsel %vm2619, %v4544, 0
        %v4954 = vsel %vm2623, %v4940, 0
        %4956 = vmatpush.bf16.msra.mxu0 0
        %4957 = vmatpush.bf16.msra.mxu0 0
        %4958 = vmatpush.bf16.msra.mxu0 0
        %4959 = vmatpush.bf16.msra.mxu0 0
        %4960 = vmatpush.bf16.msra.mxu0 0
        %4961 = vmatpush.bf16.msra.mxu0 0
        %4962 = vmatpush.bf16.msra.mxu0 0
        %4963 = vmatpush.bf16.msra.mxu0 %v4954
        %4964 = vmatmul.bf16.gmra.mxu0 %v4951
        %v4965 = vpop.f32.mrf.mxu0
        %v4966 = vadd.f32 0.0, %v4965
        %v4967 = vpop.f32.mrf.mxu0
        %4968 = vdwg.mxu0
        %v4970 = vsel %vm2619, %v4547, 0
        %v4973 = vsel %vm2623, %v4943, 0
        %4975 = vmatpush.bf16.msra.mxu0 0
        %4976 = vmatpush.bf16.msra.mxu0 0
        %4977 = vmatpush.bf16.msra.mxu0 0
        %4978 = vmatpush.bf16.msra.mxu0 0
        %4979 = vmatpush.bf16.msra.mxu0 0
        %4980 = vmatpush.bf16.msra.mxu0 0
        %4981 = vmatpush.bf16.msra.mxu0 0
        %4982 = vmatpush.bf16.msra.mxu0 %v4973
        %4983 = vmatmul.bf16.gmra.mxu0 %v4970
        %v4984 = vpop.f32.mrf.mxu0
        %v4985 = vadd.f32 0.0, %v4984
        %v4986 = vpop.f32.mrf.mxu0
        %4987 = vdwg.mxu0
        %v4989 = vsel %vm2619, %v4550, 0
        %v4992 = vsel %vm2623, %v4946, 0
        %4994 = vmatpush.bf16.msra.mxu0 0
        %4995 = vmatpush.bf16.msra.mxu0 0
        %4996 = vmatpush.bf16.msra.mxu0 0
        %4997 = vmatpush.bf16.msra.mxu0 0
        %4998 = vmatpush.bf16.msra.mxu0 0
        %4999 = vmatpush.bf16.msra.mxu0 0
        %5000 = vmatpush.bf16.msra.mxu0 0
        %5001 = vmatpush.bf16.msra.mxu0 %v4992
        %5002 = vmatmul.bf16.gmra.mxu0 %v4989
        %v5003 = vpop.f32.mrf.mxu0
        %v5004 = vadd.f32 0.0, %v5003
        %v5005 = vpop.f32.mrf.mxu0
        %5006 = vdwg.mxu0
        %v5008 = vsel %vm2619, %v4553, 0
        %v5011 = vsel %vm2623, %v4949, 0
        %5013 = vmatpush.bf16.msra.mxu0 0
        %5014 = vmatpush.bf16.msra.mxu0 0
        %5015 = vmatpush.bf16.msra.mxu0 0
        %5016 = vmatpush.bf16.msra.mxu0 0
        %5017 = vmatpush.bf16.msra.mxu0 0
        %5018 = vmatpush.bf16.msra.mxu0 0
        %5019 = vmatpush.bf16.msra.mxu0 0
        %5020 = vmatpush.bf16.msra.mxu0 %v5011
        %5021 = vmatmul.bf16.gmra.mxu0 %v5008
        %v5022 = vpop.f32.mrf.mxu0
        %v5023 = vadd.f32 0.0, %v5022
        %v5024 = vpop.f32.mrf.mxu0
        %5025 = vdwg.mxu0
        %v5026 = vmul.f32 %v4966, 0.35355338
        %v5027 = vmul.f32 %v4985, 0.35355338
        %v5028 = vmul.f32 %v5004, 0.35355338
        %v5029 = vmul.f32 %v5023, 0.35355338
        %v5030 = vsel %vm2619, %v5026, -inf
        %5031 = vmax.xlane.f32.xlu0 %v5030
        %v5032 = vpop.xlane.xlu0 %5031
        %v5033 = vsel %vm2619, %v5027, -inf
        %5034 = vmax.xlane.f32.xlu0 %v5033
        %v5035 = vpop.xlane.xlu0 %5034
        %v5036 = vsel %vm2619, %v5028, -inf
        %5037 = vmax.xlane.f32.xlu0 %v5036
        %v5038 = vpop.xlane.xlu0 %5037
        %v5039 = vsel %vm2619, %v5029, -inf
        %5040 = vmax.xlane.f32.xlu0 %v5039
        %v5041 = vpop.xlane.xlu0 %5040
        %v5042 = vsub.f32 %v5026, %v5032
        %v5043 = vsub.f32 %v5027, %v5035
        %v5044 = vsub.f32 %v5028, %v5038
        %v5045 = vsub.f32 %v5029, %v5041
        %v5046 = vmul.f32 %v5042, 1.442695
        %v5047 = vpow.pop %v5046
        %v5048 = vmul.f32 %v5043, 1.442695
        %v5049 = vpow.pop %v5048
        %v5050 = vmul.f32 %v5044, 1.442695
        %v5051 = vpow.pop %v5050
        %v5052 = vmul.f32 %v5045, 1.442695
        %v5053 = vpow.pop %v5052
        %v5054 = vsel %vm2619, %v5047, 0.0
        %5055 = vadd.xlane.f32.xlu0 %v5054
        %v5056 = vpop.xlane.xlu0 %5055
        %v5057 = vsel %vm2619, %v5049, 0.0
        %5058 = vadd.xlane.f32.xlu0 %v5057
        %v5059 = vpop.xlane.xlu0 %5058
        %v5060 = vsel %vm2619, %v5051, 0.0
        %5061 = vadd.xlane.f32.xlu0 %v5060
        %v5062 = vpop.xlane.xlu0 %5061
        %v5063 = vsel %vm2619, %v5053, 0.0
        %5064 = vadd.xlane.f32.xlu0 %v5063
        %v5065 = vpop.xlane.xlu0 %5064
        %v5066 = vrcp.pop %v5056
        %v5067 = vmul.f32 %v5056, %v5066
        %v5068 = vsub.f32 1.0, %v5067
        %v5069 = vmul.f32 %v5066, %v5068
        %v5070 = vadd.f32 %v5066, %v5069
        %vm5071 = vweird.f32 %v5056
        %vm5072 = vweird.f32 %v5066
        %vm5073 = vmor %vm5071, %vm5072
        %v5074 = vsel %vm5073, %v5066, %v5070
        %v5075 = vand.u32 2147483647, %v5056
        %vm5076 = vcmp.eq.f32.partialorder %v5075, 8.507059e+37
        %v5077 = vand.u32 %v5056, 2147483648
        %v5078 = vor.u32 1.1754944e-38, %v5077
        %v5079 = vsel %vm5076, %v5078, %v5074
        %v5080 = vmul.f32 %v5047, %v5079
        %v5081 = vrcp.pop %v5059
        %v5082 = vmul.f32 %v5059, %v5081
        %v5083 = vsub.f32 1.0, %v5082
        %v5084 = vmul.f32 %v5081, %v5083
        %v5085 = vadd.f32 %v5081, %v5084
        %vm5086 = vweird.f32 %v5059
        %vm5087 = vweird.f32 %v5081
        %vm5088 = vmor %vm5086, %vm5087
        %v5089 = vsel %vm5088, %v5081, %v5085
        %v5090 = vand.u32 2147483647, %v5059
        %vm5091 = vcmp.eq.f32.partialorder %v5090, 8.507059e+37
        %v5092 = vand.u32 %v5059, 2147483648
        %v5093 = vor.u32 1.1754944e-38, %v5092
        %v5094 = vsel %vm5091, %v5093, %v5089
        %v5095 = vmul.f32 %v5049, %v5094
        %v5096 = vrcp.pop %v5062
        %v5097 = vmul.f32 %v5062, %v5096
        %v5098 = vsub.f32 1.0, %v5097
        %v5099 = vmul.f32 %v5096, %v5098
        %v5100 = vadd.f32 %v5096, %v5099
        %vm5101 = vweird.f32 %v5062
        %vm5102 = vweird.f32 %v5096
        %vm5103 = vmor %vm5101, %vm5102
        %v5104 = vsel %vm5103, %v5096, %v5100
        %v5105 = vand.u32 2147483647, %v5062
        %vm5106 = vcmp.eq.f32.partialorder %v5105, 8.507059e+37
        %v5107 = vand.u32 %v5062, 2147483648
        %v5108 = vor.u32 1.1754944e-38, %v5107
        %v5109 = vsel %vm5106, %v5108, %v5104
        %v5110 = vmul.f32 %v5051, %v5109
        %v5111 = vrcp.pop %v5065
        %v5112 = vmul.f32 %v5065, %v5111
        %v5113 = vsub.f32 1.0, %v5112
        %v5114 = vmul.f32 %v5111, %v5113
        %v5115 = vadd.f32 %v5111, %v5114
        %vm5116 = vweird.f32 %v5065
        %vm5117 = vweird.f32 %v5111
        %vm5118 = vmor %vm5116, %vm5117
        %v5119 = vsel %vm5118, %v5111, %v5115
        %v5120 = vand.u32 2147483647, %v5065
        %vm5121 = vcmp.eq.f32.partialorder %v5120, 8.507059e+37
        %v5122 = vand.u32 %v5065, 2147483648
        %v5123 = vor.u32 1.1754944e-38, %v5122
        %v5124 = vsel %vm5121, %v5123, %v5119
        %v5125 = vmul.f32 %v5053, %v5124
        %v5126 = vpack.c.bf16 %v5080, %v5080
        %v5127 = vpack.c.bf16 %v5095, %v5095
        %v5128 = vpack.c.bf16 %v5110, %v5110
        %v5129 = vpack.c.bf16 %v5125, %v5125
        %5130 = vxpose.xlu0.c.b16.start [1/8] %v4494, 128
        %5131 = vxpose.xlu0.c.b16.cont [2/8] 0, 128
        %5132 = vxpose.xlu0.c.b16.cont [3/8] 0, 128
        %5133 = vxpose.xlu0.c.b16.cont [4/8] 0, 128
        %5134 = vxpose.xlu0.c.b16.cont [5/8] 0, 128
        %5135 = vxpose.xlu0.c.b16.cont [6/8] 0, 128
        %5136 = vxpose.xlu0.c.b16.cont [7/8] 0, 128
        %5137 = vxpose.xlu0.c.b16.end [8/8] 0, 128
        %v5138 = vpop.trf.xlu0
        %v5139 = vpop.trf.xlu0
        %v5140 = vpop.trf.xlu0
        %v5141 = vpop.trf.xlu0
        %v5142 = vpop.trf.xlu0
        %v5143 = vpop.trf.xlu0
        %v5144 = vpop.trf.xlu0
        %v5145 = vpop.trf.xlu0
        %5146 = vxpose.xlu0.c.b16.start [1/8] %v4495, 128
        %5147 = vxpose.xlu0.c.b16.cont [2/8] 0, 128
        %5148 = vxpose.xlu0.c.b16.cont [3/8] 0, 128
        %5149 = vxpose.xlu0.c.b16.cont [4/8] 0, 128
        %5150 = vxpose.xlu0.c.b16.cont [5/8] 0, 128
        %5151 = vxpose.xlu0.c.b16.cont [6/8] 0, 128
        %5152 = vxpose.xlu0.c.b16.cont [7/8] 0, 128
        %5153 = vxpose.xlu0.c.b16.end [8/8] 0, 128
        %v5154 = vpop.trf.xlu0
        %v5155 = vpop.trf.xlu0
        %v5156 = vpop.trf.xlu0
        %v5157 = vpop.trf.xlu0
        %v5158 = vpop.trf.xlu0
        %v5159 = vpop.trf.xlu0
        %v5160 = vpop.trf.xlu0
        %v5161 = vpop.trf.xlu0
        %5162 = vxpose.xlu0.c.b16.start [1/8] %v4496, 128
        %5163 = vxpose.xlu0.c.b16.cont [2/8] 0, 128
        %5164 = vxpose.xlu0.c.b16.cont [3/8] 0, 128
        %5165 = vxpose.xlu0.c.b16.cont [4/8] 0, 128
        %5166 = vxpose.xlu0.c.b16.cont [5/8] 0, 128
        %5167 = vxpose.xlu0.c.b16.cont [6/8] 0, 128
        %5168 = vxpose.xlu0.c.b16.cont [7/8] 0, 128
        %5169 = vxpose.xlu0.c.b16.end [8/8] 0, 128
        %v5170 = vpop.trf.xlu0
        %v5171 = vpop.trf.xlu0
        %v5172 = vpop.trf.xlu0
        %v5173 = vpop.trf.xlu0
        %v5174 = vpop.trf.xlu0
        %v5175 = vpop.trf.xlu0
        %v5176 = vpop.trf.xlu0
        %v5177 = vpop.trf.xlu0
        %5178 = vxpose.xlu0.c.b16.start [1/8] %v4497, 128
        %5179 = vxpose.xlu0.c.b16.cont [2/8] 0, 128
        %5180 = vxpose.xlu0.c.b16.cont [3/8] 0, 128
        %5181 = vxpose.xlu0.c.b16.cont [4/8] 0, 128
        %5182 = vxpose.xlu0.c.b16.cont [5/8] 0, 128
        %5183 = vxpose.xlu0.c.b16.cont [6/8] 0, 128
        %5184 = vxpose.xlu0.c.b16.cont [7/8] 0, 128
        %5185 = vxpose.xlu0.c.b16.end [8/8] 0, 128
        %v5186 = vpop.trf.xlu0
        %v5187 = vpop.trf.xlu0
        %v5188 = vpop.trf.xlu0
        %v5189 = vpop.trf.xlu0
        %v5190 = vpop.trf.xlu0
        %v5191 = vpop.trf.xlu0
        %v5192 = vpop.trf.xlu0
        %v5193 = vpop.trf.xlu0
        %5194 = vxpose.xlu0.c.b16.start [1/8] %v4498, 128
        %5195 = vxpose.xlu0.c.b16.cont [2/8] 0, 128
        %5196 = vxpose.xlu0.c.b16.cont [3/8] 0, 128
        %5197 = vxpose.xlu0.c.b16.cont [4/8] 0, 128
        %5198 = vxpose.xlu0.c.b16.cont [5/8] 0, 128
        %5199 = vxpose.xlu0.c.b16.cont [6/8] 0, 128
        %5200 = vxpose.xlu0.c.b16.cont [7/8] 0, 128
        %5201 = vxpose.xlu0.c.b16.end [8/8] 0, 128
        %v5202 = vpop.trf.xlu0
        %v5203 = vpop.trf.xlu0
        %v5204 = vpop.trf.xlu0
        %v5205 = vpop.trf.xlu0
        %v5206 = vpop.trf.xlu0
        %v5207 = vpop.trf.xlu0
        %v5208 = vpop.trf.xlu0
        %v5209 = vpop.trf.xlu0
        %5210 = vxpose.xlu0.c.b16.start [1/8] %v4499, 128
        %5211 = vxpose.xlu0.c.b16.cont [2/8] 0, 128
        %5212 = vxpose.xlu0.c.b16.cont [3/8] 0, 128
        %5213 = vxpose.xlu0.c.b16.cont [4/8] 0, 128
        %5214 = vxpose.xlu0.c.b16.cont [5/8] 0, 128
        %5215 = vxpose.xlu0.c.b16.cont [6/8] 0, 128
        %5216 = vxpose.xlu0.c.b16.cont [7/8] 0, 128
        %5217 = vxpose.xlu0.c.b16.end [8/8] 0, 128
        %v5218 = vpop.trf.xlu0
        %v5219 = vpop.trf.xlu0
        %v5220 = vpop.trf.xlu0
        %v5221 = vpop.trf.xlu0
        %v5222 = vpop.trf.xlu0
        %v5223 = vpop.trf.xlu0
        %v5224 = vpop.trf.xlu0
        %v5225 = vpop.trf.xlu0
        %5226 = vxpose.xlu0.c.b16.start [1/8] %v4500, 128
        %5227 = vxpose.xlu0.c.b16.cont [2/8] 0, 128
        %5228 = vxpose.xlu0.c.b16.cont [3/8] 0, 128
        %5229 = vxpose.xlu0.c.b16.cont [4/8] 0, 128
        %5230 = vxpose.xlu0.c.b16.cont [5/8] 0, 128
        %5231 = vxpose.xlu0.c.b16.cont [6/8] 0, 128
        %5232 = vxpose.xlu0.c.b16.cont [7/8] 0, 128
        %5233 = vxpose.xlu0.c.b16.end [8/8] 0, 128
        %v5234 = vpop.trf.xlu0
        %v5235 = vpop.trf.xlu0
        %v5236 = vpop.trf.xlu0
        %v5237 = vpop.trf.xlu0
        %v5238 = vpop.trf.xlu0
        %v5239 = vpop.trf.xlu0
        %v5240 = vpop.trf.xlu0
        %v5241 = vpop.trf.xlu0
        %5242 = vxpose.xlu0.c.b16.start [1/8] %v4501, 128
        %5243 = vxpose.xlu0.c.b16.cont [2/8] 0, 128
        %5244 = vxpose.xlu0.c.b16.cont [3/8] 0, 128
        %5245 = vxpose.xlu0.c.b16.cont [4/8] 0, 128
        %5246 = vxpose.xlu0.c.b16.cont [5/8] 0, 128
        %5247 = vxpose.xlu0.c.b16.cont [6/8] 0, 128
        %5248 = vxpose.xlu0.c.b16.cont [7/8] 0, 128
        %5249 = vxpose.xlu0.c.b16.end [8/8] 0, 128
        %v5250 = vpop.trf.xlu0
        %v5251 = vpop.trf.xlu0
        %v5252 = vpop.trf.xlu0
        %v5253 = vpop.trf.xlu0
        %v5254 = vpop.trf.xlu0
        %v5255 = vpop.trf.xlu0
        %v5256 = vpop.trf.xlu0
        %v5257 = vpop.trf.xlu0
        %v5258 = vrot.slane %v5202, 4
        %v5259 = vsel %vm1932, %v5258, %v5138
        %v5261 = vunpack.c.l.s4 1983009808
        %v5262 = vunpack.c.0.s8 %v5261
        %v5263 = vperm.slane %v5259, %v5262
        %v5264 = vrot.slane %v5234, 4
        %v5265 = vsel %vm1932, %v5264, %v5170
        %v5267 = vunpack.c.l.s4 1983009808
        %v5268 = vunpack.c.0.s8 %v5267
        %v5269 = vperm.slane %v5265, %v5268
        %v5270 = vrot.slane %v5269, 4
        %v5271 = vsel %vm1932, %v5270, %v5263
        %v5272 = vrot.slane %v5263, 4
        %v5273 = vsel %vm1932, %v5269, %v5272
        %v5275 = vunpack.c.l.s4 1934713408
        %v5276 = vunpack.c.0.s8 %v5275
        %v5277 = vperm.slane %v5271, %v5276
        %v5279 = vunpack.c.l.s4 1934713408
        %v5280 = vunpack.c.0.s8 %v5279
        %v5281 = vperm.slane %v5273, %v5280
        %v5282 = vrot.slane %v5277, 4
        %v5283 = vsel %vm1932, 0, %v5282
        %v5284 = vrot.slane %v5281, 4
        %v5285 = vsel %vm1932, 0, %v5284
        %v5286 = vrot.slane %v5218, 4
        %v5287 = vsel %vm1932, %v5286, %v5154
        %v5289 = vunpack.c.l.s4 1983009808
        %v5290 = vunpack.c.0.s8 %v5289
        %v5291 = vperm.slane %v5287, %v5290
        %v5292 = vrot.slane %v5250, 4
        %v5293 = vsel %vm1932, %v5292, %v5186
        %v5295 = vunpack.c.l.s4 1983009808
        %v5296 = vunpack.c.0.s8 %v5295
        %v5297 = vperm.slane %v5293, %v5296
        %v5298 = vrot.slane %v5297, 4
        %v5299 = vsel %vm1932, %v5298, %v5291
        %v5300 = vrot.slane %v5291, 4
        %v5301 = vsel %vm1932, %v5297, %v5300
        %v5303 = vunpack.c.l.s4 1934713408
        %v5304 = vunpack.c.0.s8 %v5303
        %v5305 = vperm.slane %v5299, %v5304
        %v5307 = vunpack.c.l.s4 1934713408
        %v5308 = vunpack.c.0.s8 %v5307
        %v5309 = vperm.slane %v5301, %v5308
        %v5310 = vrot.slane %v5305, 4
        %v5311 = vsel %vm1932, 0, %v5310
        %v5312 = vrot.slane %v5309, 4
        %v5313 = vsel %vm1932, 0, %v5312
        %v5316 = vpack.i.b16 %v5305, %v5277
        %v5318 = vshrl.u32 %v5277, 16
        %v5319 = vshrl.u32 %v5305, 16
        %v5320 = vpack.i.b16 %v5319, %v5318
        %v5324 = vpack.i.b16 %v5311, %v5283
        %v5326 = vshrl.u32 %v5283, 16
        %v5327 = vshrl.u32 %v5311, 16
        %v5328 = vpack.i.b16 %v5327, %v5326
        %v5332 = vpack.i.b16 %v5309, %v5281
        %v5334 = vshrl.u32 %v5281, 16
        %v5335 = vshrl.u32 %v5309, 16
        %v5336 = vpack.i.b16 %v5335, %v5334
        %v5340 = vpack.i.b16 %v5313, %v5285
        %v5342 = vshrl.u32 %v5285, 16
        %v5343 = vshrl.u32 %v5313, 16
        %v5344 = vpack.i.b16 %v5343, %v5342
        %5346 = vxpose.xlu0.c.b16.start [1/8] %v5316, 128
        %5347 = vxpose.xlu0.c.b16.cont [2/8] 0, 128
        %5348 = vxpose.xlu0.c.b16.cont [3/8] 0, 128
        %5349 = vxpose.xlu0.c.b16.cont [4/8] 0, 128
        %5350 = vxpose.xlu0.c.b16.cont [5/8] 0, 128
        %5351 = vxpose.xlu0.c.b16.cont [6/8] 0, 128
        %5352 = vxpose.xlu0.c.b16.cont [7/8] 0, 128
        %5353 = vxpose.xlu0.c.b16.end [8/8] 0, 128
        %v5354 = vpop.trf.xlu0
        %v5355 = vpop.trf.xlu0
        %v5356 = vpop.trf.xlu0
        %v5357 = vpop.trf.xlu0
        %v5358 = vpop.trf.xlu0
        %v5359 = vpop.trf.xlu0
        %v5360 = vpop.trf.xlu0
        %v5361 = vpop.trf.xlu0
        %5362 = vxpose.xlu0.c.b16.start [1/8] %v5320, 128
        %5363 = vxpose.xlu0.c.b16.cont [2/8] 0, 128
        %5364 = vxpose.xlu0.c.b16.cont [3/8] 0, 128
        %5365 = vxpose.xlu0.c.b16.cont [4/8] 0, 128
        %5366 = vxpose.xlu0.c.b16.cont [5/8] 0, 128
        %5367 = vxpose.xlu0.c.b16.cont [6/8] 0, 128
        %5368 = vxpose.xlu0.c.b16.cont [7/8] 0, 128
        %5369 = vxpose.xlu0.c.b16.end [8/8] 0, 128
        %v5370 = vpop.trf.xlu0
        %v5371 = vpop.trf.xlu0
        %v5372 = vpop.trf.xlu0
        %v5373 = vpop.trf.xlu0
        %v5374 = vpop.trf.xlu0
        %v5375 = vpop.trf.xlu0
        %v5376 = vpop.trf.xlu0
        %v5377 = vpop.trf.xlu0
        %5378 = vxpose.xlu0.c.b16.start [1/8] %v5324, 128
        %5379 = vxpose.xlu0.c.b16.cont [2/8] 0, 128
        %5380 = vxpose.xlu0.c.b16.cont [3/8] 0, 128
        %5381 = vxpose.xlu0.c.b16.cont [4/8] 0, 128
        %5382 = vxpose.xlu0.c.b16.cont [5/8] 0, 128
        %5383 = vxpose.xlu0.c.b16.cont [6/8] 0, 128
        %5384 = vxpose.xlu0.c.b16.cont [7/8] 0, 128
        %5385 = vxpose.xlu0.c.b16.end [8/8] 0, 128
        %v5386 = vpop.trf.xlu0
        %v5387 = vpop.trf.xlu0
        %v5388 = vpop.trf.xlu0
        %v5389 = vpop.trf.xlu0
        %v5390 = vpop.trf.xlu0
        %v5391 = vpop.trf.xlu0
        %v5392 = vpop.trf.xlu0
        %v5393 = vpop.trf.xlu0
        %5394 = vxpose.xlu0.c.b16.start [1/8] %v5328, 128
        %5395 = vxpose.xlu0.c.b16.cont [2/8] 0, 128
        %5396 = vxpose.xlu0.c.b16.cont [3/8] 0, 128
        %5397 = vxpose.xlu0.c.b16.cont [4/8] 0, 128
        %5398 = vxpose.xlu0.c.b16.cont [5/8] 0, 128
        %5399 = vxpose.xlu0.c.b16.cont [6/8] 0, 128
        %5400 = vxpose.xlu0.c.b16.cont [7/8] 0, 128
        %5401 = vxpose.xlu0.c.b16.end [8/8] 0, 128
        %v5402 = vpop.trf.xlu0
        %v5403 = vpop.trf.xlu0
        %v5404 = vpop.trf.xlu0
        %v5405 = vpop.trf.xlu0
        %v5406 = vpop.trf.xlu0
        %v5407 = vpop.trf.xlu0
        %v5408 = vpop.trf.xlu0
        %v5409 = vpop.trf.xlu0
        %5410 = vxpose.xlu0.c.b16.start [1/8] %v5332, 128
        %5411 = vxpose.xlu0.c.b16.cont [2/8] 0, 128
        %5412 = vxpose.xlu0.c.b16.cont [3/8] 0, 128
        %5413 = vxpose.xlu0.c.b16.cont [4/8] 0, 128
        %5414 = vxpose.xlu0.c.b16.cont [5/8] 0, 128
        %5415 = vxpose.xlu0.c.b16.cont [6/8] 0, 128
        %5416 = vxpose.xlu0.c.b16.cont [7/8] 0, 128
        %5417 = vxpose.xlu0.c.b16.end [8/8] 0, 128
        %v5418 = vpop.trf.xlu0
        %v5419 = vpop.trf.xlu0
        %v5420 = vpop.trf.xlu0
        %v5421 = vpop.trf.xlu0
        %v5422 = vpop.trf.xlu0
        %v5423 = vpop.trf.xlu0
        %v5424 = vpop.trf.xlu0
        %v5425 = vpop.trf.xlu0
        %5426 = vxpose.xlu0.c.b16.start [1/8] %v5336, 128
        %5427 = vxpose.xlu0.c.b16.cont [2/8] 0, 128
        %5428 = vxpose.xlu0.c.b16.cont [3/8] 0, 128
        %5429 = vxpose.xlu0.c.b16.cont [4/8] 0, 128
        %5430 = vxpose.xlu0.c.b16.cont [5/8] 0, 128
        %5431 = vxpose.xlu0.c.b16.cont [6/8] 0, 128
        %5432 = vxpose.xlu0.c.b16.cont [7/8] 0, 128
        %5433 = vxpose.xlu0.c.b16.end [8/8] 0, 128
        %v5434 = vpop.trf.xlu0
        %v5435 = vpop.trf.xlu0
        %v5436 = vpop.trf.xlu0
        %v5437 = vpop.trf.xlu0
        %v5438 = vpop.trf.xlu0
        %v5439 = vpop.trf.xlu0
        %v5440 = vpop.trf.xlu0
        %v5441 = vpop.trf.xlu0
        %5442 = vxpose.xlu0.c.b16.start [1/8] %v5340, 128
        %5443 = vxpose.xlu0.c.b16.cont [2/8] 0, 128
        %5444 = vxpose.xlu0.c.b16.cont [3/8] 0, 128
        %5445 = vxpose.xlu0.c.b16.cont [4/8] 0, 128
        %5446 = vxpose.xlu0.c.b16.cont [5/8] 0, 128
        %5447 = vxpose.xlu0.c.b16.cont [6/8] 0, 128
        %5448 = vxpose.xlu0.c.b16.cont [7/8] 0, 128
        %5449 = vxpose.xlu0.c.b16.end [8/8] 0, 128
        %v5450 = vpop.trf.xlu0
        %v5451 = vpop.trf.xlu0
        %v5452 = vpop.trf.xlu0
        %v5453 = vpop.trf.xlu0
        %v5454 = vpop.trf.xlu0
        %v5455 = vpop.trf.xlu0
        %v5456 = vpop.trf.xlu0
        %v5457 = vpop.trf.xlu0
        %5458 = vxpose.xlu0.c.b16.start [1/8] %v5344, 128
        %5459 = vxpose.xlu0.c.b16.cont [2/8] 0, 128
        %5460 = vxpose.xlu0.c.b16.cont [3/8] 0, 128
        %5461 = vxpose.xlu0.c.b16.cont [4/8] 0, 128
        %5462 = vxpose.xlu0.c.b16.cont [5/8] 0, 128
        %5463 = vxpose.xlu0.c.b16.cont [6/8] 0, 128
        %5464 = vxpose.xlu0.c.b16.cont [7/8] 0, 128
        %5465 = vxpose.xlu0.c.b16.end [8/8] 0, 128
        %v5466 = vpop.trf.xlu0
        %v5467 = vpop.trf.xlu0
        %v5468 = vpop.trf.xlu0
        %v5469 = vpop.trf.xlu0
        %v5470 = vpop.trf.xlu0
        %v5471 = vpop.trf.xlu0
        %v5472 = vpop.trf.xlu0
        %v5473 = vpop.trf.xlu0
        %v5474 = vrot.slane %v5418, 4
        %v5475 = vsel %vm1932, %v5474, %v5354
        %v5477 = vunpack.c.l.s4 1983009808
        %v5478 = vunpack.c.0.s8 %v5477
        %v5479 = vperm.slane %v5475, %v5478
        %v5480 = vrot.slane %v5450, 4
        %v5481 = vsel %vm1932, %v5480, %v5386
        %v5483 = vunpack.c.l.s4 1983009808
        %v5484 = vunpack.c.0.s8 %v5483
        %v5485 = vperm.slane %v5481, %v5484
        %v5486 = vrot.slane %v5485, 4
        %v5487 = vsel %vm1932, %v5486, %v5479
        %v5489 = vunpack.c.l.s4 1934713408
        %v5490 = vunpack.c.0.s8 %v5489
        %v5491 = vperm.slane %v5487, %v5490
        %v5492 = vrot.slane %v5491, 4
        %v5493 = vsel %vm1932, 0, %v5492
        %v5494 = vrot.slane %v5434, 4
        %v5495 = vsel %vm1932, %v5494, %v5370
        %v5497 = vunpack.c.l.s4 1983009808
        %v5498 = vunpack.c.0.s8 %v5497
        %v5499 = vperm.slane %v5495, %v5498
        %v5500 = vrot.slane %v5466, 4
        %v5501 = vsel %vm1932, %v5500, %v5402
        %v5503 = vunpack.c.l.s4 1983009808
        %v5504 = vunpack.c.0.s8 %v5503
        %v5505 = vperm.slane %v5501, %v5504
        %v5506 = vrot.slane %v5505, 4
        %v5507 = vsel %vm1932, %v5506, %v5499
        %v5509 = vunpack.c.l.s4 1934713408
        %v5510 = vunpack.c.0.s8 %v5509
        %v5511 = vperm.slane %v5507, %v5510
        %v5512 = vrot.slane %v5511, 4
        %v5513 = vsel %vm1932, 0, %v5512
        %v5516 = vpack.i.b16 %v5511, %v5491
        %v5517 = vshrl.u32 %v5491, 16
        %v5518 = vshrl.u32 %v5511, 16
        %v5519 = vpack.i.b16 %v5518, %v5517
        %v5522 = vpack.i.b16 %v5513, %v5493
        %v5523 = vshrl.u32 %v5493, 16
        %v5524 = vshrl.u32 %v5513, 16
        %v5525 = vpack.i.b16 %v5524, %v5523
        %v5527 = vsel %vm2619, %v5516, 0
        %v5530 = vsel %vm2619, %v5126, 0
        %5532 = vmatpush.bf16.xpose.msra.mxu0 0
        %5533 = vmatpush.bf16.xpose.msra.mxu0 0
        %5534 = vmatpush.bf16.xpose.msra.mxu0 0
        %5535 = vmatpush.bf16.xpose.msra.mxu0 0
        %5536 = vmatpush.bf16.xpose.msra.mxu0 0
        %5537 = vmatpush.bf16.xpose.msra.mxu0 0
        %5538 = vmatpush.bf16.xpose.msra.mxu0 0
        %5539 = vmatpush.bf16.xpose.msra.mxu0 %v5530
        %5540 = vmatmul.bf16.gmra.mxu0 %v5527
        %v5541 = vpop.f32.mrf.mxu0
        %v5542 = vadd.f32 0.0, %v5541
        %v5543 = vpop.f32.mrf.mxu0
        %5544 = vdwg.mxu0
        %v5546 = vsel %vm2619, %v5519, 0
        %v5549 = vsel %vm2619, %v5127, 0
        %5551 = vmatpush.bf16.xpose.msra.mxu0 0
        %5552 = vmatpush.bf16.xpose.msra.mxu0 0
        %5553 = vmatpush.bf16.xpose.msra.mxu0 0
        %5554 = vmatpush.bf16.xpose.msra.mxu0 0
        %5555 = vmatpush.bf16.xpose.msra.mxu0 0
        %5556 = vmatpush.bf16.xpose.msra.mxu0 0
        %5557 = vmatpush.bf16.xpose.msra.mxu0 0
        %5558 = vmatpush.bf16.xpose.msra.mxu0 %v5549
        %5559 = vmatmul.bf16.gmra.mxu0 %v5546
        %v5560 = vpop.f32.mrf.mxu0
        %v5561 = vadd.f32 0.0, %v5560
        %v5562 = vpop.f32.mrf.mxu0
        %5563 = vdwg.mxu0
        %v5565 = vsel %vm2619, %v5522, 0
        %v5568 = vsel %vm2619, %v5128, 0
        %5570 = vmatpush.bf16.xpose.msra.mxu0 0
        %5571 = vmatpush.bf16.xpose.msra.mxu0 0
        %5572 = vmatpush.bf16.xpose.msra.mxu0 0
        %5573 = vmatpush.bf16.xpose.msra.mxu0 0
        %5574 = vmatpush.bf16.xpose.msra.mxu0 0
        %5575 = vmatpush.bf16.xpose.msra.mxu0 0
        %5576 = vmatpush.bf16.xpose.msra.mxu0 0
        %5577 = vmatpush.bf16.xpose.msra.mxu0 %v5568
        %5578 = vmatmul.bf16.gmra.mxu0 %v5565
        %v5579 = vpop.f32.mrf.mxu0
        %v5580 = vadd.f32 0.0, %v5579
        %v5581 = vpop.f32.mrf.mxu0
        %5582 = vdwg.mxu0
        %v5584 = vsel %vm2619, %v5525, 0
        %v5587 = vsel %vm2619, %v5129, 0
        %5589 = vmatpush.bf16.xpose.msra.mxu0 0
        %5590 = vmatpush.bf16.xpose.msra.mxu0 0
        %5591 = vmatpush.bf16.xpose.msra.mxu0 0
        %5592 = vmatpush.bf16.xpose.msra.mxu0 0
        %5593 = vmatpush.bf16.xpose.msra.mxu0 0
        %5594 = vmatpush.bf16.xpose.msra.mxu0 0
        %5595 = vmatpush.bf16.xpose.msra.mxu0 0
        %5596 = vmatpush.bf16.xpose.msra.mxu0 %v5587
        %5597 = vmatmul.bf16.gmra.mxu0 %v5584
        %v5598 = vpop.f32.mrf.mxu0
        %v5599 = vadd.f32 0.0, %v5598
        %v5600 = vpop.f32.mrf.mxu0
        %5601 = vdwg.mxu0
        %5602 = vxpose.xlu0.b32.start [1/16] %v5542, 128
        %5603 = vxpose.xlu0.b32.cont [2/16] 0.0, 128
        %5604 = vxpose.xlu0.b32.cont [3/16] 0.0, 128
        %5605 = vxpose.xlu0.b32.cont [4/16] 0.0, 128
        %5606 = vxpose.xlu0.b32.cont [5/16] 0.0, 128
        %5607 = vxpose.xlu0.b32.cont [6/16] 0.0, 128
        %5608 = vxpose.xlu0.b32.cont [7/16] 0.0, 128
        %5609 = vxpose.xlu0.b32.cont [8/16] 0.0, 128
        %5610 = vxpose.xlu0.b32.cont [9/16] 0.0, 128
        %5611 = vxpose.xlu0.b32.cont [10/16] 0.0, 128
        %5612 = vxpose.xlu0.b32.cont [11/16] 0.0, 128
        %5613 = vxpose.xlu0.b32.cont [12/16] 0.0, 128
        %5614 = vxpose.xlu0.b32.cont [13/16] 0.0, 128
        %5615 = vxpose.xlu0.b32.cont [14/16] 0.0, 128
        %5616 = vxpose.xlu0.b32.cont [15/16] 0.0, 128
        %5617 = vxpose.xlu0.b32.end [16/16] 0.0, 128
        %v5618 = vpop.trf.xlu0
        %v5619 = vpop.trf.xlu0
        %v5620 = vpop.trf.xlu0
        %v5621 = vpop.trf.xlu0
        %v5622 = vpop.trf.xlu0
        %v5623 = vpop.trf.xlu0
        %v5624 = vpop.trf.xlu0
        %v5625 = vpop.trf.xlu0
        %v5626 = vpop.trf.xlu0
        %v5627 = vpop.trf.xlu0
        %v5628 = vpop.trf.xlu0
        %v5629 = vpop.trf.xlu0
        %v5630 = vpop.trf.xlu0
        %v5631 = vpop.trf.xlu0
        %v5632 = vpop.trf.xlu0
        %v5633 = vpop.trf.xlu0
        %5634 = vxpose.xlu0.b32.start [1/16] %v5561, 128
        %5635 = vxpose.xlu0.b32.cont [2/16] 0.0, 128
        %5636 = vxpose.xlu0.b32.cont [3/16] 0.0, 128
        %5637 = vxpose.xlu0.b32.cont [4/16] 0.0, 128
        %5638 = vxpose.xlu0.b32.cont [5/16] 0.0, 128
        %5639 = vxpose.xlu0.b32.cont [6/16] 0.0, 128
        %5640 = vxpose.xlu0.b32.cont [7/16] 0.0, 128
        %5641 = vxpose.xlu0.b32.cont [8/16] 0.0, 128
        %5642 = vxpose.xlu0.b32.cont [9/16] 0.0, 128
        %5643 = vxpose.xlu0.b32.cont [10/16] 0.0, 128
        %5644 = vxpose.xlu0.b32.cont [11/16] 0.0, 128
        %5645 = vxpose.xlu0.b32.cont [12/16] 0.0, 128
        %5646 = vxpose.xlu0.b32.cont [13/16] 0.0, 128
        %5647 = vxpose.xlu0.b32.cont [14/16] 0.0, 128
        %5648 = vxpose.xlu0.b32.cont [15/16] 0.0, 128
        %5649 = vxpose.xlu0.b32.end [16/16] 0.0, 128
        %v5650 = vpop.trf.xlu0
        %v5651 = vpop.trf.xlu0
        %v5652 = vpop.trf.xlu0
        %v5653 = vpop.trf.xlu0
        %v5654 = vpop.trf.xlu0
        %v5655 = vpop.trf.xlu0
        %v5656 = vpop.trf.xlu0
        %v5657 = vpop.trf.xlu0
        %v5658 = vpop.trf.xlu0
        %v5659 = vpop.trf.xlu0
        %v5660 = vpop.trf.xlu0
        %v5661 = vpop.trf.xlu0
        %v5662 = vpop.trf.xlu0
        %v5663 = vpop.trf.xlu0
        %v5664 = vpop.trf.xlu0
        %v5665 = vpop.trf.xlu0
        %5666 = vxpose.xlu0.b32.start [1/16] %v5580, 128
        %5667 = vxpose.xlu0.b32.cont [2/16] 0.0, 128
        %5668 = vxpose.xlu0.b32.cont [3/16] 0.0, 128
        %5669 = vxpose.xlu0.b32.cont [4/16] 0.0, 128
        %5670 = vxpose.xlu0.b32.cont [5/16] 0.0, 128
        %5671 = vxpose.xlu0.b32.cont [6/16] 0.0, 128
        %5672 = vxpose.xlu0.b32.cont [7/16] 0.0, 128
        %5673 = vxpose.xlu0.b32.cont [8/16] 0.0, 128
        %5674 = vxpose.xlu0.b32.cont [9/16] 0.0, 128
        %5675 = vxpose.xlu0.b32.cont [10/16] 0.0, 128
        %5676 = vxpose.xlu0.b32.cont [11/16] 0.0, 128
        %5677 = vxpose.xlu0.b32.cont [12/16] 0.0, 128
        %5678 = vxpose.xlu0.b32.cont [13/16] 0.0, 128
        %5679 = vxpose.xlu0.b32.cont [14/16] 0.0, 128
        %5680 = vxpose.xlu0.b32.cont [15/16] 0.0, 128
        %5681 = vxpose.xlu0.b32.end [16/16] 0.0, 128
        %v5682 = vpop.trf.xlu0
        %v5683 = vpop.trf.xlu0
        %v5684 = vpop.trf.xlu0
        %v5685 = vpop.trf.xlu0
        %v5686 = vpop.trf.xlu0
        %v5687 = vpop.trf.xlu0
        %v5688 = vpop.trf.xlu0
        %v5689 = vpop.trf.xlu0
        %v5690 = vpop.trf.xlu0
        %v5691 = vpop.trf.xlu0
        %v5692 = vpop.trf.xlu0
        %v5693 = vpop.trf.xlu0
        %v5694 = vpop.trf.xlu0
        %v5695 = vpop.trf.xlu0
        %v5696 = vpop.trf.xlu0
        %v5697 = vpop.trf.xlu0
        %5698 = vxpose.xlu0.b32.start [1/16] %v5599, 128
        %5699 = vxpose.xlu0.b32.cont [2/16] 0.0, 128
        %5700 = vxpose.xlu0.b32.cont [3/16] 0.0, 128
        %5701 = vxpose.xlu0.b32.cont [4/16] 0.0, 128
        %5702 = vxpose.xlu0.b32.cont [5/16] 0.0, 128
        %5703 = vxpose.xlu0.b32.cont [6/16] 0.0, 128
        %5704 = vxpose.xlu0.b32.cont [7/16] 0.0, 128
        %5705 = vxpose.xlu0.b32.cont [8/16] 0.0, 128
        %5706 = vxpose.xlu0.b32.cont [9/16] 0.0, 128
        %5707 = vxpose.xlu0.b32.cont [10/16] 0.0, 128
        %5708 = vxpose.xlu0.b32.cont [11/16] 0.0, 128
        %5709 = vxpose.xlu0.b32.cont [12/16] 0.0, 128
        %5710 = vxpose.xlu0.b32.cont [13/16] 0.0, 128
        %5711 = vxpose.xlu0.b32.cont [14/16] 0.0, 128
        %5712 = vxpose.xlu0.b32.cont [15/16] 0.0, 128
        %5713 = vxpose.xlu0.b32.end [16/16] 0.0, 128
        %v5714 = vpop.trf.xlu0
        %v5715 = vpop.trf.xlu0
        %v5716 = vpop.trf.xlu0
        %v5717 = vpop.trf.xlu0
        %v5718 = vpop.trf.xlu0
        %v5719 = vpop.trf.xlu0
        %v5720 = vpop.trf.xlu0
        %v5721 = vpop.trf.xlu0
        %v5722 = vpop.trf.xlu0
        %v5723 = vpop.trf.xlu0
        %v5724 = vpop.trf.xlu0
        %v5725 = vpop.trf.xlu0
        %v5726 = vpop.trf.xlu0
        %v5727 = vpop.trf.xlu0
        %v5728 = vpop.trf.xlu0
        %v5729 = vpop.trf.xlu0
        %v5730 = vrot.slane %v5682, 4
        %v5731 = vsel %vm1499, %v5730, %v5618
        %v5732 = vrot.slane %v5618, 4
        %v5733 = vsel %vm1499, %v5682, %v5732
        %v5735 = vunpack.c.l.s4 1983009808
        %v5736 = vunpack.c.0.s8 %v5735
        %v5737 = vperm.slane %v5731, %v5736
        %v5739 = vunpack.c.l.s4 1983009808
        %v5740 = vunpack.c.0.s8 %v5739
        %v5741 = vperm.slane %v5733, %v5740
        %v5742 = vrot.slane %v5714, 4
        %v5743 = vsel %vm1499, %v5742, %v5650
        %v5744 = vrot.slane %v5650, 4
        %v5745 = vsel %vm1499, %v5714, %v5744
        %v5747 = vunpack.c.l.s4 1983009808
        %v5748 = vunpack.c.0.s8 %v5747
        %v5749 = vperm.slane %v5743, %v5748
        %v5751 = vunpack.c.l.s4 1983009808
        %v5752 = vunpack.c.0.s8 %v5751
        %v5753 = vperm.slane %v5745, %v5752
        %v5754 = vrot.slane %v5749, 4
        %v5755 = vsel %vm1499, %v5754, %v5737
        %v5756 = vrot.slane %v5737, 4
        %v5757 = vsel %vm1499, %v5749, %v5756
        %v5759 = vunpack.c.l.s4 1934713408
        %v5760 = vunpack.c.0.s8 %v5759
        %v5761 = vperm.slane %v5755, %v5760
        %v5763 = vunpack.c.l.s4 1934713408
        %v5764 = vunpack.c.0.s8 %v5763
        %v5765 = vperm.slane %v5757, %v5764
        %v5766 = vrot.slane %v5753, 4
        %v5767 = vsel %vm1499, %v5766, %v5741
        %v5768 = vrot.slane %v5741, 4
        %v5769 = vsel %vm1499, %v5753, %v5768
        %v5771 = vunpack.c.l.s4 1934713408
        %v5772 = vunpack.c.0.s8 %v5771
        %v5773 = vperm.slane %v5767, %v5772
        %v5775 = vunpack.c.l.s4 1934713408
        %v5776 = vunpack.c.0.s8 %v5775
        %v5777 = vperm.slane %v5769, %v5776
        %v5778 = vrot.slane %v5761, 4
        %v5779 = vsel %vm1499, 0.0, %v5778
        %v5780 = vrot.slane %v5765, 4
        %v5781 = vsel %vm1499, 0.0, %v5780
        %v5782 = vrot.slane %v5773, 4
        %v5783 = vsel %vm1499, 0.0, %v5782
        %v5784 = vrot.slane %v5777, 4
        %v5785 = vsel %vm1499, 0.0, %v5784
        %v5786 = vsel %vm1499, %v5780, %v5761
        %v5788 = vunpack.c.l.s4 1983009808
        %v5789 = vunpack.c.0.s8 %v5788
        %v5790 = vperm.slane %v5786, %v5789
        %v5791 = vrot.slane %v5781, 4
        %v5792 = vsel %vm1499, %v5791, %v5779
        %v5794 = vunpack.c.l.s4 1983009808
        %v5795 = vunpack.c.0.s8 %v5794
        %v5796 = vperm.slane %v5792, %v5795
        %v5797 = vsel %vm1499, %v5784, %v5773
        %v5799 = vunpack.c.l.s4 1983009808
        %v5800 = vunpack.c.0.s8 %v5799
        %v5801 = vperm.slane %v5797, %v5800
        %v5802 = vrot.slane %v5785, 4
        %v5803 = vsel %vm1499, %v5802, %v5783
        %v5805 = vunpack.c.l.s4 1983009808
        %v5806 = vunpack.c.0.s8 %v5805
        %v5807 = vperm.slane %v5803, %v5806
        %v5808 = vrot.slane %v5796, 4
        %v5809 = vsel %vm1499, %v5808, %v5790
        %v5810 = vrot.slane %v5790, 4
        %v5811 = vsel %vm1499, %v5796, %v5810
        %v5813 = vunpack.c.l.s4 1934713408
        %v5814 = vunpack.c.0.s8 %v5813
        %v5815 = vperm.slane %v5809, %v5814
        %v5817 = vunpack.c.l.s4 1934713408
        %v5818 = vunpack.c.0.s8 %v5817
        %v5819 = vperm.slane %v5811, %v5818
        %v5820 = vrot.slane %v5807, 4
        %v5821 = vsel %vm1499, %v5820, %v5801
        %v5822 = vrot.slane %v5801, 4
        %v5823 = vsel %vm1499, %v5807, %v5822
        %v5825 = vunpack.c.l.s4 1934713408
        %v5826 = vunpack.c.0.s8 %v5825
        %v5827 = vperm.slane %v5821, %v5826
        %v5829 = vunpack.c.l.s4 1934713408
        %v5830 = vunpack.c.0.s8 %v5829
        %v5831 = vperm.slane %v5823, %v5830
        %v5832 = vrot.slane %v5827, 4
        %v5833 = vsel %vm1499, %v5832, %v5815
        %v5834 = vrot.slane %v5815, 4
        %v5835 = vsel %vm1499, %v5827, %v5834
        %v5836 = vrot.slane %v5831, 4
        %v5837 = vsel %vm1499, %v5836, %v5819
        %v5838 = vrot.slane %v5819, 4
        %v5839 = vsel %vm1499, %v5831, %v5838
        %5841 = vrot.lane.b32.xlu0 %v5835, 8
        %v5842 = vpop.permute.xlu0 %5841
        %5845 = vrot.lane.b32.xlu0 %v5837, 16
        %v5846 = vpop.permute.xlu0 %5845
        %5849 = vrot.lane.b32.xlu0 %v5839, 24
        %v5850 = vpop.permute.xlu0 %5849
        %v5852 = vsel %vm2619, %v5833, %v5842
        %v5853 = vsel %vm2726, %v5852, %v5846
        %v5854 = vsel %vm3979, %v5853, %v5850
        %v5855 = vld [vmem:[%s35] sm:$0xf]
        %v5856 = vld [vmem:[%s35 + $0x4] sm:$0xf]
        %v5857 = vld [vmem:[%s35 + $0x8] sm:$0xf]
        %v5858 = vld [vmem:[%s35 + $0xc] sm:$0xf]
        %v5859 = vld [vmem:[#allocation15] sm:$0x1]
        %v5860 = vpack.c.bf16 %v5854, %v5854
        %v5862 = vperm.slane %v5859, 0
        %v5868 = vunpack.c.l.b16 %v5855
        %v5869 = vunpack.c.l.b16 %v5856
        %v5870 = vunpack.c.l.b16 %v5857
        %v5871 = vunpack.c.l.b16 %v5858
        %v5872 = vpack.c.b16 %v5869, %v5868
        %v5873 = vpack.c.b16 %v5871, %v5870
        %v5877 = vsel %vm1460, %v5860, 0
        %5879 = vmatpush.bf16.msra.mxu0 0
        %5880 = vmatpush.bf16.msra.mxu0 0
        %5881 = vmatpush.bf16.msra.mxu0 0
        %5882 = vmatpush.bf16.msra.mxu0 0
        %5883 = vmatpush.bf16.msra.mxu0 0
        %5884 = vmatpush.bf16.msra.mxu0 0
        %5885 = vmatpush.bf16.msra.mxu0 %v5873
        %5886 = vmatpush.bf16.msra.mxu0 %v5872
        %5887 = vmatmul.bf16.gmra.mxu0 %v5877
        %v5888 = vpop.f32.mrf.mxu0
        %v5889 = vadd.f32 %v5862, %v5888
        %v5890 = vpop.f32.mrf.mxu0
        %5891 = vdwg.mxu0
        %v5892 = vadd.f32 %v4238, %v5889
        %v5893 = vld [vmem:[#allocation16] sm:$0x1]
        %v5894 = vld [vmem:[#allocation18] sm:$0x1]
        %v5895 = vsel %vm1460, %v5892, 0.0
        %5896 = vadd.xlane.f32.xlu0 %v5895
        %v5897 = vpop.xlane.xlu0 %5896
        %v5898 = vmul.f32 %v5897, %v4036
        %v5899 = vsub.f32 %v5892, %v5898
        %v5900 = vmul.f32 %v5899, %v5899
        %v5901 = vsel %vm1460, %v5900, 0.0
        %5902 = vadd.xlane.f32.xlu0 %v5901
        %v5903 = vpop.xlane.xlu0 %5902
        %v5904 = vmul.f32 %v5903, %v4036
        %v5905 = vadd.f32 %v5904, 1e-05
        %v5906 = vrsqrt.pop %v5905
        %v5907 = vmul.f32 %v5906, %v5905
        %v5908 = vmul.f32 %v5907, %v5906
        %v5909 = vmul.f32 0.5, %v5908
        %v5910 = vsub.f32 1.5, %v5909
        %v5911 = vmul.f32 %v5906, %v5910
        %vm5912 = vweird.f32 %v5905
        %vm5913 = vweird.f32 %v5906
        %vm5914 = vmor %vm5912, %vm5913
        %v5915 = vsel %vm5914, %v5906, %v5911
        %v5916 = vmul.f32 %v5899, %v5915
        %v5918 = vperm.slane %v5893, 0
        %v5920 = vmul.f32 %v5916, %v5918
        %v5922 = vperm.slane %v5894, 0
        %v5924 = vadd.f32 %v5920, %v5922
        %v5925 = vld [vmem:[#allocation19] sm:$0xf]
        %v5926 = vld [vmem:[#allocation19 + $0x4] sm:$0xf]
        %v5927 = vld [vmem:[#allocation19 + $0x8] sm:$0xf]
        %v5928 = vld [vmem:[#allocation19 + $0xc] sm:$0xf]
        %v5929 = vld [vmem:[#allocation21] sm:$0x1]
        %v5930 = vpack.c.bf16 %v5924, %v5924
        %v5932 = vperm.slane %v5929, 0
        %v5938 = vunpack.c.l.b16 %v5925
        %v5939 = vunpack.c.l.b16 %v5926
        %v5940 = vunpack.c.l.b16 %v5927
        %v5941 = vunpack.c.l.b16 %v5928
        %v5942 = vpack.c.b16 %v5939, %v5938
        %v5943 = vpack.c.b16 %v5941, %v5940
        %v5947 = vsel %vm1460, %v5930, 0
        %5949 = vmatpush.bf16.msra.mxu0 0
        %5950 = vmatpush.bf16.msra.mxu0 0
        %5951 = vmatpush.bf16.msra.mxu0 0
        %5952 = vmatpush.bf16.msra.mxu0 0
        %5953 = vmatpush.bf16.msra.mxu0 0
        %5954 = vmatpush.bf16.msra.mxu0 0
        %5955 = vmatpush.bf16.msra.mxu0 %v5943
        %5956 = vmatpush.bf16.msra.mxu0 %v5942
        %5957 = vmatmul.bf16.gmra.mxu0 %v5947
        %v5958 = vpop.f32.mrf.mxu0
        %v5959 = vadd.f32 %v5932, %v5958
        %v5960 = vpop.f32.mrf.mxu0
        %5961 = vdwg.mxu0
        %v5962 = vld [vmem:[#allocation22] sm:$0xf]
        %v5963 = vld [vmem:[#allocation22 + $0x4] sm:$0xf]
        %v5964 = vld [vmem:[#allocation22 + $0x8] sm:$0xf]
        %v5965 = vld [vmem:[#allocation22 + $0xc] sm:$0xf]
        %v5966 = vld [vmem:[#allocation24] sm:$0x1]
        %v5967 = vpack.c.bf16 %v4237, %v4236
        %v5969 = vperm.slane %v5966, 0
        %v5975 = vunpack.c.l.b16 %v5962
        %v5976 = vunpack.c.l.b16 %v5963
        %v5977 = vunpack.c.l.b16 %v5964
        %v5978 = vunpack.c.l.b16 %v5965
        %v5979 = vpack.c.b16 %v5976, %v5975
        %v5980 = vpack.c.b16 %v5978, %v5977
        %v5984 = vsel %vm1460, %v5967, 0
        %5986 = vmatpush.bf16.msra.mxu0 0
        %5987 = vmatpush.bf16.msra.mxu0 0
        %5988 = vmatpush.bf16.msra.mxu0 0
        %5989 = vmatpush.bf16.msra.mxu0 0
        %5990 = vmatpush.bf16.msra.mxu0 0
        %5991 = vmatpush.bf16.msra.mxu0 0
        %5992 = vmatpush.bf16.msra.mxu0 %v5980
        %5993 = vmatpush.bf16.msra.mxu0 %v5979
        %5994 = vmatmul.bf16.gmra.mxu0 %v5984
        %v5995 = vpop.f32.mrf.mxu0
        %v5996 = vadd.f32 %v5969, %v5995
        %v5997 = vpop.f32.mrf.mxu0
        %v5998 = vadd.f32 %v5969, %v5997
        %5999 = vdwg.mxu0
        %6001 = vrot.lane.b32.xlu0 %v5959, 120
        %v6002 = vpop.permute.xlu0 %6001
        %6004 = vrot.lane.b32.xlu0 %v5959, 112
        %v6005 = vpop.permute.xlu0 %6004
        %6007 = vrot.lane.b32.xlu0 %v5959, 104
        %v6008 = vpop.permute.xlu0 %6007
        %v6010 = vrot.slane %v6005, 4
        %v6011 = vsel %vm1499, %v6010, %v5959
        %v6012 = vrot.slane %v5959, 4
        %v6013 = vsel %vm1499, %v6005, %v6012
        %v6015 = vunpack.c.l.s4 1983009808
        %v6016 = vunpack.c.0.s8 %v6015
        %v6017 = vperm.slane %v6011, %v6016
        %v6019 = vunpack.c.l.s4 1983009808
        %v6020 = vunpack.c.0.s8 %v6019
        %v6021 = vperm.slane %v6013, %v6020
        %v6022 = vrot.slane %v6008, 4
        %v6023 = vsel %vm1499, %v6022, %v6002
        %v6024 = vrot.slane %v6002, 4
        %v6025 = vsel %vm1499, %v6008, %v6024
        %v6027 = vunpack.c.l.s4 1983009808
        %v6028 = vunpack.c.0.s8 %v6027
        %v6029 = vperm.slane %v6023, %v6028
        %v6031 = vunpack.c.l.s4 1983009808
        %v6032 = vunpack.c.0.s8 %v6031
        %v6033 = vperm.slane %v6025, %v6032
        %v6034 = vrot.slane %v6029, 4
        %v6035 = vsel %vm1499, %v6034, %v6017
        %v6036 = vrot.slane %v6017, 4
        %v6037 = vsel %vm1499, %v6029, %v6036
        %v6039 = vunpack.c.l.s4 1934713408
        %v6040 = vunpack.c.0.s8 %v6039
        %v6041 = vperm.slane %v6035, %v6040
        %v6043 = vunpack.c.l.s4 1934713408
        %v6044 = vunpack.c.0.s8 %v6043
        %v6045 = vperm.slane %v6037, %v6044
        %v6046 = vrot.slane %v6033, 4
        %v6047 = vsel %vm1499, %v6046, %v6021
        %v6048 = vrot.slane %v6021, 4
        %v6049 = vsel %vm1499, %v6033, %v6048
        %v6051 = vunpack.c.l.s4 1934713408
        %v6052 = vunpack.c.0.s8 %v6051
        %v6053 = vperm.slane %v6047, %v6052
        %v6055 = vunpack.c.l.s4 1934713408
        %v6056 = vunpack.c.0.s8 %v6055
        %v6057 = vperm.slane %v6049, %v6056
        %v6058 = vrot.slane %v6041, 4
        %v6059 = vsel %vm1499, 0.0, %v6058
        %v6060 = vrot.slane %v6045, 4
        %v6061 = vsel %vm1499, 0.0, %v6060
        %v6062 = vrot.slane %v6053, 4
        %v6063 = vsel %vm1499, 0.0, %v6062
        %v6064 = vrot.slane %v6057, 4
        %v6065 = vsel %vm1499, 0.0, %v6064
        %v6066 = vpack.c.bf16 %v6041, %v6041
        %v6067 = vpack.c.bf16 %v6059, %v6059
        %v6068 = vpack.c.bf16 %v6045, %v6045
        %v6069 = vpack.c.bf16 %v6061, %v6061
        %v6070 = vpack.c.bf16 %v6053, %v6053
        %v6071 = vpack.c.bf16 %v6063, %v6063
        %v6072 = vpack.c.bf16 %v6057, %v6057
        %v6073 = vpack.c.bf16 %v6065, %v6065
        %6076 = vrot.lane.b32.xlu0 %v5996, 120
        %v6077 = vpop.permute.xlu0 %6076
        %6078 = vrot.lane.b32.xlu0 %v5998, 120
        %v6079 = vpop.permute.xlu0 %6078
        %6082 = vrot.lane.b32.xlu0 %v5996, 112
        %v6083 = vpop.permute.xlu0 %6082
        %6084 = vrot.lane.b32.xlu0 %v5998, 112
        %v6085 = vpop.permute.xlu0 %6084
        %6088 = vrot.lane.b32.xlu0 %v5996, 104
        %v6089 = vpop.permute.xlu0 %6088
        %6090 = vrot.lane.b32.xlu0 %v5998, 104
        %v6091 = vpop.permute.xlu0 %6090
        %v6094 = vrot.slane %v6083, 4
        %v6095 = vsel %vm1499, %v6094, %v5996
        %v6096 = vrot.slane %v5996, 4
        %v6097 = vsel %vm1499, %v6083, %v6096
        %v6099 = vunpack.c.l.s4 1983009808
        %v6100 = vunpack.c.0.s8 %v6099
        %v6101 = vperm.slane %v6095, %v6100
        %v6103 = vunpack.c.l.s4 1983009808
        %v6104 = vunpack.c.0.s8 %v6103
        %v6105 = vperm.slane %v6097, %v6104
        %v6106 = vrot.slane %v6089, 4
        %v6107 = vsel %vm1499, %v6106, %v6077
        %v6108 = vrot.slane %v6077, 4
        %v6109 = vsel %vm1499, %v6089, %v6108
        %v6111 = vunpack.c.l.s4 1983009808
        %v6112 = vunpack.c.0.s8 %v6111
        %v6113 = vperm.slane %v6107, %v6112
        %v6115 = vunpack.c.l.s4 1983009808
        %v6116 = vunpack.c.0.s8 %v6115
        %v6117 = vperm.slane %v6109, %v6116
        %v6118 = vrot.slane %v6113, 4
        %v6119 = vsel %vm1499, %v6118, %v6101
        %v6120 = vrot.slane %v6101, 4
        %v6121 = vsel %vm1499, %v6113, %v6120
        %v6123 = vunpack.c.l.s4 1934713408
        %v6124 = vunpack.c.0.s8 %v6123
        %v6125 = vperm.slane %v6119, %v6124
        %v6127 = vunpack.c.l.s4 1934713408
        %v6128 = vunpack.c.0.s8 %v6127
        %v6129 = vperm.slane %v6121, %v6128
        %v6130 = vrot.slane %v6117, 4
        %v6131 = vsel %vm1499, %v6130, %v6105
        %v6132 = vrot.slane %v6105, 4
        %v6133 = vsel %vm1499, %v6117, %v6132
        %v6135 = vunpack.c.l.s4 1934713408
        %v6136 = vunpack.c.0.s8 %v6135
        %v6137 = vperm.slane %v6131, %v6136
        %v6139 = vunpack.c.l.s4 1934713408
        %v6140 = vunpack.c.0.s8 %v6139
        %v6141 = vperm.slane %v6133, %v6140
        %v6142 = vrot.slane %v6125, 4
        %v6143 = vsel %vm1499, 0.0, %v6142
        %v6144 = vrot.slane %v6129, 4
        %v6145 = vsel %vm1499, 0.0, %v6144
        %v6146 = vrot.slane %v6137, 4
        %v6147 = vsel %vm1499, 0.0, %v6146
        %v6148 = vrot.slane %v6141, 4
        %v6149 = vsel %vm1499, 0.0, %v6148
        %v6150 = vrot.slane %v6085, 4
        %v6151 = vsel %vm1499, %v6150, %v5998
        %v6152 = vrot.slane %v5998, 4
        %v6153 = vsel %vm1499, %v6085, %v6152
        %v6155 = vunpack.c.l.s4 1983009808
        %v6156 = vunpack.c.0.s8 %v6155
        %v6157 = vperm.slane %v6151, %v6156
        %v6159 = vunpack.c.l.s4 1983009808
        %v6160 = vunpack.c.0.s8 %v6159
        %v6161 = vperm.slane %v6153, %v6160
        %v6162 = vrot.slane %v6091, 4
        %v6163 = vsel %vm1499, %v6162, %v6079
        %v6164 = vrot.slane %v6079, 4
        %v6165 = vsel %vm1499, %v6091, %v6164
        %v6167 = vunpack.c.l.s4 1983009808
        %v6168 = vunpack.c.0.s8 %v6167
        %v6169 = vperm.slane %v6163, %v6168
        %v6171 = vunpack.c.l.s4 1983009808
        %v6172 = vunpack.c.0.s8 %v6171
        %v6173 = vperm.slane %v6165, %v6172
        %v6174 = vrot.slane %v6169, 4
        %v6175 = vsel %vm1499, %v6174, %v6157
        %v6176 = vrot.slane %v6157, 4
        %v6177 = vsel %vm1499, %v6169, %v6176
        %v6179 = vunpack.c.l.s4 1934713408
        %v6180 = vunpack.c.0.s8 %v6179
        %v6181 = vperm.slane %v6175, %v6180
        %v6183 = vunpack.c.l.s4 1934713408
        %v6184 = vunpack.c.0.s8 %v6183
        %v6185 = vperm.slane %v6177, %v6184
        %v6186 = vrot.slane %v6173, 4
        %v6187 = vsel %vm1499, %v6186, %v6161
        %v6188 = vrot.slane %v6161, 4
        %v6189 = vsel %vm1499, %v6173, %v6188
        %v6191 = vunpack.c.l.s4 1934713408
        %v6192 = vunpack.c.0.s8 %v6191
        %v6193 = vperm.slane %v6187, %v6192
        %v6195 = vunpack.c.l.s4 1934713408
        %v6196 = vunpack.c.0.s8 %v6195
        %v6197 = vperm.slane %v6189, %v6196
        %v6198 = vrot.slane %v6181, 4
        %v6199 = vsel %vm1499, 0.0, %v6198
        %v6200 = vrot.slane %v6185, 4
        %v6201 = vsel %vm1499, 0.0, %v6200
        %v6202 = vrot.slane %v6193, 4
        %v6203 = vsel %vm1499, 0.0, %v6202
        %v6204 = vrot.slane %v6197, 4
        %v6205 = vsel %vm1499, 0.0, %v6204
        %v6206 = vpack.c.bf16 %v6125, %v6125
        %v6207 = vpack.c.bf16 %v6143, %v6143
        %v6208 = vpack.c.bf16 %v6129, %v6129
        %v6209 = vpack.c.bf16 %v6145, %v6145
        %v6210 = vpack.c.bf16 %v6137, %v6137
        %v6211 = vpack.c.bf16 %v6147, %v6147
        %v6212 = vpack.c.bf16 %v6141, %v6141
        %v6213 = vpack.c.bf16 %v6149, %v6149
        %v6214 = vpack.c.bf16 %v6181, %v6181
        %v6215 = vpack.c.bf16 %v6199, %v6199
        %v6216 = vpack.c.bf16 %v6185, %v6185
        %v6217 = vpack.c.bf16 %v6201, %v6201
        %v6218 = vpack.c.bf16 %v6193, %v6193
        %v6219 = vpack.c.bf16 %v6203, %v6203
        %v6220 = vpack.c.bf16 %v6197, %v6197
        %v6221 = vpack.c.bf16 %v6205, %v6205
        %6222 = vrot.lane.b32.xlu0 %v5996, 96
        %v6223 = vpop.permute.xlu0 %6222
        %6224 = vrot.lane.b32.xlu0 %v5998, 96
        %v6225 = vpop.permute.xlu0 %6224
        %6226 = vrot.lane.b32.xlu0 %v6077, 96
        %v6227 = vpop.permute.xlu0 %6226
        %6228 = vrot.lane.b32.xlu0 %v6079, 96
        %v6229 = vpop.permute.xlu0 %6228
        %6230 = vrot.lane.b32.xlu0 %v6083, 96
        %v6231 = vpop.permute.xlu0 %6230
        %6232 = vrot.lane.b32.xlu0 %v6085, 96
        %v6233 = vpop.permute.xlu0 %6232
        %6234 = vrot.lane.b32.xlu0 %v6089, 96
        %v6235 = vpop.permute.xlu0 %6234
        %6236 = vrot.lane.b32.xlu0 %v6091, 96
        %v6237 = vpop.permute.xlu0 %6236
        %v6246 = vrot.slane %v6231, 4
        %v6247 = vsel %vm1499, %v6246, %v6223
        %v6248 = vrot.slane %v6223, 4
        %v6249 = vsel %vm1499, %v6231, %v6248
        %v6251 = vunpack.c.l.s4 1983009808
        %v6252 = vunpack.c.0.s8 %v6251
        %v6253 = vperm.slane %v6247, %v6252
        %v6255 = vunpack.c.l.s4 1983009808
        %v6256 = vunpack.c.0.s8 %v6255
        %v6257 = vperm.slane %v6249, %v6256
        %v6258 = vrot.slane %v6235, 4
        %v6259 = vsel %vm1499, %v6258, %v6227
        %v6260 = vrot.slane %v6227, 4
        %v6261 = vsel %vm1499, %v6235, %v6260
        %v6263 = vunpack.c.l.s4 1983009808
        %v6264 = vunpack.c.0.s8 %v6263
        %v6265 = vperm.slane %v6259, %v6264
        %v6267 = vunpack.c.l.s4 1983009808
        %v6268 = vunpack.c.0.s8 %v6267
        %v6269 = vperm.slane %v6261, %v6268
        %v6270 = vrot.slane %v6265, 4
        %v6271 = vsel %vm1499, %v6270, %v6253
        %v6272 = vrot.slane %v6253, 4
        %v6273 = vsel %vm1499, %v6265, %v6272
        %v6275 = vunpack.c.l.s4 1934713408
        %v6276 = vunpack.c.0.s8 %v6275
        %v6277 = vperm.slane %v6271, %v6276
        %v6279 = vunpack.c.l.s4 1934713408
        %v6280 = vunpack.c.0.s8 %v6279
        %v6281 = vperm.slane %v6273, %v6280
        %v6282 = vrot.slane %v6269, 4
        %v6283 = vsel %vm1499, %v6282, %v6257
        %v6284 = vrot.slane %v6257, 4
        %v6285 = vsel %vm1499, %v6269, %v6284
        %v6287 = vunpack.c.l.s4 1934713408
        %v6288 = vunpack.c.0.s8 %v6287
        %v6289 = vperm.slane %v6283, %v6288
        %v6291 = vunpack.c.l.s4 1934713408
        %v6292 = vunpack.c.0.s8 %v6291
        %v6293 = vperm.slane %v6285, %v6292
        %v6294 = vrot.slane %v6277, 4
        %v6295 = vsel %vm1499, 0.0, %v6294
        %v6296 = vrot.slane %v6281, 4
        %v6297 = vsel %vm1499, 0.0, %v6296
        %v6298 = vrot.slane %v6289, 4
        %v6299 = vsel %vm1499, 0.0, %v6298
        %v6300 = vrot.slane %v6293, 4
        %v6301 = vsel %vm1499, 0.0, %v6300
        %v6302 = vrot.slane %v6233, 4
        %v6303 = vsel %vm1499, %v6302, %v6225
        %v6304 = vrot.slane %v6225, 4
        %v6305 = vsel %vm1499, %v6233, %v6304
        %v6307 = vunpack.c.l.s4 1983009808
        %v6308 = vunpack.c.0.s8 %v6307
        %v6309 = vperm.slane %v6303, %v6308
        %v6311 = vunpack.c.l.s4 1983009808
        %v6312 = vunpack.c.0.s8 %v6311
        %v6313 = vperm.slane %v6305, %v6312
        %v6314 = vrot.slane %v6237, 4
        %v6315 = vsel %vm1499, %v6314, %v6229
        %v6316 = vrot.slane %v6229, 4
        %v6317 = vsel %vm1499, %v6237, %v6316
        %v6319 = vunpack.c.l.s4 1983009808
        %v6320 = vunpack.c.0.s8 %v6319
        %v6321 = vperm.slane %v6315, %v6320
        %v6323 = vunpack.c.l.s4 1983009808
        %v6324 = vunpack.c.0.s8 %v6323
        %v6325 = vperm.slane %v6317, %v6324
        %v6326 = vrot.slane %v6321, 4
        %v6327 = vsel %vm1499, %v6326, %v6309
        %v6328 = vrot.slane %v6309, 4
        %v6329 = vsel %vm1499, %v6321, %v6328
        %v6331 = vunpack.c.l.s4 1934713408
        %v6332 = vunpack.c.0.s8 %v6331
        %v6333 = vperm.slane %v6327, %v6332
        %v6335 = vunpack.c.l.s4 1934713408
        %v6336 = vunpack.c.0.s8 %v6335
        %v6337 = vperm.slane %v6329, %v6336
        %v6338 = vrot.slane %v6325, 4
        %v6339 = vsel %vm1499, %v6338, %v6313
        %v6340 = vrot.slane %v6313, 4
        %v6341 = vsel %vm1499, %v6325, %v6340
        %v6343 = vunpack.c.l.s4 1934713408
        %v6344 = vunpack.c.0.s8 %v6343
        %v6345 = vperm.slane %v6339, %v6344
        %v6347 = vunpack.c.l.s4 1934713408
        %v6348 = vunpack.c.0.s8 %v6347
        %v6349 = vperm.slane %v6341, %v6348
        %v6350 = vrot.slane %v6333, 4
        %v6351 = vsel %vm1499, 0.0, %v6350
        %v6352 = vrot.slane %v6337, 4
        %v6353 = vsel %vm1499, 0.0, %v6352
        %v6354 = vrot.slane %v6345, 4
        %v6355 = vsel %vm1499, 0.0, %v6354
        %v6356 = vrot.slane %v6349, 4
        %v6357 = vsel %vm1499, 0.0, %v6356
        %v6358 = vpack.c.bf16 %v6277, %v6277
        %v6359 = vpack.c.bf16 %v6295, %v6295
        %v6360 = vpack.c.bf16 %v6281, %v6281
        %v6361 = vpack.c.bf16 %v6297, %v6297
        %v6362 = vpack.c.bf16 %v6289, %v6289
        %v6363 = vpack.c.bf16 %v6299, %v6299
        %v6364 = vpack.c.bf16 %v6293, %v6293
        %v6365 = vpack.c.bf16 %v6301, %v6301
        %v6366 = vpack.c.bf16 %v6333, %v6333
        %v6367 = vpack.c.bf16 %v6351, %v6351
        %v6368 = vpack.c.bf16 %v6337, %v6337
        %v6369 = vpack.c.bf16 %v6353, %v6353
        %v6370 = vpack.c.bf16 %v6345, %v6345
        %v6371 = vpack.c.bf16 %v6355, %v6355
        %v6372 = vpack.c.bf16 %v6349, %v6349
        %v6373 = vpack.c.bf16 %v6357, %v6357
        %v6374 = vrot.slane %v6070, 4
        %v6375 = vsel %vm1932, %v6374, %v6066
        %v6377 = vunpack.c.l.s4 1983009808
        %v6378 = vunpack.c.0.s8 %v6377
        %v6379 = vperm.slane %v6375, %v6378
        %v6380 = vrot.slane %v6072, 4
        %v6381 = vsel %vm1932, %v6380, %v6068
        %v6383 = vunpack.c.l.s4 1983009808
        %v6384 = vunpack.c.0.s8 %v6383
        %v6385 = vperm.slane %v6381, %v6384
        %v6386 = vrot.slane %v6385, 4
        %v6387 = vsel %vm1932, %v6386, %v6379
        %v6389 = vunpack.c.l.s4 1934713408
        %v6390 = vunpack.c.0.s8 %v6389
        %v6391 = vperm.slane %v6387, %v6390
        %v6392 = vrot.slane %v6391, 4
        %v6393 = vsel %vm1932, 0, %v6392
        %v6394 = vrot.slane %v6071, 4
        %v6395 = vsel %vm1932, %v6394, %v6067
        %v6397 = vunpack.c.l.s4 1983009808
        %v6398 = vunpack.c.0.s8 %v6397
        %v6399 = vperm.slane %v6395, %v6398
        %v6400 = vrot.slane %v6073, 4
        %v6401 = vsel %vm1932, %v6400, %v6069
        %v6403 = vunpack.c.l.s4 1983009808
        %v6404 = vunpack.c.0.s8 %v6403
        %v6405 = vperm.slane %v6401, %v6404
        %v6406 = vrot.slane %v6405, 4
        %v6407 = vsel %vm1932, %v6406, %v6399
        %v6409 = vunpack.c.l.s4 1934713408
        %v6410 = vunpack.c.0.s8 %v6409
        %v6411 = vperm.slane %v6407, %v6410
        %v6412 = vrot.slane %v6411, 4
        %v6413 = vsel %vm1932, 0, %v6412
        %v6416 = vpack.i.b16 %v6411, %v6391
        %v6417 = vshrl.u32 %v6391, 16
        %v6418 = vshrl.u32 %v6411, 16
        %v6419 = vpack.i.b16 %v6418, %v6417
        %v6422 = vpack.i.b16 %v6413, %v6393
        %v6423 = vshrl.u32 %v6393, 16
        %v6424 = vshrl.u32 %v6413, 16
        %v6425 = vpack.i.b16 %v6424, %v6423
        %6426 = vxpose.xlu0.c.b16.start [1/8] %v6206, 128
        %6427 = vxpose.xlu0.c.b16.cont [2/8] 0, 128
        %6428 = vxpose.xlu0.c.b16.cont [3/8] 0, 128
        %6429 = vxpose.xlu0.c.b16.cont [4/8] 0, 128
        %6430 = vxpose.xlu0.c.b16.cont [5/8] 0, 128
        %6431 = vxpose.xlu0.c.b16.cont [6/8] 0, 128
        %6432 = vxpose.xlu0.c.b16.cont [7/8] 0, 128
        %6433 = vxpose.xlu0.c.b16.end [8/8] 0, 128
        %v6434 = vpop.trf.xlu0
        %v6435 = vpop.trf.xlu0
        %v6436 = vpop.trf.xlu0
        %v6437 = vpop.trf.xlu0
        %v6438 = vpop.trf.xlu0
        %v6439 = vpop.trf.xlu0
        %v6440 = vpop.trf.xlu0
        %v6441 = vpop.trf.xlu0
        %6442 = vxpose.xlu0.c.b16.start [1/8] %v6207, 128
        %6443 = vxpose.xlu0.c.b16.cont [2/8] 0, 128
        %6444 = vxpose.xlu0.c.b16.cont [3/8] 0, 128
        %6445 = vxpose.xlu0.c.b16.cont [4/8] 0, 128
        %6446 = vxpose.xlu0.c.b16.cont [5/8] 0, 128
        %6447 = vxpose.xlu0.c.b16.cont [6/8] 0, 128
        %6448 = vxpose.xlu0.c.b16.cont [7/8] 0, 128
        %6449 = vxpose.xlu0.c.b16.end [8/8] 0, 128
        %v6450 = vpop.trf.xlu0
        %v6451 = vpop.trf.xlu0
        %v6452 = vpop.trf.xlu0
        %v6453 = vpop.trf.xlu0
        %v6454 = vpop.trf.xlu0
        %v6455 = vpop.trf.xlu0
        %v6456 = vpop.trf.xlu0
        %v6457 = vpop.trf.xlu0
        %6458 = vxpose.xlu0.c.b16.start [1/8] %v6208, 128
        %6459 = vxpose.xlu0.c.b16.cont [2/8] 0, 128
        %6460 = vxpose.xlu0.c.b16.cont [3/8] 0, 128
        %6461 = vxpose.xlu0.c.b16.cont [4/8] 0, 128
        %6462 = vxpose.xlu0.c.b16.cont [5/8] 0, 128
        %6463 = vxpose.xlu0.c.b16.cont [6/8] 0, 128
        %6464 = vxpose.xlu0.c.b16.cont [7/8] 0, 128
        %6465 = vxpose.xlu0.c.b16.end [8/8] 0, 128
        %v6466 = vpop.trf.xlu0
        %v6467 = vpop.trf.xlu0
        %v6468 = vpop.trf.xlu0
        %v6469 = vpop.trf.xlu0
        %v6470 = vpop.trf.xlu0
        %v6471 = vpop.trf.xlu0
        %v6472 = vpop.trf.xlu0
        %v6473 = vpop.trf.xlu0
        %6474 = vxpose.xlu0.c.b16.start [1/8] %v6209, 128
        %6475 = vxpose.xlu0.c.b16.cont [2/8] 0, 128
        %6476 = vxpose.xlu0.c.b16.cont [3/8] 0, 128
        %6477 = vxpose.xlu0.c.b16.cont [4/8] 0, 128
        %6478 = vxpose.xlu0.c.b16.cont [5/8] 0, 128
        %6479 = vxpose.xlu0.c.b16.cont [6/8] 0, 128
        %6480 = vxpose.xlu0.c.b16.cont [7/8] 0, 128
        %6481 = vxpose.xlu0.c.b16.end [8/8] 0, 128
        %v6482 = vpop.trf.xlu0
        %v6483 = vpop.trf.xlu0
        %v6484 = vpop.trf.xlu0
        %v6485 = vpop.trf.xlu0
        %v6486 = vpop.trf.xlu0
        %v6487 = vpop.trf.xlu0
        %v6488 = vpop.trf.xlu0
        %v6489 = vpop.trf.xlu0
        %6490 = vxpose.xlu0.c.b16.start [1/8] %v6210, 128
        %6491 = vxpose.xlu0.c.b16.cont [2/8] 0, 128
        %6492 = vxpose.xlu0.c.b16.cont [3/8] 0, 128
        %6493 = vxpose.xlu0.c.b16.cont [4/8] 0, 128
        %6494 = vxpose.xlu0.c.b16.cont [5/8] 0, 128
        %6495 = vxpose.xlu0.c.b16.cont [6/8] 0, 128
        %6496 = vxpose.xlu0.c.b16.cont [7/8] 0, 128
        %6497 = vxpose.xlu0.c.b16.end [8/8] 0, 128
        %v6498 = vpop.trf.xlu0
        %v6499 = vpop.trf.xlu0
        %v6500 = vpop.trf.xlu0
        %v6501 = vpop.trf.xlu0
        %v6502 = vpop.trf.xlu0
        %v6503 = vpop.trf.xlu0
        %v6504 = vpop.trf.xlu0
        %v6505 = vpop.trf.xlu0
        %6506 = vxpose.xlu0.c.b16.start [1/8] %v6211, 128
        %6507 = vxpose.xlu0.c.b16.cont [2/8] 0, 128
        %6508 = vxpose.xlu0.c.b16.cont [3/8] 0, 128
        %6509 = vxpose.xlu0.c.b16.cont [4/8] 0, 128
        %6510 = vxpose.xlu0.c.b16.cont [5/8] 0, 128
        %6511 = vxpose.xlu0.c.b16.cont [6/8] 0, 128
        %6512 = vxpose.xlu0.c.b16.cont [7/8] 0, 128
        %6513 = vxpose.xlu0.c.b16.end [8/8] 0, 128
        %v6514 = vpop.trf.xlu0
        %v6515 = vpop.trf.xlu0
        %v6516 = vpop.trf.xlu0
        %v6517 = vpop.trf.xlu0
        %v6518 = vpop.trf.xlu0
        %v6519 = vpop.trf.xlu0
        %v6520 = vpop.trf.xlu0
        %v6521 = vpop.trf.xlu0
        %6522 = vxpose.xlu0.c.b16.start [1/8] %v6212, 128
        %6523 = vxpose.xlu0.c.b16.cont [2/8] 0, 128
        %6524 = vxpose.xlu0.c.b16.cont [3/8] 0, 128
        %6525 = vxpose.xlu0.c.b16.cont [4/8] 0, 128
        %6526 = vxpose.xlu0.c.b16.cont [5/8] 0, 128
        %6527 = vxpose.xlu0.c.b16.cont [6/8] 0, 128
        %6528 = vxpose.xlu0.c.b16.cont [7/8] 0, 128
        %6529 = vxpose.xlu0.c.b16.end [8/8] 0, 128
        %v6530 = vpop.trf.xlu0
        %v6531 = vpop.trf.xlu0
        %v6532 = vpop.trf.xlu0
        %v6533 = vpop.trf.xlu0
        %v6534 = vpop.trf.xlu0
        %v6535 = vpop.trf.xlu0
        %v6536 = vpop.trf.xlu0
        %v6537 = vpop.trf.xlu0
        %6538 = vxpose.xlu0.c.b16.start [1/8] %v6213, 128
        %6539 = vxpose.xlu0.c.b16.cont [2/8] 0, 128
        %6540 = vxpose.xlu0.c.b16.cont [3/8] 0, 128
        %6541 = vxpose.xlu0.c.b16.cont [4/8] 0, 128
        %6542 = vxpose.xlu0.c.b16.cont [5/8] 0, 128
        %6543 = vxpose.xlu0.c.b16.cont [6/8] 0, 128
        %6544 = vxpose.xlu0.c.b16.cont [7/8] 0, 128
        %6545 = vxpose.xlu0.c.b16.end [8/8] 0, 128
        %v6546 = vpop.trf.xlu0
        %v6547 = vpop.trf.xlu0
        %v6548 = vpop.trf.xlu0
        %v6549 = vpop.trf.xlu0
        %v6550 = vpop.trf.xlu0
        %v6551 = vpop.trf.xlu0
        %v6552 = vpop.trf.xlu0
        %v6553 = vpop.trf.xlu0
        %6554 = vxpose.xlu0.c.b16.start [1/8] %v6214, 128
        %6555 = vxpose.xlu0.c.b16.cont [2/8] 0, 128
        %6556 = vxpose.xlu0.c.b16.cont [3/8] 0, 128
        %6557 = vxpose.xlu0.c.b16.cont [4/8] 0, 128
        %6558 = vxpose.xlu0.c.b16.cont [5/8] 0, 128
        %6559 = vxpose.xlu0.c.b16.cont [6/8] 0, 128
        %6560 = vxpose.xlu0.c.b16.cont [7/8] 0, 128
        %6561 = vxpose.xlu0.c.b16.end [8/8] 0, 128
        %v6562 = vpop.trf.xlu0
        %v6563 = vpop.trf.xlu0
        %v6564 = vpop.trf.xlu0
        %v6565 = vpop.trf.xlu0
        %v6566 = vpop.trf.xlu0
        %v6567 = vpop.trf.xlu0
        %v6568 = vpop.trf.xlu0
        %v6569 = vpop.trf.xlu0
        %6570 = vxpose.xlu0.c.b16.start [1/8] %v6215, 128
        %6571 = vxpose.xlu0.c.b16.cont [2/8] 0, 128
        %6572 = vxpose.xlu0.c.b16.cont [3/8] 0, 128
        %6573 = vxpose.xlu0.c.b16.cont [4/8] 0, 128
        %6574 = vxpose.xlu0.c.b16.cont [5/8] 0, 128
        %6575 = vxpose.xlu0.c.b16.cont [6/8] 0, 128
        %6576 = vxpose.xlu0.c.b16.cont [7/8] 0, 128
        %6577 = vxpose.xlu0.c.b16.end [8/8] 0, 128
        %v6578 = vpop.trf.xlu0
        %v6579 = vpop.trf.xlu0
        %v6580 = vpop.trf.xlu0
        %v6581 = vpop.trf.xlu0
        %v6582 = vpop.trf.xlu0
        %v6583 = vpop.trf.xlu0
        %v6584 = vpop.trf.xlu0
        %v6585 = vpop.trf.xlu0
        %6586 = vxpose.xlu0.c.b16.start [1/8] %v6216, 128
        %6587 = vxpose.xlu0.c.b16.cont [2/8] 0, 128
        %6588 = vxpose.xlu0.c.b16.cont [3/8] 0, 128
        %6589 = vxpose.xlu0.c.b16.cont [4/8] 0, 128
        %6590 = vxpose.xlu0.c.b16.cont [5/8] 0, 128
        %6591 = vxpose.xlu0.c.b16.cont [6/8] 0, 128
        %6592 = vxpose.xlu0.c.b16.cont [7/8] 0, 128
        %6593 = vxpose.xlu0.c.b16.end [8/8] 0, 128
        %v6594 = vpop.trf.xlu0
        %v6595 = vpop.trf.xlu0
        %v6596 = vpop.trf.xlu0
        %v6597 = vpop.trf.xlu0
        %v6598 = vpop.trf.xlu0
        %v6599 = vpop.trf.xlu0
        %v6600 = vpop.trf.xlu0
        %v6601 = vpop.trf.xlu0
        %6602 = vxpose.xlu0.c.b16.start [1/8] %v6217, 128
        %6603 = vxpose.xlu0.c.b16.cont [2/8] 0, 128
        %6604 = vxpose.xlu0.c.b16.cont [3/8] 0, 128
        %6605 = vxpose.xlu0.c.b16.cont [4/8] 0, 128
        %6606 = vxpose.xlu0.c.b16.cont [5/8] 0, 128
        %6607 = vxpose.xlu0.c.b16.cont [6/8] 0, 128
        %6608 = vxpose.xlu0.c.b16.cont [7/8] 0, 128
        %6609 = vxpose.xlu0.c.b16.end [8/8] 0, 128
        %v6610 = vpop.trf.xlu0
        %v6611 = vpop.trf.xlu0
        %v6612 = vpop.trf.xlu0
        %v6613 = vpop.trf.xlu0
        %v6614 = vpop.trf.xlu0
        %v6615 = vpop.trf.xlu0
        %v6616 = vpop.trf.xlu0
        %v6617 = vpop.trf.xlu0
        %6618 = vxpose.xlu0.c.b16.start [1/8] %v6218, 128
        %6619 = vxpose.xlu0.c.b16.cont [2/8] 0, 128
        %6620 = vxpose.xlu0.c.b16.cont [3/8] 0, 128
        %6621 = vxpose.xlu0.c.b16.cont [4/8] 0, 128
        %6622 = vxpose.xlu0.c.b16.cont [5/8] 0, 128
        %6623 = vxpose.xlu0.c.b16.cont [6/8] 0, 128
        %6624 = vxpose.xlu0.c.b16.cont [7/8] 0, 128
        %6625 = vxpose.xlu0.c.b16.end [8/8] 0, 128
        %v6626 = vpop.trf.xlu0
        %v6627 = vpop.trf.xlu0
        %v6628 = vpop.trf.xlu0
        %v6629 = vpop.trf.xlu0
        %v6630 = vpop.trf.xlu0
        %v6631 = vpop.trf.xlu0
        %v6632 = vpop.trf.xlu0
        %v6633 = vpop.trf.xlu0
        %6634 = vxpose.xlu0.c.b16.start [1/8] %v6219, 128
        %6635 = vxpose.xlu0.c.b16.cont [2/8] 0, 128
        %6636 = vxpose.xlu0.c.b16.cont [3/8] 0, 128
        %6637 = vxpose.xlu0.c.b16.cont [4/8] 0, 128
        %6638 = vxpose.xlu0.c.b16.cont [5/8] 0, 128
        %6639 = vxpose.xlu0.c.b16.cont [6/8] 0, 128
        %6640 = vxpose.xlu0.c.b16.cont [7/8] 0, 128
        %6641 = vxpose.xlu0.c.b16.end [8/8] 0, 128
        %v6642 = vpop.trf.xlu0
        %v6643 = vpop.trf.xlu0
        %v6644 = vpop.trf.xlu0
        %v6645 = vpop.trf.xlu0
        %v6646 = vpop.trf.xlu0
        %v6647 = vpop.trf.xlu0
        %v6648 = vpop.trf.xlu0
        %v6649 = vpop.trf.xlu0
        %6650 = vxpose.xlu0.c.b16.start [1/8] %v6220, 128
        %6651 = vxpose.xlu0.c.b16.cont [2/8] 0, 128
        %6652 = vxpose.xlu0.c.b16.cont [3/8] 0, 128
        %6653 = vxpose.xlu0.c.b16.cont [4/8] 0, 128
        %6654 = vxpose.xlu0.c.b16.cont [5/8] 0, 128
        %6655 = vxpose.xlu0.c.b16.cont [6/8] 0, 128
        %6656 = vxpose.xlu0.c.b16.cont [7/8] 0, 128
        %6657 = vxpose.xlu0.c.b16.end [8/8] 0, 128
        %v6658 = vpop.trf.xlu0
        %v6659 = vpop.trf.xlu0
        %v6660 = vpop.trf.xlu0
        %v6661 = vpop.trf.xlu0
        %v6662 = vpop.trf.xlu0
        %v6663 = vpop.trf.xlu0
        %v6664 = vpop.trf.xlu0
        %v6665 = vpop.trf.xlu0
        %6666 = vxpose.xlu0.c.b16.start [1/8] %v6221, 128
        %6667 = vxpose.xlu0.c.b16.cont [2/8] 0, 128
        %6668 = vxpose.xlu0.c.b16.cont [3/8] 0, 128
        %6669 = vxpose.xlu0.c.b16.cont [4/8] 0, 128
        %6670 = vxpose.xlu0.c.b16.cont [5/8] 0, 128
        %6671 = vxpose.xlu0.c.b16.cont [6/8] 0, 128
        %6672 = vxpose.xlu0.c.b16.cont [7/8] 0, 128
        %6673 = vxpose.xlu0.c.b16.end [8/8] 0, 128
        %v6674 = vpop.trf.xlu0
        %v6675 = vpop.trf.xlu0
        %v6676 = vpop.trf.xlu0
        %v6677 = vpop.trf.xlu0
        %v6678 = vpop.trf.xlu0
        %v6679 = vpop.trf.xlu0
        %v6680 = vpop.trf.xlu0
        %v6681 = vpop.trf.xlu0
        %v6682 = vrot.slane %v6498, 4
        %v6683 = vsel %vm1932, %v6682, %v6434
        %v6685 = vunpack.c.l.s4 1983009808
        %v6686 = vunpack.c.0.s8 %v6685
        %v6687 = vperm.slane %v6683, %v6686
        %v6688 = vrot.slane %v6530, 4
        %v6689 = vsel %vm1932, %v6688, %v6466
        %v6691 = vunpack.c.l.s4 1983009808
        %v6692 = vunpack.c.0.s8 %v6691
        %v6693 = vperm.slane %v6689, %v6692
        %v6694 = vrot.slane %v6626, 4
        %v6695 = vsel %vm1932, %v6694, %v6562
        %v6697 = vunpack.c.l.s4 1983009808
        %v6698 = vunpack.c.0.s8 %v6697
        %v6699 = vperm.slane %v6695, %v6698
        %v6700 = vrot.slane %v6658, 4
        %v6701 = vsel %vm1932, %v6700, %v6594
        %v6703 = vunpack.c.l.s4 1983009808
        %v6704 = vunpack.c.0.s8 %v6703
        %v6705 = vperm.slane %v6701, %v6704
        %v6706 = vrot.slane %v6693, 4
        %v6707 = vsel %vm1932, %v6706, %v6687
        %v6708 = vrot.slane %v6687, 4
        %v6709 = vsel %vm1932, %v6693, %v6708
        %v6711 = vunpack.c.l.s4 1934713408
        %v6712 = vunpack.c.0.s8 %v6711
        %v6713 = vperm.slane %v6707, %v6712
        %v6715 = vunpack.c.l.s4 1934713408
        %v6716 = vunpack.c.0.s8 %v6715
        %v6717 = vperm.slane %v6709, %v6716
        %v6718 = vrot.slane %v6705, 4
        %v6719 = vsel %vm1932, %v6718, %v6699
        %v6720 = vrot.slane %v6699, 4
        %v6721 = vsel %vm1932, %v6705, %v6720
        %v6723 = vunpack.c.l.s4 1934713408
        %v6724 = vunpack.c.0.s8 %v6723
        %v6725 = vperm.slane %v6719, %v6724
        %v6727 = vunpack.c.l.s4 1934713408
        %v6728 = vunpack.c.0.s8 %v6727
        %v6729 = vperm.slane %v6721, %v6728
        %v6730 = vrot.slane %v6725, 4
        %v6731 = vsel %vm1932, %v6730, %v6713
        %v6732 = vrot.slane %v6713, 4
        %v6733 = vsel %vm1932, %v6725, %v6732
        %v6734 = vrot.slane %v6729, 4
        %v6735 = vsel %vm1932, %v6734, %v6717
        %v6736 = vrot.slane %v6717, 4
        %v6737 = vsel %vm1932, %v6729, %v6736
        %v6738 = vrot.slane %v6514, 4
        %v6739 = vsel %vm1932, %v6738, %v6450
        %v6741 = vunpack.c.l.s4 1983009808
        %v6742 = vunpack.c.0.s8 %v6741
        %v6743 = vperm.slane %v6739, %v6742
        %v6744 = vrot.slane %v6546, 4
        %v6745 = vsel %vm1932, %v6744, %v6482
        %v6747 = vunpack.c.l.s4 1983009808
        %v6748 = vunpack.c.0.s8 %v6747
        %v6749 = vperm.slane %v6745, %v6748
        %v6750 = vrot.slane %v6642, 4
        %v6751 = vsel %vm1932, %v6750, %v6578
        %v6753 = vunpack.c.l.s4 1983009808
        %v6754 = vunpack.c.0.s8 %v6753
        %v6755 = vperm.slane %v6751, %v6754
        %v6756 = vrot.slane %v6674, 4
        %v6757 = vsel %vm1932, %v6756, %v6610
        %v6759 = vunpack.c.l.s4 1983009808
        %v6760 = vunpack.c.0.s8 %v6759
        %v6761 = vperm.slane %v6757, %v6760
        %v6762 = vrot.slane %v6749, 4
        %v6763 = vsel %vm1932, %v6762, %v6743
        %v6764 = vrot.slane %v6743, 4
        %v6765 = vsel %vm1932, %v6749, %v6764
        %v6767 = vunpack.c.l.s4 1934713408
        %v6768 = vunpack.c.0.s8 %v6767
        %v6769 = vperm.slane %v6763, %v6768
        %v6771 = vunpack.c.l.s4 1934713408
        %v6772 = vunpack.c.0.s8 %v6771
        %v6773 = vperm.slane %v6765, %v6772
        %v6774 = vrot.slane %v6761, 4
        %v6775 = vsel %vm1932, %v6774, %v6755
        %v6776 = vrot.slane %v6755, 4
        %v6777 = vsel %vm1932, %v6761, %v6776
        %v6779 = vunpack.c.l.s4 1934713408
        %v6780 = vunpack.c.0.s8 %v6779
        %v6781 = vperm.slane %v6775, %v6780
        %v6783 = vunpack.c.l.s4 1934713408
        %v6784 = vunpack.c.0.s8 %v6783
        %v6785 = vperm.slane %v6777, %v6784
        %v6786 = vrot.slane %v6781, 4
        %v6787 = vsel %vm1932, %v6786, %v6769
        %v6788 = vrot.slane %v6769, 4
        %v6789 = vsel %vm1932, %v6781, %v6788
        %v6790 = vrot.slane %v6785, 4
        %v6791 = vsel %vm1932, %v6790, %v6773
        %v6792 = vrot.slane %v6773, 4
        %v6793 = vsel %vm1932, %v6785, %v6792
        %v6796 = vpack.i.b16 %v6787, %v6731
        %v6798 = vshrl.u32 %v6731, 16
        %v6799 = vshrl.u32 %v6787, 16
        %v6800 = vpack.i.b16 %v6799, %v6798
        %v6804 = vpack.i.b16 %v6789, %v6733
        %v6806 = vshrl.u32 %v6733, 16
        %v6807 = vshrl.u32 %v6789, 16
        %v6808 = vpack.i.b16 %v6807, %v6806
        %v6812 = vpack.i.b16 %v6791, %v6735
        %v6814 = vshrl.u32 %v6735, 16
        %v6815 = vshrl.u32 %v6791, 16
        %v6816 = vpack.i.b16 %v6815, %v6814
        %v6820 = vpack.i.b16 %v6793, %v6737
        %v6822 = vshrl.u32 %v6737, 16
        %v6823 = vshrl.u32 %v6793, 16
        %v6824 = vpack.i.b16 %v6823, %v6822
        %6826 = vxpose.xlu0.c.b16.start [1/8] %v6796, 128
        %6827 = vxpose.xlu0.c.b16.cont [2/8] 0, 128
        %6828 = vxpose.xlu0.c.b16.cont [3/8] 0, 128
        %6829 = vxpose.xlu0.c.b16.cont [4/8] 0, 128
        %6830 = vxpose.xlu0.c.b16.cont [5/8] 0, 128
        %6831 = vxpose.xlu0.c.b16.cont [6/8] 0, 128
        %6832 = vxpose.xlu0.c.b16.cont [7/8] 0, 128
        %6833 = vxpose.xlu0.c.b16.end [8/8] 0, 128
        %v6834 = vpop.trf.xlu0
        %v6835 = vpop.trf.xlu0
        %v6836 = vpop.trf.xlu0
        %v6837 = vpop.trf.xlu0
        %v6838 = vpop.trf.xlu0
        %v6839 = vpop.trf.xlu0
        %v6840 = vpop.trf.xlu0
        %v6841 = vpop.trf.xlu0
        %6842 = vxpose.xlu0.c.b16.start [1/8] %v6800, 128
        %6843 = vxpose.xlu0.c.b16.cont [2/8] 0, 128
        %6844 = vxpose.xlu0.c.b16.cont [3/8] 0, 128
        %6845 = vxpose.xlu0.c.b16.cont [4/8] 0, 128
        %6846 = vxpose.xlu0.c.b16.cont [5/8] 0, 128
        %6847 = vxpose.xlu0.c.b16.cont [6/8] 0, 128
        %6848 = vxpose.xlu0.c.b16.cont [7/8] 0, 128
        %6849 = vxpose.xlu0.c.b16.end [8/8] 0, 128
        %v6850 = vpop.trf.xlu0
        %v6851 = vpop.trf.xlu0
        %v6852 = vpop.trf.xlu0
        %v6853 = vpop.trf.xlu0
        %v6854 = vpop.trf.xlu0
        %v6855 = vpop.trf.xlu0
        %v6856 = vpop.trf.xlu0
        %v6857 = vpop.trf.xlu0
        %6858 = vxpose.xlu0.c.b16.start [1/8] %v6804, 128
        %6859 = vxpose.xlu0.c.b16.cont [2/8] 0, 128
        %6860 = vxpose.xlu0.c.b16.cont [3/8] 0, 128
        %6861 = vxpose.xlu0.c.b16.cont [4/8] 0, 128
        %6862 = vxpose.xlu0.c.b16.cont [5/8] 0, 128
        %6863 = vxpose.xlu0.c.b16.cont [6/8] 0, 128
        %6864 = vxpose.xlu0.c.b16.cont [7/8] 0, 128
        %6865 = vxpose.xlu0.c.b16.end [8/8] 0, 128
        %v6866 = vpop.trf.xlu0
        %v6867 = vpop.trf.xlu0
        %v6868 = vpop.trf.xlu0
        %v6869 = vpop.trf.xlu0
        %v6870 = vpop.trf.xlu0
        %v6871 = vpop.trf.xlu0
        %v6872 = vpop.trf.xlu0
        %v6873 = vpop.trf.xlu0
        %6874 = vxpose.xlu0.c.b16.start [1/8] %v6808, 128
        %6875 = vxpose.xlu0.c.b16.cont [2/8] 0, 128
        %6876 = vxpose.xlu0.c.b16.cont [3/8] 0, 128
        %6877 = vxpose.xlu0.c.b16.cont [4/8] 0, 128
        %6878 = vxpose.xlu0.c.b16.cont [5/8] 0, 128
        %6879 = vxpose.xlu0.c.b16.cont [6/8] 0, 128
        %6880 = vxpose.xlu0.c.b16.cont [7/8] 0, 128
        %6881 = vxpose.xlu0.c.b16.end [8/8] 0, 128
        %v6882 = vpop.trf.xlu0
        %v6883 = vpop.trf.xlu0
        %v6884 = vpop.trf.xlu0
        %v6885 = vpop.trf.xlu0
        %v6886 = vpop.trf.xlu0
        %v6887 = vpop.trf.xlu0
        %v6888 = vpop.trf.xlu0
        %v6889 = vpop.trf.xlu0
        %6890 = vxpose.xlu0.c.b16.start [1/8] %v6812, 128
        %6891 = vxpose.xlu0.c.b16.cont [2/8] 0, 128
        %6892 = vxpose.xlu0.c.b16.cont [3/8] 0, 128
        %6893 = vxpose.xlu0.c.b16.cont [4/8] 0, 128
        %6894 = vxpose.xlu0.c.b16.cont [5/8] 0, 128
        %6895 = vxpose.xlu0.c.b16.cont [6/8] 0, 128
        %6896 = vxpose.xlu0.c.b16.cont [7/8] 0, 128
        %6897 = vxpose.xlu0.c.b16.end [8/8] 0, 128
        %v6898 = vpop.trf.xlu0
        %v6899 = vpop.trf.xlu0
        %v6900 = vpop.trf.xlu0
        %v6901 = vpop.trf.xlu0
        %v6902 = vpop.trf.xlu0
        %v6903 = vpop.trf.xlu0
        %v6904 = vpop.trf.xlu0
        %v6905 = vpop.trf.xlu0
        %6906 = vxpose.xlu0.c.b16.start [1/8] %v6816, 128
        %6907 = vxpose.xlu0.c.b16.cont [2/8] 0, 128
        %6908 = vxpose.xlu0.c.b16.cont [3/8] 0, 128
        %6909 = vxpose.xlu0.c.b16.cont [4/8] 0, 128
        %6910 = vxpose.xlu0.c.b16.cont [5/8] 0, 128
        %6911 = vxpose.xlu0.c.b16.cont [6/8] 0, 128
        %6912 = vxpose.xlu0.c.b16.cont [7/8] 0, 128
        %6913 = vxpose.xlu0.c.b16.end [8/8] 0, 128
        %v6914 = vpop.trf.xlu0
        %v6915 = vpop.trf.xlu0
        %v6916 = vpop.trf.xlu0
        %v6917 = vpop.trf.xlu0
        %v6918 = vpop.trf.xlu0
        %v6919 = vpop.trf.xlu0
        %v6920 = vpop.trf.xlu0
        %v6921 = vpop.trf.xlu0
        %6922 = vxpose.xlu0.c.b16.start [1/8] %v6820, 128
        %6923 = vxpose.xlu0.c.b16.cont [2/8] 0, 128
        %6924 = vxpose.xlu0.c.b16.cont [3/8] 0, 128
        %6925 = vxpose.xlu0.c.b16.cont [4/8] 0, 128
        %6926 = vxpose.xlu0.c.b16.cont [5/8] 0, 128
        %6927 = vxpose.xlu0.c.b16.cont [6/8] 0, 128
        %6928 = vxpose.xlu0.c.b16.cont [7/8] 0, 128
        %6929 = vxpose.xlu0.c.b16.end [8/8] 0, 128
        %v6930 = vpop.trf.xlu0
        %v6931 = vpop.trf.xlu0
        %v6932 = vpop.trf.xlu0
        %v6933 = vpop.trf.xlu0
        %v6934 = vpop.trf.xlu0
        %v6935 = vpop.trf.xlu0
        %v6936 = vpop.trf.xlu0
        %v6937 = vpop.trf.xlu0
        %6938 = vxpose.xlu0.c.b16.start [1/8] %v6824, 128
        %6939 = vxpose.xlu0.c.b16.cont [2/8] 0, 128
        %6940 = vxpose.xlu0.c.b16.cont [3/8] 0, 128
        %6941 = vxpose.xlu0.c.b16.cont [4/8] 0, 128
        %6942 = vxpose.xlu0.c.b16.cont [5/8] 0, 128
        %6943 = vxpose.xlu0.c.b16.cont [6/8] 0, 128
        %6944 = vxpose.xlu0.c.b16.cont [7/8] 0, 128
        %6945 = vxpose.xlu0.c.b16.end [8/8] 0, 128
        %v6946 = vpop.trf.xlu0
        %v6947 = vpop.trf.xlu0
        %v6948 = vpop.trf.xlu0
        %v6949 = vpop.trf.xlu0
        %v6950 = vpop.trf.xlu0
        %v6951 = vpop.trf.xlu0
        %v6952 = vpop.trf.xlu0
        %v6953 = vpop.trf.xlu0
        %v6954 = vrot.slane %v6898, 4
        %v6955 = vsel %vm1932, %v6954, %v6834
        %v6957 = vunpack.c.l.s4 1983009808
        %v6958 = vunpack.c.0.s8 %v6957
        %v6959 = vperm.slane %v6955, %v6958
        %v6960 = vrot.slane %v6930, 4
        %v6961 = vsel %vm1932, %v6960, %v6866
        %v6963 = vunpack.c.l.s4 1983009808
        %v6964 = vunpack.c.0.s8 %v6963
        %v6965 = vperm.slane %v6961, %v6964
        %v6966 = vrot.slane %v6965, 4
        %v6967 = vsel %vm1932, %v6966, %v6959
        %v6969 = vunpack.c.l.s4 1934713408
        %v6970 = vunpack.c.0.s8 %v6969
        %v6971 = vperm.slane %v6967, %v6970
        %v6972 = vrot.slane %v6971, 4
        %v6973 = vsel %vm1932, 0, %v6972
        %v6974 = vrot.slane %v6914, 4
        %v6975 = vsel %vm1932, %v6974, %v6850
        %v6977 = vunpack.c.l.s4 1983009808
        %v6978 = vunpack.c.0.s8 %v6977
        %v6979 = vperm.slane %v6975, %v6978
        %v6980 = vrot.slane %v6946, 4
        %v6981 = vsel %vm1932, %v6980, %v6882
        %v6983 = vunpack.c.l.s4 1983009808
        %v6984 = vunpack.c.0.s8 %v6983
        %v6985 = vperm.slane %v6981, %v6984
        %v6986 = vrot.slane %v6985, 4
        %v6987 = vsel %vm1932, %v6986, %v6979
        %v6989 = vunpack.c.l.s4 1934713408
        %v6990 = vunpack.c.0.s8 %v6989
        %v6991 = vperm.slane %v6987, %v6990
        %v6992 = vrot.slane %v6991, 4
        %v6993 = vsel %vm1932, 0, %v6992
        %v6996 = vpack.i.b16 %v6991, %v6971
        %v6997 = vshrl.u32 %v6971, 16
        %v6998 = vshrl.u32 %v6991, 16
        %v6999 = vpack.i.b16 %v6998, %v6997
        %v7002 = vpack.i.b16 %v6993, %v6973
        %v7003 = vshrl.u32 %v6973, 16
        %v7004 = vshrl.u32 %v6993, 16
        %v7005 = vpack.i.b16 %v7004, %v7003
        %v7007 = vsel %vm2619, %v6416, 0
        %v7010 = vsel %vm2623, %v6996, 0
        %7012 = vmatpush.bf16.msra.mxu0 0
        %7013 = vmatpush.bf16.msra.mxu0 0
        %7014 = vmatpush.bf16.msra.mxu0 0
        %7015 = vmatpush.bf16.msra.mxu0 0
        %7016 = vmatpush.bf16.msra.mxu0 0
        %7017 = vmatpush.bf16.msra.mxu0 0
        %7018 = vmatpush.bf16.msra.mxu0 0
        %7019 = vmatpush.bf16.msra.mxu0 %v7010
        %7020 = vmatmul.bf16.gmra.mxu0 %v7007
        %v7021 = vpop.f32.mrf.mxu0
        %v7022 = vadd.f32 0.0, %v7021
        %v7023 = vpop.f32.mrf.mxu0
        %7024 = vdwg.mxu0
        %v7026 = vsel %vm2619, %v6419, 0
        %v7029 = vsel %vm2623, %v6999, 0
        %7031 = vmatpush.bf16.msra.mxu0 0
        %7032 = vmatpush.bf16.msra.mxu0 0
        %7033 = vmatpush.bf16.msra.mxu0 0
        %7034 = vmatpush.bf16.msra.mxu0 0
        %7035 = vmatpush.bf16.msra.mxu0 0
        %7036 = vmatpush.bf16.msra.mxu0 0
        %7037 = vmatpush.bf16.msra.mxu0 0
        %7038 = vmatpush.bf16.msra.mxu0 %v7029
        %7039 = vmatmul.bf16.gmra.mxu0 %v7026
        %v7040 = vpop.f32.mrf.mxu0
        %v7041 = vadd.f32 0.0, %v7040
        %v7042 = vpop.f32.mrf.mxu0
        %7043 = vdwg.mxu0
        %v7045 = vsel %vm2619, %v6422, 0
        %v7048 = vsel %vm2623, %v7002, 0
        %7050 = vmatpush.bf16.msra.mxu0 0
        %7051 = vmatpush.bf16.msra.mxu0 0
        %7052 = vmatpush.bf16.msra.mxu0 0
        %7053 = vmatpush.bf16.msra.mxu0 0
        %7054 = vmatpush.bf16.msra.mxu0 0
        %7055 = vmatpush.bf16.msra.mxu0 0
        %7056 = vmatpush.bf16.msra.mxu0 0
        %7057 = vmatpush.bf16.msra.mxu0 %v7048
        %7058 = vmatmul.bf16.gmra.mxu0 %v7045
        %v7059 = vpop.f32.mrf.mxu0
        %v7060 = vadd.f32 0.0, %v7059
        %v7061 = vpop.f32.mrf.mxu0
        %7062 = vdwg.mxu0
        %v7064 = vsel %vm2619, %v6425, 0
        %v7067 = vsel %vm2623, %v7005, 0
        %7069 = vmatpush.bf16.msra.mxu0 0
        %7070 = vmatpush.bf16.msra.mxu0 0
        %7071 = vmatpush.bf16.msra.mxu0 0
        %7072 = vmatpush.bf16.msra.mxu0 0
        %7073 = vmatpush.bf16.msra.mxu0 0
        %7074 = vmatpush.bf16.msra.mxu0 0
        %7075 = vmatpush.bf16.msra.mxu0 0
        %7076 = vmatpush.bf16.msra.mxu0 %v7067
        %7077 = vmatmul.bf16.gmra.mxu0 %v7064
        %v7078 = vpop.f32.mrf.mxu0
        %v7079 = vadd.f32 0.0, %v7078
        %v7080 = vpop.f32.mrf.mxu0
        %7081 = vdwg.mxu0
        %v7082 = vmul.f32 %v7022, 0.35355338
        %v7083 = vmul.f32 %v7041, 0.35355338
        %v7084 = vmul.f32 %v7060, 0.35355338
        %v7085 = vmul.f32 %v7079, 0.35355338
        %v7086 = vadd.f32 %v7082, %v1438
        %v7087 = vadd.f32 %v7083, %v1438
        %v7088 = vadd.f32 %v7084, %v1438
        %v7089 = vadd.f32 %v7085, %v1438
        %v7090 = vsel %vm2726, %v7086, -inf
        %7091 = vmax.xlane.f32.xlu0 %v7090
        %v7092 = vpop.xlane.xlu0 %7091
        %v7093 = vsel %vm2726, %v7087, -inf
        %7094 = vmax.xlane.f32.xlu0 %v7093
        %v7095 = vpop.xlane.xlu0 %7094
        %v7096 = vsel %vm2726, %v7088, -inf
        %7097 = vmax.xlane.f32.xlu0 %v7096
        %v7098 = vpop.xlane.xlu0 %7097
        %v7099 = vsel %vm2726, %v7089, -inf
        %7100 = vmax.xlane.f32.xlu0 %v7099
        %v7101 = vpop.xlane.xlu0 %7100
        %v7102 = vsub.f32 %v7086, %v7092
        %v7103 = vsub.f32 %v7087, %v7095
        %v7104 = vsub.f32 %v7088, %v7098
        %v7105 = vsub.f32 %v7089, %v7101
        %v7106 = vmul.f32 %v7102, 1.442695
        %v7107 = vpow.pop %v7106
        %v7108 = vmul.f32 %v7103, 1.442695
        %v7109 = vpow.pop %v7108
        %v7110 = vmul.f32 %v7104, 1.442695
        %v7111 = vpow.pop %v7110
        %v7112 = vmul.f32 %v7105, 1.442695
        %v7113 = vpow.pop %v7112
        %v7114 = vsel %vm2726, %v7107, 0.0
        %7115 = vadd.xlane.f32.xlu0 %v7114
        %v7116 = vpop.xlane.xlu0 %7115
        %v7117 = vsel %vm2726, %v7109, 0.0
        %7118 = vadd.xlane.f32.xlu0 %v7117
        %v7119 = vpop.xlane.xlu0 %7118
        %v7120 = vsel %vm2726, %v7111, 0.0
        %7121 = vadd.xlane.f32.xlu0 %v7120
        %v7122 = vpop.xlane.xlu0 %7121
        %v7123 = vsel %vm2726, %v7113, 0.0
        %7124 = vadd.xlane.f32.xlu0 %v7123
        %v7125 = vpop.xlane.xlu0 %7124
        %v7126 = vrcp.pop %v7116
        %v7127 = vmul.f32 %v7116, %v7126
        %v7128 = vsub.f32 1.0, %v7127
        %v7129 = vmul.f32 %v7126, %v7128
        %v7130 = vadd.f32 %v7126, %v7129
        %vm7131 = vweird.f32 %v7116
        %vm7132 = vweird.f32 %v7126
        %vm7133 = vmor %vm7131, %vm7132
        %v7134 = vsel %vm7133, %v7126, %v7130
        %v7135 = vand.u32 2147483647, %v7116
        %vm7136 = vcmp.eq.f32.partialorder %v7135, 8.507059e+37
        %v7137 = vand.u32 %v7116, 2147483648
        %v7138 = vor.u32 1.1754944e-38, %v7137
        %v7139 = vsel %vm7136, %v7138, %v7134
        %v7140 = vmul.f32 %v7107, %v7139
        %v7141 = vrcp.pop %v7119
        %v7142 = vmul.f32 %v7119, %v7141
        %v7143 = vsub.f32 1.0, %v7142
        %v7144 = vmul.f32 %v7141, %v7143
        %v7145 = vadd.f32 %v7141, %v7144
        %vm7146 = vweird.f32 %v7119
        %vm7147 = vweird.f32 %v7141
        %vm7148 = vmor %vm7146, %vm7147
        %v7149 = vsel %vm7148, %v7141, %v7145
        %v7150 = vand.u32 2147483647, %v7119
        %vm7151 = vcmp.eq.f32.partialorder %v7150, 8.507059e+37
        %v7152 = vand.u32 %v7119, 2147483648
        %v7153 = vor.u32 1.1754944e-38, %v7152
        %v7154 = vsel %vm7151, %v7153, %v7149
        %v7155 = vmul.f32 %v7109, %v7154
        %v7156 = vrcp.pop %v7122
        %v7157 = vmul.f32 %v7122, %v7156
        %v7158 = vsub.f32 1.0, %v7157
        %v7159 = vmul.f32 %v7156, %v7158
        %v7160 = vadd.f32 %v7156, %v7159
        %vm7161 = vweird.f32 %v7122
        %vm7162 = vweird.f32 %v7156
        %vm7163 = vmor %vm7161, %vm7162
        %v7164 = vsel %vm7163, %v7156, %v7160
        %v7165 = vand.u32 2147483647, %v7122
        %vm7166 = vcmp.eq.f32.partialorder %v7165, 8.507059e+37
        %v7167 = vand.u32 %v7122, 2147483648
        %v7168 = vor.u32 1.1754944e-38, %v7167
        %v7169 = vsel %vm7166, %v7168, %v7164
        %v7170 = vmul.f32 %v7111, %v7169
        %v7171 = vrcp.pop %v7125
        %v7172 = vmul.f32 %v7125, %v7171
        %v7173 = vsub.f32 1.0, %v7172
        %v7174 = vmul.f32 %v7171, %v7173
        %v7175 = vadd.f32 %v7171, %v7174
        %vm7176 = vweird.f32 %v7125
        %vm7177 = vweird.f32 %v7171
        %vm7178 = vmor %vm7176, %vm7177
        %v7179 = vsel %vm7178, %v7171, %v7175
        %v7180 = vand.u32 2147483647, %v7125
        %vm7181 = vcmp.eq.f32.partialorder %v7180, 8.507059e+37
        %v7182 = vand.u32 %v7125, 2147483648
        %v7183 = vor.u32 1.1754944e-38, %v7182
        %v7184 = vsel %vm7181, %v7183, %v7179
        %v7185 = vmul.f32 %v7113, %v7184
        %v7186 = vpack.c.bf16 %v7140, %v7140
        %v7187 = vpack.c.bf16 %v7155, %v7155
        %v7188 = vpack.c.bf16 %v7170, %v7170
        %v7189 = vpack.c.bf16 %v7185, %v7185
        %7190 = vxpose.xlu0.c.b16.start [1/8] %v6358, 128
        %7191 = vxpose.xlu0.c.b16.cont [2/8] 0, 128
        %7192 = vxpose.xlu0.c.b16.cont [3/8] 0, 128
        %7193 = vxpose.xlu0.c.b16.cont [4/8] 0, 128
        %7194 = vxpose.xlu0.c.b16.cont [5/8] 0, 128
        %7195 = vxpose.xlu0.c.b16.cont [6/8] 0, 128
        %7196 = vxpose.xlu0.c.b16.cont [7/8] 0, 128
        %7197 = vxpose.xlu0.c.b16.end [8/8] 0, 128
        %v7198 = vpop.trf.xlu0
        %v7199 = vpop.trf.xlu0
        %v7200 = vpop.trf.xlu0
        %v7201 = vpop.trf.xlu0
        %v7202 = vpop.trf.xlu0
        %v7203 = vpop.trf.xlu0
        %v7204 = vpop.trf.xlu0
        %v7205 = vpop.trf.xlu0
        %7206 = vxpose.xlu0.c.b16.start [1/8] %v6359, 128
        %7207 = vxpose.xlu0.c.b16.cont [2/8] 0, 128
        %7208 = vxpose.xlu0.c.b16.cont [3/8] 0, 128
        %7209 = vxpose.xlu0.c.b16.cont [4/8] 0, 128
        %7210 = vxpose.xlu0.c.b16.cont [5/8] 0, 128
        %7211 = vxpose.xlu0.c.b16.cont [6/8] 0, 128
        %7212 = vxpose.xlu0.c.b16.cont [7/8] 0, 128
        %7213 = vxpose.xlu0.c.b16.end [8/8] 0, 128
        %v7214 = vpop.trf.xlu0
        %v7215 = vpop.trf.xlu0
        %v7216 = vpop.trf.xlu0
        %v7217 = vpop.trf.xlu0
        %v7218 = vpop.trf.xlu0
        %v7219 = vpop.trf.xlu0
        %v7220 = vpop.trf.xlu0
        %v7221 = vpop.trf.xlu0
        %7222 = vxpose.xlu0.c.b16.start [1/8] %v6360, 128
        %7223 = vxpose.xlu0.c.b16.cont [2/8] 0, 128
        %7224 = vxpose.xlu0.c.b16.cont [3/8] 0, 128
        %7225 = vxpose.xlu0.c.b16.cont [4/8] 0, 128
        %7226 = vxpose.xlu0.c.b16.cont [5/8] 0, 128
        %7227 = vxpose.xlu0.c.b16.cont [6/8] 0, 128
        %7228 = vxpose.xlu0.c.b16.cont [7/8] 0, 128
        %7229 = vxpose.xlu0.c.b16.end [8/8] 0, 128
        %v7230 = vpop.trf.xlu0
        %v7231 = vpop.trf.xlu0
        %v7232 = vpop.trf.xlu0
        %v7233 = vpop.trf.xlu0
        %v7234 = vpop.trf.xlu0
        %v7235 = vpop.trf.xlu0
        %v7236 = vpop.trf.xlu0
        %v7237 = vpop.trf.xlu0
        %7238 = vxpose.xlu0.c.b16.start [1/8] %v6361, 128
        %7239 = vxpose.xlu0.c.b16.cont [2/8] 0, 128
        %7240 = vxpose.xlu0.c.b16.cont [3/8] 0, 128
        %7241 = vxpose.xlu0.c.b16.cont [4/8] 0, 128
        %7242 = vxpose.xlu0.c.b16.cont [5/8] 0, 128
        %7243 = vxpose.xlu0.c.b16.cont [6/8] 0, 128
        %7244 = vxpose.xlu0.c.b16.cont [7/8] 0, 128
        %7245 = vxpose.xlu0.c.b16.end [8/8] 0, 128
        %v7246 = vpop.trf.xlu0
        %v7247 = vpop.trf.xlu0
        %v7248 = vpop.trf.xlu0
        %v7249 = vpop.trf.xlu0
        %v7250 = vpop.trf.xlu0
        %v7251 = vpop.trf.xlu0
        %v7252 = vpop.trf.xlu0
        %v7253 = vpop.trf.xlu0
        %7254 = vxpose.xlu0.c.b16.start [1/8] %v6362, 128
        %7255 = vxpose.xlu0.c.b16.cont [2/8] 0, 128
        %7256 = vxpose.xlu0.c.b16.cont [3/8] 0, 128
        %7257 = vxpose.xlu0.c.b16.cont [4/8] 0, 128
        %7258 = vxpose.xlu0.c.b16.cont [5/8] 0, 128
        %7259 = vxpose.xlu0.c.b16.cont [6/8] 0, 128
        %7260 = vxpose.xlu0.c.b16.cont [7/8] 0, 128
        %7261 = vxpose.xlu0.c.b16.end [8/8] 0, 128
        %v7262 = vpop.trf.xlu0
        %v7263 = vpop.trf.xlu0
        %v7264 = vpop.trf.xlu0
        %v7265 = vpop.trf.xlu0
        %v7266 = vpop.trf.xlu0
        %v7267 = vpop.trf.xlu0
        %v7268 = vpop.trf.xlu0
        %v7269 = vpop.trf.xlu0
        %7270 = vxpose.xlu0.c.b16.start [1/8] %v6363, 128
        %7271 = vxpose.xlu0.c.b16.cont [2/8] 0, 128
        %7272 = vxpose.xlu0.c.b16.cont [3/8] 0, 128
        %7273 = vxpose.xlu0.c.b16.cont [4/8] 0, 128
        %7274 = vxpose.xlu0.c.b16.cont [5/8] 0, 128
        %7275 = vxpose.xlu0.c.b16.cont [6/8] 0, 128
        %7276 = vxpose.xlu0.c.b16.cont [7/8] 0, 128
        %7277 = vxpose.xlu0.c.b16.end [8/8] 0, 128
        %v7278 = vpop.trf.xlu0
        %v7279 = vpop.trf.xlu0
        %v7280 = vpop.trf.xlu0
        %v7281 = vpop.trf.xlu0
        %v7282 = vpop.trf.xlu0
        %v7283 = vpop.trf.xlu0
        %v7284 = vpop.trf.xlu0
        %v7285 = vpop.trf.xlu0
        %7286 = vxpose.xlu0.c.b16.start [1/8] %v6364, 128
        %7287 = vxpose.xlu0.c.b16.cont [2/8] 0, 128
        %7288 = vxpose.xlu0.c.b16.cont [3/8] 0, 128
        %7289 = vxpose.xlu0.c.b16.cont [4/8] 0, 128
        %7290 = vxpose.xlu0.c.b16.cont [5/8] 0, 128
        %7291 = vxpose.xlu0.c.b16.cont [6/8] 0, 128
        %7292 = vxpose.xlu0.c.b16.cont [7/8] 0, 128
        %7293 = vxpose.xlu0.c.b16.end [8/8] 0, 128
        %v7294 = vpop.trf.xlu0
        %v7295 = vpop.trf.xlu0
        %v7296 = vpop.trf.xlu0
        %v7297 = vpop.trf.xlu0
        %v7298 = vpop.trf.xlu0
        %v7299 = vpop.trf.xlu0
        %v7300 = vpop.trf.xlu0
        %v7301 = vpop.trf.xlu0
        %7302 = vxpose.xlu0.c.b16.start [1/8] %v6365, 128
        %7303 = vxpose.xlu0.c.b16.cont [2/8] 0, 128
        %7304 = vxpose.xlu0.c.b16.cont [3/8] 0, 128
        %7305 = vxpose.xlu0.c.b16.cont [4/8] 0, 128
        %7306 = vxpose.xlu0.c.b16.cont [5/8] 0, 128
        %7307 = vxpose.xlu0.c.b16.cont [6/8] 0, 128
        %7308 = vxpose.xlu0.c.b16.cont [7/8] 0, 128
        %7309 = vxpose.xlu0.c.b16.end [8/8] 0, 128
        %v7310 = vpop.trf.xlu0
        %v7311 = vpop.trf.xlu0
        %v7312 = vpop.trf.xlu0
        %v7313 = vpop.trf.xlu0
        %v7314 = vpop.trf.xlu0
        %v7315 = vpop.trf.xlu0
        %v7316 = vpop.trf.xlu0
        %v7317 = vpop.trf.xlu0
        %7318 = vxpose.xlu0.c.b16.start [1/8] %v6366, 128
        %7319 = vxpose.xlu0.c.b16.cont [2/8] 0, 128
        %7320 = vxpose.xlu0.c.b16.cont [3/8] 0, 128
        %7321 = vxpose.xlu0.c.b16.cont [4/8] 0, 128
        %7322 = vxpose.xlu0.c.b16.cont [5/8] 0, 128
        %7323 = vxpose.xlu0.c.b16.cont [6/8] 0, 128
        %7324 = vxpose.xlu0.c.b16.cont [7/8] 0, 128
        %7325 = vxpose.xlu0.c.b16.end [8/8] 0, 128
        %v7326 = vpop.trf.xlu0
        %v7327 = vpop.trf.xlu0
        %v7328 = vpop.trf.xlu0
        %v7329 = vpop.trf.xlu0
        %v7330 = vpop.trf.xlu0
        %v7331 = vpop.trf.xlu0
        %v7332 = vpop.trf.xlu0
        %v7333 = vpop.trf.xlu0
        %7334 = vxpose.xlu0.c.b16.start [1/8] %v6367, 128
        %7335 = vxpose.xlu0.c.b16.cont [2/8] 0, 128
        %7336 = vxpose.xlu0.c.b16.cont [3/8] 0, 128
        %7337 = vxpose.xlu0.c.b16.cont [4/8] 0, 128
        %7338 = vxpose.xlu0.c.b16.cont [5/8] 0, 128
        %7339 = vxpose.xlu0.c.b16.cont [6/8] 0, 128
        %7340 = vxpose.xlu0.c.b16.cont [7/8] 0, 128
        %7341 = vxpose.xlu0.c.b16.end [8/8] 0, 128
        %v7342 = vpop.trf.xlu0
        %v7343 = vpop.trf.xlu0
        %v7344 = vpop.trf.xlu0
        %v7345 = vpop.trf.xlu0
        %v7346 = vpop.trf.xlu0
        %v7347 = vpop.trf.xlu0
        %v7348 = vpop.trf.xlu0
        %v7349 = vpop.trf.xlu0
        %7350 = vxpose.xlu0.c.b16.start [1/8] %v6368, 128
        %7351 = vxpose.xlu0.c.b16.cont [2/8] 0, 128
        %7352 = vxpose.xlu0.c.b16.cont [3/8] 0, 128
        %7353 = vxpose.xlu0.c.b16.cont [4/8] 0, 128
        %7354 = vxpose.xlu0.c.b16.cont [5/8] 0, 128
        %7355 = vxpose.xlu0.c.b16.cont [6/8] 0, 128
        %7356 = vxpose.xlu0.c.b16.cont [7/8] 0, 128
        %7357 = vxpose.xlu0.c.b16.end [8/8] 0, 128
        %v7358 = vpop.trf.xlu0
        %v7359 = vpop.trf.xlu0
        %v7360 = vpop.trf.xlu0
        %v7361 = vpop.trf.xlu0
        %v7362 = vpop.trf.xlu0
        %v7363 = vpop.trf.xlu0
        %v7364 = vpop.trf.xlu0
        %v7365 = vpop.trf.xlu0
        %7366 = vxpose.xlu0.c.b16.start [1/8] %v6369, 128
        %7367 = vxpose.xlu0.c.b16.cont [2/8] 0, 128
        %7368 = vxpose.xlu0.c.b16.cont [3/8] 0, 128
        %7369 = vxpose.xlu0.c.b16.cont [4/8] 0, 128
        %7370 = vxpose.xlu0.c.b16.cont [5/8] 0, 128
        %7371 = vxpose.xlu0.c.b16.cont [6/8] 0, 128
        %7372 = vxpose.xlu0.c.b16.cont [7/8] 0, 128
        %7373 = vxpose.xlu0.c.b16.end [8/8] 0, 128
        %v7374 = vpop.trf.xlu0
        %v7375 = vpop.trf.xlu0
        %v7376 = vpop.trf.xlu0
        %v7377 = vpop.trf.xlu0
        %v7378 = vpop.trf.xlu0
        %v7379 = vpop.trf.xlu0
        %v7380 = vpop.trf.xlu0
        %v7381 = vpop.trf.xlu0
        %7382 = vxpose.xlu0.c.b16.start [1/8] %v6370, 128
        %7383 = vxpose.xlu0.c.b16.cont [2/8] 0, 128
        %7384 = vxpose.xlu0.c.b16.cont [3/8] 0, 128
        %7385 = vxpose.xlu0.c.b16.cont [4/8] 0, 128
        %7386 = vxpose.xlu0.c.b16.cont [5/8] 0, 128
        %7387 = vxpose.xlu0.c.b16.cont [6/8] 0, 128
        %7388 = vxpose.xlu0.c.b16.cont [7/8] 0, 128
        %7389 = vxpose.xlu0.c.b16.end [8/8] 0, 128
        %v7390 = vpop.trf.xlu0
        %v7391 = vpop.trf.xlu0
        %v7392 = vpop.trf.xlu0
        %v7393 = vpop.trf.xlu0
        %v7394 = vpop.trf.xlu0
        %v7395 = vpop.trf.xlu0
        %v7396 = vpop.trf.xlu0
        %v7397 = vpop.trf.xlu0
        %7398 = vxpose.xlu0.c.b16.start [1/8] %v6371, 128
        %7399 = vxpose.xlu0.c.b16.cont [2/8] 0, 128
        %7400 = vxpose.xlu0.c.b16.cont [3/8] 0, 128
        %7401 = vxpose.xlu0.c.b16.cont [4/8] 0, 128
        %7402 = vxpose.xlu0.c.b16.cont [5/8] 0, 128
        %7403 = vxpose.xlu0.c.b16.cont [6/8] 0, 128
        %7404 = vxpose.xlu0.c.b16.cont [7/8] 0, 128
        %7405 = vxpose.xlu0.c.b16.end [8/8] 0, 128
        %v7406 = vpop.trf.xlu0
        %v7407 = vpop.trf.xlu0
        %v7408 = vpop.trf.xlu0
        %v7409 = vpop.trf.xlu0
        %v7410 = vpop.trf.xlu0
        %v7411 = vpop.trf.xlu0
        %v7412 = vpop.trf.xlu0
        %v7413 = vpop.trf.xlu0
        %7414 = vxpose.xlu0.c.b16.start [1/8] %v6372, 128
        %7415 = vxpose.xlu0.c.b16.cont [2/8] 0, 128
        %7416 = vxpose.xlu0.c.b16.cont [3/8] 0, 128
        %7417 = vxpose.xlu0.c.b16.cont [4/8] 0, 128
        %7418 = vxpose.xlu0.c.b16.cont [5/8] 0, 128
        %7419 = vxpose.xlu0.c.b16.cont [6/8] 0, 128
        %7420 = vxpose.xlu0.c.b16.cont [7/8] 0, 128
        %7421 = vxpose.xlu0.c.b16.end [8/8] 0, 128
        %v7422 = vpop.trf.xlu0
        %v7423 = vpop.trf.xlu0
        %v7424 = vpop.trf.xlu0
        %v7425 = vpop.trf.xlu0
        %v7426 = vpop.trf.xlu0
        %v7427 = vpop.trf.xlu0
        %v7428 = vpop.trf.xlu0
        %v7429 = vpop.trf.xlu0
        %7430 = vxpose.xlu0.c.b16.start [1/8] %v6373, 128
        %7431 = vxpose.xlu0.c.b16.cont [2/8] 0, 128
        %7432 = vxpose.xlu0.c.b16.cont [3/8] 0, 128
        %7433 = vxpose.xlu0.c.b16.cont [4/8] 0, 128
        %7434 = vxpose.xlu0.c.b16.cont [5/8] 0, 128
        %7435 = vxpose.xlu0.c.b16.cont [6/8] 0, 128
        %7436 = vxpose.xlu0.c.b16.cont [7/8] 0, 128
        %7437 = vxpose.xlu0.c.b16.end [8/8] 0, 128
        %v7438 = vpop.trf.xlu0
        %v7439 = vpop.trf.xlu0
        %v7440 = vpop.trf.xlu0
        %v7441 = vpop.trf.xlu0
        %v7442 = vpop.trf.xlu0
        %v7443 = vpop.trf.xlu0
        %v7444 = vpop.trf.xlu0
        %v7445 = vpop.trf.xlu0
        %v7446 = vrot.slane %v7262, 4
        %v7447 = vsel %vm1932, %v7446, %v7198
        %v7449 = vunpack.c.l.s4 1983009808
        %v7450 = vunpack.c.0.s8 %v7449
        %v7451 = vperm.slane %v7447, %v7450
        %v7452 = vrot.slane %v7294, 4
        %v7453 = vsel %vm1932, %v7452, %v7230
        %v7455 = vunpack.c.l.s4 1983009808
        %v7456 = vunpack.c.0.s8 %v7455
        %v7457 = vperm.slane %v7453, %v7456
        %v7458 = vrot.slane %v7390, 4
        %v7459 = vsel %vm1932, %v7458, %v7326
        %v7461 = vunpack.c.l.s4 1983009808
        %v7462 = vunpack.c.0.s8 %v7461
        %v7463 = vperm.slane %v7459, %v7462
        %v7464 = vrot.slane %v7422, 4
        %v7465 = vsel %vm1932, %v7464, %v7358
        %v7467 = vunpack.c.l.s4 1983009808
        %v7468 = vunpack.c.0.s8 %v7467
        %v7469 = vperm.slane %v7465, %v7468
        %v7470 = vrot.slane %v7457, 4
        %v7471 = vsel %vm1932, %v7470, %v7451
        %v7472 = vrot.slane %v7451, 4
        %v7473 = vsel %vm1932, %v7457, %v7472
        %v7475 = vunpack.c.l.s4 1934713408
        %v7476 = vunpack.c.0.s8 %v7475
        %v7477 = vperm.slane %v7471, %v7476
        %v7479 = vunpack.c.l.s4 1934713408
        %v7480 = vunpack.c.0.s8 %v7479
        %v7481 = vperm.slane %v7473, %v7480
        %v7482 = vrot.slane %v7469, 4
        %v7483 = vsel %vm1932, %v7482, %v7463
        %v7484 = vrot.slane %v7463, 4
        %v7485 = vsel %vm1932, %v7469, %v7484
        %v7487 = vunpack.c.l.s4 1934713408
        %v7488 = vunpack.c.0.s8 %v7487
        %v7489 = vperm.slane %v7483, %v7488
        %v7491 = vunpack.c.l.s4 1934713408
        %v7492 = vunpack.c.0.s8 %v7491
        %v7493 = vperm.slane %v7485, %v7492
        %v7494 = vrot.slane %v7489, 4
        %v7495 = vsel %vm1932, %v7494, %v7477
        %v7496 = vrot.slane %v7477, 4
        %v7497 = vsel %vm1932, %v7489, %v7496
        %v7498 = vrot.slane %v7493, 4
        %v7499 = vsel %vm1932, %v7498, %v7481
        %v7500 = vrot.slane %v7481, 4
        %v7501 = vsel %vm1932, %v7493, %v7500
        %v7502 = vrot.slane %v7278, 4
        %v7503 = vsel %vm1932, %v7502, %v7214
        %v7505 = vunpack.c.l.s4 1983009808
        %v7506 = vunpack.c.0.s8 %v7505
        %v7507 = vperm.slane %v7503, %v7506
        %v7508 = vrot.slane %v7310, 4
        %v7509 = vsel %vm1932, %v7508, %v7246
        %v7511 = vunpack.c.l.s4 1983009808
        %v7512 = vunpack.c.0.s8 %v7511
        %v7513 = vperm.slane %v7509, %v7512
        %v7514 = vrot.slane %v7406, 4
        %v7515 = vsel %vm1932, %v7514, %v7342
        %v7517 = vunpack.c.l.s4 1983009808
        %v7518 = vunpack.c.0.s8 %v7517
        %v7519 = vperm.slane %v7515, %v7518
        %v7520 = vrot.slane %v7438, 4
        %v7521 = vsel %vm1932, %v7520, %v7374
        %v7523 = vunpack.c.l.s4 1983009808
        %v7524 = vunpack.c.0.s8 %v7523
        %v7525 = vperm.slane %v7521, %v7524
        %v7526 = vrot.slane %v7513, 4
        %v7527 = vsel %vm1932, %v7526, %v7507
        %v7528 = vrot.slane %v7507, 4
        %v7529 = vsel %vm1932, %v7513, %v7528
        %v7531 = vunpack.c.l.s4 1934713408
        %v7532 = vunpack.c.0.s8 %v7531
        %v7533 = vperm.slane %v7527, %v7532
        %v7535 = vunpack.c.l.s4 1934713408
        %v7536 = vunpack.c.0.s8 %v7535
        %v7537 = vperm.slane %v7529, %v7536
        %v7538 = vrot.slane %v7525, 4
        %v7539 = vsel %vm1932, %v7538, %v7519
        %v7540 = vrot.slane %v7519, 4
        %v7541 = vsel %vm1932, %v7525, %v7540
        %v7543 = vunpack.c.l.s4 1934713408
        %v7544 = vunpack.c.0.s8 %v7543
        %v7545 = vperm.slane %v7539, %v7544
        %v7547 = vunpack.c.l.s4 1934713408
        %v7548 = vunpack.c.0.s8 %v7547
        %v7549 = vperm.slane %v7541, %v7548
        %v7550 = vrot.slane %v7545, 4
        %v7551 = vsel %vm1932, %v7550, %v7533
        %v7552 = vrot.slane %v7533, 4
        %v7553 = vsel %vm1932, %v7545, %v7552
        %v7554 = vrot.slane %v7549, 4
        %v7555 = vsel %vm1932, %v7554, %v7537
        %v7556 = vrot.slane %v7537, 4
        %v7557 = vsel %vm1932, %v7549, %v7556
        %v7560 = vpack.i.b16 %v7551, %v7495
        %v7562 = vshrl.u32 %v7495, 16
        %v7563 = vshrl.u32 %v7551, 16
        %v7564 = vpack.i.b16 %v7563, %v7562
        %v7568 = vpack.i.b16 %v7553, %v7497
        %v7570 = vshrl.u32 %v7497, 16
        %v7571 = vshrl.u32 %v7553, 16
        %v7572 = vpack.i.b16 %v7571, %v7570
        %v7576 = vpack.i.b16 %v7555, %v7499
        %v7578 = vshrl.u32 %v7499, 16
        %v7579 = vshrl.u32 %v7555, 16
        %v7580 = vpack.i.b16 %v7579, %v7578
        %v7584 = vpack.i.b16 %v7557, %v7501
        %v7586 = vshrl.u32 %v7501, 16
        %v7587 = vshrl.u32 %v7557, 16
        %v7588 = vpack.i.b16 %v7587, %v7586
        %7590 = vxpose.xlu0.c.b16.start [1/8] %v7560, 128
        %7591 = vxpose.xlu0.c.b16.cont [2/8] 0, 128
        %7592 = vxpose.xlu0.c.b16.cont [3/8] 0, 128
        %7593 = vxpose.xlu0.c.b16.cont [4/8] 0, 128
        %7594 = vxpose.xlu0.c.b16.cont [5/8] 0, 128
        %7595 = vxpose.xlu0.c.b16.cont [6/8] 0, 128
        %7596 = vxpose.xlu0.c.b16.cont [7/8] 0, 128
        %7597 = vxpose.xlu0.c.b16.end [8/8] 0, 128
        %v7598 = vpop.trf.xlu0
        %v7599 = vpop.trf.xlu0
        %v7600 = vpop.trf.xlu0
        %v7601 = vpop.trf.xlu0
        %v7602 = vpop.trf.xlu0
        %v7603 = vpop.trf.xlu0
        %v7604 = vpop.trf.xlu0
        %v7605 = vpop.trf.xlu0
        %7606 = vxpose.xlu0.c.b16.start [1/8] %v7564, 128
        %7607 = vxpose.xlu0.c.b16.cont [2/8] 0, 128
        %7608 = vxpose.xlu0.c.b16.cont [3/8] 0, 128
        %7609 = vxpose.xlu0.c.b16.cont [4/8] 0, 128
        %7610 = vxpose.xlu0.c.b16.cont [5/8] 0, 128
        %7611 = vxpose.xlu0.c.b16.cont [6/8] 0, 128
        %7612 = vxpose.xlu0.c.b16.cont [7/8] 0, 128
        %7613 = vxpose.xlu0.c.b16.end [8/8] 0, 128
        %v7614 = vpop.trf.xlu0
        %v7615 = vpop.trf.xlu0
        %v7616 = vpop.trf.xlu0
        %v7617 = vpop.trf.xlu0
        %v7618 = vpop.trf.xlu0
        %v7619 = vpop.trf.xlu0
        %v7620 = vpop.trf.xlu0
        %v7621 = vpop.trf.xlu0
        %7622 = vxpose.xlu0.c.b16.start [1/8] %v7568, 128
        %7623 = vxpose.xlu0.c.b16.cont [2/8] 0, 128
        %7624 = vxpose.xlu0.c.b16.cont [3/8] 0, 128
        %7625 = vxpose.xlu0.c.b16.cont [4/8] 0, 128
        %7626 = vxpose.xlu0.c.b16.cont [5/8] 0, 128
        %7627 = vxpose.xlu0.c.b16.cont [6/8] 0, 128
        %7628 = vxpose.xlu0.c.b16.cont [7/8] 0, 128
        %7629 = vxpose.xlu0.c.b16.end [8/8] 0, 128
        %v7630 = vpop.trf.xlu0
        %v7631 = vpop.trf.xlu0
        %v7632 = vpop.trf.xlu0
        %v7633 = vpop.trf.xlu0
        %v7634 = vpop.trf.xlu0
        %v7635 = vpop.trf.xlu0
        %v7636 = vpop.trf.xlu0
        %v7637 = vpop.trf.xlu0
        %7638 = vxpose.xlu0.c.b16.start [1/8] %v7572, 128
        %7639 = vxpose.xlu0.c.b16.cont [2/8] 0, 128
        %7640 = vxpose.xlu0.c.b16.cont [3/8] 0, 128
        %7641 = vxpose.xlu0.c.b16.cont [4/8] 0, 128
        %7642 = vxpose.xlu0.c.b16.cont [5/8] 0, 128
        %7643 = vxpose.xlu0.c.b16.cont [6/8] 0, 128
        %7644 = vxpose.xlu0.c.b16.cont [7/8] 0, 128
        %7645 = vxpose.xlu0.c.b16.end [8/8] 0, 128
        %v7646 = vpop.trf.xlu0
        %v7647 = vpop.trf.xlu0
        %v7648 = vpop.trf.xlu0
        %v7649 = vpop.trf.xlu0
        %v7650 = vpop.trf.xlu0
        %v7651 = vpop.trf.xlu0
        %v7652 = vpop.trf.xlu0
        %v7653 = vpop.trf.xlu0
        %7654 = vxpose.xlu0.c.b16.start [1/8] %v7576, 128
        %7655 = vxpose.xlu0.c.b16.cont [2/8] 0, 128
        %7656 = vxpose.xlu0.c.b16.cont [3/8] 0, 128
        %7657 = vxpose.xlu0.c.b16.cont [4/8] 0, 128
        %7658 = vxpose.xlu0.c.b16.cont [5/8] 0, 128
        %7659 = vxpose.xlu0.c.b16.cont [6/8] 0, 128
        %7660 = vxpose.xlu0.c.b16.cont [7/8] 0, 128
        %7661 = vxpose.xlu0.c.b16.end [8/8] 0, 128
        %v7662 = vpop.trf.xlu0
        %v7663 = vpop.trf.xlu0
        %v7664 = vpop.trf.xlu0
        %v7665 = vpop.trf.xlu0
        %v7666 = vpop.trf.xlu0
        %v7667 = vpop.trf.xlu0
        %v7668 = vpop.trf.xlu0
        %v7669 = vpop.trf.xlu0
        %7670 = vxpose.xlu0.c.b16.start [1/8] %v7580, 128
        %7671 = vxpose.xlu0.c.b16.cont [2/8] 0, 128
        %7672 = vxpose.xlu0.c.b16.cont [3/8] 0, 128
        %7673 = vxpose.xlu0.c.b16.cont [4/8] 0, 128
        %7674 = vxpose.xlu0.c.b16.cont [5/8] 0, 128
        %7675 = vxpose.xlu0.c.b16.cont [6/8] 0, 128
        %7676 = vxpose.xlu0.c.b16.cont [7/8] 0, 128
        %7677 = vxpose.xlu0.c.b16.end [8/8] 0, 128
        %v7678 = vpop.trf.xlu0
        %v7679 = vpop.trf.xlu0
        %v7680 = vpop.trf.xlu0
        %v7681 = vpop.trf.xlu0
        %v7682 = vpop.trf.xlu0
        %v7683 = vpop.trf.xlu0
        %v7684 = vpop.trf.xlu0
        %v7685 = vpop.trf.xlu0
        %7686 = vxpose.xlu0.c.b16.start [1/8] %v7584, 128
        %7687 = vxpose.xlu0.c.b16.cont [2/8] 0, 128
        %7688 = vxpose.xlu0.c.b16.cont [3/8] 0, 128
        %7689 = vxpose.xlu0.c.b16.cont [4/8] 0, 128
        %7690 = vxpose.xlu0.c.b16.cont [5/8] 0, 128
        %7691 = vxpose.xlu0.c.b16.cont [6/8] 0, 128
        %7692 = vxpose.xlu0.c.b16.cont [7/8] 0, 128
        %7693 = vxpose.xlu0.c.b16.end [8/8] 0, 128
        %v7694 = vpop.trf.xlu0
        %v7695 = vpop.trf.xlu0
        %v7696 = vpop.trf.xlu0
        %v7697 = vpop.trf.xlu0
        %v7698 = vpop.trf.xlu0
        %v7699 = vpop.trf.xlu0
        %v7700 = vpop.trf.xlu0
        %v7701 = vpop.trf.xlu0
        %7702 = vxpose.xlu0.c.b16.start [1/8] %v7588, 128
        %7703 = vxpose.xlu0.c.b16.cont [2/8] 0, 128
        %7704 = vxpose.xlu0.c.b16.cont [3/8] 0, 128
        %7705 = vxpose.xlu0.c.b16.cont [4/8] 0, 128
        %7706 = vxpose.xlu0.c.b16.cont [5/8] 0, 128
        %7707 = vxpose.xlu0.c.b16.cont [6/8] 0, 128
        %7708 = vxpose.xlu0.c.b16.cont [7/8] 0, 128
        %7709 = vxpose.xlu0.c.b16.end [8/8] 0, 128
        %v7710 = vpop.trf.xlu0
        %v7711 = vpop.trf.xlu0
        %v7712 = vpop.trf.xlu0
        %v7713 = vpop.trf.xlu0
        %v7714 = vpop.trf.xlu0
        %v7715 = vpop.trf.xlu0
        %v7716 = vpop.trf.xlu0
        %v7717 = vpop.trf.xlu0
        %v7718 = vrot.slane %v7662, 4
        %v7719 = vsel %vm1932, %v7718, %v7598
        %v7721 = vunpack.c.l.s4 1983009808
        %v7722 = vunpack.c.0.s8 %v7721
        %v7723 = vperm.slane %v7719, %v7722
        %v7724 = vrot.slane %v7694, 4
        %v7725 = vsel %vm1932, %v7724, %v7630
        %v7727 = vunpack.c.l.s4 1983009808
        %v7728 = vunpack.c.0.s8 %v7727
        %v7729 = vperm.slane %v7725, %v7728
        %v7730 = vrot.slane %v7729, 4
        %v7731 = vsel %vm1932, %v7730, %v7723
        %v7733 = vunpack.c.l.s4 1934713408
        %v7734 = vunpack.c.0.s8 %v7733
        %v7735 = vperm.slane %v7731, %v7734
        %v7736 = vrot.slane %v7735, 4
        %v7737 = vsel %vm1932, 0, %v7736
        %v7738 = vrot.slane %v7678, 4
        %v7739 = vsel %vm1932, %v7738, %v7614
        %v7741 = vunpack.c.l.s4 1983009808
        %v7742 = vunpack.c.0.s8 %v7741
        %v7743 = vperm.slane %v7739, %v7742
        %v7744 = vrot.slane %v7710, 4
        %v7745 = vsel %vm1932, %v7744, %v7646
        %v7747 = vunpack.c.l.s4 1983009808
        %v7748 = vunpack.c.0.s8 %v7747
        %v7749 = vperm.slane %v7745, %v7748
        %v7750 = vrot.slane %v7749, 4
        %v7751 = vsel %vm1932, %v7750, %v7743
        %v7753 = vunpack.c.l.s4 1934713408
        %v7754 = vunpack.c.0.s8 %v7753
        %v7755 = vperm.slane %v7751, %v7754
        %v7756 = vrot.slane %v7755, 4
        %v7757 = vsel %vm1932, 0, %v7756
        %v7760 = vpack.i.b16 %v7755, %v7735
        %v7761 = vshrl.u32 %v7735, 16
        %v7762 = vshrl.u32 %v7755, 16
        %v7763 = vpack.i.b16 %v7762, %v7761
        %v7766 = vpack.i.b16 %v7757, %v7737
        %v7767 = vshrl.u32 %v7737, 16
        %v7768 = vshrl.u32 %v7757, 16
        %v7769 = vpack.i.b16 %v7768, %v7767
        %v7771 = vsel %vm2726, %v7760, 0
        %v7774 = vsel %vm2726, %v7186, 0
        %7776 = vmatpush.bf16.xpose.msra.mxu0 0
        %7777 = vmatpush.bf16.xpose.msra.mxu0 0
        %7778 = vmatpush.bf16.xpose.msra.mxu0 0
        %7779 = vmatpush.bf16.xpose.msra.mxu0 0
        %7780 = vmatpush.bf16.xpose.msra.mxu0 0
        %7781 = vmatpush.bf16.xpose.msra.mxu0 0
        %7782 = vmatpush.bf16.xpose.msra.mxu0 0
        %7783 = vmatpush.bf16.xpose.msra.mxu0 %v7774
        %7784 = vmatmul.bf16.gmra.mxu0 %v7771
        %v7785 = vpop.f32.mrf.mxu0
        %v7786 = vadd.f32 0.0, %v7785
        %v7787 = vpop.f32.mrf.mxu0
        %7788 = vdwg.mxu0
        %v7790 = vsel %vm2726, %v7763, 0
        %v7793 = vsel %vm2726, %v7187, 0
        %7795 = vmatpush.bf16.xpose.msra.mxu0 0
        %7796 = vmatpush.bf16.xpose.msra.mxu0 0
        %7797 = vmatpush.bf16.xpose.msra.mxu0 0
        %7798 = vmatpush.bf16.xpose.msra.mxu0 0
        %7799 = vmatpush.bf16.xpose.msra.mxu0 0
        %7800 = vmatpush.bf16.xpose.msra.mxu0 0
        %7801 = vmatpush.bf16.xpose.msra.mxu0 0
        %7802 = vmatpush.bf16.xpose.msra.mxu0 %v7793
        %7803 = vmatmul.bf16.gmra.mxu0 %v7790
        %v7804 = vpop.f32.mrf.mxu0
        %v7805 = vadd.f32 0.0, %v7804
        %v7806 = vpop.f32.mrf.mxu0
        %7807 = vdwg.mxu0
        %v7809 = vsel %vm2726, %v7766, 0
        %v7812 = vsel %vm2726, %v7188, 0
        %7814 = vmatpush.bf16.xpose.msra.mxu0 0
        %7815 = vmatpush.bf16.xpose.msra.mxu0 0
        %7816 = vmatpush.bf16.xpose.msra.mxu0 0
        %7817 = vmatpush.bf16.xpose.msra.mxu0 0
        %7818 = vmatpush.bf16.xpose.msra.mxu0 0
        %7819 = vmatpush.bf16.xpose.msra.mxu0 0
        %7820 = vmatpush.bf16.xpose.msra.mxu0 0
        %7821 = vmatpush.bf16.xpose.msra.mxu0 %v7812
        %7822 = vmatmul.bf16.gmra.mxu0 %v7809
        %v7823 = vpop.f32.mrf.mxu0
        %v7824 = vadd.f32 0.0, %v7823
        %v7825 = vpop.f32.mrf.mxu0
        %7826 = vdwg.mxu0
        %v7828 = vsel %vm2726, %v7769, 0
        %v7831 = vsel %vm2726, %v7189, 0
        %7833 = vmatpush.bf16.xpose.msra.mxu0 0
        %7834 = vmatpush.bf16.xpose.msra.mxu0 0
        %7835 = vmatpush.bf16.xpose.msra.mxu0 0
        %7836 = vmatpush.bf16.xpose.msra.mxu0 0
        %7837 = vmatpush.bf16.xpose.msra.mxu0 0
        %7838 = vmatpush.bf16.xpose.msra.mxu0 0
        %7839 = vmatpush.bf16.xpose.msra.mxu0 0
        %7840 = vmatpush.bf16.xpose.msra.mxu0 %v7831
        %7841 = vmatmul.bf16.gmra.mxu0 %v7828
        %v7842 = vpop.f32.mrf.mxu0
        %v7843 = vadd.f32 0.0, %v7842
        %v7844 = vpop.f32.mrf.mxu0
        %7845 = vdwg.mxu0
        %7846 = vxpose.xlu0.b32.start [1/16] %v7786, 128
        %7847 = vxpose.xlu0.b32.cont [2/16] 0.0, 128
        %7848 = vxpose.xlu0.b32.cont [3/16] 0.0, 128
        %7849 = vxpose.xlu0.b32.cont [4/16] 0.0, 128
        %7850 = vxpose.xlu0.b32.cont [5/16] 0.0, 128
        %7851 = vxpose.xlu0.b32.cont [6/16] 0.0, 128
        %7852 = vxpose.xlu0.b32.cont [7/16] 0.0, 128
        %7853 = vxpose.xlu0.b32.cont [8/16] 0.0, 128
        %7854 = vxpose.xlu0.b32.cont [9/16] 0.0, 128
        %7855 = vxpose.xlu0.b32.cont [10/16] 0.0, 128
        %7856 = vxpose.xlu0.b32.cont [11/16] 0.0, 128
        %7857 = vxpose.xlu0.b32.cont [12/16] 0.0, 128
        %7858 = vxpose.xlu0.b32.cont [13/16] 0.0, 128
        %7859 = vxpose.xlu0.b32.cont [14/16] 0.0, 128
        %7860 = vxpose.xlu0.b32.cont [15/16] 0.0, 128
        %7861 = vxpose.xlu0.b32.end [16/16] 0.0, 128
        %v7862 = vpop.trf.xlu0
        %v7863 = vpop.trf.xlu0
        %v7864 = vpop.trf.xlu0
        %v7865 = vpop.trf.xlu0
        %v7866 = vpop.trf.xlu0
        %v7867 = vpop.trf.xlu0
        %v7868 = vpop.trf.xlu0
        %v7869 = vpop.trf.xlu0
        %v7870 = vpop.trf.xlu0
        %v7871 = vpop.trf.xlu0
        %v7872 = vpop.trf.xlu0
        %v7873 = vpop.trf.xlu0
        %v7874 = vpop.trf.xlu0
        %v7875 = vpop.trf.xlu0
        %v7876 = vpop.trf.xlu0
        %v7877 = vpop.trf.xlu0
        %7878 = vxpose.xlu0.b32.start [1/16] %v7805, 128
        %7879 = vxpose.xlu0.b32.cont [2/16] 0.0, 128
        %7880 = vxpose.xlu0.b32.cont [3/16] 0.0, 128
        %7881 = vxpose.xlu0.b32.cont [4/16] 0.0, 128
        %7882 = vxpose.xlu0.b32.cont [5/16] 0.0, 128
        %7883 = vxpose.xlu0.b32.cont [6/16] 0.0, 128
        %7884 = vxpose.xlu0.b32.cont [7/16] 0.0, 128
        %7885 = vxpose.xlu0.b32.cont [8/16] 0.0, 128
        %7886 = vxpose.xlu0.b32.cont [9/16] 0.0, 128
        %7887 = vxpose.xlu0.b32.cont [10/16] 0.0, 128
        %7888 = vxpose.xlu0.b32.cont [11/16] 0.0, 128
        %7889 = vxpose.xlu0.b32.cont [12/16] 0.0, 128
        %7890 = vxpose.xlu0.b32.cont [13/16] 0.0, 128
        %7891 = vxpose.xlu0.b32.cont [14/16] 0.0, 128
        %7892 = vxpose.xlu0.b32.cont [15/16] 0.0, 128
        %7893 = vxpose.xlu0.b32.end [16/16] 0.0, 128
        %v7894 = vpop.trf.xlu0
        %v7895 = vpop.trf.xlu0
        %v7896 = vpop.trf.xlu0
        %v7897 = vpop.trf.xlu0
        %v7898 = vpop.trf.xlu0
        %v7899 = vpop.trf.xlu0
        %v7900 = vpop.trf.xlu0
        %v7901 = vpop.trf.xlu0
        %v7902 = vpop.trf.xlu0
        %v7903 = vpop.trf.xlu0
        %v7904 = vpop.trf.xlu0
        %v7905 = vpop.trf.xlu0
        %v7906 = vpop.trf.xlu0
        %v7907 = vpop.trf.xlu0
        %v7908 = vpop.trf.xlu0
        %v7909 = vpop.trf.xlu0
        %7910 = vxpose.xlu0.b32.start [1/16] %v7824, 128
        %7911 = vxpose.xlu0.b32.cont [2/16] 0.0, 128
        %7912 = vxpose.xlu0.b32.cont [3/16] 0.0, 128
        %7913 = vxpose.xlu0.b32.cont [4/16] 0.0, 128
        %7914 = vxpose.xlu0.b32.cont [5/16] 0.0, 128
        %7915 = vxpose.xlu0.b32.cont [6/16] 0.0, 128
        %7916 = vxpose.xlu0.b32.cont [7/16] 0.0, 128
        %7917 = vxpose.xlu0.b32.cont [8/16] 0.0, 128
        %7918 = vxpose.xlu0.b32.cont [9/16] 0.0, 128
        %7919 = vxpose.xlu0.b32.cont [10/16] 0.0, 128
        %7920 = vxpose.xlu0.b32.cont [11/16] 0.0, 128
        %7921 = vxpose.xlu0.b32.cont [12/16] 0.0, 128
        %7922 = vxpose.xlu0.b32.cont [13/16] 0.0, 128
        %7923 = vxpose.xlu0.b32.cont [14/16] 0.0, 128
        %7924 = vxpose.xlu0.b32.cont [15/16] 0.0, 128
        %7925 = vxpose.xlu0.b32.end [16/16] 0.0, 128
        %v7926 = vpop.trf.xlu0
        %v7927 = vpop.trf.xlu0
        %v7928 = vpop.trf.xlu0
        %v7929 = vpop.trf.xlu0
        %v7930 = vpop.trf.xlu0
        %v7931 = vpop.trf.xlu0
        %v7932 = vpop.trf.xlu0
        %v7933 = vpop.trf.xlu0
        %v7934 = vpop.trf.xlu0
        %v7935 = vpop.trf.xlu0
        %v7936 = vpop.trf.xlu0
        %v7937 = vpop.trf.xlu0
        %v7938 = vpop.trf.xlu0
        %v7939 = vpop.trf.xlu0
        %v7940 = vpop.trf.xlu0
        %v7941 = vpop.trf.xlu0
        %7942 = vxpose.xlu0.b32.start [1/16] %v7843, 128
        %7943 = vxpose.xlu0.b32.cont [2/16] 0.0, 128
        %7944 = vxpose.xlu0.b32.cont [3/16] 0.0, 128
        %7945 = vxpose.xlu0.b32.cont [4/16] 0.0, 128
        %7946 = vxpose.xlu0.b32.cont [5/16] 0.0, 128
        %7947 = vxpose.xlu0.b32.cont [6/16] 0.0, 128
        %7948 = vxpose.xlu0.b32.cont [7/16] 0.0, 128
        %7949 = vxpose.xlu0.b32.cont [8/16] 0.0, 128
        %7950 = vxpose.xlu0.b32.cont [9/16] 0.0, 128
        %7951 = vxpose.xlu0.b32.cont [10/16] 0.0, 128
        %7952 = vxpose.xlu0.b32.cont [11/16] 0.0, 128
        %7953 = vxpose.xlu0.b32.cont [12/16] 0.0, 128
        %7954 = vxpose.xlu0.b32.cont [13/16] 0.0, 128
        %7955 = vxpose.xlu0.b32.cont [14/16] 0.0, 128
        %7956 = vxpose.xlu0.b32.cont [15/16] 0.0, 128
        %7957 = vxpose.xlu0.b32.end [16/16] 0.0, 128
        %v7958 = vpop.trf.xlu0
        %v7959 = vpop.trf.xlu0
        %v7960 = vpop.trf.xlu0
        %v7961 = vpop.trf.xlu0
        %v7962 = vpop.trf.xlu0
        %v7963 = vpop.trf.xlu0
        %v7964 = vpop.trf.xlu0
        %v7965 = vpop.trf.xlu0
        %v7966 = vpop.trf.xlu0
        %v7967 = vpop.trf.xlu0
        %v7968 = vpop.trf.xlu0
        %v7969 = vpop.trf.xlu0
        %v7970 = vpop.trf.xlu0
        %v7971 = vpop.trf.xlu0
        %v7972 = vpop.trf.xlu0
        %v7973 = vpop.trf.xlu0
        %v7974 = vrot.slane %v7926, 4
        %v7975 = vsel %vm1499, %v7974, %v7862
        %v7976 = vrot.slane %v7862, 4
        %v7977 = vsel %vm1499, %v7926, %v7976
        %v7979 = vunpack.c.l.s4 1983009808
        %v7980 = vunpack.c.0.s8 %v7979
        %v7981 = vperm.slane %v7975, %v7980
        %v7983 = vunpack.c.l.s4 1983009808
        %v7984 = vunpack.c.0.s8 %v7983
        %v7985 = vperm.slane %v7977, %v7984
        %v7986 = vrot.slane %v7958, 4
        %v7987 = vsel %vm1499, %v7986, %v7894
        %v7988 = vrot.slane %v7894, 4
        %v7989 = vsel %vm1499, %v7958, %v7988
        %v7991 = vunpack.c.l.s4 1983009808
        %v7992 = vunpack.c.0.s8 %v7991
        %v7993 = vperm.slane %v7987, %v7992
        %v7995 = vunpack.c.l.s4 1983009808
        %v7996 = vunpack.c.0.s8 %v7995
        %v7997 = vperm.slane %v7989, %v7996
        %v7998 = vrot.slane %v7993, 4
        %v7999 = vsel %vm1499, %v7998, %v7981
        %v8000 = vrot.slane %v7981, 4
        %v8001 = vsel %vm1499, %v7993, %v8000
        %v8003 = vunpack.c.l.s4 1934713408
        %v8004 = vunpack.c.0.s8 %v8003
        %v8005 = vperm.slane %v7999, %v8004
        %v8007 = vunpack.c.l.s4 1934713408
        %v8008 = vunpack.c.0.s8 %v8007
        %v8009 = vperm.slane %v8001, %v8008
        %v8010 = vrot.slane %v7997, 4
        %v8011 = vsel %vm1499, %v8010, %v7985
        %v8012 = vrot.slane %v7985, 4
        %v8013 = vsel %vm1499, %v7997, %v8012
        %v8015 = vunpack.c.l.s4 1934713408
        %v8016 = vunpack.c.0.s8 %v8015
        %v8017 = vperm.slane %v8011, %v8016
        %v8019 = vunpack.c.l.s4 1934713408
        %v8020 = vunpack.c.0.s8 %v8019
        %v8021 = vperm.slane %v8013, %v8020
        %v8022 = vrot.slane %v8005, 4
        %v8023 = vsel %vm1499, 0.0, %v8022
        %v8024 = vrot.slane %v8009, 4
        %v8025 = vsel %vm1499, 0.0, %v8024
        %v8026 = vrot.slane %v8017, 4
        %v8027 = vsel %vm1499, 0.0, %v8026
        %v8028 = vrot.slane %v8021, 4
        %v8029 = vsel %vm1499, 0.0, %v8028
        %v8030 = vsel %vm1499, %v8024, %v8005
        %v8032 = vunpack.c.l.s4 1983009808
        %v8033 = vunpack.c.0.s8 %v8032
        %v8034 = vperm.slane %v8030, %v8033
        %v8035 = vrot.slane %v8025, 4
        %v8036 = vsel %vm1499, %v8035, %v8023
        %v8038 = vunpack.c.l.s4 1983009808
        %v8039 = vunpack.c.0.s8 %v8038
        %v8040 = vperm.slane %v8036, %v8039
        %v8041 = vsel %vm1499, %v8028, %v8017
        %v8043 = vunpack.c.l.s4 1983009808
        %v8044 = vunpack.c.0.s8 %v8043
        %v8045 = vperm.slane %v8041, %v8044
        %v8046 = vrot.slane %v8029, 4
        %v8047 = vsel %vm1499, %v8046, %v8027
        %v8049 = vunpack.c.l.s4 1983009808
        %v8050 = vunpack.c.0.s8 %v8049
        %v8051 = vperm.slane %v8047, %v8050
        %v8052 = vrot.slane %v8040, 4
        %v8053 = vsel %vm1499, %v8052, %v8034
        %v8054 = vrot.slane %v8034, 4
        %v8055 = vsel %vm1499, %v8040, %v8054
        %v8057 = vunpack.c.l.s4 1934713408
        %v8058 = vunpack.c.0.s8 %v8057
        %v8059 = vperm.slane %v8053, %v8058
        %v8061 = vunpack.c.l.s4 1934713408
        %v8062 = vunpack.c.0.s8 %v8061
        %v8063 = vperm.slane %v8055, %v8062
        %v8064 = vrot.slane %v8051, 4
        %v8065 = vsel %vm1499, %v8064, %v8045
        %v8066 = vrot.slane %v8045, 4
        %v8067 = vsel %vm1499, %v8051, %v8066
        %v8069 = vunpack.c.l.s4 1934713408
        %v8070 = vunpack.c.0.s8 %v8069
        %v8071 = vperm.slane %v8065, %v8070
        %v8073 = vunpack.c.l.s4 1934713408
        %v8074 = vunpack.c.0.s8 %v8073
        %v8075 = vperm.slane %v8067, %v8074
        %v8076 = vrot.slane %v8071, 4
        %v8077 = vsel %vm1499, %v8076, %v8059
        %v8078 = vrot.slane %v8059, 4
        %v8079 = vsel %vm1499, %v8071, %v8078
        %v8080 = vrot.slane %v8075, 4
        %v8081 = vsel %vm1499, %v8080, %v8063
        %v8082 = vrot.slane %v8063, 4
        %v8083 = vsel %vm1499, %v8075, %v8082
        %8085 = vrot.lane.b32.xlu0 %v8079, 8
        %v8086 = vpop.permute.xlu0 %8085
        %8089 = vrot.lane.b32.xlu0 %v8081, 16
        %v8090 = vpop.permute.xlu0 %8089
        %8093 = vrot.lane.b32.xlu0 %v8083, 24
        %v8094 = vpop.permute.xlu0 %8093
        %v8096 = vsel %vm2619, %v8077, %v8086
        %v8097 = vsel %vm2726, %v8096, %v8090
        %v8098 = vsel %vm3979, %v8097, %v8094
        %v8099 = vld [vmem:[#allocation25] sm:$0xf]
        %v8100 = vld [vmem:[#allocation25 + $0x4] sm:$0xf]
        %v8101 = vld [vmem:[#allocation25 + $0x8] sm:$0xf]
        %v8102 = vld [vmem:[#allocation25 + $0xc] sm:$0xf]
        %v8103 = vld [vmem:[#allocation27] sm:$0x1]
        %v8104 = vpack.c.bf16 %v8098, %v8098
        %v8106 = vperm.slane %v8103, 0
        %v8112 = vunpack.c.l.b16 %v8099
        %v8113 = vunpack.c.l.b16 %v8100
        %v8114 = vunpack.c.l.b16 %v8101
        %v8115 = vunpack.c.l.b16 %v8102
        %v8116 = vpack.c.b16 %v8113, %v8112
        %v8117 = vpack.c.b16 %v8115, %v8114
        %v8121 = vsel %vm1460, %v8104, 0
        %8123 = vmatpush.bf16.msra.mxu0 0
        %8124 = vmatpush.bf16.msra.mxu0 0
        %8125 = vmatpush.bf16.msra.mxu0 0
        %8126 = vmatpush.bf16.msra.mxu0 0
        %8127 = vmatpush.bf16.msra.mxu0 0
        %8128 = vmatpush.bf16.msra.mxu0 0
        %8129 = vmatpush.bf16.msra.mxu0 %v8117
        %8130 = vmatpush.bf16.msra.mxu0 %v8116
        %8131 = vmatmul.bf16.gmra.mxu0 %v8121
        %v8132 = vpop.f32.mrf.mxu0
        %v8133 = vadd.f32 %v8106, %v8132
        %v8134 = vpop.f32.mrf.mxu0
        %8135 = vdwg.mxu0
        %v8136 = vadd.f32 %v5924, %v8133
        %v8137 = vld [vmem:[#allocation28] sm:$0x1]
        %v8138 = vld [vmem:[#allocation30] sm:$0x1]
        %v8139 = vsel %vm1460, %v8136, 0.0
        %8140 = vadd.xlane.f32.xlu0 %v8139
        %v8141 = vpop.xlane.xlu0 %8140
        %v8142 = vmul.f32 %v8141, %v4036
        %v8143 = vsub.f32 %v8136, %v8142
        %v8144 = vmul.f32 %v8143, %v8143
        %v8145 = vsel %vm1460, %v8144, 0.0
        %8146 = vadd.xlane.f32.xlu0 %v8145
        %v8147 = vpop.xlane.xlu0 %8146
        %v8148 = vmul.f32 %v8147, %v4036
        %v8149 = vadd.f32 %v8148, 1e-05
        %v8150 = vrsqrt.pop %v8149
        %v8151 = vmul.f32 %v8150, %v8149
        %v8152 = vmul.f32 %v8151, %v8150
        %v8153 = vmul.f32 0.5, %v8152
        %v8154 = vsub.f32 1.5, %v8153
        %v8155 = vmul.f32 %v8150, %v8154
        %vm8156 = vweird.f32 %v8149
        %vm8157 = vweird.f32 %v8150
        %vm8158 = vmor %vm8156, %vm8157
        %v8159 = vsel %vm8158, %v8150, %v8155
        %v8160 = vmul.f32 %v8143, %v8159
        %v8162 = vperm.slane %v8137, 0
        %v8164 = vmul.f32 %v8160, %v8162
        %v8166 = vperm.slane %v8138, 0
        %v8168 = vadd.f32 %v8164, %v8166
        %v8169 = vld [vmem:[%s59] sm:$0xf]
        %v8170 = vld [vmem:[%s59 + $0x4] sm:$0xf]
        %v8171 = vld [vmem:[%s59 + $0x8] sm:$0xf]
        %v8172 = vld [vmem:[%s59 + $0xc] sm:$0xf]
        %v8173 = vld [vmem:[#allocation31] sm:$0x1]
        %v8174 = vpack.c.bf16 %v8168, %v8168
        %v8176 = vperm.slane %v8173, 0
        %v8182 = vunpack.c.l.b16 %v8169
        %v8183 = vunpack.c.l.b16 %v8170
        %v8184 = vunpack.c.l.b16 %v8171
        %v8185 = vunpack.c.l.b16 %v8172
        %v8186 = vpack.c.b16 %v8183, %v8182
        %v8187 = vpack.c.b16 %v8185, %v8184
        %v8191 = vsel %vm1460, %v8174, 0
        %8193 = vmatpush.bf16.msra.mxu0 0
        %8194 = vmatpush.bf16.msra.mxu0 0
        %8195 = vmatpush.bf16.msra.mxu0 0
        %8196 = vmatpush.bf16.msra.mxu0 0
        %8197 = vmatpush.bf16.msra.mxu0 0
        %8198 = vmatpush.bf16.msra.mxu0 0
        %8199 = vmatpush.bf16.msra.mxu0 %v8187
        %8200 = vmatpush.bf16.msra.mxu0 %v8186
        %8201 = vmatmul.bf16.gmra.mxu0 %v8191
        %v8202 = vpop.f32.mrf.mxu0
        %v8203 = vadd.f32 %v8176, %v8202
        %v8204 = vpop.f32.mrf.mxu0
        %8205 = vdwg.mxu0
        %v8206 = vmax.f32 %v8203, 0.0
        %v8207 = vld [vmem:[%s63] sm:$0xf]
        %v8208 = vld [vmem:[%s63 + $0x4] sm:$0xf]
        %v8209 = vld [vmem:[%s63 + $0x8] sm:$0xf]
        %v8210 = vld [vmem:[%s63 + $0xc] sm:$0xf]
        %v8211 = vld [vmem:[%s63 + $0x10] sm:$0xf]
        %v8212 = vld [vmem:[%s63 + $0x14] sm:$0xf]
        %v8213 = vld [vmem:[%s63 + $0x18] sm:$0xf]
        %v8214 = vld [vmem:[%s63 + $0x1c] sm:$0xf]
        %v8215 = vld [vmem:[#allocation33] sm:$0x1]
        %v8216 = vpack.c.bf16 %v8206, %v8206
        %v8218 = vperm.slane %v8215, 0
        %v8228 = vunpack.c.l.b16 %v8207
        %v8229 = vunpack.c.l.b16 %v8208
        %v8230 = vunpack.c.l.b16 %v8209
        %v8231 = vunpack.c.l.b16 %v8210
        %v8232 = vunpack.c.l.b16 %v8211
        %v8233 = vunpack.c.l.b16 %v8212
        %v8234 = vunpack.c.l.b16 %v8213
        %v8235 = vunpack.c.l.b16 %v8214
        %v8236 = vpack.c.b16 %v8229, %v8228
        %v8237 = vpack.c.b16 %v8231, %v8230
        %v8238 = vpack.c.b16 %v8233, %v8232
        %v8239 = vpack.c.b16 %v8235, %v8234
        %v8245 = vsel %vm4162, %v8216, 0
        %8247 = vmatpush.bf16.msra.mxu0 0
        %8248 = vmatpush.bf16.msra.mxu0 0
        %8249 = vmatpush.bf16.msra.mxu0 0
        %8250 = vmatpush.bf16.msra.mxu0 0
        %8251 = vmatpush.bf16.msra.mxu0 %v8239
        %8252 = vmatpush.bf16.msra.mxu0 %v8238
        %8253 = vmatpush.bf16.msra.mxu0 %v8237
        %8254 = vmatpush.bf16.msra.mxu0 %v8236
        %8255 = vmatmul.bf16.gmra.mxu0 %v8245
        %v8256 = vpop.f32.mrf.mxu0
        %v8257 = vadd.f32 %v8218, %v8256
        %v8258 = vpop.f32.mrf.mxu0
        %8259 = vdwg.mxu0
        %v8260 = vadd.f32 %v8168, %v8257
        %v8261 = vld [vmem:[#allocation34] sm:$0x1]
        %v8262 = vld [vmem:[#allocation36] sm:$0x1]
        %v8263 = vsel %vm1460, %v8260, 0.0
        %8264 = vadd.xlane.f32.xlu0 %v8263
        %v8265 = vpop.xlane.xlu0 %8264
        %v8266 = vmul.f32 %v8265, %v4036
        %v8267 = vsub.f32 %v8260, %v8266
        %v8268 = vmul.f32 %v8267, %v8267
        %v8269 = vsel %vm1460, %v8268, 0.0
        %8270 = vadd.xlane.f32.xlu0 %v8269
        %v8271 = vpop.xlane.xlu0 %8270
        %v8272 = vmul.f32 %v8271, %v4036
        %v8273 = vadd.f32 %v8272, 1e-05
        %v8274 = vrsqrt.pop %v8273
        %v8275 = vmul.f32 %v8274, %v8273
        %v8276 = vmul.f32 %v8275, %v8274
        %v8277 = vmul.f32 0.5, %v8276
        %v8278 = vsub.f32 1.5, %v8277
        %v8279 = vmul.f32 %v8274, %v8278
        %vm8280 = vweird.f32 %v8273
        %vm8281 = vweird.f32 %v8274
        %vm8282 = vmor %vm8280, %vm8281
        %v8283 = vsel %vm8282, %v8274, %v8279
        %v8284 = vmul.f32 %v8267, %v8283
        %v8286 = vperm.slane %v8261, 0
        %v8288 = vmul.f32 %v8284, %v8286
        %v8290 = vperm.slane %v8262, 0
        %v8292 = vadd.f32 %v8288, %v8290
        %v8293 = vrot.slane %v8292, 4
        %v8294 = vsel %vm1499, 0.0, %v8293
        %v8296 = vunpack.c.l.s4 1983009808
        %v8297 = vunpack.c.0.s8 %v8296
        %v8298 = vperm.slane %v8292, %v8297
        %v8300 = vunpack.c.l.s4 1983009808
        %v8301 = vunpack.c.0.s8 %v8300
        %v8302 = vperm.slane %v8294, %v8301
        %v8303 = vrot.slane %v8298, 4
        %v8304 = vsel %vm1499, 0.0, %v8303
        %v8306 = vunpack.c.l.s4 1934713408
        %v8307 = vunpack.c.0.s8 %v8306
        %v8308 = vperm.slane %v8298, %v8307
        %v8310 = vunpack.c.l.s4 1934713408
        %v8311 = vunpack.c.0.s8 %v8310
        %v8312 = vperm.slane %v8304, %v8311
        %v8313 = vrot.slane %v8302, 4
        %v8314 = vsel %vm1499, 0.0, %v8313
        %v8316 = vunpack.c.l.s4 1934713408
        %v8317 = vunpack.c.0.s8 %v8316
        %v8318 = vperm.slane %v8302, %v8317
        %v8320 = vunpack.c.l.s4 1934713408
        %v8321 = vunpack.c.0.s8 %v8320
        %v8322 = vperm.slane %v8314, %v8321
        %v8323 = vrot.slane %v8308, 4
        %v8324 = vsel %vm1499, 0.0, %v8323
        %v8325 = vrot.slane %v8312, 4
        %v8326 = vsel %vm1499, 0.0, %v8325
        %v8327 = vrot.slane %v8318, 4
        %v8328 = vsel %vm1499, 0.0, %v8327
        %v8329 = vrot.slane %v8322, 4
        %v8330 = vsel %vm1499, 0.0, %v8329
        %8332 = vrot.lane.b32.xlu0 %v8324, 32
        %v8333 = vpop.permute.xlu0 %8332
        %8336 = vrot.lane.b32.xlu0 %v8312, 64
        %v8337 = vpop.permute.xlu0 %8336
        %8340 = vrot.lane.b32.xlu0 %v8326, 96
        %v8341 = vpop.permute.xlu0 %8340
        %8344 = vrot.lane.b32.xlu0 %v8328, 32
        %v8345 = vpop.permute.xlu0 %8344
        %8348 = vrot.lane.b32.xlu0 %v8322, 64
        %v8349 = vpop.permute.xlu0 %8348
        %8352 = vrot.lane.b32.xlu0 %v8330, 96
        %v8353 = vpop.permute.xlu0 %8352
        %v8355 = vsel %vm1460, %v8308, %v8333
        %v8356 = vsel %vm4162, %v8355, %v8337
        %vm8357 = vcmask 785408
        %v8358 = vsel %vm8357, %v8356, %v8341
        %v8359 = vsel %vm1460, %v8318, %v8345
        %v8360 = vsel %vm4162, %v8359, %v8349
        %v8361 = vsel %vm8357, %v8360, %v8353
        %v8364 = vrot.slane %v8361, 7
        %v8365 = vsel %vm1432, %v8358, %v8364
        %v8367 = vlaneseq
        %vm8368 = vcmp.ge.s32.totalorder %v8367, 0
        %vm8369 = vcmp.lt.s32.totalorder %v8367, 256
        %vm8370 = vmand %vm8368, %vm8369
        %8371 = vst.msk [vmem:[%s1425] sm:$0x3] %vm8370, %v8365
        %p8372 = scmp.lt.s32.totalorder %s96, 1
        %s8373 = scalar_select %p8372, %s96, 1
        %s8374 = smul.addr %s8373, 2
        %s8375 = scalar_lea.vmem %s71, %s8374
        // Predicated region
        $region253: #{artr_forward.1} parent=159 // pred_check
          %p8376 = pneg %p859
        $region254: #{artr_forward.1} parent=159 // pred_check_branch
          %8378 = sbr.rel (%p8376) target = $region256
        $region255: #{artr_forward.1} parent=159 // pred_region
          _
        $region256: #{artr_forward.1} parent=159 // pred_fallthru
          _
      $region160: #{artr_forward.1} parent=5 // pred_fallthru
        _
      %p8379 = scmp.le.s32.totalorder 2, %s91
      // Predicated region
      $region257: #{artr_forward.1} parent=5 // pred_check
        %p8380 = pneg %p8379
      $region258: #{artr_forward.1} parent=5 // pred_check_branch
        %8382 = sbr.rel (%p8380) target = $region260
      $region259: #{artr_forward.1} parent=5 // pred_region
        %s8383 = ssub.s32 %s91, 2
        // Predicated region
        $region261: #{artr_forward.1} parent=259 // pred_check
          %p8384 = pneg %p865
        $region262: #{artr_forward.1} parent=259 // pred_check_branch
          %8386 = sbr.rel (%p8384) target = $region264
        $region263: #{artr_forward.1} parent=259 // pred_region
          %p8387 = scmp.lt.s32.totalorder %s97, 1
          %s8388 = scalar_select %p8387, %s97, 1
          %s8389 = smul.addr %s8388, 2
          %s8390 = scalar_lea.vmem %s71, %s8389
        $region264: #{artr_forward.1} parent=259 // pred_fallthru
          _
      $region260: #{artr_forward.1} parent=5 // pred_fallthru
        _
    $region6: #{artr_forward.1} parent=1 // loop_footer
      %s95 = sadd.s32 1, %s91
    $region7: #{artr_forward.1} parent=1 // loop_footer_branch
      %90 = sbr.rel target = $region3
    $region8: #{artr_forward.1} parent=1 // loop_exit
      _
    %8391 = vsyncpa [#allocation3], 1
    %s8392 = scalar_lea.sflag [#allocation3], 1
    %8393 = vsyncpa %s8392, 1
    %8394 = vsyncpa [#allocation5], 1
    %8395 = vsyncpa [#allocation8], 1
    %8396 = vsyncpa [#allocation11], 1
    %8397 = vsyncpa [#allocation14], 1
    %8398 = vsyncpa [#allocation17], 1
    %8399 = vsyncpa [#allocation20], 1
    %8400 = vsyncpa [#allocation23], 1
    %8401 = vsyncpa [#allocation26], 1
    %8402 = vsyncpa [#allocation29], 1
    %8403 = vsyncpa [#allocation32], 1
    %8404 = vsyncpa [#allocation35], 1

</llo_original>
